<compile_context>
chip_gen: v7x
topology: tpu7x:2x2x1
jax: 0.10.0
libtpu: 0.0.40
codegen_flags: <defaults>
</compile_context>

<pallas_src>
import jax
import jax.numpy as jnp
from jax.experimental import pallas as pl
from jax.experimental.pallas import tpu as pltpu


def _round_up(x, m):
    return ((x + m - 1) // m) * m


# ------------------------------------------------------------------ kernels --
def _mlp_kernel(x_ref, w1_ref, b1_ref, w2_ref, b2_ref, o_ref):
    # h1 = relu(x @ w1 + b1); h2 = relu(h1 @ w2 + b2) -- one launch, all in VMEM.
    h = jnp.dot(x_ref[...], w1_ref[...], preferred_element_type=jnp.float32)
    h = jnp.maximum(h + b1_ref[...], 0.0).astype(jnp.bfloat16)
    y = jnp.dot(h, w2_ref[...], preferred_element_type=jnp.float32)
    o_ref[...] = jnp.maximum(y + b2_ref[...], 0.0).astype(o_ref.dtype)


def _matmul_kernel(x_ref, w_ref, o_ref):
    # Full-K / full-N block matmul (bf16 in, f32 accumulate/out).
    o_ref[...] = jnp.dot(x_ref[...], w_ref[...],
                         preferred_element_type=jnp.float32)


# ----------------------------------------------------------------- wrappers --
def pallas_mlp(x, w1, b1, w2, b2, n_out):
    """relu(relu(x@w1+b1)@w2+b2) in one pallas_call. Returns (B, n_out) bf16."""
    B, L = x.shape
    N1 = w1.shape[1]
    N2p = w2.shape[1]                                   # 128-padded columns
    Bp = _round_up(max(B, 16), 16)                      # bf16 sublane-friendly rows
    xp = jnp.pad(x.astype(jnp.bfloat16), ((0, Bp - B), (0, 0)))
    out = pl.pallas_call(
        _mlp_kernel,
        out_shape=jax.ShapeDtypeStruct((Bp, N2p), jnp.bfloat16),
        grid=(1,),
        in_specs=[
            pl.BlockSpec((Bp, L), lambda i: (0, 0)),
            pl.BlockSpec((L, N1), lambda i: (0, 0)),
            pl.BlockSpec((1, N1), lambda i: (0, 0)),
            pl.BlockSpec((N1, N2p), lambda i: (0, 0)),
            pl.BlockSpec((1, N2p), lambda i: (0, 0)),
        ],
        out_specs=pl.BlockSpec((Bp, N2p), lambda i: (0, 0)),
        compiler_params=pltpu.CompilerParams(
            dimension_semantics=("arbitrary",)),
    )(xp, w1, b1, w2, b2)
    return out[:B, :n_out]


def pallas_matmul(x, w):
    """x:(M,K) bf16 @ w:(K,N) bf16 -> (M,N) f32.

    Single block at small M (the inference path here); tiles M with the weight
    block held resident when M grows large.  N is pre-padded to a multiple of
    128 by prepare_params -> unmasked lane-dense stores.
    """
    M, K = x.shape
    _, N = w.shape
    Mp = _round_up(max(M, 16), 16)
    tm = min(Mp, 1024)
    Mp = _round_up(Mp, tm)
    if Mp != M:
        x = jnp.pad(x, ((0, Mp - M), (0, 0)))
    nm = Mp // tm
    out = pl.pallas_call(
        _matmul_kernel,
        out_shape=jax.ShapeDtypeStruct((Mp, N), jnp.float32),
        grid=(nm,),
        in_specs=[pl.BlockSpec((tm, K), lambda i: (i, 0)),
                  pl.BlockSpec((K, N), lambda i: (0, 0))],
        out_specs=pl.BlockSpec((tm, N), lambda i: (i, 0)),
        compiler_params=pltpu.CompilerParams(
            dimension_semantics=("parallel",)),
    )(x, w)
    return out[:M]


# -------------------------------------------------- ConvTranspose via col2im --
def conv_transpose_col2im(x_nhwc, wmat, bias, stride, kernel, cout, activation):
    """ConvTranspose2d (no padding) = col matmul + pixel-shuffle overlap-add.

    x_nhwc : (B,H,W,Cin)
    wmat   : (Cin, Np) bf16, first K*K*Cout columns ordered (kh, kw, co),
             remaining columns are zero padding (lane-dense store).
    bias   : (Cout,) f32 (added once per output pixel, after overlap-add)
    Returns (B, OH, OW, Cout) f32 with activation applied (NHWC).
    """
    B, H, W, Cin = x_nhwc.shape
    K, s = kernel, stride
    OH = (H - 1) * s + K
    OW = (W - 1) * s + K
    assert K % s == 0
    c = K // s                                         # kernel blocks per dim
    kkc = K * K * cout

    x_flat = x_nhwc.reshape(B * H * W, Cin).astype(jnp.bfloat16)
    y = pallas_matmul(x_flat, wmat)                    # (B*H*W, Np) f32
    y6 = y[:, :kkc].reshape(B, H, W, K, K, cout)       # drop zero-pad columns

    # Overlap-add: split the KxK taps into c*c blocks of sxs; each block is a
    # pixel-shuffle (depth-to-space) slab placed at offset (i*s, j*s).
    parts = []
    for i in range(c):
        for j in range(c):
            blk = y6[:, :, :, i * s:(i + 1) * s, j * s:(j + 1) * s, :]
            blk = blk.transpose(0, 1, 3, 2, 4, 5).reshape(B, H * s, W * s, cout)
            parts.append(jnp.pad(
                blk,
                ((0, 0),
                 (i * s, OH - H * s - i * s),
                 (j * s, OW - W * s - j * s),
                 (0, 0))))
    out = sum(parts)                                   # tiny f32 tensors; XLA fuses

    out = out + bias                                   # broadcast over Cout
    if activation == "relu":
        out = jnp.maximum(out, 0.0)
    elif activation == "sigmoid255":
        out = 255.0 * jax.nn.sigmoid(out)              # *255 fused into epilogue
    return out


# ------------------------------------------------------------- full decoder --
def decoder_forward(x, prep):
    B = x.shape[0]
    # Fused Linear->ReLU->Linear->ReLU; output columns already NHWC-ordered.
    h = pallas_mlp(x, prep["w1"], prep["b1"], prep["w2"], prep["b2"],
                   n_out=64 * 7 * 7)
    h = h.reshape(B, 7, 7, 64)                                              # NHWC
    h = conv_transpose_col2im(h, prep["wc1"], prep["bc1"], 1, 3, 64, "relu")        # (B, 9, 9,64)
    h = conv_transpose_col2im(h, prep["wc2"], prep["bc2"], 2, 4, 32, "relu")        # (B,20,20,32)
    h = conv_transpose_col2im(h, prep["wc3"], prep["bc3"], 4, 8, 3, "sigmoid255")   # (B,84,84, 3)
    return h   # already NHWC and scaled by 255 (== PyTorch permute(0,2,3,1)*255)


# -------------------------------------------------- one-time weight repacking --
def _pad_cols_128(a2d):
    n = a2d.shape[1]
    npad = _round_up(n, 128)
    if npad != n:
        a2d = jnp.pad(a2d, ((0, 0), (0, npad - n)))
    return a2d


def prepare_params(p):
    latent, n1 = p["w1"].shape

    def conv_wmat(w):
        cin, cout, k, _ = w.shape
        # (Cin, Cout, K, K) -> (Cin, kh, kw, co) -> (Cin, K*K*Cout) -> pad to 128
        m = w.transpose(0, 2, 3, 1).reshape(cin, k * k * cout)
        return _pad_cols_128(m).astype(jnp.bfloat16)

    # Reorder w2/b2 output columns from PyTorch's Unflatten order (c,h,w)
    # to NHWC order (h,w,c) so no runtime transpose is needed; pad columns to
    # a multiple of 128 for unmasked vector stores (zeros, sliced off later).
    w2 = p["w2"].reshape(n1, 64, 7, 7).transpose(0, 2, 3, 1).reshape(n1, 64 * 7 * 7)
    b2 = p["b2"].reshape(64, 7, 7).transpose(1, 2, 0).reshape(1, 64 * 7 * 7)

    return {
        "w1": p["w1"].astype(jnp.bfloat16),
        "b1": p["b1"].reshape(1, n1).astype(jnp.float32),
        "w2": _pad_cols_128(w2).astype(jnp.bfloat16),
        "b2": _pad_cols_128(b2).astype(jnp.float32),
        "wc1": conv_wmat(p["wc1"]), "bc1": p["bc1"].astype(jnp.float32),
        "wc2": conv_wmat(p["wc2"]), "bc2": p["bc2"].astype(jnp.float32),
        "wc3": conv_wmat(p["wc3"]), "bc3": p["bc3"].astype(jnp.float32),
    }


# ---------------------------------------------------------- f32 jnp reference --
def _ref_conv_transpose2d(x, w, b, s):
    # PyTorch ConvTranspose2d semantics (no padding), NCHW, f32.
    K = w.shape[2]
    wc = jnp.flip(w, (2, 3)).transpose(1, 0, 2, 3)     # (Cout, Cin, K, K)
    y = jax.lax.conv_general_dilated(
        x, wc, window_strides=(1, 1),
        padding=[(K - 1, K - 1), (K - 1, K - 1)],
        lhs_dilation=(s, s),
        dimension_numbers=("NCHW", "OIHW", "NCHW"))
    return y + b.reshape(1, -1, 1, 1)


def reference_forward(x, p):
    B = x.shape[0]
    h = jnp.maximum(x @ p["w1"] + p["b1"], 0.0)
    h = jnp.maximum(h @ p["w2"] + p["b2"], 0.0)
    h = h.reshape(B, 64, 7, 7)
    h = jnp.maximum(_ref_conv_transpose2d(h, p["wc1"], p["bc1"], 1), 0.0)
    h = jnp.maximum(_ref_conv_transpose2d(h, p["wc2"], p["bc2"], 2), 0.0)
    h = jax.nn.sigmoid(_ref_conv_transpose2d(h, p["wc3"], p["bc3"], 4))
    return h.transpose(0, 2, 3, 1) * 255.0


def init_params(key, latent):
    ks = jax.random.split(key, 10)
    s = 0.02
    return {
        "w1": jax.random.normal(ks[0], (latent, 512), jnp.float32) * s,
        "b1": jax.random.normal(ks[1], (512,), jnp.float32) * s,
        "w2": jax.random.normal(ks[2], (512, 64 * 7 * 7), jnp.float32) * s,
        "b2": jax.random.normal(ks[3], (64 * 7 * 7,), jnp.float32) * s,
        "wc1": jax.random.normal(ks[4], (64, 64, 3, 3), jnp.float32) * s,
        "bc1": jax.random.normal(ks[5], (64,), jnp.float32) * s,
        "wc2": jax.random.normal(ks[6], (64, 32, 4, 4), jnp.float32) * s,
        "bc2": jax.random.normal(ks[7], (32,), jnp.float32) * s,
        "wc3": jax.random.normal(ks[8], (32, 3, 8, 8), jnp.float32) * s,
        "bc3": jax.random.normal(ks[9], (3,), jnp.float32) * s,
    }


if __name__ == "__main__":
    latent, batch = 32, 2
    key = jax.random.PRNGKey(0)
    kx, kp = jax.random.split(key)
    x = jax.random.normal(kx, (batch, latent), jnp.float32)
    params = init_params(kp, latent)

    prep = prepare_params(params)          # one-time repack (bf16, col2im layout)
    fwd = jax.jit(decoder_forward)

    out = jax.block_until_ready(fwd(x, prep))
    assert out.shape == (batch, 84, 84, 3), out.shape

    # Validate against an independent f32 XLA reference of the PyTorch module.
    ref = jax.block_until_ready(reference_forward(x, params))
    err = float(jnp.max(jnp.abs(out - ref)))
    # bf16 matmul inputs vs f32 reference on a 0..255 output scale.
    assert err < 0.5, err

    print("KERNEL_OK")
</pallas_src>

<mosaic_0001>
module attributes {stable_mosaic.version = 11 : i64} {
  func.func @_mlp_kernel(%arg0: i32, %arg1: memref<16x32xbf16, #tpu.memory_space<vmem>>, %arg2: memref<32x512xbf16, #tpu.memory_space<vmem>>, %arg3: memref<1x512xf32, #tpu.memory_space<vmem>>, %arg4: memref<512x3200xbf16, #tpu.memory_space<vmem>>, %arg5: memref<1x3200xf32, #tpu.memory_space<vmem>>, %arg6: memref<16x3200xbf16, #tpu.memory_space<vmem>>) attributes {dimension_semantics = [#tpu.dimension_semantics<arbitrary>], iteration_bounds = array<i64: 1>, scalar_prefetch = 0 : i64, scratch_operands = 0 : i64, tpu.core_type = #tpu.core_type<tc>, window_params = [{pipeline_mode = #tpu.pipeline_mode<synchronous>, transform_indices = @transform_0, window_bounds = array<i64: 16, 32>}, {pipeline_mode = #tpu.pipeline_mode<synchronous>, transform_indices = @transform_1, window_bounds = array<i64: 32, 512>}, {pipeline_mode = #tpu.pipeline_mode<synchronous>, transform_indices = @transform_2, window_bounds = array<i64: 1, 512>}, {pipeline_mode = #tpu.pipeline_mode<synchronous>, transform_indices = @transform_3, window_bounds = array<i64: 512, 3200>}, {pipeline_mode = #tpu.pipeline_mode<synchronous>, transform_indices = @transform_4, window_bounds = array<i64: 1, 3200>}, {pipeline_mode = #tpu.pipeline_mode<synchronous>, transform_indices = @transform_5, window_bounds = array<i64: 16, 3200>}]} {
    %c0 = arith.constant 0 : index
    %c0_0 = arith.constant 0 : index
    %0 = vector.load %arg1[%c0, %c0_0] : memref<16x32xbf16, #tpu.memory_space<vmem>>, vector<16x32xbf16>
    %c0_1 = arith.constant 0 : index
    %c0_2 = arith.constant 0 : index
    %1 = vector.load %arg2[%c0_1, %c0_2] : memref<32x512xbf16, #tpu.memory_space<vmem>>, vector<32x512xbf16>
    %cst = arith.constant dense<0.000000e+00> : vector<16x512xf32>
    %2 = tpu.matmul %0, %1, %cst {dimension_numbers = #tpu.dot_dimension_numbers<[1], [0], [0], [1], [0, 0, 1, 1], [], []>} : vector<16x32xbf16>, vector<32x512xbf16>, vector<16x512xf32> -> vector<16x512xf32>
    %c0_3 = arith.constant 0 : index
    %c0_4 = arith.constant 0 : index
    %3 = vector.load %arg3[%c0_3, %c0_4] : memref<1x512xf32, #tpu.memory_space<vmem>>, vector<1x512xf32>
    %4 = vector.broadcast %3 : vector<1x512xf32> to vector<16x512xf32>
    %5 = arith.addf %2, %4 : vector<16x512xf32>
    %cst_5 = arith.constant 0.000000e+00 : f32
    %6 = vector.broadcast %cst_5 : f32 to vector<16x512xf32>
    %7 = arith.maximumf %5, %6 : vector<16x512xf32>
    %8 = arith.truncf %7 : vector<16x512xf32> to vector<16x512xbf16>
    %c0_6 = arith.constant 0 : index
    %c0_7 = arith.constant 0 : index
    %9 = vector.load %arg4[%c0_6, %c0_7] : memref<512x3200xbf16, #tpu.memory_space<vmem>>, vector<512x3200xbf16>
    %cst_8 = arith.constant dense<0.000000e+00> : vector<16x3200xf32>
    %10 = tpu.matmul %8, %9, %cst_8 {dimension_numbers = #tpu.dot_dimension_numbers<[1], [0], [0], [1], [0, 0, 1, 1], [], []>} : vector<16x512xbf16>, vector<512x3200xbf16>, vector<16x3200xf32> -> vector<16x3200xf32>
    %c0_9 = arith.constant 0 : index
    %c0_10 = arith.constant 0 : index
    %11 = vector.load %arg5[%c0_9, %c0_10] : memref<1x3200xf32, #tpu.memory_space<vmem>>, vector<1x3200xf32>
    %12 = vector.broadcast %11 : vector<1x3200xf32> to vector<16x3200xf32>
    %13 = arith.addf %10, %12 : vector<16x3200xf32>
    %cst_11 = arith.constant 0.000000e+00 : f32
    %14 = vector.broadcast %cst_11 : f32 to vector<16x3200xf32>
    %15 = arith.maximumf %13, %14 : vector<16x3200xf32>
    %16 = arith.truncf %15 : vector<16x3200xf32> to vector<16x3200xbf16>
    %c0_12 = arith.constant 0 : index
    %c0_13 = arith.constant 0 : index
    %17 = vector.load %arg6[%c0_12, %c0_13] : memref<16x3200xbf16, #tpu.memory_space<vmem>>, vector<16x3200xbf16>
    tpu.vector_store %arg6[%c0_12, %c0_13], %16 {strides = array<i32>} : memref<16x3200xbf16, #tpu.memory_space<vmem>>, vector<16x3200xbf16>,
    return
  }
  func.func @transform_0(%arg0: i32) -> (i32, i32) {
    %c0_i32 = arith.constant 0 : i32
    %c0_i32_0 = arith.constant 0 : i32
    %c0_i32_1 = arith.constant 0 : i32
    return %c0_i32, %c0_i32_0 : i32, i32
  }
  func.func @transform_1(%arg0: i32) -> (i32, i32) {
    %c0_i32 = arith.constant 0 : i32
    %c0_i32_0 = arith.constant 0 : i32
    %c0_i32_1 = arith.constant 0 : i32
    return %c0_i32, %c0_i32_0 : i32, i32
  }
  func.func @transform_2(%arg0: i32) -> (i32, i32) {
    %c0_i32 = arith.constant 0 : i32
    %c0_i32_0 = arith.constant 0 : i32
    %c0_i32_1 = arith.constant 0 : i32
    return %c0_i32, %c0_i32_0 : i32, i32
  }
  func.func @transform_3(%arg0: i32) -> (i32, i32) {
    %c0_i32 = arith.constant 0 : i32
    %c0_i32_0 = arith.constant 0 : i32
    %c0_i32_1 = arith.constant 0 : i32
    return %c0_i32, %c0_i32_0 : i32, i32
  }
  func.func @transform_4(%arg0: i32) -> (i32, i32) {
    %c0_i32 = arith.constant 0 : i32
    %c0_i32_0 = arith.constant 0 : i32
    %c0_i32_1 = arith.constant 0 : i32
    return %c0_i32, %c0_i32_0 : i32, i32
  }
  func.func @transform_5(%arg0: i32) -> (i32, i32) {
    %c0_i32 = arith.constant 0 : i32
    %c0_i32_0 = arith.constant 0 : i32
    %c0_i32_1 = arith.constant 0 : i32
    return %c0_i32, %c0_i32_0 : i32, i32
  }
}

module attributes {stable_mosaic.version = 11 : i64} {
  func.func @_matmul_kernel(%arg0: i32, %arg1: memref<112x64xbf16, #tpu.memory_space<vmem>>, %arg2: memref<64x640xbf16, #tpu.memory_space<vmem>>, %arg3: memref<112x640xf32, #tpu.memory_space<vmem>>) attributes {dimension_semantics = [#tpu.dimension_semantics<parallel>], iteration_bounds = array<i64: 1>, scalar_prefetch = 0 : i64, scratch_operands = 0 : i64, tpu.core_type = #tpu.core_type<tc>, window_params = [{transform_indices = @transform_0, window_bounds = array<i64: 112, 64>}, {pipeline_mode = #tpu.pipeline_mode<synchronous>, transform_indices = @transform_1, window_bounds = array<i64: 64, 640>}, {transform_indices = @transform_2, window_bounds = array<i64: 112, 640>}]} {
    %c0 = arith.constant 0 : index
    %c0_0 = arith.constant 0 : index
    %0 = vector.load %arg1[%c0, %c0_0] : memref<112x64xbf16, #tpu.memory_space<vmem>>, vector<112x64xbf16>
    %c0_1 = arith.constant 0 : index
    %c0_2 = arith.constant 0 : index
    %1 = vector.load %arg2[%c0_1, %c0_2] : memref<64x640xbf16, #tpu.memory_space<vmem>>, vector<64x640xbf16>
    %cst = arith.constant dense<0.000000e+00> : vector<112x640xf32>
    %2 = tpu.matmul %0, %1, %cst {dimension_numbers = #tpu.dot_dimension_numbers<[1], [0], [0], [1], [0, 0, 1, 1], [], []>} : vector<112x64xbf16>, vector<64x640xbf16>, vector<112x640xf32> -> vector<112x640xf32>
    %c0_3 = arith.constant 0 : index
    %c0_4 = arith.constant 0 : index
    %3 = vector.load %arg3[%c0_3, %c0_4] : memref<112x640xf32, #tpu.memory_space<vmem>>, vector<112x640xf32>
    tpu.vector_store %arg3[%c0_3, %c0_4], %2 {strides = array<i32>} : memref<112x640xf32, #tpu.memory_space<vmem>>, vector<112x640xf32>,
    return
  }
  func.func @transform_0(%arg0: i32) -> (i32, i32) {
    %c0_i32 = arith.constant 0 : i32
    %c0_i32_0 = arith.constant 0 : i32
    return %arg0, %c0_i32 : i32, i32
  }
  func.func @transform_1(%arg0: i32) -> (i32, i32) {
    %c0_i32 = arith.constant 0 : i32
    %c0_i32_0 = arith.constant 0 : i32
    %c0_i32_1 = arith.constant 0 : i32
    return %c0_i32, %c0_i32_0 : i32, i32
  }
  func.func @transform_2(%arg0: i32) -> (i32, i32) {
    %c0_i32 = arith.constant 0 : i32
    %c0_i32_0 = arith.constant 0 : i32
    return %arg0, %c0_i32 : i32, i32
  }
}

module attributes {stable_mosaic.version = 11 : i64} {
  func.func @_matmul_kernel(%arg0: i32, %arg1: memref<176x64xbf16, #tpu.memory_space<vmem>>, %arg2: memref<64x512xbf16, #tpu.memory_space<vmem>>, %arg3: memref<176x512xf32, #tpu.memory_space<vmem>>) attributes {dimension_semantics = [#tpu.dimension_semantics<parallel>], iteration_bounds = array<i64: 1>, scalar_prefetch = 0 : i64, scratch_operands = 0 : i64, tpu.core_type = #tpu.core_type<tc>, window_params = [{transform_indices = @transform_0, window_bounds = array<i64: 176, 64>}, {pipeline_mode = #tpu.pipeline_mode<synchronous>, transform_indices = @transform_1, window_bounds = array<i64: 64, 512>}, {transform_indices = @transform_2, window_bounds = array<i64: 176, 512>}]} {
    %c0 = arith.constant 0 : index
    %c0_0 = arith.constant 0 : index
    %0 = vector.load %arg1[%c0, %c0_0] : memref<176x64xbf16, #tpu.memory_space<vmem>>, vector<176x64xbf16>
    %c0_1 = arith.constant 0 : index
    %c0_2 = arith.constant 0 : index
    %1 = vector.load %arg2[%c0_1, %c0_2] : memref<64x512xbf16, #tpu.memory_space<vmem>>, vector<64x512xbf16>
    %cst = arith.constant dense<0.000000e+00> : vector<176x512xf32>
    %2 = tpu.matmul %0, %1, %cst {dimension_numbers = #tpu.dot_dimension_numbers<[1], [0], [0], [1], [0, 0, 1, 1], [], []>} : vector<176x64xbf16>, vector<64x512xbf16>, vector<176x512xf32> -> vector<176x512xf32>
    %c0_3 = arith.constant 0 : index
    %c0_4 = arith.constant 0 : index
    %3 = vector.load %arg3[%c0_3, %c0_4] : memref<176x512xf32, #tpu.memory_space<vmem>>, vector<176x512xf32>
    tpu.vector_store %arg3[%c0_3, %c0_4], %2 {strides = array<i32>} : memref<176x512xf32, #tpu.memory_space<vmem>>, vector<176x512xf32>,
    return
  }
  func.func @transform_0(%arg0: i32) -> (i32, i32) {
    %c0_i32 = arith.constant 0 : i32
    %c0_i32_0 = arith.constant 0 : i32
    return %arg0, %c0_i32 : i32, i32
  }
  func.func @transform_1(%arg0: i32) -> (i32, i32) {
    %c0_i32 = arith.constant 0 : i32
    %c0_i32_0 = arith.constant 0 : i32
    %c0_i32_1 = arith.constant 0 : i32
    return %c0_i32, %c0_i32_0 : i32, i32
  }
  func.func @transform_2(%arg0: i32) -> (i32, i32) {
    %c0_i32 = arith.constant 0 : i32
    %c0_i32_0 = arith.constant 0 : i32
    return %arg0, %c0_i32 : i32, i32
  }
}

module attributes {stable_mosaic.version = 11 : i64} {
  func.func @_matmul_kernel(%arg0: i32, %arg1: memref<800x32xbf16, #tpu.memory_space<vmem>>, %arg2: memref<32x256xbf16, #tpu.memory_space<vmem>>, %arg3: memref<800x256xf32, #tpu.memory_space<vmem>>) attributes {dimension_semantics = [#tpu.dimension_semantics<parallel>], iteration_bounds = array<i64: 1>, scalar_prefetch = 0 : i64, scratch_operands = 0 : i64, tpu.core_type = #tpu.core_type<tc>, window_params = [{transform_indices = @transform_0, window_bounds = array<i64: 800, 32>}, {pipeline_mode = #tpu.pipeline_mode<synchronous>, transform_indices = @transform_1, window_bounds = array<i64: 32, 256>}, {transform_indices = @transform_2, window_bounds = array<i64: 800, 256>}]} {
    %c0 = arith.constant 0 : index
    %c0_0 = arith.constant 0 : index
    %0 = vector.load %arg1[%c0, %c0_0] : memref<800x32xbf16, #tpu.memory_space<vmem>>, vector<800x32xbf16>
    %c0_1 = arith.constant 0 : index
    %c0_2 = arith.constant 0 : index
    %1 = vector.load %arg2[%c0_1, %c0_2] : memref<32x256xbf16, #tpu.memory_space<vmem>>, vector<32x256xbf16>
    %cst = arith.constant dense<0.000000e+00> : vector<800x256xf32>
    %2 = tpu.matmul %0, %1, %cst {dimension_numbers = #tpu.dot_dimension_numbers<[1], [0], [0], [1], [0, 0, 1, 1], [], []>} : vector<800x32xbf16>, vector<32x256xbf16>, vector<800x256xf32> -> vector<800x256xf32>
    %c0_3 = arith.constant 0 : index
    %c0_4 = arith.constant 0 : index
    %3 = vector.load %arg3[%c0_3, %c0_4] : memref<800x256xf32, #tpu.memory_space<vmem>>, vector<800x256xf32>
    tpu.vector_store %arg3[%c0_3, %c0_4], %2 {strides = array<i32>} : memref<800x256xf32, #tpu.memory_space<vmem>>, vector<800x256xf32>,
    return
  }
  func.func @transform_0(%arg0: i32) -> (i32, i32) {
    %c0_i32 = arith.constant 0 : i32
    %c0_i32_0 = arith.constant 0 : i32
    return %arg0, %c0_i32 : i32, i32
  }
  func.func @transform_1(%arg0: i32) -> (i32, i32) {
    %c0_i32 = arith.constant 0 : i32
    %c0_i32_0 = arith.constant 0 : i32
    %c0_i32_1 = arith.constant 0 : i32
    return %c0_i32, %c0_i32_0 : i32, i32
  }
  func.func @transform_2(%arg0: i32) -> (i32, i32) {
    %c0_i32 = arith.constant 0 : i32
    %c0_i32_0 = arith.constant 0 : i32
    return %arg0, %c0_i32 : i32, i32
  }
}

</mosaic_0001>

<llo_original>
// kernel: decoder_forward.5
$region0: #{decoder_forward.5}
  #allocation0 [shape = 'u32[]', space=smem, size = 0x4, offset = 0x4, fixed_abs, tag = 'smem constant byte address 0x4 - core index']
  #allocation1 [shape = 'u32[144,128]{1,0:T(1,128)}', space=vmem, size = 0x12000, scoped, tag = 'internal scratch']
  %s0 = inlined_call_operand.vmem [shape: bf16[112,64], index: 0, kind: input, shape index: {}]
  %s1 = inlined_call_operand.vmem [shape: bf16[64,640], index: 1, kind: input, shape index: {}]
  %s2 = inlined_call_operand.vmem [shape: f32[112,640], index: 2, kind: output, shape index: {}]
  %s3 = sld [smem:[#allocation0]]
  $region18: #{decoder_forward.5} parent=0
    _
  %s5 = ssub.s32 1, %s3
  %s6 = scalar_select 0, %s5, %s3
  // Predicated region
  $region2: #{decoder_forward.5} parent=0 // pred_check
    _
  $region3: #{decoder_forward.5} parent=0 // pred_check_branch
    %8 = sbr.rel (0) target = $region5
  $region4: #{decoder_forward.5} parent=0 // pred_region
    _
  $region5: #{decoder_forward.5} parent=0 // pred_fallthru
    _
  // Predicated region
  $region6: #{decoder_forward.5} parent=0 // pred_check
    _
  $region7: #{decoder_forward.5} parent=0 // pred_check_branch
    %10 = sbr.rel (0) target = $region9
  $region8: #{decoder_forward.5} parent=0 // pred_region
    _
  $region9: #{decoder_forward.5} parent=0 // pred_fallthru
    _
  %v12 = vld [vmem:[%s0] sm:$0xf]
  %v13 = vld [vmem:[%s0 + $0x4] sm:$0xf]
  %v14 = vld [vmem:[%s0 + $0x8] sm:$0xf]
  %v15 = vld [vmem:[%s0 + $0xc] sm:$0xf]
  %v16 = vld [vmem:[%s0 + $0x10] sm:$0xf]
  %v17 = vld [vmem:[%s0 + $0x14] sm:$0xf]
  %v18 = vld [vmem:[%s0 + $0x18] sm:$0xf]
  %v19 = vld [vmem:[%s0 + $0x1c] sm:$0xf]
  %v20 = vld [vmem:[%s0 + $0x20] sm:$0xf]
  %v21 = vld [vmem:[%s0 + $0x24] sm:$0xf]
  %v22 = vld [vmem:[%s0 + $0x28] sm:$0xf]
  %v23 = vld [vmem:[%s0 + $0x2c] sm:$0xf]
  %v24 = vld [vmem:[%s0 + $0x30] sm:$0xf]
  %v25 = vld [vmem:[%s0 + $0x34] sm:$0xf]
  %v26 = vld [vmem:[%s1] sm:$0xff]
  %v27 = vld [vmem:[%s1 + $0x8] sm:$0xff]
  %v28 = vld [vmem:[%s1 + $0x10] sm:$0xf]
  %v29 = vld [vmem:[%s1 + $0x14] sm:$0xff]
  %v30 = vld [vmem:[%s1 + $0x1c] sm:$0xff]
  %v31 = vld [vmem:[%s1 + $0x24] sm:$0xf]
  %v32 = vld [vmem:[%s1 + $0x28] sm:$0xff]
  %v33 = vld [vmem:[%s1 + $0x30] sm:$0xff]
  %v34 = vld [vmem:[%s1 + $0x38] sm:$0xf]
  %v35 = vld [vmem:[%s1 + $0x3c] sm:$0xff]
  %v36 = vld [vmem:[%s1 + $0x44] sm:$0xff]
  %v37 = vld [vmem:[%s1 + $0x4c] sm:$0xf]
  %v38 = vld [vmem:[%s1 + $0x50] sm:$0xff]
  %v39 = vld [vmem:[%s1 + $0x58] sm:$0xff]
  %v40 = vld [vmem:[%s1 + $0x60] sm:$0xf]
  %v41 = vld [vmem:[%s1 + $0x64] sm:$0xff]
  %v42 = vld [vmem:[%s1 + $0x6c] sm:$0xff]
  %v43 = vld [vmem:[%s1 + $0x74] sm:$0xf]
  %v44 = vld [vmem:[%s1 + $0x78] sm:$0xff]
  %v45 = vld [vmem:[%s1 + $0x80] sm:$0xff]
  %v46 = vld [vmem:[%s1 + $0x88] sm:$0xf]
  %v47 = vld [vmem:[%s1 + $0x8c] sm:$0xff]
  %v48 = vld [vmem:[%s1 + $0x94] sm:$0xff]
  %v49 = vld [vmem:[%s1 + $0x9c] sm:$0xf]
  %v64 = vunpack.c.l.b16 %v12
  %v65 = vunpack.c.l.b16 %v13
  %v66 = vunpack.c.l.b16 %v14
  %v67 = vunpack.c.l.b16 %v15
  %v68 = vunpack.c.l.b16 %v16
  %v69 = vunpack.c.l.b16 %v17
  %v70 = vunpack.c.l.b16 %v18
  %v71 = vunpack.c.l.b16 %v19
  %v72 = vunpack.c.l.b16 %v20
  %v73 = vunpack.c.l.b16 %v21
  %v74 = vunpack.c.l.b16 %v22
  %v75 = vunpack.c.l.b16 %v23
  %v76 = vunpack.c.l.b16 %v24
  %v77 = vunpack.c.l.b16 %v25
  %v78 = vpack.c.b16 %v65, %v64
  %v79 = vpack.c.b16 %v67, %v66
  %v80 = vpack.c.b16 %v69, %v68
  %v81 = vpack.c.b16 %v71, %v70
  %v82 = vpack.c.b16 %v73, %v72
  %v83 = vpack.c.b16 %v75, %v74
  %v84 = vpack.c.b16 %v77, %v76
  %v109 = vunpack.c.l.b16 %v26
  %v110 = vunpack.c.h.b16 %v26
  %v111 = vunpack.c.l.b16 %v27
  %v112 = vunpack.c.h.b16 %v27
  %v113 = vunpack.c.l.b16 %v28
  %v114 = vunpack.c.l.b16 %v29
  %v115 = vunpack.c.h.b16 %v29
  %v116 = vunpack.c.l.b16 %v30
  %v117 = vunpack.c.h.b16 %v30
  %v118 = vunpack.c.l.b16 %v31
  %v119 = vunpack.c.l.b16 %v32
  %v120 = vunpack.c.h.b16 %v32
  %v121 = vunpack.c.l.b16 %v33
  %v122 = vunpack.c.h.b16 %v33
  %v123 = vunpack.c.l.b16 %v34
  %v124 = vunpack.c.l.b16 %v35
  %v125 = vunpack.c.h.b16 %v35
  %v126 = vunpack.c.l.b16 %v36
  %v127 = vunpack.c.h.b16 %v36
  %v128 = vunpack.c.l.b16 %v37
  %v129 = vunpack.c.l.b16 %v38
  %v130 = vunpack.c.h.b16 %v38
  %v131 = vunpack.c.l.b16 %v39
  %v132 = vunpack.c.h.b16 %v39
  %v133 = vunpack.c.l.b16 %v40
  %v134 = vunpack.c.l.b16 %v41
  %v135 = vunpack.c.h.b16 %v41
  %v136 = vunpack.c.l.b16 %v42
  %v137 = vunpack.c.h.b16 %v42
  %v138 = vunpack.c.l.b16 %v43
  %v139 = vunpack.c.l.b16 %v44
  %v140 = vunpack.c.h.b16 %v44
  %v141 = vunpack.c.l.b16 %v45
  %v142 = vunpack.c.h.b16 %v45
  %v143 = vunpack.c.l.b16 %v46
  %v144 = vunpack.c.l.b16 %v47
  %v145 = vunpack.c.h.b16 %v47
  %v146 = vunpack.c.l.b16 %v48
  %v147 = vunpack.c.h.b16 %v48
  %v148 = vunpack.c.l.b16 %v49
  %v149 = vpack.c.b16 %v114, %v109
  %v150 = vpack.c.b16 %v115, %v110
  %v151 = vpack.c.b16 %v116, %v111
  %v152 = vpack.c.b16 %v117, %v112
  %v153 = vpack.c.b16 %v118, %v113
  %v154 = vpack.c.b16 %v124, %v119
  %v155 = vpack.c.b16 %v125, %v120
  %v156 = vpack.c.b16 %v126, %v121
  %v157 = vpack.c.b16 %v127, %v122
  %v158 = vpack.c.b16 %v128, %v123
  %v159 = vpack.c.b16 %v134, %v129
  %v160 = vpack.c.b16 %v135, %v130
  %v161 = vpack.c.b16 %v136, %v131
  %v162 = vpack.c.b16 %v137, %v132
  %v163 = vpack.c.b16 %v138, %v133
  %v164 = vpack.c.b16 %v144, %v139
  %v165 = vpack.c.b16 %v145, %v140
  %v166 = vpack.c.b16 %v146, %v141
  %v167 = vpack.c.b16 %v147, %v142
  %v168 = vpack.c.b16 %v148, %v143
  %vm189 = vcmask 523264
  %v191 = vsel %vm189, %v78, 0
  %v194 = vsel %vm189, %v79, 0
  %v197 = vsel %vm189, %v80, 0
  %v200 = vsel %vm189, %v81, 0
  %v203 = vsel %vm189, %v82, 0
  %v206 = vsel %vm189, %v83, 0
  %v209 = vsel %vm189, %v84, 0
  %211 = vmatprep.subr.bf16.mxu0 %v150
  %212 = vmatpush1.bf16.msra.mxu0 %v149
  %213 = vmatprep.subr.bf16.mxu0 %v155
  %214 = vmatpush1.bf16.msra.mxu0 %v154
  %215 = vmatprep.subr.bf16.mxu0 %v160
  %216 = vmatpush1.bf16.msra.mxu0 %v159
  %217 = vmatprep.subr.bf16.mxu0 %v165
  %218 = vmatpush1.bf16.msra.mxu0 %v164
  %219 = vmatprep.subr.bf16.mxu0 0
  %220 = vmatpush1.bf16.msra.mxu0 0
  %221 = vmatprep.subr.bf16.mxu0 0
  %222 = vmatpush1.bf16.msra.mxu0 0
  %223 = vmatprep.subr.bf16.mxu0 0
  %224 = vmatpush1.bf16.msra.mxu0 0
  %225 = vmatprep.subr.bf16.mxu0 0
  %226 = vmatpush1.bf16.msra.mxu0 0
  %227 = vmatprep.subr.bf16.mxu0 0
  %228 = vmatpush1.bf16.msra.mxu0 0
  %229 = vmatprep.subr.bf16.mxu0 0
  %230 = vmatpush1.bf16.msra.mxu0 0
  %231 = vmatprep.subr.bf16.mxu0 0
  %232 = vmatpush1.bf16.msra.mxu0 0
  %233 = vmatprep.subr.bf16.mxu0 0
  %234 = vmatpush1.bf16.msra.mxu0 0
  %235 = vmatprep.subr.bf16.mxu0 0
  %236 = vmatpush1.bf16.msra.mxu0 0
  %237 = vmatprep.subr.bf16.mxu0 0
  %238 = vmatpush1.bf16.msra.mxu0 0
  %239 = vmatprep.subr.bf16.mxu0 0
  %240 = vmatpush1.bf16.msra.mxu0 0
  %241 = vmatprep.subr.bf16.mxu0 0
  %242 = vmatpush1.bf16.msra.mxu0 0
  %243 = vmatprep.mubr.bf16.mxu0 0
  %244 = vmatmul.mubr.bf16.gmra.mrb[0].mxu0 %v191
  %v245 = vpop.f32.mrb[0].mxu0
  %v246 = vadd.f32 0.0, %v245
  %v247 = vpop.f32.mrb[0].mxu0
  %v248 = vadd.f32 0.0, %v247
  %v249 = vpop.f32.mrb[0].mxu0
  %v250 = vadd.f32 0.0, %v249
  %v251 = vpop.f32.mrb[0].mxu0
  %v252 = vadd.f32 0.0, %v251
  %253 = vmatprep.mubr.bf16.mxu0 0
  %254 = vmatmul.mubr.bf16.gmra.mrb[0].mxu0 %v194
  %v255 = vpop.f32.mrb[0].mxu0
  %v256 = vadd.f32 0.0, %v255
  %v257 = vpop.f32.mrb[0].mxu0
  %v258 = vadd.f32 0.0, %v257
  %v259 = vpop.f32.mrb[0].mxu0
  %v260 = vadd.f32 0.0, %v259
  %v261 = vpop.f32.mrb[0].mxu0
  %v262 = vadd.f32 0.0, %v261
  %263 = vmatprep.mubr.bf16.mxu0 0
  %264 = vmatmul.mubr.bf16.gmra.mrb[0].mxu0 %v197
  %v265 = vpop.f32.mrb[0].mxu0
  %v266 = vadd.f32 0.0, %v265
  %v267 = vpop.f32.mrb[0].mxu0
  %v268 = vadd.f32 0.0, %v267
  %v269 = vpop.f32.mrb[0].mxu0
  %v270 = vadd.f32 0.0, %v269
  %v271 = vpop.f32.mrb[0].mxu0
  %v272 = vadd.f32 0.0, %v271
  %273 = vmatprep.mubr.bf16.mxu0 0
  %274 = vmatmul.mubr.bf16.gmra.mrb[0].mxu0 %v200
  %v275 = vpop.f32.mrb[0].mxu0
  %v276 = vadd.f32 0.0, %v275
  %v277 = vpop.f32.mrb[0].mxu0
  %v278 = vadd.f32 0.0, %v277
  %v279 = vpop.f32.mrb[0].mxu0
  %v280 = vadd.f32 0.0, %v279
  %v281 = vpop.f32.mrb[0].mxu0
  %v282 = vadd.f32 0.0, %v281
  %283 = vmatprep.mubr.bf16.mxu0 0
  %284 = vmatmul.mubr.bf16.gmra.mrb[0].mxu0 %v203
  %v285 = vpop.f32.mrb[0].mxu0
  %v286 = vadd.f32 0.0, %v285
  %v287 = vpop.f32.mrb[0].mxu0
  %v288 = vadd.f32 0.0, %v287
  %v289 = vpop.f32.mrb[0].mxu0
  %v290 = vadd.f32 0.0, %v289
  %v291 = vpop.f32.mrb[0].mxu0
  %v292 = vadd.f32 0.0, %v291
  %293 = vmatprep.mubr.bf16.mxu0 0
  %294 = vmatmul.mubr.bf16.gmra.mrb[0].mxu0 %v206
  %v295 = vpop.f32.mrb[0].mxu0
  %v296 = vadd.f32 0.0, %v295
  %v297 = vpop.f32.mrb[0].mxu0
  %v298 = vadd.f32 0.0, %v297
  %v299 = vpop.f32.mrb[0].mxu0
  %v300 = vadd.f32 0.0, %v299
  %v301 = vpop.f32.mrb[0].mxu0
  %v302 = vadd.f32 0.0, %v301
  %303 = vmatprep.mubr.bf16.mxu0 0
  %304 = vmatmul.mubr.bf16.gmra.mrb[0].mxu0 %v209
  %v305 = vpop.f32.mrb[0].mxu0
  %v306 = vadd.f32 0.0, %v305
  %v307 = vpop.f32.mrb[0].mxu0
  %v308 = vadd.f32 0.0, %v307
  %v309 = vpop.f32.mrb[0].mxu0
  %v310 = vadd.f32 0.0, %v309
  %v311 = vpop.f32.mrb[0].mxu0
  %v312 = vadd.f32 0.0, %v311
  %313 = vdwg.mxu0
  %314 = vmatprep.subr.bf16.mxu0 %v152
  %315 = vmatpush1.bf16.msra.mxu0 %v151
  %316 = vmatprep.subr.bf16.mxu0 %v157
  %317 = vmatpush1.bf16.msra.mxu0 %v156
  %318 = vmatprep.subr.bf16.mxu0 %v162
  %319 = vmatpush1.bf16.msra.mxu0 %v161
  %320 = vmatprep.subr.bf16.mxu0 %v167
  %321 = vmatpush1.bf16.msra.mxu0 %v166
  %322 = vmatprep.subr.bf16.mxu0 0
  %323 = vmatpush1.bf16.msra.mxu0 0
  %324 = vmatprep.subr.bf16.mxu0 0
  %325 = vmatpush1.bf16.msra.mxu0 0
  %326 = vmatprep.subr.bf16.mxu0 0
  %327 = vmatpush1.bf16.msra.mxu0 0
  %328 = vmatprep.subr.bf16.mxu0 0
  %329 = vmatpush1.bf16.msra.mxu0 0
  %330 = vmatprep.subr.bf16.mxu0 0
  %331 = vmatpush1.bf16.msra.mxu0 0
  %332 = vmatprep.subr.bf16.mxu0 0
  %333 = vmatpush1.bf16.msra.mxu0 0
  %334 = vmatprep.subr.bf16.mxu0 0
  %335 = vmatpush1.bf16.msra.mxu0 0
  %336 = vmatprep.subr.bf16.mxu0 0
  %337 = vmatpush1.bf16.msra.mxu0 0
  %338 = vmatprep.subr.bf16.mxu0 0
  %339 = vmatpush1.bf16.msra.mxu0 0
  %340 = vmatprep.subr.bf16.mxu0 0
  %341 = vmatpush1.bf16.msra.mxu0 0
  %342 = vmatprep.subr.bf16.mxu0 0
  %343 = vmatpush1.bf16.msra.mxu0 0
  %344 = vmatprep.subr.bf16.mxu0 0
  %345 = vmatpush1.bf16.msra.mxu0 0
  %346 = vmatprep.mubr.bf16.mxu0 0
  %347 = vmatmul.mubr.bf16.gmra.mrb[0].mxu0 %v191
  %v348 = vpop.f32.mrb[0].mxu0
  %v349 = vadd.f32 0.0, %v348
  %v350 = vpop.f32.mrb[0].mxu0
  %v351 = vadd.f32 0.0, %v350
  %v352 = vpop.f32.mrb[0].mxu0
  %v353 = vadd.f32 0.0, %v352
  %v354 = vpop.f32.mrb[0].mxu0
  %v355 = vadd.f32 0.0, %v354
  %356 = vmatprep.mubr.bf16.mxu0 0
  %357 = vmatmul.mubr.bf16.gmra.mrb[0].mxu0 %v194
  %v358 = vpop.f32.mrb[0].mxu0
  %v359 = vadd.f32 0.0, %v358
  %v360 = vpop.f32.mrb[0].mxu0
  %v361 = vadd.f32 0.0, %v360
  %v362 = vpop.f32.mrb[0].mxu0
  %v363 = vadd.f32 0.0, %v362
  %v364 = vpop.f32.mrb[0].mxu0
  %v365 = vadd.f32 0.0, %v364
  %366 = vmatprep.mubr.bf16.mxu0 0
  %367 = vmatmul.mubr.bf16.gmra.mrb[0].mxu0 %v197
  %v368 = vpop.f32.mrb[0].mxu0
  %v369 = vadd.f32 0.0, %v368
  %v370 = vpop.f32.mrb[0].mxu0
  %v371 = vadd.f32 0.0, %v370
  %v372 = vpop.f32.mrb[0].mxu0
  %v373 = vadd.f32 0.0, %v372
  %v374 = vpop.f32.mrb[0].mxu0
  %v375 = vadd.f32 0.0, %v374
  %376 = vmatprep.mubr.bf16.mxu0 0
  %377 = vmatmul.mubr.bf16.gmra.mrb[0].mxu0 %v200
  %v378 = vpop.f32.mrb[0].mxu0
  %v379 = vadd.f32 0.0, %v378
  %v380 = vpop.f32.mrb[0].mxu0
  %v381 = vadd.f32 0.0, %v380
  %v382 = vpop.f32.mrb[0].mxu0
  %v383 = vadd.f32 0.0, %v382
  %v384 = vpop.f32.mrb[0].mxu0
  %v385 = vadd.f32 0.0, %v384
  %386 = vmatprep.mubr.bf16.mxu0 0
  %387 = vmatmul.mubr.bf16.gmra.mrb[0].mxu0 %v203
  %v388 = vpop.f32.mrb[0].mxu0
  %v389 = vadd.f32 0.0, %v388
  %v390 = vpop.f32.mrb[0].mxu0
  %v391 = vadd.f32 0.0, %v390
  %v392 = vpop.f32.mrb[0].mxu0
  %v393 = vadd.f32 0.0, %v392
  %v394 = vpop.f32.mrb[0].mxu0
  %v395 = vadd.f32 0.0, %v394
  %396 = vmatprep.mubr.bf16.mxu0 0
  %397 = vmatmul.mubr.bf16.gmra.mrb[0].mxu0 %v206
  %v398 = vpop.f32.mrb[0].mxu0
  %v399 = vadd.f32 0.0, %v398
  %v400 = vpop.f32.mrb[0].mxu0
  %v401 = vadd.f32 0.0, %v400
  %v402 = vpop.f32.mrb[0].mxu0
  %v403 = vadd.f32 0.0, %v402
  %v404 = vpop.f32.mrb[0].mxu0
  %v405 = vadd.f32 0.0, %v404
  %406 = vmatprep.mubr.bf16.mxu0 0
  %407 = vmatmul.mubr.bf16.gmra.mrb[0].mxu0 %v209
  %v408 = vpop.f32.mrb[0].mxu0
  %v409 = vadd.f32 0.0, %v408
  %v410 = vpop.f32.mrb[0].mxu0
  %v411 = vadd.f32 0.0, %v410
  %v412 = vpop.f32.mrb[0].mxu0
  %v413 = vadd.f32 0.0, %v412
  %v414 = vpop.f32.mrb[0].mxu0
  %v415 = vadd.f32 0.0, %v414
  %416 = vdwg.mxu0
  %417 = vmatprep.subr.bf16.mxu0 0
  %418 = vmatpush1.bf16.msra.mxu0 %v153
  %419 = vmatprep.subr.bf16.mxu0 0
  %420 = vmatpush1.bf16.msra.mxu0 %v158
  %421 = vmatprep.subr.bf16.mxu0 0
  %422 = vmatpush1.bf16.msra.mxu0 %v163
  %423 = vmatprep.subr.bf16.mxu0 0
  %424 = vmatpush1.bf16.msra.mxu0 %v168
  %425 = vmatprep.subr.bf16.mxu0 0
  %426 = vmatpush1.bf16.msra.mxu0 0
  %427 = vmatprep.subr.bf16.mxu0 0
  %428 = vmatpush1.bf16.msra.mxu0 0
  %429 = vmatprep.subr.bf16.mxu0 0
  %430 = vmatpush1.bf16.msra.mxu0 0
  %431 = vmatprep.subr.bf16.mxu0 0
  %432 = vmatpush1.bf16.msra.mxu0 0
  %433 = vmatprep.subr.bf16.mxu0 0
  %434 = vmatpush1.bf16.msra.mxu0 0
  %435 = vmatprep.subr.bf16.mxu0 0
  %436 = vmatpush1.bf16.msra.mxu0 0
  %437 = vmatprep.subr.bf16.mxu0 0
  %438 = vmatpush1.bf16.msra.mxu0 0
  %439 = vmatprep.subr.bf16.mxu0 0
  %440 = vmatpush1.bf16.msra.mxu0 0
  %441 = vmatprep.subr.bf16.mxu0 0
  %442 = vmatpush1.bf16.msra.mxu0 0
  %443 = vmatprep.subr.bf16.mxu0 0
  %444 = vmatpush1.bf16.msra.mxu0 0
  %445 = vmatprep.subr.bf16.mxu0 0
  %446 = vmatpush1.bf16.msra.mxu0 0
  %447 = vmatprep.subr.bf16.mxu0 0
  %448 = vmatpush1.bf16.msra.mxu0 0
  %449 = vmatprep.mubr.bf16.mxu0 0
  %450 = vmatmul.mubr.bf16.gmra.mrb[0].mxu0 %v191
  %v451 = vpop.f32.mrb[0].mxu0
  %v452 = vadd.f32 0.0, %v451
  %v453 = vpop.f32.mrb[0].mxu0
  %v454 = vpop.f32.mrb[0].mxu0
  %v455 = vadd.f32 0.0, %v454
  %v456 = vpop.f32.mrb[0].mxu0
  %457 = vmatprep.mubr.bf16.mxu0 0
  %458 = vmatmul.mubr.bf16.gmra.mrb[0].mxu0 %v194
  %v459 = vpop.f32.mrb[0].mxu0
  %v460 = vadd.f32 0.0, %v459
  %v461 = vpop.f32.mrb[0].mxu0
  %v462 = vpop.f32.mrb[0].mxu0
  %v463 = vadd.f32 0.0, %v462
  %v464 = vpop.f32.mrb[0].mxu0
  %465 = vmatprep.mubr.bf16.mxu0 0
  %466 = vmatmul.mubr.bf16.gmra.mrb[0].mxu0 %v197
  %v467 = vpop.f32.mrb[0].mxu0
  %v468 = vadd.f32 0.0, %v467
  %v469 = vpop.f32.mrb[0].mxu0
  %v470 = vpop.f32.mrb[0].mxu0
  %v471 = vadd.f32 0.0, %v470
  %v472 = vpop.f32.mrb[0].mxu0
  %473 = vmatprep.mubr.bf16.mxu0 0
  %474 = vmatmul.mubr.bf16.gmra.mrb[0].mxu0 %v200
  %v475 = vpop.f32.mrb[0].mxu0
  %v476 = vadd.f32 0.0, %v475
  %v477 = vpop.f32.mrb[0].mxu0
  %v478 = vpop.f32.mrb[0].mxu0
  %v479 = vadd.f32 0.0, %v478
  %v480 = vpop.f32.mrb[0].mxu0
  %481 = vmatprep.mubr.bf16.mxu0 0
  %482 = vmatmul.mubr.bf16.gmra.mrb[0].mxu0 %v203
  %v483 = vpop.f32.mrb[0].mxu0
  %v484 = vadd.f32 0.0, %v483
  %v485 = vpop.f32.mrb[0].mxu0
  %v486 = vpop.f32.mrb[0].mxu0
  %v487 = vadd.f32 0.0, %v486
  %v488 = vpop.f32.mrb[0].mxu0
  %489 = vmatprep.mubr.bf16.mxu0 0
  %490 = vmatmul.mubr.bf16.gmra.mrb[0].mxu0 %v206
  %v491 = vpop.f32.mrb[0].mxu0
  %v492 = vadd.f32 0.0, %v491
  %v493 = vpop.f32.mrb[0].mxu0
  %v494 = vpop.f32.mrb[0].mxu0
  %v495 = vadd.f32 0.0, %v494
  %v496 = vpop.f32.mrb[0].mxu0
  %497 = vmatprep.mubr.bf16.mxu0 0
  %498 = vmatmul.mubr.bf16.gmra.mrb[0].mxu0 %v209
  %v499 = vpop.f32.mrb[0].mxu0
  %v500 = vadd.f32 0.0, %v499
  %v501 = vpop.f32.mrb[0].mxu0
  %v502 = vpop.f32.mrb[0].mxu0
  %v503 = vadd.f32 0.0, %v502
  %v504 = vpop.f32.mrb[0].mxu0
  %505 = vdwg.mxu0
  %506 = vst [vmem:[%s2] sm:$0xff] %v246
  %507 = vst [vmem:[%s2 + $0x8] sm:$0xff] %v248
  %508 = vst [vmem:[%s2 + $0x10] sm:$0xff] %v349
  %509 = vst [vmem:[%s2 + $0x18] sm:$0xff] %v351
  %510 = vst [vmem:[%s2 + $0x20] sm:$0xff] %v452
  %511 = vst [vmem:[%s2 + $0x28] sm:$0xff] %v250
  %512 = vst [vmem:[%s2 + $0x30] sm:$0xff] %v252
  %513 = vst [vmem:[%s2 + $0x38] sm:$0xff] %v353
  %514 = vst [vmem:[%s2 + $0x40] sm:$0xff] %v355
  %515 = vst [vmem:[%s2 + $0x48] sm:$0xff] %v455
  %516 = vst [vmem:[%s2 + $0x50] sm:$0xff] %v256
  %517 = vst [vmem:[%s2 + $0x58] sm:$0xff] %v258
  %518 = vst [vmem:[%s2 + $0x60] sm:$0xff] %v359
  %519 = vst [vmem:[%s2 + $0x68] sm:$0xff] %v361
  %520 = vst [vmem:[%s2 + $0x70] sm:$0xff] %v460
  %521 = vst [vmem:[%s2 + $0x78] sm:$0xff] %v260
  %522 = vst [vmem:[%s2 + $0x80] sm:$0xff] %v262
  %523 = vst [vmem:[%s2 + $0x88] sm:$0xff] %v363
  %524 = vst [vmem:[%s2 + $0x90] sm:$0xff] %v365
  %525 = vst [vmem:[%s2 + $0x98] sm:$0xff] %v463
  %526 = vst [vmem:[%s2 + $0xa0] sm:$0xff] %v266
  %527 = vst [vmem:[%s2 + $0xa8] sm:$0xff] %v268
  %528 = vst [vmem:[%s2 + $0xb0] sm:$0xff] %v369
  %529 = vst [vmem:[%s2 + $0xb8] sm:$0xff] %v371
  %530 = vst [vmem:[%s2 + $0xc0] sm:$0xff] %v468
  %531 = vst [vmem:[%s2 + $0xc8] sm:$0xff] %v270
  %532 = vst [vmem:[%s2 + $0xd0] sm:$0xff] %v272
  %533 = vst [vmem:[%s2 + $0xd8] sm:$0xff] %v373
  %534 = vst [vmem:[%s2 + $0xe0] sm:$0xff] %v375
  %535 = vst [vmem:[%s2 + $0xe8] sm:$0xff] %v471
  %536 = vst [vmem:[%s2 + $0xf0] sm:$0xff] %v276
  %537 = vst [vmem:[%s2 + $0xf8] sm:$0xff] %v278
  %538 = vst [vmem:[%s2 + $0x100] sm:$0xff] %v379
  %539 = vst [vmem:[%s2 + $0x108] sm:$0xff] %v381
  %540 = vst [vmem:[%s2 + $0x110] sm:$0xff] %v476
  %541 = vst [vmem:[%s2 + $0x118] sm:$0xff] %v280
  %542 = vst [vmem:[%s2 + $0x120] sm:$0xff] %v282
  %543 = vst [vmem:[%s2 + $0x128] sm:$0xff] %v383
  %544 = vst [vmem:[%s2 + $0x130] sm:$0xff] %v385
  %545 = vst [vmem:[%s2 + $0x138] sm:$0xff] %v479
  %546 = vst [vmem:[%s2 + $0x140] sm:$0xff] %v286
  %547 = vst [vmem:[%s2 + $0x148] sm:$0xff] %v288
  %548 = vst [vmem:[%s2 + $0x150] sm:$0xff] %v389
  %549 = vst [vmem:[%s2 + $0x158] sm:$0xff] %v391
  %550 = vst [vmem:[%s2 + $0x160] sm:$0xff] %v484
  %551 = vst [vmem:[%s2 + $0x168] sm:$0xff] %v290
  %552 = vst [vmem:[%s2 + $0x170] sm:$0xff] %v292
  %553 = vst [vmem:[%s2 + $0x178] sm:$0xff] %v393
  %554 = vst [vmem:[%s2 + $0x180] sm:$0xff] %v395
  %555 = vst [vmem:[%s2 + $0x188] sm:$0xff] %v487
  %556 = vst [vmem:[%s2 + $0x190] sm:$0xff] %v296
  %557 = vst [vmem:[%s2 + $0x198] sm:$0xff] %v298
  %558 = vst [vmem:[%s2 + $0x1a0] sm:$0xff] %v399
  %559 = vst [vmem:[%s2 + $0x1a8] sm:$0xff] %v401
  %560 = vst [vmem:[%s2 + $0x1b0] sm:$0xff] %v492
  %561 = vst [vmem:[%s2 + $0x1b8] sm:$0xff] %v300
  %562 = vst [vmem:[%s2 + $0x1c0] sm:$0xff] %v302
  %563 = vst [vmem:[%s2 + $0x1c8] sm:$0xff] %v403
  %564 = vst [vmem:[%s2 + $0x1d0] sm:$0xff] %v405
  %565 = vst [vmem:[%s2 + $0x1d8] sm:$0xff] %v495
  %566 = vst [vmem:[%s2 + $0x1e0] sm:$0xff] %v306
  %567 = vst [vmem:[%s2 + $0x1e8] sm:$0xff] %v308
  %568 = vst [vmem:[%s2 + $0x1f0] sm:$0xff] %v409
  %569 = vst [vmem:[%s2 + $0x1f8] sm:$0xff] %v411
  %570 = vst [vmem:[%s2 + $0x200] sm:$0xff] %v500
  %571 = vst [vmem:[%s2 + $0x208] sm:$0xff] %v310
  %572 = vst [vmem:[%s2 + $0x210] sm:$0xff] %v312
  %573 = vst [vmem:[%s2 + $0x218] sm:$0xff] %v413
  %574 = vst [vmem:[%s2 + $0x220] sm:$0xff] %v415
  %575 = vst [vmem:[%s2 + $0x228] sm:$0xff] %v503
  // Predicated region
  $region10: #{decoder_forward.5} parent=0 // pred_check
    _
  $region11: #{decoder_forward.5} parent=0 // pred_check_branch
    %577 = sbr.rel (0) target = $region13
  $region12: #{decoder_forward.5} parent=0 // pred_region
    _
  $region13: #{decoder_forward.5} parent=0 // pred_fallthru
    _
  // Predicated region
  $region14: #{decoder_forward.5} parent=0 // pred_check
    _
  $region15: #{decoder_forward.5} parent=0 // pred_check_branch
    %579 = sbr.rel (0) target = $region17
  $region16: #{decoder_forward.5} parent=0 // pred_region
    _
  $region17: #{decoder_forward.5} parent=0 // pred_fallthru
    _

// kernel: decoder_forward.6
$region0: #{decoder_forward.6}
  #allocation0 [shape = 'u32[]', space=smem, size = 0x4, offset = 0x4, fixed_abs, tag = 'smem constant byte address 0x4 - core index']
  #allocation1 [shape = 'u32[144,128]{1,0:T(1,128)}', space=vmem, size = 0x12000, scoped, tag = 'internal scratch']
  %s0 = inlined_call_operand.vmem [shape: bf16[176,64], index: 0, kind: input, shape index: {}]
  %s1 = inlined_call_operand.vmem [shape: bf16[64,512], index: 1, kind: input, shape index: {}]
  %s2 = inlined_call_operand.vmem [shape: f32[176,512], index: 2, kind: output, shape index: {}]
  %s3 = sld [smem:[#allocation0]]
  $region18: #{decoder_forward.6} parent=0
    _
  %s5 = ssub.s32 1, %s3
  %s6 = scalar_select 0, %s5, %s3
  // Predicated region
  $region2: #{decoder_forward.6} parent=0 // pred_check
    _
  $region3: #{decoder_forward.6} parent=0 // pred_check_branch
    %8 = sbr.rel (0) target = $region5
  $region4: #{decoder_forward.6} parent=0 // pred_region
    _
  $region5: #{decoder_forward.6} parent=0 // pred_fallthru
    _
  // Predicated region
  $region6: #{decoder_forward.6} parent=0 // pred_check
    _
  $region7: #{decoder_forward.6} parent=0 // pred_check_branch
    %10 = sbr.rel (0) target = $region9
  $region8: #{decoder_forward.6} parent=0 // pred_region
    _
  $region9: #{decoder_forward.6} parent=0 // pred_fallthru
    _
  %v12 = vld [vmem:[%s0] sm:$0xf]
  %v13 = vld [vmem:[%s0 + $0x4] sm:$0xf]
  %v14 = vld [vmem:[%s0 + $0x8] sm:$0xf]
  %v15 = vld [vmem:[%s0 + $0xc] sm:$0xf]
  %v16 = vld [vmem:[%s0 + $0x10] sm:$0xf]
  %v17 = vld [vmem:[%s0 + $0x14] sm:$0xf]
  %v18 = vld [vmem:[%s0 + $0x18] sm:$0xf]
  %v19 = vld [vmem:[%s0 + $0x1c] sm:$0xf]
  %v20 = vld [vmem:[%s0 + $0x20] sm:$0xf]
  %v21 = vld [vmem:[%s0 + $0x24] sm:$0xf]
  %v22 = vld [vmem:[%s0 + $0x28] sm:$0xf]
  %v23 = vld [vmem:[%s0 + $0x2c] sm:$0xf]
  %v24 = vld [vmem:[%s0 + $0x30] sm:$0xf]
  %v25 = vld [vmem:[%s0 + $0x34] sm:$0xf]
  %v26 = vld [vmem:[%s0 + $0x38] sm:$0xf]
  %v27 = vld [vmem:[%s0 + $0x3c] sm:$0xf]
  %v28 = vld [vmem:[%s0 + $0x40] sm:$0xf]
  %v29 = vld [vmem:[%s0 + $0x44] sm:$0xf]
  %v30 = vld [vmem:[%s0 + $0x48] sm:$0xf]
  %v31 = vld [vmem:[%s0 + $0x4c] sm:$0xf]
  %v32 = vld [vmem:[%s0 + $0x50] sm:$0xf]
  %v33 = vld [vmem:[%s0 + $0x54] sm:$0xf]
  %v34 = vld [vmem:[%s1] sm:$0xff]
  %v35 = vld [vmem:[%s1 + $0x8] sm:$0xff]
  %v36 = vld [vmem:[%s1 + $0x10] sm:$0xff]
  %v37 = vld [vmem:[%s1 + $0x18] sm:$0xff]
  %v38 = vld [vmem:[%s1 + $0x20] sm:$0xff]
  %v39 = vld [vmem:[%s1 + $0x28] sm:$0xff]
  %v40 = vld [vmem:[%s1 + $0x30] sm:$0xff]
  %v41 = vld [vmem:[%s1 + $0x38] sm:$0xff]
  %v42 = vld [vmem:[%s1 + $0x40] sm:$0xff]
  %v43 = vld [vmem:[%s1 + $0x48] sm:$0xff]
  %v44 = vld [vmem:[%s1 + $0x50] sm:$0xff]
  %v45 = vld [vmem:[%s1 + $0x58] sm:$0xff]
  %v46 = vld [vmem:[%s1 + $0x60] sm:$0xff]
  %v47 = vld [vmem:[%s1 + $0x68] sm:$0xff]
  %v48 = vld [vmem:[%s1 + $0x70] sm:$0xff]
  %v49 = vld [vmem:[%s1 + $0x78] sm:$0xff]
  %v72 = vunpack.c.l.b16 %v12
  %v73 = vunpack.c.l.b16 %v13
  %v74 = vunpack.c.l.b16 %v14
  %v75 = vunpack.c.l.b16 %v15
  %v76 = vunpack.c.l.b16 %v16
  %v77 = vunpack.c.l.b16 %v17
  %v78 = vunpack.c.l.b16 %v18
  %v79 = vunpack.c.l.b16 %v19
  %v80 = vunpack.c.l.b16 %v20
  %v81 = vunpack.c.l.b16 %v21
  %v82 = vunpack.c.l.b16 %v22
  %v83 = vunpack.c.l.b16 %v23
  %v84 = vunpack.c.l.b16 %v24
  %v85 = vunpack.c.l.b16 %v25
  %v86 = vunpack.c.l.b16 %v26
  %v87 = vunpack.c.l.b16 %v27
  %v88 = vunpack.c.l.b16 %v28
  %v89 = vunpack.c.l.b16 %v29
  %v90 = vunpack.c.l.b16 %v30
  %v91 = vunpack.c.l.b16 %v31
  %v92 = vunpack.c.l.b16 %v32
  %v93 = vunpack.c.l.b16 %v33
  %v94 = vpack.c.b16 %v73, %v72
  %v95 = vpack.c.b16 %v75, %v74
  %v96 = vpack.c.b16 %v77, %v76
  %v97 = vpack.c.b16 %v79, %v78
  %v98 = vpack.c.b16 %v81, %v80
  %v99 = vpack.c.b16 %v83, %v82
  %v100 = vpack.c.b16 %v85, %v84
  %v101 = vpack.c.b16 %v87, %v86
  %v102 = vpack.c.b16 %v89, %v88
  %v103 = vpack.c.b16 %v91, %v90
  %v104 = vpack.c.b16 %v93, %v92
  %v121 = vunpack.c.l.b16 %v34
  %v122 = vunpack.c.h.b16 %v34
  %v123 = vunpack.c.l.b16 %v35
  %v124 = vunpack.c.h.b16 %v35
  %v125 = vunpack.c.l.b16 %v36
  %v126 = vunpack.c.h.b16 %v36
  %v127 = vunpack.c.l.b16 %v37
  %v128 = vunpack.c.h.b16 %v37
  %v129 = vunpack.c.l.b16 %v38
  %v130 = vunpack.c.h.b16 %v38
  %v131 = vunpack.c.l.b16 %v39
  %v132 = vunpack.c.h.b16 %v39
  %v133 = vunpack.c.l.b16 %v40
  %v134 = vunpack.c.h.b16 %v40
  %v135 = vunpack.c.l.b16 %v41
  %v136 = vunpack.c.h.b16 %v41
  %v137 = vunpack.c.l.b16 %v42
  %v138 = vunpack.c.h.b16 %v42
  %v139 = vunpack.c.l.b16 %v43
  %v140 = vunpack.c.h.b16 %v43
  %v141 = vunpack.c.l.b16 %v44
  %v142 = vunpack.c.h.b16 %v44
  %v143 = vunpack.c.l.b16 %v45
  %v144 = vunpack.c.h.b16 %v45
  %v145 = vunpack.c.l.b16 %v46
  %v146 = vunpack.c.h.b16 %v46
  %v147 = vunpack.c.l.b16 %v47
  %v148 = vunpack.c.h.b16 %v47
  %v149 = vunpack.c.l.b16 %v48
  %v150 = vunpack.c.h.b16 %v48
  %v151 = vunpack.c.l.b16 %v49
  %v152 = vunpack.c.h.b16 %v49
  %v153 = vpack.c.b16 %v125, %v121
  %v154 = vpack.c.b16 %v126, %v122
  %v155 = vpack.c.b16 %v127, %v123
  %v156 = vpack.c.b16 %v128, %v124
  %v157 = vpack.c.b16 %v133, %v129
  %v158 = vpack.c.b16 %v134, %v130
  %v159 = vpack.c.b16 %v135, %v131
  %v160 = vpack.c.b16 %v136, %v132
  %v161 = vpack.c.b16 %v141, %v137
  %v162 = vpack.c.b16 %v142, %v138
  %v163 = vpack.c.b16 %v143, %v139
  %v164 = vpack.c.b16 %v144, %v140
  %v165 = vpack.c.b16 %v149, %v145
  %v166 = vpack.c.b16 %v150, %v146
  %v167 = vpack.c.b16 %v151, %v147
  %v168 = vpack.c.b16 %v152, %v148
  %vm185 = vcmask 523264
  %v187 = vsel %vm185, %v94, 0
  %v190 = vsel %vm185, %v95, 0
  %v193 = vsel %vm185, %v96, 0
  %v196 = vsel %vm185, %v97, 0
  %v199 = vsel %vm185, %v98, 0
  %v202 = vsel %vm185, %v99, 0
  %v205 = vsel %vm185, %v100, 0
  %v208 = vsel %vm185, %v101, 0
  %v211 = vsel %vm185, %v102, 0
  %v214 = vsel %vm185, %v103, 0
  %v217 = vsel %vm185, %v104, 0
  %219 = vmatprep.subr.bf16.mxu0 %v154
  %220 = vmatpush1.bf16.msra.mxu0 %v153
  %221 = vmatprep.subr.bf16.mxu0 %v158
  %222 = vmatpush1.bf16.msra.mxu0 %v157
  %223 = vmatprep.subr.bf16.mxu0 %v162
  %224 = vmatpush1.bf16.msra.mxu0 %v161
  %225 = vmatprep.subr.bf16.mxu0 %v166
  %226 = vmatpush1.bf16.msra.mxu0 %v165
  %227 = vmatprep.subr.bf16.mxu0 0
  %228 = vmatpush1.bf16.msra.mxu0 0
  %229 = vmatprep.subr.bf16.mxu0 0
  %230 = vmatpush1.bf16.msra.mxu0 0
  %231 = vmatprep.subr.bf16.mxu0 0
  %232 = vmatpush1.bf16.msra.mxu0 0
  %233 = vmatprep.subr.bf16.mxu0 0
  %234 = vmatpush1.bf16.msra.mxu0 0
  %235 = vmatprep.subr.bf16.mxu0 0
  %236 = vmatpush1.bf16.msra.mxu0 0
  %237 = vmatprep.subr.bf16.mxu0 0
  %238 = vmatpush1.bf16.msra.mxu0 0
  %239 = vmatprep.subr.bf16.mxu0 0
  %240 = vmatpush1.bf16.msra.mxu0 0
  %241 = vmatprep.subr.bf16.mxu0 0
  %242 = vmatpush1.bf16.msra.mxu0 0
  %243 = vmatprep.subr.bf16.mxu0 0
  %244 = vmatpush1.bf16.msra.mxu0 0
  %245 = vmatprep.subr.bf16.mxu0 0
  %246 = vmatpush1.bf16.msra.mxu0 0
  %247 = vmatprep.subr.bf16.mxu0 0
  %248 = vmatpush1.bf16.msra.mxu0 0
  %249 = vmatprep.subr.bf16.mxu0 0
  %250 = vmatpush1.bf16.msra.mxu0 0
  %251 = vmatprep.mubr.bf16.mxu0 0
  %252 = vmatmul.mubr.bf16.gmra.mrb[0].mxu0 %v187
  %v253 = vpop.f32.mrb[0].mxu0
  %v254 = vadd.f32 0.0, %v253
  %v255 = vpop.f32.mrb[0].mxu0
  %v256 = vadd.f32 0.0, %v255
  %v257 = vpop.f32.mrb[0].mxu0
  %v258 = vadd.f32 0.0, %v257
  %v259 = vpop.f32.mrb[0].mxu0
  %v260 = vadd.f32 0.0, %v259
  %261 = vmatprep.mubr.bf16.mxu0 0
  %262 = vmatmul.mubr.bf16.gmra.mrb[0].mxu0 %v190
  %v263 = vpop.f32.mrb[0].mxu0
  %v264 = vadd.f32 0.0, %v263
  %v265 = vpop.f32.mrb[0].mxu0
  %v266 = vadd.f32 0.0, %v265
  %v267 = vpop.f32.mrb[0].mxu0
  %v268 = vadd.f32 0.0, %v267
  %v269 = vpop.f32.mrb[0].mxu0
  %v270 = vadd.f32 0.0, %v269
  %271 = vmatprep.mubr.bf16.mxu0 0
  %272 = vmatmul.mubr.bf16.gmra.mrb[0].mxu0 %v193
  %v273 = vpop.f32.mrb[0].mxu0
  %v274 = vadd.f32 0.0, %v273
  %v275 = vpop.f32.mrb[0].mxu0
  %v276 = vadd.f32 0.0, %v275
  %v277 = vpop.f32.mrb[0].mxu0
  %v278 = vadd.f32 0.0, %v277
  %v279 = vpop.f32.mrb[0].mxu0
  %v280 = vadd.f32 0.0, %v279
  %281 = vmatprep.mubr.bf16.mxu0 0
  %282 = vmatmul.mubr.bf16.gmra.mrb[0].mxu0 %v196
  %v283 = vpop.f32.mrb[0].mxu0
  %v284 = vadd.f32 0.0, %v283
  %v285 = vpop.f32.mrb[0].mxu0
  %v286 = vadd.f32 0.0, %v285
  %v287 = vpop.f32.mrb[0].mxu0
  %v288 = vadd.f32 0.0, %v287
  %v289 = vpop.f32.mrb[0].mxu0
  %v290 = vadd.f32 0.0, %v289
  %291 = vmatprep.mubr.bf16.mxu0 0
  %292 = vmatmul.mubr.bf16.gmra.mrb[0].mxu0 %v199
  %v293 = vpop.f32.mrb[0].mxu0
  %v294 = vadd.f32 0.0, %v293
  %v295 = vpop.f32.mrb[0].mxu0
  %v296 = vadd.f32 0.0, %v295
  %v297 = vpop.f32.mrb[0].mxu0
  %v298 = vadd.f32 0.0, %v297
  %v299 = vpop.f32.mrb[0].mxu0
  %v300 = vadd.f32 0.0, %v299
  %301 = vmatprep.mubr.bf16.mxu0 0
  %302 = vmatmul.mubr.bf16.gmra.mrb[0].mxu0 %v202
  %v303 = vpop.f32.mrb[0].mxu0
  %v304 = vadd.f32 0.0, %v303
  %v305 = vpop.f32.mrb[0].mxu0
  %v306 = vadd.f32 0.0, %v305
  %v307 = vpop.f32.mrb[0].mxu0
  %v308 = vadd.f32 0.0, %v307
  %v309 = vpop.f32.mrb[0].mxu0
  %v310 = vadd.f32 0.0, %v309
  %311 = vmatprep.mubr.bf16.mxu0 0
  %312 = vmatmul.mubr.bf16.gmra.mrb[0].mxu0 %v205
  %v313 = vpop.f32.mrb[0].mxu0
  %v314 = vadd.f32 0.0, %v313
  %v315 = vpop.f32.mrb[0].mxu0
  %v316 = vadd.f32 0.0, %v315
  %v317 = vpop.f32.mrb[0].mxu0
  %v318 = vadd.f32 0.0, %v317
  %v319 = vpop.f32.mrb[0].mxu0
  %v320 = vadd.f32 0.0, %v319
  %321 = vmatprep.mubr.bf16.mxu0 0
  %322 = vmatmul.mubr.bf16.gmra.mrb[0].mxu0 %v208
  %v323 = vpop.f32.mrb[0].mxu0
  %v324 = vadd.f32 0.0, %v323
  %v325 = vpop.f32.mrb[0].mxu0
  %v326 = vadd.f32 0.0, %v325
  %v327 = vpop.f32.mrb[0].mxu0
  %v328 = vadd.f32 0.0, %v327
  %v329 = vpop.f32.mrb[0].mxu0
  %v330 = vadd.f32 0.0, %v329
  %331 = vmatprep.mubr.bf16.mxu0 0
  %332 = vmatmul.mubr.bf16.gmra.mrb[0].mxu0 %v211
  %v333 = vpop.f32.mrb[0].mxu0
  %v334 = vadd.f32 0.0, %v333
  %v335 = vpop.f32.mrb[0].mxu0
  %v336 = vadd.f32 0.0, %v335
  %v337 = vpop.f32.mrb[0].mxu0
  %v338 = vadd.f32 0.0, %v337
  %v339 = vpop.f32.mrb[0].mxu0
  %v340 = vadd.f32 0.0, %v339
  %341 = vmatprep.mubr.bf16.mxu0 0
  %342 = vmatmul.mubr.bf16.gmra.mrb[0].mxu0 %v214
  %v343 = vpop.f32.mrb[0].mxu0
  %v344 = vadd.f32 0.0, %v343
  %v345 = vpop.f32.mrb[0].mxu0
  %v346 = vadd.f32 0.0, %v345
  %v347 = vpop.f32.mrb[0].mxu0
  %v348 = vadd.f32 0.0, %v347
  %v349 = vpop.f32.mrb[0].mxu0
  %v350 = vadd.f32 0.0, %v349
  %351 = vmatprep.mubr.bf16.mxu0 0
  %352 = vmatmul.mubr.bf16.gmra.mrb[0].mxu0 %v217
  %v353 = vpop.f32.mrb[0].mxu0
  %v354 = vadd.f32 0.0, %v353
  %v355 = vpop.f32.mrb[0].mxu0
  %v356 = vadd.f32 0.0, %v355
  %v357 = vpop.f32.mrb[0].mxu0
  %v358 = vadd.f32 0.0, %v357
  %v359 = vpop.f32.mrb[0].mxu0
  %v360 = vadd.f32 0.0, %v359
  %361 = vdwg.mxu0
  %362 = vmatprep.subr.bf16.mxu0 %v156
  %363 = vmatpush1.bf16.msra.mxu0 %v155
  %364 = vmatprep.subr.bf16.mxu0 %v160
  %365 = vmatpush1.bf16.msra.mxu0 %v159
  %366 = vmatprep.subr.bf16.mxu0 %v164
  %367 = vmatpush1.bf16.msra.mxu0 %v163
  %368 = vmatprep.subr.bf16.mxu0 %v168
  %369 = vmatpush1.bf16.msra.mxu0 %v167
  %370 = vmatprep.subr.bf16.mxu0 0
  %371 = vmatpush1.bf16.msra.mxu0 0
  %372 = vmatprep.subr.bf16.mxu0 0
  %373 = vmatpush1.bf16.msra.mxu0 0
  %374 = vmatprep.subr.bf16.mxu0 0
  %375 = vmatpush1.bf16.msra.mxu0 0
  %376 = vmatprep.subr.bf16.mxu0 0
  %377 = vmatpush1.bf16.msra.mxu0 0
  %378 = vmatprep.subr.bf16.mxu0 0
  %379 = vmatpush1.bf16.msra.mxu0 0
  %380 = vmatprep.subr.bf16.mxu0 0
  %381 = vmatpush1.bf16.msra.mxu0 0
  %382 = vmatprep.subr.bf16.mxu0 0
  %383 = vmatpush1.bf16.msra.mxu0 0
  %384 = vmatprep.subr.bf16.mxu0 0
  %385 = vmatpush1.bf16.msra.mxu0 0
  %386 = vmatprep.subr.bf16.mxu0 0
  %387 = vmatpush1.bf16.msra.mxu0 0
  %388 = vmatprep.subr.bf16.mxu0 0
  %389 = vmatpush1.bf16.msra.mxu0 0
  %390 = vmatprep.subr.bf16.mxu0 0
  %391 = vmatpush1.bf16.msra.mxu0 0
  %392 = vmatprep.subr.bf16.mxu0 0
  %393 = vmatpush1.bf16.msra.mxu0 0
  %394 = vmatprep.mubr.bf16.mxu0 0
  %395 = vmatmul.mubr.bf16.gmra.mrb[0].mxu0 %v187
  %v396 = vpop.f32.mrb[0].mxu0
  %v397 = vadd.f32 0.0, %v396
  %v398 = vpop.f32.mrb[0].mxu0
  %v399 = vadd.f32 0.0, %v398
  %v400 = vpop.f32.mrb[0].mxu0
  %v401 = vadd.f32 0.0, %v400
  %v402 = vpop.f32.mrb[0].mxu0
  %v403 = vadd.f32 0.0, %v402
  %404 = vmatprep.mubr.bf16.mxu0 0
  %405 = vmatmul.mubr.bf16.gmra.mrb[0].mxu0 %v190
  %v406 = vpop.f32.mrb[0].mxu0
  %v407 = vadd.f32 0.0, %v406
  %v408 = vpop.f32.mrb[0].mxu0
  %v409 = vadd.f32 0.0, %v408
  %v410 = vpop.f32.mrb[0].mxu0
  %v411 = vadd.f32 0.0, %v410
  %v412 = vpop.f32.mrb[0].mxu0
  %v413 = vadd.f32 0.0, %v412
  %414 = vmatprep.mubr.bf16.mxu0 0
  %415 = vmatmul.mubr.bf16.gmra.mrb[0].mxu0 %v193
  %v416 = vpop.f32.mrb[0].mxu0
  %v417 = vadd.f32 0.0, %v416
  %v418 = vpop.f32.mrb[0].mxu0
  %v419 = vadd.f32 0.0, %v418
  %v420 = vpop.f32.mrb[0].mxu0
  %v421 = vadd.f32 0.0, %v420
  %v422 = vpop.f32.mrb[0].mxu0
  %v423 = vadd.f32 0.0, %v422
  %424 = vmatprep.mubr.bf16.mxu0 0
  %425 = vmatmul.mubr.bf16.gmra.mrb[0].mxu0 %v196
  %v426 = vpop.f32.mrb[0].mxu0
  %v427 = vadd.f32 0.0, %v426
  %v428 = vpop.f32.mrb[0].mxu0
  %v429 = vadd.f32 0.0, %v428
  %v430 = vpop.f32.mrb[0].mxu0
  %v431 = vadd.f32 0.0, %v430
  %v432 = vpop.f32.mrb[0].mxu0
  %v433 = vadd.f32 0.0, %v432
  %434 = vmatprep.mubr.bf16.mxu0 0
  %435 = vmatmul.mubr.bf16.gmra.mrb[0].mxu0 %v199
  %v436 = vpop.f32.mrb[0].mxu0
  %v437 = vadd.f32 0.0, %v436
  %v438 = vpop.f32.mrb[0].mxu0
  %v439 = vadd.f32 0.0, %v438
  %v440 = vpop.f32.mrb[0].mxu0
  %v441 = vadd.f32 0.0, %v440
  %v442 = vpop.f32.mrb[0].mxu0
  %v443 = vadd.f32 0.0, %v442
  %444 = vmatprep.mubr.bf16.mxu0 0
  %445 = vmatmul.mubr.bf16.gmra.mrb[0].mxu0 %v202
  %v446 = vpop.f32.mrb[0].mxu0
  %v447 = vadd.f32 0.0, %v446
  %v448 = vpop.f32.mrb[0].mxu0
  %v449 = vadd.f32 0.0, %v448
  %v450 = vpop.f32.mrb[0].mxu0
  %v451 = vadd.f32 0.0, %v450
  %v452 = vpop.f32.mrb[0].mxu0
  %v453 = vadd.f32 0.0, %v452
  %454 = vmatprep.mubr.bf16.mxu0 0
  %455 = vmatmul.mubr.bf16.gmra.mrb[0].mxu0 %v205
  %v456 = vpop.f32.mrb[0].mxu0
  %v457 = vadd.f32 0.0, %v456
  %v458 = vpop.f32.mrb[0].mxu0
  %v459 = vadd.f32 0.0, %v458
  %v460 = vpop.f32.mrb[0].mxu0
  %v461 = vadd.f32 0.0, %v460
  %v462 = vpop.f32.mrb[0].mxu0
  %v463 = vadd.f32 0.0, %v462
  %464 = vmatprep.mubr.bf16.mxu0 0
  %465 = vmatmul.mubr.bf16.gmra.mrb[0].mxu0 %v208
  %v466 = vpop.f32.mrb[0].mxu0
  %v467 = vadd.f32 0.0, %v466
  %v468 = vpop.f32.mrb[0].mxu0
  %v469 = vadd.f32 0.0, %v468
  %v470 = vpop.f32.mrb[0].mxu0
  %v471 = vadd.f32 0.0, %v470
  %v472 = vpop.f32.mrb[0].mxu0
  %v473 = vadd.f32 0.0, %v472
  %474 = vmatprep.mubr.bf16.mxu0 0
  %475 = vmatmul.mubr.bf16.gmra.mrb[0].mxu0 %v211
  %v476 = vpop.f32.mrb[0].mxu0
  %v477 = vadd.f32 0.0, %v476
  %v478 = vpop.f32.mrb[0].mxu0
  %v479 = vadd.f32 0.0, %v478
  %v480 = vpop.f32.mrb[0].mxu0
  %v481 = vadd.f32 0.0, %v480
  %v482 = vpop.f32.mrb[0].mxu0
  %v483 = vadd.f32 0.0, %v482
  %484 = vmatprep.mubr.bf16.mxu0 0
  %485 = vmatmul.mubr.bf16.gmra.mrb[0].mxu0 %v214
  %v486 = vpop.f32.mrb[0].mxu0
  %v487 = vadd.f32 0.0, %v486
  %v488 = vpop.f32.mrb[0].mxu0
  %v489 = vadd.f32 0.0, %v488
  %v490 = vpop.f32.mrb[0].mxu0
  %v491 = vadd.f32 0.0, %v490
  %v492 = vpop.f32.mrb[0].mxu0
  %v493 = vadd.f32 0.0, %v492
  %494 = vmatprep.mubr.bf16.mxu0 0
  %495 = vmatmul.mubr.bf16.gmra.mrb[0].mxu0 %v217
  %v496 = vpop.f32.mrb[0].mxu0
  %v497 = vadd.f32 0.0, %v496
  %v498 = vpop.f32.mrb[0].mxu0
  %v499 = vadd.f32 0.0, %v498
  %v500 = vpop.f32.mrb[0].mxu0
  %v501 = vadd.f32 0.0, %v500
  %v502 = vpop.f32.mrb[0].mxu0
  %v503 = vadd.f32 0.0, %v502
  %504 = vdwg.mxu0
  %505 = vst [vmem:[%s2] sm:$0xff] %v254
  %506 = vst [vmem:[%s2 + $0x8] sm:$0xff] %v256
  %507 = vst [vmem:[%s2 + $0x10] sm:$0xff] %v397
  %508 = vst [vmem:[%s2 + $0x18] sm:$0xff] %v399
  %509 = vst [vmem:[%s2 + $0x20] sm:$0xff] %v258
  %510 = vst [vmem:[%s2 + $0x28] sm:$0xff] %v260
  %511 = vst [vmem:[%s2 + $0x30] sm:$0xff] %v401
  %512 = vst [vmem:[%s2 + $0x38] sm:$0xff] %v403
  %513 = vst [vmem:[%s2 + $0x40] sm:$0xff] %v264
  %514 = vst [vmem:[%s2 + $0x48] sm:$0xff] %v266
  %515 = vst [vmem:[%s2 + $0x50] sm:$0xff] %v407
  %516 = vst [vmem:[%s2 + $0x58] sm:$0xff] %v409
  %517 = vst [vmem:[%s2 + $0x60] sm:$0xff] %v268
  %518 = vst [vmem:[%s2 + $0x68] sm:$0xff] %v270
  %519 = vst [vmem:[%s2 + $0x70] sm:$0xff] %v411
  %520 = vst [vmem:[%s2 + $0x78] sm:$0xff] %v413
  %521 = vst [vmem:[%s2 + $0x80] sm:$0xff] %v274
  %522 = vst [vmem:[%s2 + $0x88] sm:$0xff] %v276
  %523 = vst [vmem:[%s2 + $0x90] sm:$0xff] %v417
  %524 = vst [vmem:[%s2 + $0x98] sm:$0xff] %v419
  %525 = vst [vmem:[%s2 + $0xa0] sm:$0xff] %v278
  %526 = vst [vmem:[%s2 + $0xa8] sm:$0xff] %v280
  %527 = vst [vmem:[%s2 + $0xb0] sm:$0xff] %v421
  %528 = vst [vmem:[%s2 + $0xb8] sm:$0xff] %v423
  %529 = vst [vmem:[%s2 + $0xc0] sm:$0xff] %v284
  %530 = vst [vmem:[%s2 + $0xc8] sm:$0xff] %v286
  %531 = vst [vmem:[%s2 + $0xd0] sm:$0xff] %v427
  %532 = vst [vmem:[%s2 + $0xd8] sm:$0xff] %v429
  %533 = vst [vmem:[%s2 + $0xe0] sm:$0xff] %v288
  %534 = vst [vmem:[%s2 + $0xe8] sm:$0xff] %v290
  %535 = vst [vmem:[%s2 + $0xf0] sm:$0xff] %v431
  %536 = vst [vmem:[%s2 + $0xf8] sm:$0xff] %v433
  %537 = vst [vmem:[%s2 + $0x100] sm:$0xff] %v294
  %538 = vst [vmem:[%s2 + $0x108] sm:$0xff] %v296
  %539 = vst [vmem:[%s2 + $0x110] sm:$0xff] %v437
  %540 = vst [vmem:[%s2 + $0x118] sm:$0xff] %v439
  %541 = vst [vmem:[%s2 + $0x120] sm:$0xff] %v298
  %542 = vst [vmem:[%s2 + $0x128] sm:$0xff] %v300
  %543 = vst [vmem:[%s2 + $0x130] sm:$0xff] %v441
  %544 = vst [vmem:[%s2 + $0x138] sm:$0xff] %v443
  %545 = vst [vmem:[%s2 + $0x140] sm:$0xff] %v304
  %546 = vst [vmem:[%s2 + $0x148] sm:$0xff] %v306
  %547 = vst [vmem:[%s2 + $0x150] sm:$0xff] %v447
  %548 = vst [vmem:[%s2 + $0x158] sm:$0xff] %v449
  %549 = vst [vmem:[%s2 + $0x160] sm:$0xff] %v308
  %550 = vst [vmem:[%s2 + $0x168] sm:$0xff] %v310
  %551 = vst [vmem:[%s2 + $0x170] sm:$0xff] %v451
  %552 = vst [vmem:[%s2 + $0x178] sm:$0xff] %v453
  %553 = vst [vmem:[%s2 + $0x180] sm:$0xff] %v314
  %554 = vst [vmem:[%s2 + $0x188] sm:$0xff] %v316
  %555 = vst [vmem:[%s2 + $0x190] sm:$0xff] %v457
  %556 = vst [vmem:[%s2 + $0x198] sm:$0xff] %v459
  %557 = vst [vmem:[%s2 + $0x1a0] sm:$0xff] %v318
  %558 = vst [vmem:[%s2 + $0x1a8] sm:$0xff] %v320
  %559 = vst [vmem:[%s2 + $0x1b0] sm:$0xff] %v461
  %560 = vst [vmem:[%s2 + $0x1b8] sm:$0xff] %v463
  %561 = vst [vmem:[%s2 + $0x1c0] sm:$0xff] %v324
  %562 = vst [vmem:[%s2 + $0x1c8] sm:$0xff] %v326
  %563 = vst [vmem:[%s2 + $0x1d0] sm:$0xff] %v467
  %564 = vst [vmem:[%s2 + $0x1d8] sm:$0xff] %v469
  %565 = vst [vmem:[%s2 + $0x1e0] sm:$0xff] %v328
  %566 = vst [vmem:[%s2 + $0x1e8] sm:$0xff] %v330
  %567 = vst [vmem:[%s2 + $0x1f0] sm:$0xff] %v471
  %568 = vst [vmem:[%s2 + $0x1f8] sm:$0xff] %v473
  %569 = vst [vmem:[%s2 + $0x200] sm:$0xff] %v334
  %570 = vst [vmem:[%s2 + $0x208] sm:$0xff] %v336
  %571 = vst [vmem:[%s2 + $0x210] sm:$0xff] %v477
  %572 = vst [vmem:[%s2 + $0x218] sm:$0xff] %v479
  %573 = vst [vmem:[%s2 + $0x220] sm:$0xff] %v338
  %574 = vst [vmem:[%s2 + $0x228] sm:$0xff] %v340
  %575 = vst [vmem:[%s2 + $0x230] sm:$0xff] %v481
  %576 = vst [vmem:[%s2 + $0x238] sm:$0xff] %v483
  %577 = vst [vmem:[%s2 + $0x240] sm:$0xff] %v344
  %578 = vst [vmem:[%s2 + $0x248] sm:$0xff] %v346
  %579 = vst [vmem:[%s2 + $0x250] sm:$0xff] %v487
  %580 = vst [vmem:[%s2 + $0x258] sm:$0xff] %v489
  %581 = vst [vmem:[%s2 + $0x260] sm:$0xff] %v348
  %582 = vst [vmem:[%s2 + $0x268] sm:$0xff] %v350
  %583 = vst [vmem:[%s2 + $0x270] sm:$0xff] %v491
  %584 = vst [vmem:[%s2 + $0x278] sm:$0xff] %v493
  %585 = vst [vmem:[%s2 + $0x280] sm:$0xff] %v354
  %586 = vst [vmem:[%s2 + $0x288] sm:$0xff] %v356
  %587 = vst [vmem:[%s2 + $0x290] sm:$0xff] %v497
  %588 = vst [vmem:[%s2 + $0x298] sm:$0xff] %v499
  %589 = vst [vmem:[%s2 + $0x2a0] sm:$0xff] %v358
  %590 = vst [vmem:[%s2 + $0x2a8] sm:$0xff] %v360
  %591 = vst [vmem:[%s2 + $0x2b0] sm:$0xff] %v501
  %592 = vst [vmem:[%s2 + $0x2b8] sm:$0xff] %v503
  // Predicated region
  $region10: #{decoder_forward.6} parent=0 // pred_check
    _
  $region11: #{decoder_forward.6} parent=0 // pred_check_branch
    %594 = sbr.rel (0) target = $region13
  $region12: #{decoder_forward.6} parent=0 // pred_region
    _
  $region13: #{decoder_forward.6} parent=0 // pred_fallthru
    _
  // Predicated region
  $region14: #{decoder_forward.6} parent=0 // pred_check
    _
  $region15: #{decoder_forward.6} parent=0 // pred_check_branch
    %596 = sbr.rel (0) target = $region17
  $region16: #{decoder_forward.6} parent=0 // pred_region
    _
  $region17: #{decoder_forward.6} parent=0 // pred_fallthru
    _

// kernel: decoder_forward.4
$region0: #{decoder_forward.4}
  #allocation0 [shape = 'u32[]', space=smem, size = 0x4, offset = 0x4, fixed_abs, tag = 'smem constant byte address 0x4 - core index']
  #allocation1 [shape = 'u32[144,128]{1,0:T(1,128)}', space=vmem, size = 0x12000, scoped, tag = 'internal scratch']
  %s0 = inlined_call_operand.vmem [shape: bf16[16,32], index: 0, kind: input, shape index: {}]
  %s1 = inlined_call_operand.hbm [shape: bf16[32,512], index: 1, kind: input, shape index: {}]
  %s2 = inlined_call_operand.hbm [shape: f32[1,512], index: 2, kind: input, shape index: {}]
  %s3 = inlined_call_operand.hbm [shape: bf16[512,3200], index: 3, kind: input, shape index: {}]
  %s4 = inlined_call_operand.hbm [shape: f32[1,3200], index: 4, kind: input, shape index: {}]
  %s5 = inlined_call_operand.vmem [shape: bf16[16,3200], index: 5, kind: output, shape index: {}]
  %s6 = sld [smem:[#allocation0]]
  $region46: #{decoder_forward.4} parent=0
    _
  %s8 = ssub.s32 1, %s6
  %s9 = scalar_select 0, %s8, %s6
  $region1: #{decoder_forward.4} parent=0
    #allocation2 [shape = 'u8[32768]{0}', space=vmem, size = 0x8000, scoped, tag = 'input window, operand 1, single buffered']
    #allocation3 [shape = 's32[1]{0}', space=sflag, size = 0x4, scoped, tag = 'scoped memory for decoder_forward.4']
    #allocation4 [shape = 'u8[2048]{0}', space=vmem, size = 0x800, scoped, tag = 'input window, operand 2, single buffered']
    #allocation5 [shape = 's32[1]{0}', space=sflag, size = 0x4, scoped, tag = 'scoped memory for decoder_forward.4']
    #allocation6 [shape = 'u8[3276800]{0}', space=vmem, size = 0x320000, scoped, tag = 'input window, operand 3, single buffered']
    #allocation7 [shape = 'u8[12800]{0}', space=vmem, size = 0x3400, scoped, tag = 'input window, operand 4, single buffered']
    #allocation8 [shape = 's32[1]{0}', space=sflag, size = 0x4, scoped, tag = 'scoped memory for decoder_forward.4']
    %10 = vsyncpa [#allocation3], 0
    %11 = vsyncpa [#allocation5], 0
    %12 = vsyncpa [#allocation8], 0
    // Predicated region
    $region2: #{decoder_forward.4} parent=1 // pred_check
      _
    $region3: #{decoder_forward.4} parent=1 // pred_check_branch
      %14 = sbr.rel (0) target = $region5
    $region4: #{decoder_forward.4} parent=1 // pred_region
      _
    $region5: #{decoder_forward.4} parent=1 // pred_fallthru
      _
    // Predicated region
    $region6: #{decoder_forward.4} parent=1 // pred_check
      _
    $region7: #{decoder_forward.4} parent=1 // pred_check_branch
      %16 = sbr.rel (0) target = $region9
    $region8: #{decoder_forward.4} parent=1 // pred_region
      %s18 = ssub.s32 1024, 1024
      %19 = vsyncadd [#allocation3], %s18
      %s20 = sshll.u32 [#allocation2], 4
      %s21 = int_to_ptr.vmem [resolvable:$true] %s20
      %26 = dma.hbm_to_vmem [thread:$0]  %s1, 1024, %s21, [#allocation3], 256, 256, 16
    $region9: #{decoder_forward.4} parent=1 // pred_fallthru
      _
    // Predicated region
    $region10: #{decoder_forward.4} parent=1 // pred_check
      _
    $region11: #{decoder_forward.4} parent=1 // pred_check_branch
      %28 = sbr.rel (0) target = $region13
    $region12: #{decoder_forward.4} parent=1 // pred_region
      %s30 = ssub.s32 64, 64
      %31 = vsyncadd [#allocation5], %s30
      %s33 = sshll.u32 [#allocation4], 4
      %s34 = int_to_ptr.vmem [resolvable:$true] %s33
      %36 = dma.hbm_to_vmem [thread:$0]  %s2, 64, %s34, [#allocation5]
    $region13: #{decoder_forward.4} parent=1 // pred_fallthru
      _
    // Predicated region
    $region14: #{decoder_forward.4} parent=1 // pred_check
      _
    $region15: #{decoder_forward.4} parent=1 // pred_check_branch
      %38 = sbr.rel (0) target = $region17
    $region16: #{decoder_forward.4} parent=1 // pred_region
      %s40 = ssub.s32 102400, 102400
      %41 = vsyncadd [#allocation5], %s40
      %s42 = sshll.u32 [#allocation6], 4
      %s43 = int_to_ptr.vmem [resolvable:$true] %s42
      %48 = dma.hbm_to_vmem [thread:$0]  %s3, 102400, %s43, [#allocation5], 1600, 1600, 100
    $region17: #{decoder_forward.4} parent=1 // pred_fallthru
      _
    // Predicated region
    $region18: #{decoder_forward.4} parent=1 // pred_check
      _
    $region19: #{decoder_forward.4} parent=1 // pred_check_branch
      %50 = sbr.rel (0) target = $region21
    $region20: #{decoder_forward.4} parent=1 // pred_region
      %s52 = ssub.s32 400, 400
      %53 = vsyncadd [#allocation8], %s52
      %s55 = sshll.u32 [#allocation7], 4
      %s56 = int_to_ptr.vmem [resolvable:$true] %s55
      %58 = dma.hbm_to_vmem [thread:$0]  %s4, 400, %s56, [#allocation8]
    $region21: #{decoder_forward.4} parent=1 // pred_fallthru
      _
    // Predicated region
    $region22: #{decoder_forward.4} parent=1 // pred_check
      _
    $region23: #{decoder_forward.4} parent=1 // pred_check_branch
      %60 = sbr.rel (0) target = $region25
    $region24: #{decoder_forward.4} parent=1 // pred_region
      %61 = dma.done [#allocation3], 1024
    $region25: #{decoder_forward.4} parent=1 // pred_fallthru
      _
    // Predicated region
    $region26: #{decoder_forward.4} parent=1 // pred_check
      _
    $region27: #{decoder_forward.4} parent=1 // pred_check_branch
      %63 = sbr.rel (0) target = $region29
    $region28: #{decoder_forward.4} parent=1 // pred_region
      %64 = dma.done [#allocation5], 64
    $region29: #{decoder_forward.4} parent=1 // pred_fallthru
      _
    // Predicated region
    $region30: #{decoder_forward.4} parent=1 // pred_check
      _
    $region31: #{decoder_forward.4} parent=1 // pred_check_branch
      %66 = sbr.rel (0) target = $region33
    $region32: #{decoder_forward.4} parent=1 // pred_region
      %67 = dma.done [#allocation5], 102400
    $region33: #{decoder_forward.4} parent=1 // pred_fallthru
      _
    // Predicated region
    $region34: #{decoder_forward.4} parent=1 // pred_check
      _
    $region35: #{decoder_forward.4} parent=1 // pred_check_branch
      %69 = sbr.rel (0) target = $region37
    $region36: #{decoder_forward.4} parent=1 // pred_region
      %70 = dma.done [#allocation8], 400
    $region37: #{decoder_forward.4} parent=1 // pred_fallthru
      _
    %v72 = vld [vmem:[%s0] sm:$0xf]
    %v73 = vld [vmem:[%s0 + $0x4] sm:$0xf]
    %v74 = vld [vmem:[#allocation2] sm:$0xff]
    %v75 = vld [vmem:[#allocation2 + $0x8] sm:$0xff]
    %v76 = vld [vmem:[#allocation2 + $0x10] sm:$0xff]
    %v77 = vld [vmem:[#allocation2 + $0x18] sm:$0xff]
    %v78 = vld [vmem:[#allocation2 + $0x20] sm:$0xff]
    %v79 = vld [vmem:[#allocation2 + $0x28] sm:$0xff]
    %v80 = vld [vmem:[#allocation2 + $0x30] sm:$0xff]
    %v81 = vld [vmem:[#allocation2 + $0x38] sm:$0xff]
    %v82 = vld [vmem:[#allocation4] sm:$0xf]
    %v84 = vlaneseq
    %v85 = vshrl.u32 %v84, 7
    %v86 = vsub.s32 0, %v85
    %v87 = vrot.slane %v82, %v86
    %v88 = vlaneseq
    %v89 = vshrl.u32 %v88, 7
    %v90 = vsub.s32 1, %v89
    %v91 = vrot.slane %v82, %v90
    %v92 = vlaneseq
    %v93 = vshrl.u32 %v92, 7
    %v94 = vsub.s32 2, %v93
    %v95 = vrot.slane %v82, %v94
    %v96 = vlaneseq
    %v97 = vshrl.u32 %v96, 7
    %v98 = vsub.s32 3, %v97
    %v99 = vrot.slane %v82, %v98
    %v106 = vunpack.c.l.b16 %v72
    %v107 = vunpack.c.l.b16 %v73
    %v108 = vpack.c.b16 %v107, %v106
    %v117 = vunpack.c.l.b16 %v74
    %v118 = vunpack.c.h.b16 %v74
    %v119 = vunpack.c.l.b16 %v75
    %v120 = vunpack.c.h.b16 %v75
    %v121 = vunpack.c.l.b16 %v76
    %v122 = vunpack.c.h.b16 %v76
    %v123 = vunpack.c.l.b16 %v77
    %v124 = vunpack.c.h.b16 %v77
    %v125 = vunpack.c.l.b16 %v78
    %v126 = vunpack.c.h.b16 %v78
    %v127 = vunpack.c.l.b16 %v79
    %v128 = vunpack.c.h.b16 %v79
    %v129 = vunpack.c.l.b16 %v80
    %v130 = vunpack.c.h.b16 %v80
    %v131 = vunpack.c.l.b16 %v81
    %v132 = vunpack.c.h.b16 %v81
    %v133 = vpack.c.b16 %v121, %v117
    %v134 = vpack.c.b16 %v122, %v118
    %v135 = vpack.c.b16 %v123, %v119
    %v136 = vpack.c.b16 %v124, %v120
    %v137 = vpack.c.b16 %v129, %v125
    %v138 = vpack.c.b16 %v130, %v126
    %v139 = vpack.c.b16 %v131, %v127
    %v140 = vpack.c.b16 %v132, %v128
    %vm149 = vcmask 261120
    %v151 = vsel %vm149, %v108, 0
    %153 = vmatprep.subr.bf16.mxu0 %v134
    %154 = vmatpush1.bf16.msra.mxu0 %v133
    %155 = vmatprep.subr.bf16.mxu0 %v138
    %156 = vmatpush1.bf16.msra.mxu0 %v137
    %157 = vmatprep.subr.bf16.mxu0 0
    %158 = vmatpush1.bf16.msra.mxu0 0
    %159 = vmatprep.subr.bf16.mxu0 0
    %160 = vmatpush1.bf16.msra.mxu0 0
    %161 = vmatprep.subr.bf16.mxu0 0
    %162 = vmatpush1.bf16.msra.mxu0 0
    %163 = vmatprep.subr.bf16.mxu0 0
    %164 = vmatpush1.bf16.msra.mxu0 0
    %165 = vmatprep.subr.bf16.mxu0 0
    %166 = vmatpush1.bf16.msra.mxu0 0
    %167 = vmatprep.subr.bf16.mxu0 0
    %168 = vmatpush1.bf16.msra.mxu0 0
    %169 = vmatprep.subr.bf16.mxu0 0
    %170 = vmatpush1.bf16.msra.mxu0 0
    %171 = vmatprep.subr.bf16.mxu0 0
    %172 = vmatpush1.bf16.msra.mxu0 0
    %173 = vmatprep.subr.bf16.mxu0 0
    %174 = vmatpush1.bf16.msra.mxu0 0
    %175 = vmatprep.subr.bf16.mxu0 0
    %176 = vmatpush1.bf16.msra.mxu0 0
    %177 = vmatprep.subr.bf16.mxu0 0
    %178 = vmatpush1.bf16.msra.mxu0 0
    %179 = vmatprep.subr.bf16.mxu0 0
    %180 = vmatpush1.bf16.msra.mxu0 0
    %181 = vmatprep.subr.bf16.mxu0 0
    %182 = vmatpush1.bf16.msra.mxu0 0
    %183 = vmatprep.subr.bf16.mxu0 0
    %184 = vmatpush1.bf16.msra.mxu0 0
    %185 = vmatprep.mubr.bf16.mxu0 0
    %186 = vmatmul.mubr.bf16.gmra.mrb[0].mxu0 %v151
    %v187 = vpop.f32.mrb[0].mxu0
    %v188 = vadd.f32 %v87, %v187
    %v189 = vpop.f32.mrb[0].mxu0
    %v190 = vadd.f32 %v91, %v189
    %v191 = vpop.f32.mrb[0].mxu0
    %v192 = vadd.f32 %v87, %v191
    %v193 = vpop.f32.mrb[0].mxu0
    %v194 = vadd.f32 %v91, %v193
    %195 = vdwg.mxu0
    %196 = vmatprep.subr.bf16.mxu0 %v136
    %197 = vmatpush1.bf16.msra.mxu0 %v135
    %198 = vmatprep.subr.bf16.mxu0 %v140
    %199 = vmatpush1.bf16.msra.mxu0 %v139
    %200 = vmatprep.subr.bf16.mxu0 0
    %201 = vmatpush1.bf16.msra.mxu0 0
    %202 = vmatprep.subr.bf16.mxu0 0
    %203 = vmatpush1.bf16.msra.mxu0 0
    %204 = vmatprep.subr.bf16.mxu0 0
    %205 = vmatpush1.bf16.msra.mxu0 0
    %206 = vmatprep.subr.bf16.mxu0 0
    %207 = vmatpush1.bf16.msra.mxu0 0
    %208 = vmatprep.subr.bf16.mxu0 0
    %209 = vmatpush1.bf16.msra.mxu0 0
    %210 = vmatprep.subr.bf16.mxu0 0
    %211 = vmatpush1.bf16.msra.mxu0 0
    %212 = vmatprep.subr.bf16.mxu0 0
    %213 = vmatpush1.bf16.msra.mxu0 0
    %214 = vmatprep.subr.bf16.mxu0 0
    %215 = vmatpush1.bf16.msra.mxu0 0
    %216 = vmatprep.subr.bf16.mxu0 0
    %217 = vmatpush1.bf16.msra.mxu0 0
    %218 = vmatprep.subr.bf16.mxu0 0
    %219 = vmatpush1.bf16.msra.mxu0 0
    %220 = vmatprep.subr.bf16.mxu0 0
    %221 = vmatpush1.bf16.msra.mxu0 0
    %222 = vmatprep.subr.bf16.mxu0 0
    %223 = vmatpush1.bf16.msra.mxu0 0
    %224 = vmatprep.subr.bf16.mxu0 0
    %225 = vmatpush1.bf16.msra.mxu0 0
    %226 = vmatprep.subr.bf16.mxu0 0
    %227 = vmatpush1.bf16.msra.mxu0 0
    %228 = vmatprep.mubr.bf16.mxu0 0
    %229 = vmatmul.mubr.bf16.gmra.mrb[0].mxu0 %v151
    %v230 = vpop.f32.mrb[0].mxu0
    %v231 = vadd.f32 %v95, %v230
    %v232 = vpop.f32.mrb[0].mxu0
    %v233 = vadd.f32 %v99, %v232
    %v234 = vpop.f32.mrb[0].mxu0
    %v235 = vadd.f32 %v95, %v234
    %v236 = vpop.f32.mrb[0].mxu0
    %v237 = vadd.f32 %v99, %v236
    %238 = vdwg.mxu0
    %v239 = vmax.f32 %v188, 0.0
    %v240 = vmax.f32 %v190, 0.0
    %v241 = vmax.f32 %v231, 0.0
    %v242 = vmax.f32 %v233, 0.0
    %v243 = vmax.f32 %v192, 0.0
    %v244 = vmax.f32 %v194, 0.0
    %v245 = vmax.f32 %v235, 0.0
    %v246 = vmax.f32 %v237, 0.0
    %v247 = vpack.c.bf16 %v243, %v239
    %v248 = vpack.c.bf16 %v244, %v240
    %v249 = vpack.c.bf16 %v245, %v241
    %v250 = vpack.c.bf16 %v246, %v242
    %v251 = vld [vmem:[#allocation6] sm:$0xff]
    %v252 = vld [vmem:[#allocation6 + $0x8] sm:$0xff]
    %v253 = vld [vmem:[#allocation6 + $0x10] sm:$0xff]
    %v254 = vld [vmem:[#allocation6 + $0x18] sm:$0xff]
    %v255 = vld [vmem:[#allocation6 + $0x20] sm:$0xff]
    %v256 = vld [vmem:[#allocation6 + $0x28] sm:$0xff]
    %v257 = vld [vmem:[#allocation6 + $0x30] sm:$0xff]
    %v258 = vld [vmem:[#allocation6 + $0x38] sm:$0xff]
    %v259 = vld [vmem:[#allocation6 + $0x40] sm:$0xff]
    %v260 = vld [vmem:[#allocation6 + $0x48] sm:$0xff]
    %v261 = vld [vmem:[#allocation6 + $0x50] sm:$0xff]
    %v262 = vld [vmem:[#allocation6 + $0x58] sm:$0xff]
    %v263 = vld [vmem:[#allocation6 + $0x60] sm:$0xf]
    %v264 = vld [vmem:[#allocation6 + $0x64] sm:$0xff]
    %v265 = vld [vmem:[#allocation6 + $0x6c] sm:$0xff]
    %v266 = vld [vmem:[#allocation6 + $0x74] sm:$0xff]
    %v267 = vld [vmem:[#allocation6 + $0x7c] sm:$0xff]
    %v268 = vld [vmem:[#allocation6 + $0x84] sm:$0xff]
    %v269 = vld [vmem:[#allocation6 + $0x8c] sm:$0xff]
    %v270 = vld [vmem:[#allocation6 + $0x94] sm:$0xff]
    %v271 = vld [vmem:[#allocation6 + $0x9c] sm:$0xff]
    %v272 = vld [vmem:[#allocation6 + $0xa4] sm:$0xff]
    %v273 = vld [vmem:[#allocation6 + $0xac] sm:$0xff]
    %v274 = vld [vmem:[#allocation6 + $0xb4] sm:$0xff]
    %v275 = vld [vmem:[#allocation6 + $0xbc] sm:$0xff]
    %v276 = vld [vmem:[#allocation6 + $0xc4] sm:$0xf]
    %v277 = vld [vmem:[#allocation6 + $0xc8] sm:$0xff]
    %v278 = vld [vmem:[#allocation6 + $0xd0] sm:$0xff]
    %v279 = vld [vmem:[#allocation6 + $0xd8] sm:$0xff]
    %v280 = vld [vmem:[#allocation6 + $0xe0] sm:$0xff]
    %v281 = vld [vmem:[#allocation6 + $0xe8] sm:$0xff]
    %v282 = vld [vmem:[#allocation6 + $0xf0] sm:$0xff]
    %v283 = vld [vmem:[#allocation6 + $0xf8] sm:$0xff]
    %v284 = vld [vmem:[#allocation6 + $0x100] sm:$0xff]
    %v285 = vld [vmem:[#allocation6 + $0x108] sm:$0xff]
    %v286 = vld [vmem:[#allocation6 + $0x110] sm:$0xff]
    %v287 = vld [vmem:[#allocation6 + $0x118] sm:$0xff]
    %v288 = vld [vmem:[#allocation6 + $0x120] sm:$0xff]
    %v289 = vld [vmem:[#allocation6 + $0x128] sm:$0xf]
    %v290 = vld [vmem:[#allocation6 + $0x12c] sm:$0xff]
    %v291 = vld [vmem:[#allocation6 + $0x134] sm:$0xff]
    %v292 = vld [vmem:[#allocation6 + $0x13c] sm:$0xff]
    %v293 = vld [vmem:[#allocation6 + $0x144] sm:$0xff]
    %v294 = vld [vmem:[#allocation6 + $0x14c] sm:$0xff]
    %v295 = vld [vmem:[#allocation6 + $0x154] sm:$0xff]
    %v296 = vld [vmem:[#allocation6 + $0x15c] sm:$0xff]
    %v297 = vld [vmem:[#allocation6 + $0x164] sm:$0xff]
    %v298 = vld [vmem:[#allocation6 + $0x16c] sm:$0xff]
    %v299 = vld [vmem:[#allocation6 + $0x174] sm:$0xff]
    %v300 = vld [vmem:[#allocation6 + $0x17c] sm:$0xff]
    %v301 = vld [vmem:[#allocation6 + $0x184] sm:$0xff]
    %v302 = vld [vmem:[#allocation6 + $0x18c] sm:$0xf]
    %v303 = vld [vmem:[#allocation6 + $0x190] sm:$0xff]
    %v304 = vld [vmem:[#allocation6 + $0x198] sm:$0xff]
    %v305 = vld [vmem:[#allocation6 + $0x1a0] sm:$0xff]
    %v306 = vld [vmem:[#allocation6 + $0x1a8] sm:$0xff]
    %v307 = vld [vmem:[#allocation6 + $0x1b0] sm:$0xff]
    %v308 = vld [vmem:[#allocation6 + $0x1b8] sm:$0xff]
    %v309 = vld [vmem:[#allocation6 + $0x1c0] sm:$0xff]
    %v310 = vld [vmem:[#allocation6 + $0x1c8] sm:$0xff]
    %v311 = vld [vmem:[#allocation6 + $0x1d0] sm:$0xff]
    %v312 = vld [vmem:[#allocation6 + $0x1d8] sm:$0xff]
    %v313 = vld [vmem:[#allocation6 + $0x1e0] sm:$0xff]
    %v314 = vld [vmem:[#allocation6 + $0x1e8] sm:$0xff]
    %v315 = vld [vmem:[#allocation6 + $0x1f0] sm:$0xf]
    %v316 = vld [vmem:[#allocation6 + $0x1f4] sm:$0xff]
    %v317 = vld [vmem:[#allocation6 + $0x1fc] sm:$0xff]
    %v318 = vld [vmem:[#allocation6 + $0x204] sm:$0xff]
    %v319 = vld [vmem:[#allocation6 + $0x20c] sm:$0xff]
    %v320 = vld [vmem:[#allocation6 + $0x214] sm:$0xff]
    %v321 = vld [vmem:[#allocation6 + $0x21c] sm:$0xff]
    %v322 = vld [vmem:[#allocation6 + $0x224] sm:$0xff]
    %v323 = vld [vmem:[#allocation6 + $0x22c] sm:$0xff]
    %v324 = vld [vmem:[#allocation6 + $0x234] sm:$0xff]
    %v325 = vld [vmem:[#allocation6 + $0x23c] sm:$0xff]
    %v326 = vld [vmem:[#allocation6 + $0x244] sm:$0xff]
    %v327 = vld [vmem:[#allocation6 + $0x24c] sm:$0xff]
    %v328 = vld [vmem:[#allocation6 + $0x254] sm:$0xf]
    %v329 = vld [vmem:[#allocation6 + $0x258] sm:$0xff]
    %v330 = vld [vmem:[#allocation6 + $0x260] sm:$0xff]
    %v331 = vld [vmem:[#allocation6 + $0x268] sm:$0xff]
    %v332 = vld [vmem:[#allocation6 + $0x270] sm:$0xff]
    %v333 = vld [vmem:[#allocation6 + $0x278] sm:$0xff]
    %v334 = vld [vmem:[#allocation6 + $0x280] sm:$0xff]
    %v335 = vld [vmem:[#allocation6 + $0x288] sm:$0xff]
    %v336 = vld [vmem:[#allocation6 + $0x290] sm:$0xff]
    %v337 = vld [vmem:[#allocation6 + $0x298] sm:$0xff]
    %v338 = vld [vmem:[#allocation6 + $0x2a0] sm:$0xff]
    %v339 = vld [vmem:[#allocation6 + $0x2a8] sm:$0xff]
    %v340 = vld [vmem:[#allocation6 + $0x2b0] sm:$0xff]
    %v341 = vld [vmem:[#allocation6 + $0x2b8] sm:$0xf]
    %v342 = vld [vmem:[#allocation6 + $0x2bc] sm:$0xff]
    %v343 = vld [vmem:[#allocation6 + $0x2c4] sm:$0xff]
    %v344 = vld [vmem:[#allocation6 + $0x2cc] sm:$0xff]
    %v345 = vld [vmem:[#allocation6 + $0x2d4] sm:$0xff]
    %v346 = vld [vmem:[#allocation6 + $0x2dc] sm:$0xff]
    %v347 = vld [vmem:[#allocation6 + $0x2e4] sm:$0xff]
    %v348 = vld [vmem:[#allocation6 + $0x2ec] sm:$0xff]
    %v349 = vld [vmem:[#allocation6 + $0x2f4] sm:$0xff]
    %v350 = vld [vmem:[#allocation6 + $0x2fc] sm:$0xff]
    %v351 = vld [vmem:[#allocation6 + $0x304] sm:$0xff]
    %v352 = vld [vmem:[#allocation6 + $0x30c] sm:$0xff]
    %v353 = vld [vmem:[#allocation6 + $0x314] sm:$0xff]
    %v354 = vld [vmem:[#allocation6 + $0x31c] sm:$0xf]
    %v355 = vld [vmem:[#allocation6 + $0x320] sm:$0xff]
    %v356 = vld [vmem:[#allocation6 + $0x328] sm:$0xff]
    %v357 = vld [vmem:[#allocation6 + $0x330] sm:$0xff]
    %v358 = vld [vmem:[#allocation6 + $0x338] sm:$0xff]
    %v359 = vld [vmem:[#allocation6 + $0x340] sm:$0xff]
    %v360 = vld [vmem:[#allocation6 + $0x348] sm:$0xff]
    %v361 = vld [vmem:[#allocation6 + $0x350] sm:$0xff]
    %v362 = vld [vmem:[#allocation6 + $0x358] sm:$0xff]
    %v363 = vld [vmem:[#allocation6 + $0x360] sm:$0xff]
    %v364 = vld [vmem:[#allocation6 + $0x368] sm:$0xff]
    %v365 = vld [vmem:[#allocation6 + $0x370] sm:$0xff]
    %v366 = vld [vmem:[#allocation6 + $0x378] sm:$0xff]
    %v367 = vld [vmem:[#allocation6 + $0x380] sm:$0xf]
    %v368 = vld [vmem:[#allocation6 + $0x384] sm:$0xff]
    %v369 = vld [vmem:[#allocation6 + $0x38c] sm:$0xff]
    %v370 = vld [vmem:[#allocation6 + $0x394] sm:$0xff]
    %v371 = vld [vmem:[#allocation6 + $0x39c] sm:$0xff]
    %v372 = vld [vmem:[#allocation6 + $0x3a4] sm:$0xff]
    %v373 = vld [vmem:[#allocation6 + $0x3ac] sm:$0xff]
    %v374 = vld [vmem:[#allocation6 + $0x3b4] sm:$0xff]
    %v375 = vld [vmem:[#allocation6 + $0x3bc] sm:$0xff]
    %v376 = vld [vmem:[#allocation6 + $0x3c4] sm:$0xff]
    %v377 = vld [vmem:[#allocation6 + $0x3cc] sm:$0xff]
    %v378 = vld [vmem:[#allocation6 + $0x3d4] sm:$0xff]
    %v379 = vld [vmem:[#allocation6 + $0x3dc] sm:$0xff]
    %v380 = vld [vmem:[#allocation6 + $0x3e4] sm:$0xf]
    %v381 = vld [vmem:[#allocation6 + $0x3e8] sm:$0xff]
    %v382 = vld [vmem:[#allocation6 + $0x3f0] sm:$0xff]
    %v383 = vld [vmem:[#allocation6 + $0x3f8] sm:$0xff]
    %v384 = vld [vmem:[#allocation6 + $0x400] sm:$0xff]
    %v385 = vld [vmem:[#allocation6 + $0x408] sm:$0xff]
    %v386 = vld [vmem:[#allocation6 + $0x410] sm:$0xff]
    %v387 = vld [vmem:[#allocation6 + $0x418] sm:$0xff]
    %v388 = vld [vmem:[#allocation6 + $0x420] sm:$0xff]
    %v389 = vld [vmem:[#allocation6 + $0x428] sm:$0xff]
    %v390 = vld [vmem:[#allocation6 + $0x430] sm:$0xff]
    %v391 = vld [vmem:[#allocation6 + $0x438] sm:$0xff]
    %v392 = vld [vmem:[#allocation6 + $0x440] sm:$0xff]
    %v393 = vld [vmem:[#allocation6 + $0x448] sm:$0xf]
    %v394 = vld [vmem:[#allocation6 + $0x44c] sm:$0xff]
    %v395 = vld [vmem:[#allocation6 + $0x454] sm:$0xff]
    %v396 = vld [vmem:[#allocation6 + $0x45c] sm:$0xff]
    %v397 = vld [vmem:[#allocation6 + $0x464] sm:$0xff]
    %v398 = vld [vmem:[#allocation6 + $0x46c] sm:$0xff]
    %v399 = vld [vmem:[#allocation6 + $0x474] sm:$0xff]
    %v400 = vld [vmem:[#allocation6 + $0x47c] sm:$0xff]
    %v401 = vld [vmem:[#allocation6 + $0x484] sm:$0xff]
    %v402 = vld [vmem:[#allocation6 + $0x48c] sm:$0xff]
    %v403 = vld [vmem:[#allocation6 + $0x494] sm:$0xff]
    %v404 = vld [vmem:[#allocation6 + $0x49c] sm:$0xff]
    %v405 = vld [vmem:[#allocation6 + $0x4a4] sm:$0xff]
    %v406 = vld [vmem:[#allocation6 + $0x4ac] sm:$0xf]
    %v407 = vld [vmem:[#allocation6 + $0x4b0] sm:$0xff]
    %v408 = vld [vmem:[#allocation6 + $0x4b8] sm:$0xff]
    %v409 = vld [vmem:[#allocation6 + $0x4c0] sm:$0xff]
    %v410 = vld [vmem:[#allocation6 + $0x4c8] sm:$0xff]
    %v411 = vld [vmem:[#allocation6 + $0x4d0] sm:$0xff]
    %v412 = vld [vmem:[#allocation6 + $0x4d8] sm:$0xff]
    %v413 = vld [vmem:[#allocation6 + $0x4e0] sm:$0xff]
    %v414 = vld [vmem:[#allocation6 + $0x4e8] sm:$0xff]
    %v415 = vld [vmem:[#allocation6 + $0x4f0] sm:$0xff]
    %v416 = vld [vmem:[#allocation6 + $0x4f8] sm:$0xff]
    %v417 = vld [vmem:[#allocation6 + $0x500] sm:$0xff]
    %v418 = vld [vmem:[#allocation6 + $0x508] sm:$0xff]
    %v419 = vld [vmem:[#allocation6 + $0x510] sm:$0xf]
    %v420 = vld [vmem:[#allocation6 + $0x514] sm:$0xff]
    %v421 = vld [vmem:[#allocation6 + $0x51c] sm:$0xff]
    %v422 = vld [vmem:[#allocation6 + $0x524] sm:$0xff]
    %v423 = vld [vmem:[#allocation6 + $0x52c] sm:$0xff]
    %v424 = vld [vmem:[#allocation6 + $0x534] sm:$0xff]
    %v425 = vld [vmem:[#allocation6 + $0x53c] sm:$0xff]
    %v426 = vld [vmem:[#allocation6 + $0x544] sm:$0xff]
    %v427 = vld [vmem:[#allocation6 + $0x54c] sm:$0xff]
    %v428 = vld [vmem:[#allocation6 + $0x554] sm:$0xff]
    %v429 = vld [vmem:[#allocation6 + $0x55c] sm:$0xff]
    %v430 = vld [vmem:[#allocation6 + $0x564] sm:$0xff]
    %v431 = vld [vmem:[#allocation6 + $0x56c] sm:$0xff]
    %v432 = vld [vmem:[#allocation6 + $0x574] sm:$0xf]
    %v433 = vld [vmem:[#allocation6 + $0x578] sm:$0xff]
    %v434 = vld [vmem:[#allocation6 + $0x580] sm:$0xff]
    %v435 = vld [vmem:[#allocation6 + $0x588] sm:$0xff]
    %v436 = vld [vmem:[#allocation6 + $0x590] sm:$0xff]
    %v437 = vld [vmem:[#allocation6 + $0x598] sm:$0xff]
    %v438 = vld [vmem:[#allocation6 + $0x5a0] sm:$0xff]
    %v439 = vld [vmem:[#allocation6 + $0x5a8] sm:$0xff]
    %v440 = vld [vmem:[#allocation6 + $0x5b0] sm:$0xff]
    %v441 = vld [vmem:[#allocation6 + $0x5b8] sm:$0xff]
    %v442 = vld [vmem:[#allocation6 + $0x5c0] sm:$0xff]
    %v443 = vld [vmem:[#allocation6 + $0x5c8] sm:$0xff]
    %v444 = vld [vmem:[#allocation6 + $0x5d0] sm:$0xff]
    %v445 = vld [vmem:[#allocation6 + $0x5d8] sm:$0xf]
    %v446 = vld [vmem:[#allocation6 + $0x5dc] sm:$0xff]
    %v447 = vld [vmem:[#allocation6 + $0x5e4] sm:$0xff]
    %v448 = vld [vmem:[#allocation6 + $0x5ec] sm:$0xff]
    %v449 = vld [vmem:[#allocation6 + $0x5f4] sm:$0xff]
    %v450 = vld [vmem:[#allocation6 + $0x5fc] sm:$0xff]
    %v451 = vld [vmem:[#allocation6 + $0x604] sm:$0xff]
    %v452 = vld [vmem:[#allocation6 + $0x60c] sm:$0xff]
    %v453 = vld [vmem:[#allocation6 + $0x614] sm:$0xff]
    %v454 = vld [vmem:[#allocation6 + $0x61c] sm:$0xff]
    %v455 = vld [vmem:[#allocation6 + $0x624] sm:$0xff]
    %v456 = vld [vmem:[#allocation6 + $0x62c] sm:$0xff]
    %v457 = vld [vmem:[#allocation6 + $0x634] sm:$0xff]
    %v458 = vld [vmem:[#allocation6 + $0x63c] sm:$0xf]
    %v459 = vld [vmem:[#allocation6 + $0x640] sm:$0xff]
    %v460 = vld [vmem:[#allocation6 + $0x648] sm:$0xff]
    %v461 = vld [vmem:[#allocation6 + $0x650] sm:$0xff]
    %v462 = vld [vmem:[#allocation6 + $0x658] sm:$0xff]
    %v463 = vld [vmem:[#allocation6 + $0x660] sm:$0xff]
    %v464 = vld [vmem:[#allocation6 + $0x668] sm:$0xff]
    %v465 = vld [vmem:[#allocation6 + $0x670] sm:$0xff]
    %v466 = vld [vmem:[#allocation6 + $0x678] sm:$0xff]
    %v467 = vld [vmem:[#allocation6 + $0x680] sm:$0xff]
    %v468 = vld [vmem:[#allocation6 + $0x688] sm:$0xff]
    %v469 = vld [vmem:[#allocation6 + $0x690] sm:$0xff]
    %v470 = vld [vmem:[#allocation6 + $0x698] sm:$0xff]
    %v471 = vld [vmem:[#allocation6 + $0x6a0] sm:$0xf]
    %v472 = vld [vmem:[#allocation6 + $0x6a4] sm:$0xff]
    %v473 = vld [vmem:[#allocation6 + $0x6ac] sm:$0xff]
    %v474 = vld [vmem:[#allocation6 + $0x6b4] sm:$0xff]
    %v475 = vld [vmem:[#allocation6 + $0x6bc] sm:$0xff]
    %v476 = vld [vmem:[#allocation6 + $0x6c4] sm:$0xff]
    %v477 = vld [vmem:[#allocation6 + $0x6cc] sm:$0xff]
    %v478 = vld [vmem:[#allocation6 + $0x6d4] sm:$0xff]
    %v479 = vld [vmem:[#allocation6 + $0x6dc] sm:$0xff]
    %v480 = vld [vmem:[#allocation6 + $0x6e4] sm:$0xff]
    %v481 = vld [vmem:[#allocation6 + $0x6ec] sm:$0xff]
    %v482 = vld [vmem:[#allocation6 + $0x6f4] sm:$0xff]
    %v483 = vld [vmem:[#allocation6 + $0x6fc] sm:$0xff]
    %v484 = vld [vmem:[#allocation6 + $0x704] sm:$0xf]
    %v485 = vld [vmem:[#allocation6 + $0x708] sm:$0xff]
    %v486 = vld [vmem:[#allocation6 + $0x710] sm:$0xff]
    %v487 = vld [vmem:[#allocation6 + $0x718] sm:$0xff]
    %v488 = vld [vmem:[#allocation6 + $0x720] sm:$0xff]
    %v489 = vld [vmem:[#allocation6 + $0x728] sm:$0xff]
    %v490 = vld [vmem:[#allocation6 + $0x730] sm:$0xff]
    %v491 = vld [vmem:[#allocation6 + $0x738] sm:$0xff]
    %v492 = vld [vmem:[#allocation6 + $0x740] sm:$0xff]
    %v493 = vld [vmem:[#allocation6 + $0x748] sm:$0xff]
    %v494 = vld [vmem:[#allocation6 + $0x750] sm:$0xff]
    %v495 = vld [vmem:[#allocation6 + $0x758] sm:$0xff]
    %v496 = vld [vmem:[#allocation6 + $0x760] sm:$0xff]
    %v497 = vld [vmem:[#allocation6 + $0x768] sm:$0xf]
    %v498 = vld [vmem:[#allocation6 + $0x76c] sm:$0xff]
    %v499 = vld [vmem:[#allocation6 + $0x774] sm:$0xff]
    %v500 = vld [vmem:[#allocation6 + $0x77c] sm:$0xff]
    %v501 = vld [vmem:[#allocation6 + $0x784] sm:$0xff]
    %v502 = vld [vmem:[#allocation6 + $0x78c] sm:$0xff]
    %v503 = vld [vmem:[#allocation6 + $0x794] sm:$0xff]
    %v504 = vld [vmem:[#allocation6 + $0x79c] sm:$0xff]
    %v505 = vld [vmem:[#allocation6 + $0x7a4] sm:$0xff]
    %v506 = vld [vmem:[#allocation6 + $0x7ac] sm:$0xff]
    %v507 = vld [vmem:[#allocation6 + $0x7b4] sm:$0xff]
    %v508 = vld [vmem:[#allocation6 + $0x7bc] sm:$0xff]
    %v509 = vld [vmem:[#allocation6 + $0x7c4] sm:$0xff]
    %v510 = vld [vmem:[#allocation6 + $0x7cc] sm:$0xf]
    %v511 = vld [vmem:[#allocation6 + $0x7d0] sm:$0xff]
    %v512 = vld [vmem:[#allocation6 + $0x7d8] sm:$0xff]
    %v513 = vld [vmem:[#allocation6 + $0x7e0] sm:$0xff]
    %v514 = vld [vmem:[#allocation6 + $0x7e8] sm:$0xff]
    %v515 = vld [vmem:[#allocation6 + $0x7f0] sm:$0xff]
    %v516 = vld [vmem:[#allocation6 + $0x7f8] sm:$0xff]
    %v517 = vld [vmem:[#allocation6 + $0x800] sm:$0xff]
    %v518 = vld [vmem:[#allocation6 + $0x808] sm:$0xff]
    %v519 = vld [vmem:[#allocation6 + $0x810] sm:$0xff]
    %v520 = vld [vmem:[#allocation6 + $0x818] sm:$0xff]
    %v521 = vld [vmem:[#allocation6 + $0x820] sm:$0xff]
    %v522 = vld [vmem:[#allocation6 + $0x828] sm:$0xff]
    %v523 = vld [vmem:[#allocation6 + $0x830] sm:$0xf]
    %v524 = vld [vmem:[#allocation6 + $0x834] sm:$0xff]
    %v525 = vld [vmem:[#allocation6 + $0x83c] sm:$0xff]
    %v526 = vld [vmem:[#allocation6 + $0x844] sm:$0xff]
    %v527 = vld [vmem:[#allocation6 + $0x84c] sm:$0xff]
    %v528 = vld [vmem:[#allocation6 + $0x854] sm:$0xff]
    %v529 = vld [vmem:[#allocation6 + $0x85c] sm:$0xff]
    %v530 = vld [vmem:[#allocation6 + $0x864] sm:$0xff]
    %v531 = vld [vmem:[#allocation6 + $0x86c] sm:$0xff]
    %v532 = vld [vmem:[#allocation6 + $0x874] sm:$0xff]
    %v533 = vld [vmem:[#allocation6 + $0x87c] sm:$0xff]
    %v534 = vld [vmem:[#allocation6 + $0x884] sm:$0xff]
    %v535 = vld [vmem:[#allocation6 + $0x88c] sm:$0xff]
    %v536 = vld [vmem:[#allocation6 + $0x894] sm:$0xf]
    %v537 = vld [vmem:[#allocation6 + $0x898] sm:$0xff]
    %v538 = vld [vmem:[#allocation6 + $0x8a0] sm:$0xff]
    %v539 = vld [vmem:[#allocation6 + $0x8a8] sm:$0xff]
    %v540 = vld [vmem:[#allocation6 + $0x8b0] sm:$0xff]
    %v541 = vld [vmem:[#allocation6 + $0x8b8] sm:$0xff]
    %v542 = vld [vmem:[#allocation6 + $0x8c0] sm:$0xff]
    %v543 = vld [vmem:[#allocation6 + $0x8c8] sm:$0xff]
    %v544 = vld [vmem:[#allocation6 + $0x8d0] sm:$0xff]
    %v545 = vld [vmem:[#allocation6 + $0x8d8] sm:$0xff]
    %v546 = vld [vmem:[#allocation6 + $0x8e0] sm:$0xff]
    %v547 = vld [vmem:[#allocation6 + $0x8e8] sm:$0xff]
    %v548 = vld [vmem:[#allocation6 + $0x8f0] sm:$0xff]
    %v549 = vld [vmem:[#allocation6 + $0x8f8] sm:$0xf]
    %v550 = vld [vmem:[#allocation6 + $0x8fc] sm:$0xff]
    %v551 = vld [vmem:[#allocation6 + $0x904] sm:$0xff]
    %v552 = vld [vmem:[#allocation6 + $0x90c] sm:$0xff]
    %v553 = vld [vmem:[#allocation6 + $0x914] sm:$0xff]
    %v554 = vld [vmem:[#allocation6 + $0x91c] sm:$0xff]
    %v555 = vld [vmem:[#allocation6 + $0x924] sm:$0xff]
    %v556 = vld [vmem:[#allocation6 + $0x92c] sm:$0xff]
    %v557 = vld [vmem:[#allocation6 + $0x934] sm:$0xff]
    %v558 = vld [vmem:[#allocation6 + $0x93c] sm:$0xff]
    %v559 = vld [vmem:[#allocation6 + $0x944] sm:$0xff]
    %v560 = vld [vmem:[#allocation6 + $0x94c] sm:$0xff]
    %v561 = vld [vmem:[#allocation6 + $0x954] sm:$0xff]
    %v562 = vld [vmem:[#allocation6 + $0x95c] sm:$0xf]
    %v563 = vld [vmem:[#allocation6 + $0x960] sm:$0xff]
    %v564 = vld [vmem:[#allocation6 + $0x968] sm:$0xff]
    %v565 = vld [vmem:[#allocation6 + $0x970] sm:$0xff]
    %v566 = vld [vmem:[#allocation6 + $0x978] sm:$0xff]
    %v567 = vld [vmem:[#allocation6 + $0x980] sm:$0xff]
    %v568 = vld [vmem:[#allocation6 + $0x988] sm:$0xff]
    %v569 = vld [vmem:[#allocation6 + $0x990] sm:$0xff]
    %v570 = vld [vmem:[#allocation6 + $0x998] sm:$0xff]
    %v571 = vld [vmem:[#allocation6 + $0x9a0] sm:$0xff]
    %v572 = vld [vmem:[#allocation6 + $0x9a8] sm:$0xff]
    %v573 = vld [vmem:[#allocation6 + $0x9b0] sm:$0xff]
    %v574 = vld [vmem:[#allocation6 + $0x9b8] sm:$0xff]
    %v575 = vld [vmem:[#allocation6 + $0x9c0] sm:$0xf]
    %v576 = vld [vmem:[#allocation6 + $0x9c4] sm:$0xff]
    %v577 = vld [vmem:[#allocation6 + $0x9cc] sm:$0xff]
    %v578 = vld [vmem:[#allocation6 + $0x9d4] sm:$0xff]
    %v579 = vld [vmem:[#allocation6 + $0x9dc] sm:$0xff]
    %v580 = vld [vmem:[#allocation6 + $0x9e4] sm:$0xff]
    %v581 = vld [vmem:[#allocation6 + $0x9ec] sm:$0xff]
    %v582 = vld [vmem:[#allocation6 + $0x9f4] sm:$0xff]
    %v583 = vld [vmem:[#allocation6 + $0x9fc] sm:$0xff]
    %v584 = vld [vmem:[#allocation6 + $0xa04] sm:$0xff]
    %v585 = vld [vmem:[#allocation6 + $0xa0c] sm:$0xff]
    %v586 = vld [vmem:[#allocation6 + $0xa14] sm:$0xff]
    %v587 = vld [vmem:[#allocation6 + $0xa1c] sm:$0xff]
    %v588 = vld [vmem:[#allocation6 + $0xa24] sm:$0xf]
    %v589 = vld [vmem:[#allocation6 + $0xa28] sm:$0xff]
    %v590 = vld [vmem:[#allocation6 + $0xa30] sm:$0xff]
    %v591 = vld [vmem:[#allocation6 + $0xa38] sm:$0xff]
    %v592 = vld [vmem:[#allocation6 + $0xa40] sm:$0xff]
    %v593 = vld [vmem:[#allocation6 + $0xa48] sm:$0xff]
    %v594 = vld [vmem:[#allocation6 + $0xa50] sm:$0xff]
    %v595 = vld [vmem:[#allocation6 + $0xa58] sm:$0xff]
    %v596 = vld [vmem:[#allocation6 + $0xa60] sm:$0xff]
    %v597 = vld [vmem:[#allocation6 + $0xa68] sm:$0xff]
    %v598 = vld [vmem:[#allocation6 + $0xa70] sm:$0xff]
    %v599 = vld [vmem:[#allocation6 + $0xa78] sm:$0xff]
    %v600 = vld [vmem:[#allocation6 + $0xa80] sm:$0xff]
    %v601 = vld [vmem:[#allocation6 + $0xa88] sm:$0xf]
    %v602 = vld [vmem:[#allocation6 + $0xa8c] sm:$0xff]
    %v603 = vld [vmem:[#allocation6 + $0xa94] sm:$0xff]
    %v604 = vld [vmem:[#allocation6 + $0xa9c] sm:$0xff]
    %v605 = vld [vmem:[#allocation6 + $0xaa4] sm:$0xff]
    %v606 = vld [vmem:[#allocation6 + $0xaac] sm:$0xff]
    %v607 = vld [vmem:[#allocation6 + $0xab4] sm:$0xff]
    %v608 = vld [vmem:[#allocation6 + $0xabc] sm:$0xff]
    %v609 = vld [vmem:[#allocation6 + $0xac4] sm:$0xff]
    %v610 = vld [vmem:[#allocation6 + $0xacc] sm:$0xff]
    %v611 = vld [vmem:[#allocation6 + $0xad4] sm:$0xff]
    %v612 = vld [vmem:[#allocation6 + $0xadc] sm:$0xff]
    %v613 = vld [vmem:[#allocation6 + $0xae4] sm:$0xff]
    %v614 = vld [vmem:[#allocation6 + $0xaec] sm:$0xf]
    %v615 = vld [vmem:[#allocation6 + $0xaf0] sm:$0xff]
    %v616 = vld [vmem:[#allocation6 + $0xaf8] sm:$0xff]
    %v617 = vld [vmem:[#allocation6 + $0xb00] sm:$0xff]
    %v618 = vld [vmem:[#allocation6 + $0xb08] sm:$0xff]
    %v619 = vld [vmem:[#allocation6 + $0xb10] sm:$0xff]
    %v620 = vld [vmem:[#allocation6 + $0xb18] sm:$0xff]
    %v621 = vld [vmem:[#allocation6 + $0xb20] sm:$0xff]
    %v622 = vld [vmem:[#allocation6 + $0xb28] sm:$0xff]
    %v623 = vld [vmem:[#allocation6 + $0xb30] sm:$0xff]
    %v624 = vld [vmem:[#allocation6 + $0xb38] sm:$0xff]
    %v625 = vld [vmem:[#allocation6 + $0xb40] sm:$0xff]
    %v626 = vld [vmem:[#allocation6 + $0xb48] sm:$0xff]
    %v627 = vld [vmem:[#allocation6 + $0xb50] sm:$0xf]
    %v628 = vld [vmem:[#allocation6 + $0xb54] sm:$0xff]
    %v629 = vld [vmem:[#allocation6 + $0xb5c] sm:$0xff]
    %v630 = vld [vmem:[#allocation6 + $0xb64] sm:$0xff]
    %v631 = vld [vmem:[#allocation6 + $0xb6c] sm:$0xff]
    %v632 = vld [vmem:[#allocation6 + $0xb74] sm:$0xff]
    %v633 = vld [vmem:[#allocation6 + $0xb7c] sm:$0xff]
    %v634 = vld [vmem:[#allocation6 + $0xb84] sm:$0xff]
    %v635 = vld [vmem:[#allocation6 + $0xb8c] sm:$0xff]
    %v636 = vld [vmem:[#allocation6 + $0xb94] sm:$0xff]
    %v637 = vld [vmem:[#allocation6 + $0xb9c] sm:$0xff]
    %v638 = vld [vmem:[#allocation6 + $0xba4] sm:$0xff]
    %v639 = vld [vmem:[#allocation6 + $0xbac] sm:$0xff]
    %v640 = vld [vmem:[#allocation6 + $0xbb4] sm:$0xf]
    %v641 = vld [vmem:[#allocation6 + $0xbb8] sm:$0xff]
    %v642 = vld [vmem:[#allocation6 + $0xbc0] sm:$0xff]
    %v643 = vld [vmem:[#allocation6 + $0xbc8] sm:$0xff]
    %v644 = vld [vmem:[#allocation6 + $0xbd0] sm:$0xff]
    %v645 = vld [vmem:[#allocation6 + $0xbd8] sm:$0xff]
    %v646 = vld [vmem:[#allocation6 + $0xbe0] sm:$0xff]
    %v647 = vld [vmem:[#allocation6 + $0xbe8] sm:$0xff]
    %v648 = vld [vmem:[#allocation6 + $0xbf0] sm:$0xff]
    %v649 = vld [vmem:[#allocation6 + $0xbf8] sm:$0xff]
    %v650 = vld [vmem:[#allocation6 + $0xc00] sm:$0xff]
    %v651 = vld [vmem:[#allocation6 + $0xc08] sm:$0xff]
    %v652 = vld [vmem:[#allocation6 + $0xc10] sm:$0xff]
    %v653 = vld [vmem:[#allocation6 + $0xc18] sm:$0xf]
    %v654 = vld [vmem:[#allocation6 + $0xc1c] sm:$0xff]
    %v655 = vld [vmem:[#allocation6 + $0xc24] sm:$0xff]
    %v656 = vld [vmem:[#allocation6 + $0xc2c] sm:$0xff]
    %v657 = vld [vmem:[#allocation6 + $0xc34] sm:$0xff]
    %v658 = vld [vmem:[#allocation6 + $0xc3c] sm:$0xff]
    %v659 = vld [vmem:[#allocation6 + $0xc44] sm:$0xff]
    %v660 = vld [vmem:[#allocation6 + $0xc4c] sm:$0xff]
    %v661 = vld [vmem:[#allocation6 + $0xc54] sm:$0xff]
    %v662 = vld [vmem:[#allocation6 + $0xc5c] sm:$0xff]
    %v663 = vld [vmem:[#allocation6 + $0xc64] sm:$0xff]
    %v664 = vld [vmem:[#allocation6 + $0xc6c] sm:$0xff]
    %v665 = vld [vmem:[#allocation6 + $0xc74] sm:$0xff]
    %v666 = vld [vmem:[#allocation6 + $0xc7c] sm:$0xf]
    %v667 = vld [vmem:[#allocation6 + $0xc80] sm:$0xff]
    %v668 = vld [vmem:[#allocation6 + $0xc88] sm:$0xff]
    %v669 = vld [vmem:[#allocation6 + $0xc90] sm:$0xff]
    %v670 = vld [vmem:[#allocation6 + $0xc98] sm:$0xff]
    %v671 = vld [vmem:[#allocation6 + $0xca0] sm:$0xff]
    %v672 = vld [vmem:[#allocation6 + $0xca8] sm:$0xff]
    %v673 = vld [vmem:[#allocation6 + $0xcb0] sm:$0xff]
    %v674 = vld [vmem:[#allocation6 + $0xcb8] sm:$0xff]
    %v675 = vld [vmem:[#allocation6 + $0xcc0] sm:$0xff]
    %v676 = vld [vmem:[#allocation6 + $0xcc8] sm:$0xff]
    %v677 = vld [vmem:[#allocation6 + $0xcd0] sm:$0xff]
    %v678 = vld [vmem:[#allocation6 + $0xcd8] sm:$0xff]
    %v679 = vld [vmem:[#allocation6 + $0xce0] sm:$0xf]
    %v680 = vld [vmem:[#allocation6 + $0xce4] sm:$0xff]
    %v681 = vld [vmem:[#allocation6 + $0xcec] sm:$0xff]
    %v682 = vld [vmem:[#allocation6 + $0xcf4] sm:$0xff]
    %v683 = vld [vmem:[#allocation6 + $0xcfc] sm:$0xff]
    %v684 = vld [vmem:[#allocation6 + $0xd04] sm:$0xff]
    %v685 = vld [vmem:[#allocation6 + $0xd0c] sm:$0xff]
    %v686 = vld [vmem:[#allocation6 + $0xd14] sm:$0xff]
    %v687 = vld [vmem:[#allocation6 + $0xd1c] sm:$0xff]
    %v688 = vld [vmem:[#allocation6 + $0xd24] sm:$0xff]
    %v689 = vld [vmem:[#allocation6 + $0xd2c] sm:$0xff]
    %v690 = vld [vmem:[#allocation6 + $0xd34] sm:$0xff]
    %v691 = vld [vmem:[#allocation6 + $0xd3c] sm:$0xff]
    %v692 = vld [vmem:[#allocation6 + $0xd44] sm:$0xf]
    %v693 = vld [vmem:[#allocation6 + $0xd48] sm:$0xff]
    %v694 = vld [vmem:[#allocation6 + $0xd50] sm:$0xff]
    %v695 = vld [vmem:[#allocation6 + $0xd58] sm:$0xff]
    %v696 = vld [vmem:[#allocation6 + $0xd60] sm:$0xff]
    %v697 = vld [vmem:[#allocation6 + $0xd68] sm:$0xff]
    %v698 = vld [vmem:[#allocation6 + $0xd70] sm:$0xff]
    %v699 = vld [vmem:[#allocation6 + $0xd78] sm:$0xff]
    %v700 = vld [vmem:[#allocation6 + $0xd80] sm:$0xff]
    %v701 = vld [vmem:[#allocation6 + $0xd88] sm:$0xff]
    %v702 = vld [vmem:[#allocation6 + $0xd90] sm:$0xff]
    %v703 = vld [vmem:[#allocation6 + $0xd98] sm:$0xff]
    %v704 = vld [vmem:[#allocation6 + $0xda0] sm:$0xff]
    %v705 = vld [vmem:[#allocation6 + $0xda8] sm:$0xf]
    %v706 = vld [vmem:[#allocation6 + $0xdac] sm:$0xff]
    %v707 = vld [vmem:[#allocation6 + $0xdb4] sm:$0xff]
    %v708 = vld [vmem:[#allocation6 + $0xdbc] sm:$0xff]
    %v709 = vld [vmem:[#allocation6 + $0xdc4] sm:$0xff]
    %v710 = vld [vmem:[#allocation6 + $0xdcc] sm:$0xff]
    %v711 = vld [vmem:[#allocation6 + $0xdd4] sm:$0xff]
    %v712 = vld [vmem:[#allocation6 + $0xddc] sm:$0xff]
    %v713 = vld [vmem:[#allocation6 + $0xde4] sm:$0xff]
    %v714 = vld [vmem:[#allocation6 + $0xdec] sm:$0xff]
    %v715 = vld [vmem:[#allocation6 + $0xdf4] sm:$0xff]
    %v716 = vld [vmem:[#allocation6 + $0xdfc] sm:$0xff]
    %v717 = vld [vmem:[#allocation6 + $0xe04] sm:$0xff]
    %v718 = vld [vmem:[#allocation6 + $0xe0c] sm:$0xf]
    %v719 = vld [vmem:[#allocation6 + $0xe10] sm:$0xff]
    %v720 = vld [vmem:[#allocation6 + $0xe18] sm:$0xff]
    %v721 = vld [vmem:[#allocation6 + $0xe20] sm:$0xff]
    %v722 = vld [vmem:[#allocation6 + $0xe28] sm:$0xff]
    %v723 = vld [vmem:[#allocation6 + $0xe30] sm:$0xff]
    %v724 = vld [vmem:[#allocation6 + $0xe38] sm:$0xff]
    %v725 = vld [vmem:[#allocation6 + $0xe40] sm:$0xff]
    %v726 = vld [vmem:[#allocation6 + $0xe48] sm:$0xff]
    %v727 = vld [vmem:[#allocation6 + $0xe50] sm:$0xff]
    %v728 = vld [vmem:[#allocation6 + $0xe58] sm:$0xff]
    %v729 = vld [vmem:[#allocation6 + $0xe60] sm:$0xff]
    %v730 = vld [vmem:[#allocation6 + $0xe68] sm:$0xff]
    %v731 = vld [vmem:[#allocation6 + $0xe70] sm:$0xf]
    %v732 = vld [vmem:[#allocation6 + $0xe74] sm:$0xff]
    %v733 = vld [vmem:[#allocation6 + $0xe7c] sm:$0xff]
    %v734 = vld [vmem:[#allocation6 + $0xe84] sm:$0xff]
    %v735 = vld [vmem:[#allocation6 + $0xe8c] sm:$0xff]
    %v736 = vld [vmem:[#allocation6 + $0xe94] sm:$0xff]
    %v737 = vld [vmem:[#allocation6 + $0xe9c] sm:$0xff]
    %v738 = vld [vmem:[#allocation6 + $0xea4] sm:$0xff]
    %v739 = vld [vmem:[#allocation6 + $0xeac] sm:$0xff]
    %v740 = vld [vmem:[#allocation6 + $0xeb4] sm:$0xff]
    %v741 = vld [vmem:[#allocation6 + $0xebc] sm:$0xff]
    %v742 = vld [vmem:[#allocation6 + $0xec4] sm:$0xff]
    %v743 = vld [vmem:[#allocation6 + $0xecc] sm:$0xff]
    %v744 = vld [vmem:[#allocation6 + $0xed4] sm:$0xf]
    %v745 = vld [vmem:[#allocation6 + $0xed8] sm:$0xff]
    %v746 = vld [vmem:[#allocation6 + $0xee0] sm:$0xff]
    %v747 = vld [vmem:[#allocation6 + $0xee8] sm:$0xff]
    %v748 = vld [vmem:[#allocation6 + $0xef0] sm:$0xff]
    %v749 = vld [vmem:[#allocation6 + $0xef8] sm:$0xff]
    %v750 = vld [vmem:[#allocation6 + $0xf00] sm:$0xff]
    %v751 = vld [vmem:[#allocation6 + $0xf08] sm:$0xff]
    %v752 = vld [vmem:[#allocation6 + $0xf10] sm:$0xff]
    %v753 = vld [vmem:[#allocation6 + $0xf18] sm:$0xff]
    %v754 = vld [vmem:[#allocation6 + $0xf20] sm:$0xff]
    %v755 = vld [vmem:[#allocation6 + $0xf28] sm:$0xff]
    %v756 = vld [vmem:[#allocation6 + $0xf30] sm:$0xff]
    %v757 = vld [vmem:[#allocation6 + $0xf38] sm:$0xf]
    %v758 = vld [vmem:[#allocation6 + $0xf3c] sm:$0xff]
    %v759 = vld [vmem:[#allocation6 + $0xf44] sm:$0xff]
    %v760 = vld [vmem:[#allocation6 + $0xf4c] sm:$0xff]
    %v761 = vld [vmem:[#allocation6 + $0xf54] sm:$0xff]
    %v762 = vld [vmem:[#allocation6 + $0xf5c] sm:$0xff]
    %v763 = vld [vmem:[#allocation6 + $0xf64] sm:$0xff]
    %v764 = vld [vmem:[#allocation6 + $0xf6c] sm:$0xff]
    %v765 = vld [vmem:[#allocation6 + $0xf74] sm:$0xff]
    %v766 = vld [vmem:[#allocation6 + $0xf7c] sm:$0xff]
    %v767 = vld [vmem:[#allocation6 + $0xf84] sm:$0xff]
    %v768 = vld [vmem:[#allocation6 + $0xf8c] sm:$0xff]
    %v769 = vld [vmem:[#allocation6 + $0xf94] sm:$0xff]
    %v770 = vld [vmem:[#allocation6 + $0xf9c] sm:$0xf]
    %v771 = vld [vmem:[#allocation6 + $0xfa0] sm:$0xff]
    %v772 = vld [vmem:[#allocation6 + $0xfa8] sm:$0xff]
    %v773 = vld [vmem:[#allocation6 + $0xfb0] sm:$0xff]
    %v774 = vld [vmem:[#allocation6 + $0xfb8] sm:$0xff]
    %v775 = vld [vmem:[#allocation6 + $0xfc0] sm:$0xff]
    %v776 = vld [vmem:[#allocation6 + $0xfc8] sm:$0xff]
    %v777 = vld [vmem:[#allocation6 + $0xfd0] sm:$0xff]
    %v778 = vld [vmem:[#allocation6 + $0xfd8] sm:$0xff]
    %v779 = vld [vmem:[#allocation6 + $0xfe0] sm:$0xff]
    %v780 = vld [vmem:[#allocation6 + $0xfe8] sm:$0xff]
    %v781 = vld [vmem:[#allocation6 + $0xff0] sm:$0xff]
    %v782 = vld [vmem:[#allocation6 + $0xff8] sm:$0xff]
    %v783 = vld [vmem:[#allocation6 + $0x1000] sm:$0xf]
    %v784 = vld [vmem:[#allocation6 + $0x1004] sm:$0xff]
    %v785 = vld [vmem:[#allocation6 + $0x100c] sm:$0xff]
    %v786 = vld [vmem:[#allocation6 + $0x1014] sm:$0xff]
    %v787 = vld [vmem:[#allocation6 + $0x101c] sm:$0xff]
    %v788 = vld [vmem:[#allocation6 + $0x1024] sm:$0xff]
    %v789 = vld [vmem:[#allocation6 + $0x102c] sm:$0xff]
    %v790 = vld [vmem:[#allocation6 + $0x1034] sm:$0xff]
    %v791 = vld [vmem:[#allocation6 + $0x103c] sm:$0xff]
    %v792 = vld [vmem:[#allocation6 + $0x1044] sm:$0xff]
    %v793 = vld [vmem:[#allocation6 + $0x104c] sm:$0xff]
    %v794 = vld [vmem:[#allocation6 + $0x1054] sm:$0xff]
    %v795 = vld [vmem:[#allocation6 + $0x105c] sm:$0xff]
    %v796 = vld [vmem:[#allocation6 + $0x1064] sm:$0xf]
    %v797 = vld [vmem:[#allocation6 + $0x1068] sm:$0xff]
    %v798 = vld [vmem:[#allocation6 + $0x1070] sm:$0xff]
    %v799 = vld [vmem:[#allocation6 + $0x1078] sm:$0xff]
    %v800 = vld [vmem:[#allocation6 + $0x1080] sm:$0xff]
    %v801 = vld [vmem:[#allocation6 + $0x1088] sm:$0xff]
    %v802 = vld [vmem:[#allocation6 + $0x1090] sm:$0xff]
    %v803 = vld [vmem:[#allocation6 + $0x1098] sm:$0xff]
    %v804 = vld [vmem:[#allocation6 + $0x10a0] sm:$0xff]
    %v805 = vld [vmem:[#allocation6 + $0x10a8] sm:$0xff]
    %v806 = vld [vmem:[#allocation6 + $0x10b0] sm:$0xff]
    %v807 = vld [vmem:[#allocation6 + $0x10b8] sm:$0xff]
    %v808 = vld [vmem:[#allocation6 + $0x10c0] sm:$0xff]
    %v809 = vld [vmem:[#allocation6 + $0x10c8] sm:$0xf]
    %v810 = vld [vmem:[#allocation6 + $0x10cc] sm:$0xff]
    %v811 = vld [vmem:[#allocation6 + $0x10d4] sm:$0xff]
    %v812 = vld [vmem:[#allocation6 + $0x10dc] sm:$0xff]
    %v813 = vld [vmem:[#allocation6 + $0x10e4] sm:$0xff]
    %v814 = vld [vmem:[#allocation6 + $0x10ec] sm:$0xff]
    %v815 = vld [vmem:[#allocation6 + $0x10f4] sm:$0xff]
    %v816 = vld [vmem:[#allocation6 + $0x10fc] sm:$0xff]
    %v817 = vld [vmem:[#allocation6 + $0x1104] sm:$0xff]
    %v818 = vld [vmem:[#allocation6 + $0x110c] sm:$0xff]
    %v819 = vld [vmem:[#allocation6 + $0x1114] sm:$0xff]
    %v820 = vld [vmem:[#allocation6 + $0x111c] sm:$0xff]
    %v821 = vld [vmem:[#allocation6 + $0x1124] sm:$0xff]
    %v822 = vld [vmem:[#allocation6 + $0x112c] sm:$0xf]
    %v823 = vld [vmem:[#allocation6 + $0x1130] sm:$0xff]
    %v824 = vld [vmem:[#allocation6 + $0x1138] sm:$0xff]
    %v825 = vld [vmem:[#allocation6 + $0x1140] sm:$0xff]
    %v826 = vld [vmem:[#allocation6 + $0x1148] sm:$0xff]
    %v827 = vld [vmem:[#allocation6 + $0x1150] sm:$0xff]
    %v828 = vld [vmem:[#allocation6 + $0x1158] sm:$0xff]
    %v829 = vld [vmem:[#allocation6 + $0x1160] sm:$0xff]
    %v830 = vld [vmem:[#allocation6 + $0x1168] sm:$0xff]
    %v831 = vld [vmem:[#allocation6 + $0x1170] sm:$0xff]
    %v832 = vld [vmem:[#allocation6 + $0x1178] sm:$0xff]
    %v833 = vld [vmem:[#allocation6 + $0x1180] sm:$0xff]
    %v834 = vld [vmem:[#allocation6 + $0x1188] sm:$0xff]
    %v835 = vld [vmem:[#allocation6 + $0x1190] sm:$0xf]
    %v836 = vld [vmem:[#allocation6 + $0x1194] sm:$0xff]
    %v837 = vld [vmem:[#allocation6 + $0x119c] sm:$0xff]
    %v838 = vld [vmem:[#allocation6 + $0x11a4] sm:$0xff]
    %v839 = vld [vmem:[#allocation6 + $0x11ac] sm:$0xff]
    %v840 = vld [vmem:[#allocation6 + $0x11b4] sm:$0xff]
    %v841 = vld [vmem:[#allocation6 + $0x11bc] sm:$0xff]
    %v842 = vld [vmem:[#allocation6 + $0x11c4] sm:$0xff]
    %v843 = vld [vmem:[#allocation6 + $0x11cc] sm:$0xff]
    %v844 = vld [vmem:[#allocation6 + $0x11d4] sm:$0xff]
    %v845 = vld [vmem:[#allocation6 + $0x11dc] sm:$0xff]
    %v846 = vld [vmem:[#allocation6 + $0x11e4] sm:$0xff]
    %v847 = vld [vmem:[#allocation6 + $0x11ec] sm:$0xff]
    %v848 = vld [vmem:[#allocation6 + $0x11f4] sm:$0xf]
    %v849 = vld [vmem:[#allocation6 + $0x11f8] sm:$0xff]
    %v850 = vld [vmem:[#allocation6 + $0x1200] sm:$0xff]
    %v851 = vld [vmem:[#allocation6 + $0x1208] sm:$0xff]
    %v852 = vld [vmem:[#allocation6 + $0x1210] sm:$0xff]
    %v853 = vld [vmem:[#allocation6 + $0x1218] sm:$0xff]
    %v854 = vld [vmem:[#allocation6 + $0x1220] sm:$0xff]
    %v855 = vld [vmem:[#allocation6 + $0x1228] sm:$0xff]
    %v856 = vld [vmem:[#allocation6 + $0x1230] sm:$0xff]
    %v857 = vld [vmem:[#allocation6 + $0x1238] sm:$0xff]
    %v858 = vld [vmem:[#allocation6 + $0x1240] sm:$0xff]
    %v859 = vld [vmem:[#allocation6 + $0x1248] sm:$0xff]
    %v860 = vld [vmem:[#allocation6 + $0x1250] sm:$0xff]
    %v861 = vld [vmem:[#allocation6 + $0x1258] sm:$0xf]
    %v862 = vld [vmem:[#allocation6 + $0x125c] sm:$0xff]
    %v863 = vld [vmem:[#allocation6 + $0x1264] sm:$0xff]
    %v864 = vld [vmem:[#allocation6 + $0x126c] sm:$0xff]
    %v865 = vld [vmem:[#allocation6 + $0x1274] sm:$0xff]
    %v866 = vld [vmem:[#allocation6 + $0x127c] sm:$0xff]
    %v867 = vld [vmem:[#allocation6 + $0x1284] sm:$0xff]
    %v868 = vld [vmem:[#allocation6 + $0x128c] sm:$0xff]
    %v869 = vld [vmem:[#allocation6 + $0x1294] sm:$0xff]
    %v870 = vld [vmem:[#allocation6 + $0x129c] sm:$0xff]
    %v871 = vld [vmem:[#allocation6 + $0x12a4] sm:$0xff]
    %v872 = vld [vmem:[#allocation6 + $0x12ac] sm:$0xff]
    %v873 = vld [vmem:[#allocation6 + $0x12b4] sm:$0xff]
    %v874 = vld [vmem:[#allocation6 + $0x12bc] sm:$0xf]
    %v875 = vld [vmem:[#allocation6 + $0x12c0] sm:$0xff]
    %v876 = vld [vmem:[#allocation6 + $0x12c8] sm:$0xff]
    %v877 = vld [vmem:[#allocation6 + $0x12d0] sm:$0xff]
    %v878 = vld [vmem:[#allocation6 + $0x12d8] sm:$0xff]
    %v879 = vld [vmem:[#allocation6 + $0x12e0] sm:$0xff]
    %v880 = vld [vmem:[#allocation6 + $0x12e8] sm:$0xff]
    %v881 = vld [vmem:[#allocation6 + $0x12f0] sm:$0xff]
    %v882 = vld [vmem:[#allocation6 + $0x12f8] sm:$0xff]
    %v883 = vld [vmem:[#allocation6 + $0x1300] sm:$0xff]
    %v884 = vld [vmem:[#allocation6 + $0x1308] sm:$0xff]
    %v885 = vld [vmem:[#allocation6 + $0x1310] sm:$0xff]
    %v886 = vld [vmem:[#allocation6 + $0x1318] sm:$0xff]
    %v887 = vld [vmem:[#allocation6 + $0x1320] sm:$0xf]
    %v888 = vld [vmem:[#allocation6 + $0x1324] sm:$0xff]
    %v889 = vld [vmem:[#allocation6 + $0x132c] sm:$0xff]
    %v890 = vld [vmem:[#allocation6 + $0x1334] sm:$0xff]
    %v891 = vld [vmem:[#allocation6 + $0x133c] sm:$0xff]
    %v892 = vld [vmem:[#allocation6 + $0x1344] sm:$0xff]
    %v893 = vld [vmem:[#allocation6 + $0x134c] sm:$0xff]
    %v894 = vld [vmem:[#allocation6 + $0x1354] sm:$0xff]
    %v895 = vld [vmem:[#allocation6 + $0x135c] sm:$0xff]
    %v896 = vld [vmem:[#allocation6 + $0x1364] sm:$0xff]
    %v897 = vld [vmem:[#allocation6 + $0x136c] sm:$0xff]
    %v898 = vld [vmem:[#allocation6 + $0x1374] sm:$0xff]
    %v899 = vld [vmem:[#allocation6 + $0x137c] sm:$0xff]
    %v900 = vld [vmem:[#allocation6 + $0x1384] sm:$0xf]
    %v901 = vld [vmem:[#allocation6 + $0x1388] sm:$0xff]
    %v902 = vld [vmem:[#allocation6 + $0x1390] sm:$0xff]
    %v903 = vld [vmem:[#allocation6 + $0x1398] sm:$0xff]
    %v904 = vld [vmem:[#allocation6 + $0x13a0] sm:$0xff]
    %v905 = vld [vmem:[#allocation6 + $0x13a8] sm:$0xff]
    %v906 = vld [vmem:[#allocation6 + $0x13b0] sm:$0xff]
    %v907 = vld [vmem:[#allocation6 + $0x13b8] sm:$0xff]
    %v908 = vld [vmem:[#allocation6 + $0x13c0] sm:$0xff]
    %v909 = vld [vmem:[#allocation6 + $0x13c8] sm:$0xff]
    %v910 = vld [vmem:[#allocation6 + $0x13d0] sm:$0xff]
    %v911 = vld [vmem:[#allocation6 + $0x13d8] sm:$0xff]
    %v912 = vld [vmem:[#allocation6 + $0x13e0] sm:$0xff]
    %v913 = vld [vmem:[#allocation6 + $0x13e8] sm:$0xf]
    %v914 = vld [vmem:[#allocation6 + $0x13ec] sm:$0xff]
    %v915 = vld [vmem:[#allocation6 + $0x13f4] sm:$0xff]
    %v916 = vld [vmem:[#allocation6 + $0x13fc] sm:$0xff]
    %v917 = vld [vmem:[#allocation6 + $0x1404] sm:$0xff]
    %v918 = vld [vmem:[#allocation6 + $0x140c] sm:$0xff]
    %v919 = vld [vmem:[#allocation6 + $0x1414] sm:$0xff]
    %v920 = vld [vmem:[#allocation6 + $0x141c] sm:$0xff]
    %v921 = vld [vmem:[#allocation6 + $0x1424] sm:$0xff]
    %v922 = vld [vmem:[#allocation6 + $0x142c] sm:$0xff]
    %v923 = vld [vmem:[#allocation6 + $0x1434] sm:$0xff]
    %v924 = vld [vmem:[#allocation6 + $0x143c] sm:$0xff]
    %v925 = vld [vmem:[#allocation6 + $0x1444] sm:$0xff]
    %v926 = vld [vmem:[#allocation6 + $0x144c] sm:$0xf]
    %v927 = vld [vmem:[#allocation6 + $0x1450] sm:$0xff]
    %v928 = vld [vmem:[#allocation6 + $0x1458] sm:$0xff]
    %v929 = vld [vmem:[#allocation6 + $0x1460] sm:$0xff]
    %v930 = vld [vmem:[#allocation6 + $0x1468] sm:$0xff]
    %v931 = vld [vmem:[#allocation6 + $0x1470] sm:$0xff]
    %v932 = vld [vmem:[#allocation6 + $0x1478] sm:$0xff]
    %v933 = vld [vmem:[#allocation6 + $0x1480] sm:$0xff]
    %v934 = vld [vmem:[#allocation6 + $0x1488] sm:$0xff]
    %v935 = vld [vmem:[#allocation6 + $0x1490] sm:$0xff]
    %v936 = vld [vmem:[#allocation6 + $0x1498] sm:$0xff]
    %v937 = vld [vmem:[#allocation6 + $0x14a0] sm:$0xff]
    %v938 = vld [vmem:[#allocation6 + $0x14a8] sm:$0xff]
    %v939 = vld [vmem:[#allocation6 + $0x14b0] sm:$0xf]
    %v940 = vld [vmem:[#allocation6 + $0x14b4] sm:$0xff]
    %v941 = vld [vmem:[#allocation6 + $0x14bc] sm:$0xff]
    %v942 = vld [vmem:[#allocation6 + $0x14c4] sm:$0xff]
    %v943 = vld [vmem:[#allocation6 + $0x14cc] sm:$0xff]
    %v944 = vld [vmem:[#allocation6 + $0x14d4] sm:$0xff]
    %v945 = vld [vmem:[#allocation6 + $0x14dc] sm:$0xff]
    %v946 = vld [vmem:[#allocation6 + $0x14e4] sm:$0xff]
    %v947 = vld [vmem:[#allocation6 + $0x14ec] sm:$0xff]
    %v948 = vld [vmem:[#allocation6 + $0x14f4] sm:$0xff]
    %v949 = vld [vmem:[#allocation6 + $0x14fc] sm:$0xff]
    %v950 = vld [vmem:[#allocation6 + $0x1504] sm:$0xff]
    %v951 = vld [vmem:[#allocation6 + $0x150c] sm:$0xff]
    %v952 = vld [vmem:[#allocation6 + $0x1514] sm:$0xf]
    %v953 = vld [vmem:[#allocation6 + $0x1518] sm:$0xff]
    %v954 = vld [vmem:[#allocation6 + $0x1520] sm:$0xff]
    %v955 = vld [vmem:[#allocation6 + $0x1528] sm:$0xff]
    %v956 = vld [vmem:[#allocation6 + $0x1530] sm:$0xff]
    %v957 = vld [vmem:[#allocation6 + $0x1538] sm:$0xff]
    %v958 = vld [vmem:[#allocation6 + $0x1540] sm:$0xff]
    %v959 = vld [vmem:[#allocation6 + $0x1548] sm:$0xff]
    %v960 = vld [vmem:[#allocation6 + $0x1550] sm:$0xff]
    %v961 = vld [vmem:[#allocation6 + $0x1558] sm:$0xff]
    %v962 = vld [vmem:[#allocation6 + $0x1560] sm:$0xff]
    %v963 = vld [vmem:[#allocation6 + $0x1568] sm:$0xff]
    %v964 = vld [vmem:[#allocation6 + $0x1570] sm:$0xff]
    %v965 = vld [vmem:[#allocation6 + $0x1578] sm:$0xf]
    %v966 = vld [vmem:[#allocation6 + $0x157c] sm:$0xff]
    %v967 = vld [vmem:[#allocation6 + $0x1584] sm:$0xff]
    %v968 = vld [vmem:[#allocation6 + $0x158c] sm:$0xff]
    %v969 = vld [vmem:[#allocation6 + $0x1594] sm:$0xff]
    %v970 = vld [vmem:[#allocation6 + $0x159c] sm:$0xff]
    %v971 = vld [vmem:[#allocation6 + $0x15a4] sm:$0xff]
    %v972 = vld [vmem:[#allocation6 + $0x15ac] sm:$0xff]
    %v973 = vld [vmem:[#allocation6 + $0x15b4] sm:$0xff]
    %v974 = vld [vmem:[#allocation6 + $0x15bc] sm:$0xff]
    %v975 = vld [vmem:[#allocation6 + $0x15c4] sm:$0xff]
    %v976 = vld [vmem:[#allocation6 + $0x15cc] sm:$0xff]
    %v977 = vld [vmem:[#allocation6 + $0x15d4] sm:$0xff]
    %v978 = vld [vmem:[#allocation6 + $0x15dc] sm:$0xf]
    %v979 = vld [vmem:[#allocation6 + $0x15e0] sm:$0xff]
    %v980 = vld [vmem:[#allocation6 + $0x15e8] sm:$0xff]
    %v981 = vld [vmem:[#allocation6 + $0x15f0] sm:$0xff]
    %v982 = vld [vmem:[#allocation6 + $0x15f8] sm:$0xff]
    %v983 = vld [vmem:[#allocation6 + $0x1600] sm:$0xff]
    %v984 = vld [vmem:[#allocation6 + $0x1608] sm:$0xff]
    %v985 = vld [vmem:[#allocation6 + $0x1610] sm:$0xff]
    %v986 = vld [vmem:[#allocation6 + $0x1618] sm:$0xff]
    %v987 = vld [vmem:[#allocation6 + $0x1620] sm:$0xff]
    %v988 = vld [vmem:[#allocation6 + $0x1628] sm:$0xff]
    %v989 = vld [vmem:[#allocation6 + $0x1630] sm:$0xff]
    %v990 = vld [vmem:[#allocation6 + $0x1638] sm:$0xff]
    %v991 = vld [vmem:[#allocation6 + $0x1640] sm:$0xf]
    %v992 = vld [vmem:[#allocation6 + $0x1644] sm:$0xff]
    %v993 = vld [vmem:[#allocation6 + $0x164c] sm:$0xff]
    %v994 = vld [vmem:[#allocation6 + $0x1654] sm:$0xff]
    %v995 = vld [vmem:[#allocation6 + $0x165c] sm:$0xff]
    %v996 = vld [vmem:[#allocation6 + $0x1664] sm:$0xff]
    %v997 = vld [vmem:[#allocation6 + $0x166c] sm:$0xff]
    %v998 = vld [vmem:[#allocation6 + $0x1674] sm:$0xff]
    %v999 = vld [vmem:[#allocation6 + $0x167c] sm:$0xff]
    %v1000 = vld [vmem:[#allocation6 + $0x1684] sm:$0xff]
    %v1001 = vld [vmem:[#allocation6 + $0x168c] sm:$0xff]
    %v1002 = vld [vmem:[#allocation6 + $0x1694] sm:$0xff]
    %v1003 = vld [vmem:[#allocation6 + $0x169c] sm:$0xff]
    %v1004 = vld [vmem:[#allocation6 + $0x16a4] sm:$0xf]
    %v1005 = vld [vmem:[#allocation6 + $0x16a8] sm:$0xff]
    %v1006 = vld [vmem:[#allocation6 + $0x16b0] sm:$0xff]
    %v1007 = vld [vmem:[#allocation6 + $0x16b8] sm:$0xff]
    %v1008 = vld [vmem:[#allocation6 + $0x16c0] sm:$0xff]
    %v1009 = vld [vmem:[#allocation6 + $0x16c8] sm:$0xff]
    %v1010 = vld [vmem:[#allocation6 + $0x16d0] sm:$0xff]
    %v1011 = vld [vmem:[#allocation6 + $0x16d8] sm:$0xff]
    %v1012 = vld [vmem:[#allocation6 + $0x16e0] sm:$0xff]
    %v1013 = vld [vmem:[#allocation6 + $0x16e8] sm:$0xff]
    %v1014 = vld [vmem:[#allocation6 + $0x16f0] sm:$0xff]
    %v1015 = vld [vmem:[#allocation6 + $0x16f8] sm:$0xff]
    %v1016 = vld [vmem:[#allocation6 + $0x1700] sm:$0xff]
    %v1017 = vld [vmem:[#allocation6 + $0x1708] sm:$0xf]
    %v1018 = vld [vmem:[#allocation6 + $0x170c] sm:$0xff]
    %v1019 = vld [vmem:[#allocation6 + $0x1714] sm:$0xff]
    %v1020 = vld [vmem:[#allocation6 + $0x171c] sm:$0xff]
    %v1021 = vld [vmem:[#allocation6 + $0x1724] sm:$0xff]
    %v1022 = vld [vmem:[#allocation6 + $0x172c] sm:$0xff]
    %v1023 = vld [vmem:[#allocation6 + $0x1734] sm:$0xff]
    %v1024 = vld [vmem:[#allocation6 + $0x173c] sm:$0xff]
    %v1025 = vld [vmem:[#allocation6 + $0x1744] sm:$0xff]
    %v1026 = vld [vmem:[#allocation6 + $0x174c] sm:$0xff]
    %v1027 = vld [vmem:[#allocation6 + $0x1754] sm:$0xff]
    %v1028 = vld [vmem:[#allocation6 + $0x175c] sm:$0xff]
    %v1029 = vld [vmem:[#allocation6 + $0x1764] sm:$0xff]
    %v1030 = vld [vmem:[#allocation6 + $0x176c] sm:$0xf]
    %v1031 = vld [vmem:[#allocation6 + $0x1770] sm:$0xff]
    %v1032 = vld [vmem:[#allocation6 + $0x1778] sm:$0xff]
    %v1033 = vld [vmem:[#allocation6 + $0x1780] sm:$0xff]
    %v1034 = vld [vmem:[#allocation6 + $0x1788] sm:$0xff]
    %v1035 = vld [vmem:[#allocation6 + $0x1790] sm:$0xff]
    %v1036 = vld [vmem:[#allocation6 + $0x1798] sm:$0xff]
    %v1037 = vld [vmem:[#allocation6 + $0x17a0] sm:$0xff]
    %v1038 = vld [vmem:[#allocation6 + $0x17a8] sm:$0xff]
    %v1039 = vld [vmem:[#allocation6 + $0x17b0] sm:$0xff]
    %v1040 = vld [vmem:[#allocation6 + $0x17b8] sm:$0xff]
    %v1041 = vld [vmem:[#allocation6 + $0x17c0] sm:$0xff]
    %v1042 = vld [vmem:[#allocation6 + $0x17c8] sm:$0xff]
    %v1043 = vld [vmem:[#allocation6 + $0x17d0] sm:$0xf]
    %v1044 = vld [vmem:[#allocation6 + $0x17d4] sm:$0xff]
    %v1045 = vld [vmem:[#allocation6 + $0x17dc] sm:$0xff]
    %v1046 = vld [vmem:[#allocation6 + $0x17e4] sm:$0xff]
    %v1047 = vld [vmem:[#allocation6 + $0x17ec] sm:$0xff]
    %v1048 = vld [vmem:[#allocation6 + $0x17f4] sm:$0xff]
    %v1049 = vld [vmem:[#allocation6 + $0x17fc] sm:$0xff]
    %v1050 = vld [vmem:[#allocation6 + $0x1804] sm:$0xff]
    %v1051 = vld [vmem:[#allocation6 + $0x180c] sm:$0xff]
    %v1052 = vld [vmem:[#allocation6 + $0x1814] sm:$0xff]
    %v1053 = vld [vmem:[#allocation6 + $0x181c] sm:$0xff]
    %v1054 = vld [vmem:[#allocation6 + $0x1824] sm:$0xff]
    %v1055 = vld [vmem:[#allocation6 + $0x182c] sm:$0xff]
    %v1056 = vld [vmem:[#allocation6 + $0x1834] sm:$0xf]
    %v1057 = vld [vmem:[#allocation6 + $0x1838] sm:$0xff]
    %v1058 = vld [vmem:[#allocation6 + $0x1840] sm:$0xff]
    %v1059 = vld [vmem:[#allocation6 + $0x1848] sm:$0xff]
    %v1060 = vld [vmem:[#allocation6 + $0x1850] sm:$0xff]
    %v1061 = vld [vmem:[#allocation6 + $0x1858] sm:$0xff]
    %v1062 = vld [vmem:[#allocation6 + $0x1860] sm:$0xff]
    %v1063 = vld [vmem:[#allocation6 + $0x1868] sm:$0xff]
    %v1064 = vld [vmem:[#allocation6 + $0x1870] sm:$0xff]
    %v1065 = vld [vmem:[#allocation6 + $0x1878] sm:$0xff]
    %v1066 = vld [vmem:[#allocation6 + $0x1880] sm:$0xff]
    %v1067 = vld [vmem:[#allocation6 + $0x1888] sm:$0xff]
    %v1068 = vld [vmem:[#allocation6 + $0x1890] sm:$0xff]
    %v1069 = vld [vmem:[#allocation6 + $0x1898] sm:$0xf]
    %v1070 = vld [vmem:[#allocation6 + $0x189c] sm:$0xff]
    %v1071 = vld [vmem:[#allocation6 + $0x18a4] sm:$0xff]
    %v1072 = vld [vmem:[#allocation6 + $0x18ac] sm:$0xff]
    %v1073 = vld [vmem:[#allocation6 + $0x18b4] sm:$0xff]
    %v1074 = vld [vmem:[#allocation6 + $0x18bc] sm:$0xff]
    %v1075 = vld [vmem:[#allocation6 + $0x18c4] sm:$0xff]
    %v1076 = vld [vmem:[#allocation6 + $0x18cc] sm:$0xff]
    %v1077 = vld [vmem:[#allocation6 + $0x18d4] sm:$0xff]
    %v1078 = vld [vmem:[#allocation6 + $0x18dc] sm:$0xff]
    %v1079 = vld [vmem:[#allocation6 + $0x18e4] sm:$0xff]
    %v1080 = vld [vmem:[#allocation6 + $0x18ec] sm:$0xff]
    %v1081 = vld [vmem:[#allocation6 + $0x18f4] sm:$0xff]
    %v1082 = vld [vmem:[#allocation6 + $0x18fc] sm:$0xf]
    %v1083 = vld [vmem:[#allocation7] sm:$0xff]
    %v1084 = vld [vmem:[#allocation7 + $0x8] sm:$0xff]
    %v1085 = vld [vmem:[#allocation7 + $0x10] sm:$0xff]
    %v1086 = vld [vmem:[#allocation7 + $0x18] sm:$0x1]
    %v1091 = vlaneseq
    %v1092 = vshrl.u32 %v1091, 7
    %v1093 = vsub.s32 0, %v1092
    %v1094 = vrot.slane %v1083, %v1093
    %v1095 = vlaneseq
    %v1096 = vshrl.u32 %v1095, 7
    %v1097 = vsub.s32 1, %v1096
    %v1098 = vrot.slane %v1083, %v1097
    %v1099 = vlaneseq
    %v1100 = vshrl.u32 %v1099, 7
    %v1101 = vsub.s32 2, %v1100
    %v1102 = vrot.slane %v1083, %v1101
    %v1103 = vlaneseq
    %v1104 = vshrl.u32 %v1103, 7
    %v1105 = vsub.s32 3, %v1104
    %v1106 = vrot.slane %v1083, %v1105
    %v1107 = vlaneseq
    %v1108 = vshrl.u32 %v1107, 7
    %v1109 = vsub.s32 4, %v1108
    %v1110 = vrot.slane %v1083, %v1109
    %v1111 = vlaneseq
    %v1112 = vshrl.u32 %v1111, 7
    %v1113 = vsub.s32 5, %v1112
    %v1114 = vrot.slane %v1083, %v1113
    %v1115 = vlaneseq
    %v1116 = vshrl.u32 %v1115, 7
    %v1117 = vsub.s32 6, %v1116
    %v1118 = vrot.slane %v1083, %v1117
    %v1119 = vlaneseq
    %v1120 = vshrl.u32 %v1119, 7
    %v1121 = vsub.s32 7, %v1120
    %v1122 = vrot.slane %v1083, %v1121
    %v1123 = vlaneseq
    %v1124 = vshrl.u32 %v1123, 7
    %v1125 = vsub.s32 0, %v1124
    %v1126 = vrot.slane %v1084, %v1125
    %v1127 = vlaneseq
    %v1128 = vshrl.u32 %v1127, 7
    %v1129 = vsub.s32 1, %v1128
    %v1130 = vrot.slane %v1084, %v1129
    %v1131 = vlaneseq
    %v1132 = vshrl.u32 %v1131, 7
    %v1133 = vsub.s32 2, %v1132
    %v1134 = vrot.slane %v1084, %v1133
    %v1135 = vlaneseq
    %v1136 = vshrl.u32 %v1135, 7
    %v1137 = vsub.s32 3, %v1136
    %v1138 = vrot.slane %v1084, %v1137
    %v1139 = vlaneseq
    %v1140 = vshrl.u32 %v1139, 7
    %v1141 = vsub.s32 4, %v1140
    %v1142 = vrot.slane %v1084, %v1141
    %v1143 = vlaneseq
    %v1144 = vshrl.u32 %v1143, 7
    %v1145 = vsub.s32 5, %v1144
    %v1146 = vrot.slane %v1084, %v1145
    %v1147 = vlaneseq
    %v1148 = vshrl.u32 %v1147, 7
    %v1149 = vsub.s32 6, %v1148
    %v1150 = vrot.slane %v1084, %v1149
    %v1151 = vlaneseq
    %v1152 = vshrl.u32 %v1151, 7
    %v1153 = vsub.s32 7, %v1152
    %v1154 = vrot.slane %v1084, %v1153
    %v1155 = vlaneseq
    %v1156 = vshrl.u32 %v1155, 7
    %v1157 = vsub.s32 0, %v1156
    %v1158 = vrot.slane %v1085, %v1157
    %v1159 = vlaneseq
    %v1160 = vshrl.u32 %v1159, 7
    %v1161 = vsub.s32 1, %v1160
    %v1162 = vrot.slane %v1085, %v1161
    %v1163 = vlaneseq
    %v1164 = vshrl.u32 %v1163, 7
    %v1165 = vsub.s32 2, %v1164
    %v1166 = vrot.slane %v1085, %v1165
    %v1167 = vlaneseq
    %v1168 = vshrl.u32 %v1167, 7
    %v1169 = vsub.s32 3, %v1168
    %v1170 = vrot.slane %v1085, %v1169
    %v1171 = vlaneseq
    %v1172 = vshrl.u32 %v1171, 7
    %v1173 = vsub.s32 4, %v1172
    %v1174 = vrot.slane %v1085, %v1173
    %v1175 = vlaneseq
    %v1176 = vshrl.u32 %v1175, 7
    %v1177 = vsub.s32 5, %v1176
    %v1178 = vrot.slane %v1085, %v1177
    %v1179 = vlaneseq
    %v1180 = vshrl.u32 %v1179, 7
    %v1181 = vsub.s32 6, %v1180
    %v1182 = vrot.slane %v1085, %v1181
    %v1183 = vlaneseq
    %v1184 = vshrl.u32 %v1183, 7
    %v1185 = vsub.s32 7, %v1184
    %v1186 = vrot.slane %v1085, %v1185
    %v1187 = vlaneseq
    %v1188 = vshrl.u32 %v1187, 7
    %v1189 = vsub.s32 0, %v1188
    %v1190 = vrot.slane %v1086, %v1189
    %v2048 = vunpack.c.l.b16 %v251
    %v2049 = vunpack.c.h.b16 %v251
    %v2050 = vunpack.c.l.b16 %v252
    %v2051 = vunpack.c.h.b16 %v252
    %v2052 = vunpack.c.l.b16 %v253
    %v2053 = vunpack.c.h.b16 %v253
    %v2054 = vunpack.c.l.b16 %v254
    %v2055 = vunpack.c.h.b16 %v254
    %v2056 = vunpack.c.l.b16 %v255
    %v2057 = vunpack.c.h.b16 %v255
    %v2058 = vunpack.c.l.b16 %v256
    %v2059 = vunpack.c.h.b16 %v256
    %v2060 = vunpack.c.l.b16 %v257
    %v2061 = vunpack.c.h.b16 %v257
    %v2062 = vunpack.c.l.b16 %v258
    %v2063 = vunpack.c.h.b16 %v258
    %v2064 = vunpack.c.l.b16 %v259
    %v2065 = vunpack.c.h.b16 %v259
    %v2066 = vunpack.c.l.b16 %v260
    %v2067 = vunpack.c.h.b16 %v260
    %v2068 = vunpack.c.l.b16 %v261
    %v2069 = vunpack.c.h.b16 %v261
    %v2070 = vunpack.c.l.b16 %v262
    %v2071 = vunpack.c.h.b16 %v262
    %v2072 = vunpack.c.l.b16 %v263
    %v2073 = vunpack.c.l.b16 %v264
    %v2074 = vunpack.c.h.b16 %v264
    %v2075 = vunpack.c.l.b16 %v265
    %v2076 = vunpack.c.h.b16 %v265
    %v2077 = vunpack.c.l.b16 %v266
    %v2078 = vunpack.c.h.b16 %v266
    %v2079 = vunpack.c.l.b16 %v267
    %v2080 = vunpack.c.h.b16 %v267
    %v2081 = vunpack.c.l.b16 %v268
    %v2082 = vunpack.c.h.b16 %v268
    %v2083 = vunpack.c.l.b16 %v269
    %v2084 = vunpack.c.h.b16 %v269
    %v2085 = vunpack.c.l.b16 %v270
    %v2086 = vunpack.c.h.b16 %v270
    %v2087 = vunpack.c.l.b16 %v271
    %v2088 = vunpack.c.h.b16 %v271
    %v2089 = vunpack.c.l.b16 %v272
    %v2090 = vunpack.c.h.b16 %v272
    %v2091 = vunpack.c.l.b16 %v273
    %v2092 = vunpack.c.h.b16 %v273
    %v2093 = vunpack.c.l.b16 %v274
    %v2094 = vunpack.c.h.b16 %v274
    %v2095 = vunpack.c.l.b16 %v275
    %v2096 = vunpack.c.h.b16 %v275
    %v2097 = vunpack.c.l.b16 %v276
    %v2098 = vunpack.c.l.b16 %v277
    %v2099 = vunpack.c.h.b16 %v277
    %v2100 = vunpack.c.l.b16 %v278
    %v2101 = vunpack.c.h.b16 %v278
    %v2102 = vunpack.c.l.b16 %v279
    %v2103 = vunpack.c.h.b16 %v279
    %v2104 = vunpack.c.l.b16 %v280
    %v2105 = vunpack.c.h.b16 %v280
    %v2106 = vunpack.c.l.b16 %v281
    %v2107 = vunpack.c.h.b16 %v281
    %v2108 = vunpack.c.l.b16 %v282
    %v2109 = vunpack.c.h.b16 %v282
    %v2110 = vunpack.c.l.b16 %v283
    %v2111 = vunpack.c.h.b16 %v283
    %v2112 = vunpack.c.l.b16 %v284
    %v2113 = vunpack.c.h.b16 %v284
    %v2114 = vunpack.c.l.b16 %v285
    %v2115 = vunpack.c.h.b16 %v285
    %v2116 = vunpack.c.l.b16 %v286
    %v2117 = vunpack.c.h.b16 %v286
    %v2118 = vunpack.c.l.b16 %v287
    %v2119 = vunpack.c.h.b16 %v287
    %v2120 = vunpack.c.l.b16 %v288
    %v2121 = vunpack.c.h.b16 %v288
    %v2122 = vunpack.c.l.b16 %v289
    %v2123 = vunpack.c.l.b16 %v290
    %v2124 = vunpack.c.h.b16 %v290
    %v2125 = vunpack.c.l.b16 %v291
    %v2126 = vunpack.c.h.b16 %v291
    %v2127 = vunpack.c.l.b16 %v292
    %v2128 = vunpack.c.h.b16 %v292
    %v2129 = vunpack.c.l.b16 %v293
    %v2130 = vunpack.c.h.b16 %v293
    %v2131 = vunpack.c.l.b16 %v294
    %v2132 = vunpack.c.h.b16 %v294
    %v2133 = vunpack.c.l.b16 %v295
    %v2134 = vunpack.c.h.b16 %v295
    %v2135 = vunpack.c.l.b16 %v296
    %v2136 = vunpack.c.h.b16 %v296
    %v2137 = vunpack.c.l.b16 %v297
    %v2138 = vunpack.c.h.b16 %v297
    %v2139 = vunpack.c.l.b16 %v298
    %v2140 = vunpack.c.h.b16 %v298
    %v2141 = vunpack.c.l.b16 %v299
    %v2142 = vunpack.c.h.b16 %v299
    %v2143 = vunpack.c.l.b16 %v300
    %v2144 = vunpack.c.h.b16 %v300
    %v2145 = vunpack.c.l.b16 %v301
    %v2146 = vunpack.c.h.b16 %v301
    %v2147 = vunpack.c.l.b16 %v302
    %v2148 = vunpack.c.l.b16 %v303
    %v2149 = vunpack.c.h.b16 %v303
    %v2150 = vunpack.c.l.b16 %v304
    %v2151 = vunpack.c.h.b16 %v304
    %v2152 = vunpack.c.l.b16 %v305
    %v2153 = vunpack.c.h.b16 %v305
    %v2154 = vunpack.c.l.b16 %v306
    %v2155 = vunpack.c.h.b16 %v306
    %v2156 = vunpack.c.l.b16 %v307
    %v2157 = vunpack.c.h.b16 %v307
    %v2158 = vunpack.c.l.b16 %v308
    %v2159 = vunpack.c.h.b16 %v308
    %v2160 = vunpack.c.l.b16 %v309
    %v2161 = vunpack.c.h.b16 %v309
    %v2162 = vunpack.c.l.b16 %v310
    %v2163 = vunpack.c.h.b16 %v310
    %v2164 = vunpack.c.l.b16 %v311
    %v2165 = vunpack.c.h.b16 %v311
    %v2166 = vunpack.c.l.b16 %v312
    %v2167 = vunpack.c.h.b16 %v312
    %v2168 = vunpack.c.l.b16 %v313
    %v2169 = vunpack.c.h.b16 %v313
    %v2170 = vunpack.c.l.b16 %v314
    %v2171 = vunpack.c.h.b16 %v314
    %v2172 = vunpack.c.l.b16 %v315
    %v2173 = vunpack.c.l.b16 %v316
    %v2174 = vunpack.c.h.b16 %v316
    %v2175 = vunpack.c.l.b16 %v317
    %v2176 = vunpack.c.h.b16 %v317
    %v2177 = vunpack.c.l.b16 %v318
    %v2178 = vunpack.c.h.b16 %v318
    %v2179 = vunpack.c.l.b16 %v319
    %v2180 = vunpack.c.h.b16 %v319
    %v2181 = vunpack.c.l.b16 %v320
    %v2182 = vunpack.c.h.b16 %v320
    %v2183 = vunpack.c.l.b16 %v321
    %v2184 = vunpack.c.h.b16 %v321
    %v2185 = vunpack.c.l.b16 %v322
    %v2186 = vunpack.c.h.b16 %v322
    %v2187 = vunpack.c.l.b16 %v323
    %v2188 = vunpack.c.h.b16 %v323
    %v2189 = vunpack.c.l.b16 %v324
    %v2190 = vunpack.c.h.b16 %v324
    %v2191 = vunpack.c.l.b16 %v325
    %v2192 = vunpack.c.h.b16 %v325
    %v2193 = vunpack.c.l.b16 %v326
    %v2194 = vunpack.c.h.b16 %v326
    %v2195 = vunpack.c.l.b16 %v327
    %v2196 = vunpack.c.h.b16 %v327
    %v2197 = vunpack.c.l.b16 %v328
    %v2198 = vunpack.c.l.b16 %v329
    %v2199 = vunpack.c.h.b16 %v329
    %v2200 = vunpack.c.l.b16 %v330
    %v2201 = vunpack.c.h.b16 %v330
    %v2202 = vunpack.c.l.b16 %v331
    %v2203 = vunpack.c.h.b16 %v331
    %v2204 = vunpack.c.l.b16 %v332
    %v2205 = vunpack.c.h.b16 %v332
    %v2206 = vunpack.c.l.b16 %v333
    %v2207 = vunpack.c.h.b16 %v333
    %v2208 = vunpack.c.l.b16 %v334
    %v2209 = vunpack.c.h.b16 %v334
    %v2210 = vunpack.c.l.b16 %v335
    %v2211 = vunpack.c.h.b16 %v335
    %v2212 = vunpack.c.l.b16 %v336
    %v2213 = vunpack.c.h.b16 %v336
    %v2214 = vunpack.c.l.b16 %v337
    %v2215 = vunpack.c.h.b16 %v337
    %v2216 = vunpack.c.l.b16 %v338
    %v2217 = vunpack.c.h.b16 %v338
    %v2218 = vunpack.c.l.b16 %v339
    %v2219 = vunpack.c.h.b16 %v339
    %v2220 = vunpack.c.l.b16 %v340
    %v2221 = vunpack.c.h.b16 %v340
    %v2222 = vunpack.c.l.b16 %v341
    %v2223 = vunpack.c.l.b16 %v342
    %v2224 = vunpack.c.h.b16 %v342
    %v2225 = vunpack.c.l.b16 %v343
    %v2226 = vunpack.c.h.b16 %v343
    %v2227 = vunpack.c.l.b16 %v344
    %v2228 = vunpack.c.h.b16 %v344
    %v2229 = vunpack.c.l.b16 %v345
    %v2230 = vunpack.c.h.b16 %v345
    %v2231 = vunpack.c.l.b16 %v346
    %v2232 = vunpack.c.h.b16 %v346
    %v2233 = vunpack.c.l.b16 %v347
    %v2234 = vunpack.c.h.b16 %v347
    %v2235 = vunpack.c.l.b16 %v348
    %v2236 = vunpack.c.h.b16 %v348
    %v2237 = vunpack.c.l.b16 %v349
    %v2238 = vunpack.c.h.b16 %v349
    %v2239 = vunpack.c.l.b16 %v350
    %v2240 = vunpack.c.h.b16 %v350
    %v2241 = vunpack.c.l.b16 %v351
    %v2242 = vunpack.c.h.b16 %v351
    %v2243 = vunpack.c.l.b16 %v352
    %v2244 = vunpack.c.h.b16 %v352
    %v2245 = vunpack.c.l.b16 %v353
    %v2246 = vunpack.c.h.b16 %v353
    %v2247 = vunpack.c.l.b16 %v354
    %v2248 = vunpack.c.l.b16 %v355
    %v2249 = vunpack.c.h.b16 %v355
    %v2250 = vunpack.c.l.b16 %v356
    %v2251 = vunpack.c.h.b16 %v356
    %v2252 = vunpack.c.l.b16 %v357
    %v2253 = vunpack.c.h.b16 %v357
    %v2254 = vunpack.c.l.b16 %v358
    %v2255 = vunpack.c.h.b16 %v358
    %v2256 = vunpack.c.l.b16 %v359
    %v2257 = vunpack.c.h.b16 %v359
    %v2258 = vunpack.c.l.b16 %v360
    %v2259 = vunpack.c.h.b16 %v360
    %v2260 = vunpack.c.l.b16 %v361
    %v2261 = vunpack.c.h.b16 %v361
    %v2262 = vunpack.c.l.b16 %v362
    %v2263 = vunpack.c.h.b16 %v362
    %v2264 = vunpack.c.l.b16 %v363
    %v2265 = vunpack.c.h.b16 %v363
    %v2266 = vunpack.c.l.b16 %v364
    %v2267 = vunpack.c.h.b16 %v364
    %v2268 = vunpack.c.l.b16 %v365
    %v2269 = vunpack.c.h.b16 %v365
    %v2270 = vunpack.c.l.b16 %v366
    %v2271 = vunpack.c.h.b16 %v366
    %v2272 = vunpack.c.l.b16 %v367
    %v2273 = vunpack.c.l.b16 %v368
    %v2274 = vunpack.c.h.b16 %v368
    %v2275 = vunpack.c.l.b16 %v369
    %v2276 = vunpack.c.h.b16 %v369
    %v2277 = vunpack.c.l.b16 %v370
    %v2278 = vunpack.c.h.b16 %v370
    %v2279 = vunpack.c.l.b16 %v371
    %v2280 = vunpack.c.h.b16 %v371
    %v2281 = vunpack.c.l.b16 %v372
    %v2282 = vunpack.c.h.b16 %v372
    %v2283 = vunpack.c.l.b16 %v373
    %v2284 = vunpack.c.h.b16 %v373
    %v2285 = vunpack.c.l.b16 %v374
    %v2286 = vunpack.c.h.b16 %v374
    %v2287 = vunpack.c.l.b16 %v375
    %v2288 = vunpack.c.h.b16 %v375
    %v2289 = vunpack.c.l.b16 %v376
    %v2290 = vunpack.c.h.b16 %v376
    %v2291 = vunpack.c.l.b16 %v377
    %v2292 = vunpack.c.h.b16 %v377
    %v2293 = vunpack.c.l.b16 %v378
    %v2294 = vunpack.c.h.b16 %v378
    %v2295 = vunpack.c.l.b16 %v379
    %v2296 = vunpack.c.h.b16 %v379
    %v2297 = vunpack.c.l.b16 %v380
    %v2298 = vunpack.c.l.b16 %v381
    %v2299 = vunpack.c.h.b16 %v381
    %v2300 = vunpack.c.l.b16 %v382
    %v2301 = vunpack.c.h.b16 %v382
    %v2302 = vunpack.c.l.b16 %v383
    %v2303 = vunpack.c.h.b16 %v383
    %v2304 = vunpack.c.l.b16 %v384
    %v2305 = vunpack.c.h.b16 %v384
    %v2306 = vunpack.c.l.b16 %v385
    %v2307 = vunpack.c.h.b16 %v385
    %v2308 = vunpack.c.l.b16 %v386
    %v2309 = vunpack.c.h.b16 %v386
    %v2310 = vunpack.c.l.b16 %v387
    %v2311 = vunpack.c.h.b16 %v387
    %v2312 = vunpack.c.l.b16 %v388
    %v2313 = vunpack.c.h.b16 %v388
    %v2314 = vunpack.c.l.b16 %v389
    %v2315 = vunpack.c.h.b16 %v389
    %v2316 = vunpack.c.l.b16 %v390
    %v2317 = vunpack.c.h.b16 %v390
    %v2318 = vunpack.c.l.b16 %v391
    %v2319 = vunpack.c.h.b16 %v391
    %v2320 = vunpack.c.l.b16 %v392
    %v2321 = vunpack.c.h.b16 %v392
    %v2322 = vunpack.c.l.b16 %v393
    %v2323 = vunpack.c.l.b16 %v394
    %v2324 = vunpack.c.h.b16 %v394
    %v2325 = vunpack.c.l.b16 %v395
    %v2326 = vunpack.c.h.b16 %v395
    %v2327 = vunpack.c.l.b16 %v396
    %v2328 = vunpack.c.h.b16 %v396
    %v2329 = vunpack.c.l.b16 %v397
    %v2330 = vunpack.c.h.b16 %v397
    %v2331 = vunpack.c.l.b16 %v398
    %v2332 = vunpack.c.h.b16 %v398
    %v2333 = vunpack.c.l.b16 %v399
    %v2334 = vunpack.c.h.b16 %v399
    %v2335 = vunpack.c.l.b16 %v400
    %v2336 = vunpack.c.h.b16 %v400
    %v2337 = vunpack.c.l.b16 %v401
    %v2338 = vunpack.c.h.b16 %v401
    %v2339 = vunpack.c.l.b16 %v402
    %v2340 = vunpack.c.h.b16 %v402
    %v2341 = vunpack.c.l.b16 %v403
    %v2342 = vunpack.c.h.b16 %v403
    %v2343 = vunpack.c.l.b16 %v404
    %v2344 = vunpack.c.h.b16 %v404
    %v2345 = vunpack.c.l.b16 %v405
    %v2346 = vunpack.c.h.b16 %v405
    %v2347 = vunpack.c.l.b16 %v406
    %v2348 = vunpack.c.l.b16 %v407
    %v2349 = vunpack.c.h.b16 %v407
    %v2350 = vunpack.c.l.b16 %v408
    %v2351 = vunpack.c.h.b16 %v408
    %v2352 = vunpack.c.l.b16 %v409
    %v2353 = vunpack.c.h.b16 %v409
    %v2354 = vunpack.c.l.b16 %v410
    %v2355 = vunpack.c.h.b16 %v410
    %v2356 = vunpack.c.l.b16 %v411
    %v2357 = vunpack.c.h.b16 %v411
    %v2358 = vunpack.c.l.b16 %v412
    %v2359 = vunpack.c.h.b16 %v412
    %v2360 = vunpack.c.l.b16 %v413
    %v2361 = vunpack.c.h.b16 %v413
    %v2362 = vunpack.c.l.b16 %v414
    %v2363 = vunpack.c.h.b16 %v414
    %v2364 = vunpack.c.l.b16 %v415
    %v2365 = vunpack.c.h.b16 %v415
    %v2366 = vunpack.c.l.b16 %v416
    %v2367 = vunpack.c.h.b16 %v416
    %v2368 = vunpack.c.l.b16 %v417
    %v2369 = vunpack.c.h.b16 %v417
    %v2370 = vunpack.c.l.b16 %v418
    %v2371 = vunpack.c.h.b16 %v418
    %v2372 = vunpack.c.l.b16 %v419
    %v2373 = vunpack.c.l.b16 %v420
    %v2374 = vunpack.c.h.b16 %v420
    %v2375 = vunpack.c.l.b16 %v421
    %v2376 = vunpack.c.h.b16 %v421
    %v2377 = vunpack.c.l.b16 %v422
    %v2378 = vunpack.c.h.b16 %v422
    %v2379 = vunpack.c.l.b16 %v423
    %v2380 = vunpack.c.h.b16 %v423
    %v2381 = vunpack.c.l.b16 %v424
    %v2382 = vunpack.c.h.b16 %v424
    %v2383 = vunpack.c.l.b16 %v425
    %v2384 = vunpack.c.h.b16 %v425
    %v2385 = vunpack.c.l.b16 %v426
    %v2386 = vunpack.c.h.b16 %v426
    %v2387 = vunpack.c.l.b16 %v427
    %v2388 = vunpack.c.h.b16 %v427
    %v2389 = vunpack.c.l.b16 %v428
    %v2390 = vunpack.c.h.b16 %v428
    %v2391 = vunpack.c.l.b16 %v429
    %v2392 = vunpack.c.h.b16 %v429
    %v2393 = vunpack.c.l.b16 %v430
    %v2394 = vunpack.c.h.b16 %v430
    %v2395 = vunpack.c.l.b16 %v431
    %v2396 = vunpack.c.h.b16 %v431
    %v2397 = vunpack.c.l.b16 %v432
    %v2398 = vunpack.c.l.b16 %v433
    %v2399 = vunpack.c.h.b16 %v433
    %v2400 = vunpack.c.l.b16 %v434
    %v2401 = vunpack.c.h.b16 %v434
    %v2402 = vunpack.c.l.b16 %v435
    %v2403 = vunpack.c.h.b16 %v435
    %v2404 = vunpack.c.l.b16 %v436
    %v2405 = vunpack.c.h.b16 %v436
    %v2406 = vunpack.c.l.b16 %v437
    %v2407 = vunpack.c.h.b16 %v437
    %v2408 = vunpack.c.l.b16 %v438
    %v2409 = vunpack.c.h.b16 %v438
    %v2410 = vunpack.c.l.b16 %v439
    %v2411 = vunpack.c.h.b16 %v439
    %v2412 = vunpack.c.l.b16 %v440
    %v2413 = vunpack.c.h.b16 %v440
    %v2414 = vunpack.c.l.b16 %v441
    %v2415 = vunpack.c.h.b16 %v441
    %v2416 = vunpack.c.l.b16 %v442
    %v2417 = vunpack.c.h.b16 %v442
    %v2418 = vunpack.c.l.b16 %v443
    %v2419 = vunpack.c.h.b16 %v443
    %v2420 = vunpack.c.l.b16 %v444
    %v2421 = vunpack.c.h.b16 %v444
    %v2422 = vunpack.c.l.b16 %v445
    %v2423 = vunpack.c.l.b16 %v446
    %v2424 = vunpack.c.h.b16 %v446
    %v2425 = vunpack.c.l.b16 %v447
    %v2426 = vunpack.c.h.b16 %v447
    %v2427 = vunpack.c.l.b16 %v448
    %v2428 = vunpack.c.h.b16 %v448
    %v2429 = vunpack.c.l.b16 %v449
    %v2430 = vunpack.c.h.b16 %v449
    %v2431 = vunpack.c.l.b16 %v450
    %v2432 = vunpack.c.h.b16 %v450
    %v2433 = vunpack.c.l.b16 %v451
    %v2434 = vunpack.c.h.b16 %v451
    %v2435 = vunpack.c.l.b16 %v452
    %v2436 = vunpack.c.h.b16 %v452
    %v2437 = vunpack.c.l.b16 %v453
    %v2438 = vunpack.c.h.b16 %v453
    %v2439 = vunpack.c.l.b16 %v454
    %v2440 = vunpack.c.h.b16 %v454
    %v2441 = vunpack.c.l.b16 %v455
    %v2442 = vunpack.c.h.b16 %v455
    %v2443 = vunpack.c.l.b16 %v456
    %v2444 = vunpack.c.h.b16 %v456
    %v2445 = vunpack.c.l.b16 %v457
    %v2446 = vunpack.c.h.b16 %v457
    %v2447 = vunpack.c.l.b16 %v458
    %v2448 = vunpack.c.l.b16 %v459
    %v2449 = vunpack.c.h.b16 %v459
    %v2450 = vunpack.c.l.b16 %v460
    %v2451 = vunpack.c.h.b16 %v460
    %v2452 = vunpack.c.l.b16 %v461
    %v2453 = vunpack.c.h.b16 %v461
    %v2454 = vunpack.c.l.b16 %v462
    %v2455 = vunpack.c.h.b16 %v462
    %v2456 = vunpack.c.l.b16 %v463
    %v2457 = vunpack.c.h.b16 %v463
    %v2458 = vunpack.c.l.b16 %v464
    %v2459 = vunpack.c.h.b16 %v464
    %v2460 = vunpack.c.l.b16 %v465
    %v2461 = vunpack.c.h.b16 %v465
    %v2462 = vunpack.c.l.b16 %v466
    %v2463 = vunpack.c.h.b16 %v466
    %v2464 = vunpack.c.l.b16 %v467
    %v2465 = vunpack.c.h.b16 %v467
    %v2466 = vunpack.c.l.b16 %v468
    %v2467 = vunpack.c.h.b16 %v468
    %v2468 = vunpack.c.l.b16 %v469
    %v2469 = vunpack.c.h.b16 %v469
    %v2470 = vunpack.c.l.b16 %v470
    %v2471 = vunpack.c.h.b16 %v470
    %v2472 = vunpack.c.l.b16 %v471
    %v2473 = vunpack.c.l.b16 %v472
    %v2474 = vunpack.c.h.b16 %v472
    %v2475 = vunpack.c.l.b16 %v473
    %v2476 = vunpack.c.h.b16 %v473
    %v2477 = vunpack.c.l.b16 %v474
    %v2478 = vunpack.c.h.b16 %v474
    %v2479 = vunpack.c.l.b16 %v475
    %v2480 = vunpack.c.h.b16 %v475
    %v2481 = vunpack.c.l.b16 %v476
    %v2482 = vunpack.c.h.b16 %v476
    %v2483 = vunpack.c.l.b16 %v477
    %v2484 = vunpack.c.h.b16 %v477
    %v2485 = vunpack.c.l.b16 %v478
    %v2486 = vunpack.c.h.b16 %v478
    %v2487 = vunpack.c.l.b16 %v479
    %v2488 = vunpack.c.h.b16 %v479
    %v2489 = vunpack.c.l.b16 %v480
    %v2490 = vunpack.c.h.b16 %v480
    %v2491 = vunpack.c.l.b16 %v481
    %v2492 = vunpack.c.h.b16 %v481
    %v2493 = vunpack.c.l.b16 %v482
    %v2494 = vunpack.c.h.b16 %v482
    %v2495 = vunpack.c.l.b16 %v483
    %v2496 = vunpack.c.h.b16 %v483
    %v2497 = vunpack.c.l.b16 %v484
    %v2498 = vunpack.c.l.b16 %v485
    %v2499 = vunpack.c.h.b16 %v485
    %v2500 = vunpack.c.l.b16 %v486
    %v2501 = vunpack.c.h.b16 %v486
    %v2502 = vunpack.c.l.b16 %v487
    %v2503 = vunpack.c.h.b16 %v487
    %v2504 = vunpack.c.l.b16 %v488
    %v2505 = vunpack.c.h.b16 %v488
    %v2506 = vunpack.c.l.b16 %v489
    %v2507 = vunpack.c.h.b16 %v489
    %v2508 = vunpack.c.l.b16 %v490
    %v2509 = vunpack.c.h.b16 %v490
    %v2510 = vunpack.c.l.b16 %v491
    %v2511 = vunpack.c.h.b16 %v491
    %v2512 = vunpack.c.l.b16 %v492
    %v2513 = vunpack.c.h.b16 %v492
    %v2514 = vunpack.c.l.b16 %v493
    %v2515 = vunpack.c.h.b16 %v493
    %v2516 = vunpack.c.l.b16 %v494
    %v2517 = vunpack.c.h.b16 %v494
    %v2518 = vunpack.c.l.b16 %v495
    %v2519 = vunpack.c.h.b16 %v495
    %v2520 = vunpack.c.l.b16 %v496
    %v2521 = vunpack.c.h.b16 %v496
    %v2522 = vunpack.c.l.b16 %v497
    %v2523 = vunpack.c.l.b16 %v498
    %v2524 = vunpack.c.h.b16 %v498
    %v2525 = vunpack.c.l.b16 %v499
    %v2526 = vunpack.c.h.b16 %v499
    %v2527 = vunpack.c.l.b16 %v500
    %v2528 = vunpack.c.h.b16 %v500
    %v2529 = vunpack.c.l.b16 %v501
    %v2530 = vunpack.c.h.b16 %v501
    %v2531 = vunpack.c.l.b16 %v502
    %v2532 = vunpack.c.h.b16 %v502
    %v2533 = vunpack.c.l.b16 %v503
    %v2534 = vunpack.c.h.b16 %v503
    %v2535 = vunpack.c.l.b16 %v504
    %v2536 = vunpack.c.h.b16 %v504
    %v2537 = vunpack.c.l.b16 %v505
    %v2538 = vunpack.c.h.b16 %v505
    %v2539 = vunpack.c.l.b16 %v506
    %v2540 = vunpack.c.h.b16 %v506
    %v2541 = vunpack.c.l.b16 %v507
    %v2542 = vunpack.c.h.b16 %v507
    %v2543 = vunpack.c.l.b16 %v508
    %v2544 = vunpack.c.h.b16 %v508
    %v2545 = vunpack.c.l.b16 %v509
    %v2546 = vunpack.c.h.b16 %v509
    %v2547 = vunpack.c.l.b16 %v510
    %v2548 = vunpack.c.l.b16 %v511
    %v2549 = vunpack.c.h.b16 %v511
    %v2550 = vunpack.c.l.b16 %v512
    %v2551 = vunpack.c.h.b16 %v512
    %v2552 = vunpack.c.l.b16 %v513
    %v2553 = vunpack.c.h.b16 %v513
    %v2554 = vunpack.c.l.b16 %v514
    %v2555 = vunpack.c.h.b16 %v514
    %v2556 = vunpack.c.l.b16 %v515
    %v2557 = vunpack.c.h.b16 %v515
    %v2558 = vunpack.c.l.b16 %v516
    %v2559 = vunpack.c.h.b16 %v516
    %v2560 = vunpack.c.l.b16 %v517
    %v2561 = vunpack.c.h.b16 %v517
    %v2562 = vunpack.c.l.b16 %v518
    %v2563 = vunpack.c.h.b16 %v518
    %v2564 = vunpack.c.l.b16 %v519
    %v2565 = vunpack.c.h.b16 %v519
    %v2566 = vunpack.c.l.b16 %v520
    %v2567 = vunpack.c.h.b16 %v520
    %v2568 = vunpack.c.l.b16 %v521
    %v2569 = vunpack.c.h.b16 %v521
    %v2570 = vunpack.c.l.b16 %v522
    %v2571 = vunpack.c.h.b16 %v522
    %v2572 = vunpack.c.l.b16 %v523
    %v2573 = vunpack.c.l.b16 %v524
    %v2574 = vunpack.c.h.b16 %v524
    %v2575 = vunpack.c.l.b16 %v525
    %v2576 = vunpack.c.h.b16 %v525
    %v2577 = vunpack.c.l.b16 %v526
    %v2578 = vunpack.c.h.b16 %v526
    %v2579 = vunpack.c.l.b16 %v527
    %v2580 = vunpack.c.h.b16 %v527
    %v2581 = vunpack.c.l.b16 %v528
    %v2582 = vunpack.c.h.b16 %v528
    %v2583 = vunpack.c.l.b16 %v529
    %v2584 = vunpack.c.h.b16 %v529
    %v2585 = vunpack.c.l.b16 %v530
    %v2586 = vunpack.c.h.b16 %v530
    %v2587 = vunpack.c.l.b16 %v531
    %v2588 = vunpack.c.h.b16 %v531
    %v2589 = vunpack.c.l.b16 %v532
    %v2590 = vunpack.c.h.b16 %v532
    %v2591 = vunpack.c.l.b16 %v533
    %v2592 = vunpack.c.h.b16 %v533
    %v2593 = vunpack.c.l.b16 %v534
    %v2594 = vunpack.c.h.b16 %v534
    %v2595 = vunpack.c.l.b16 %v535
    %v2596 = vunpack.c.h.b16 %v535
    %v2597 = vunpack.c.l.b16 %v536
    %v2598 = vunpack.c.l.b16 %v537
    %v2599 = vunpack.c.h.b16 %v537
    %v2600 = vunpack.c.l.b16 %v538
    %v2601 = vunpack.c.h.b16 %v538
    %v2602 = vunpack.c.l.b16 %v539
    %v2603 = vunpack.c.h.b16 %v539
    %v2604 = vunpack.c.l.b16 %v540
    %v2605 = vunpack.c.h.b16 %v540
    %v2606 = vunpack.c.l.b16 %v541
    %v2607 = vunpack.c.h.b16 %v541
    %v2608 = vunpack.c.l.b16 %v542
    %v2609 = vunpack.c.h.b16 %v542
    %v2610 = vunpack.c.l.b16 %v543
    %v2611 = vunpack.c.h.b16 %v543
    %v2612 = vunpack.c.l.b16 %v544
    %v2613 = vunpack.c.h.b16 %v544
    %v2614 = vunpack.c.l.b16 %v545
    %v2615 = vunpack.c.h.b16 %v545
    %v2616 = vunpack.c.l.b16 %v546
    %v2617 = vunpack.c.h.b16 %v546
    %v2618 = vunpack.c.l.b16 %v547
    %v2619 = vunpack.c.h.b16 %v547
    %v2620 = vunpack.c.l.b16 %v548
    %v2621 = vunpack.c.h.b16 %v548
    %v2622 = vunpack.c.l.b16 %v549
    %v2623 = vunpack.c.l.b16 %v550
    %v2624 = vunpack.c.h.b16 %v550
    %v2625 = vunpack.c.l.b16 %v551
    %v2626 = vunpack.c.h.b16 %v551
    %v2627 = vunpack.c.l.b16 %v552
    %v2628 = vunpack.c.h.b16 %v552
    %v2629 = vunpack.c.l.b16 %v553
    %v2630 = vunpack.c.h.b16 %v553
    %v2631 = vunpack.c.l.b16 %v554
    %v2632 = vunpack.c.h.b16 %v554
    %v2633 = vunpack.c.l.b16 %v555
    %v2634 = vunpack.c.h.b16 %v555
    %v2635 = vunpack.c.l.b16 %v556
    %v2636 = vunpack.c.h.b16 %v556
    %v2637 = vunpack.c.l.b16 %v557
    %v2638 = vunpack.c.h.b16 %v557
    %v2639 = vunpack.c.l.b16 %v558
    %v2640 = vunpack.c.h.b16 %v558
    %v2641 = vunpack.c.l.b16 %v559
    %v2642 = vunpack.c.h.b16 %v559
    %v2643 = vunpack.c.l.b16 %v560
    %v2644 = vunpack.c.h.b16 %v560
    %v2645 = vunpack.c.l.b16 %v561
    %v2646 = vunpack.c.h.b16 %v561
    %v2647 = vunpack.c.l.b16 %v562
    %v2648 = vunpack.c.l.b16 %v563
    %v2649 = vunpack.c.h.b16 %v563
    %v2650 = vunpack.c.l.b16 %v564
    %v2651 = vunpack.c.h.b16 %v564
    %v2652 = vunpack.c.l.b16 %v565
    %v2653 = vunpack.c.h.b16 %v565
    %v2654 = vunpack.c.l.b16 %v566
    %v2655 = vunpack.c.h.b16 %v566
    %v2656 = vunpack.c.l.b16 %v567
    %v2657 = vunpack.c.h.b16 %v567
    %v2658 = vunpack.c.l.b16 %v568
    %v2659 = vunpack.c.h.b16 %v568
    %v2660 = vunpack.c.l.b16 %v569
    %v2661 = vunpack.c.h.b16 %v569
    %v2662 = vunpack.c.l.b16 %v570
    %v2663 = vunpack.c.h.b16 %v570
    %v2664 = vunpack.c.l.b16 %v571
    %v2665 = vunpack.c.h.b16 %v571
    %v2666 = vunpack.c.l.b16 %v572
    %v2667 = vunpack.c.h.b16 %v572
    %v2668 = vunpack.c.l.b16 %v573
    %v2669 = vunpack.c.h.b16 %v573
    %v2670 = vunpack.c.l.b16 %v574
    %v2671 = vunpack.c.h.b16 %v574
    %v2672 = vunpack.c.l.b16 %v575
    %v2673 = vunpack.c.l.b16 %v576
    %v2674 = vunpack.c.h.b16 %v576
    %v2675 = vunpack.c.l.b16 %v577
    %v2676 = vunpack.c.h.b16 %v577
    %v2677 = vunpack.c.l.b16 %v578
    %v2678 = vunpack.c.h.b16 %v578
    %v2679 = vunpack.c.l.b16 %v579
    %v2680 = vunpack.c.h.b16 %v579
    %v2681 = vunpack.c.l.b16 %v580
    %v2682 = vunpack.c.h.b16 %v580
    %v2683 = vunpack.c.l.b16 %v581
    %v2684 = vunpack.c.h.b16 %v581
    %v2685 = vunpack.c.l.b16 %v582
    %v2686 = vunpack.c.h.b16 %v582
    %v2687 = vunpack.c.l.b16 %v583
    %v2688 = vunpack.c.h.b16 %v583
    %v2689 = vunpack.c.l.b16 %v584
    %v2690 = vunpack.c.h.b16 %v584
    %v2691 = vunpack.c.l.b16 %v585
    %v2692 = vunpack.c.h.b16 %v585
    %v2693 = vunpack.c.l.b16 %v586
    %v2694 = vunpack.c.h.b16 %v586
    %v2695 = vunpack.c.l.b16 %v587
    %v2696 = vunpack.c.h.b16 %v587
    %v2697 = vunpack.c.l.b16 %v588
    %v2698 = vunpack.c.l.b16 %v589
    %v2699 = vunpack.c.h.b16 %v589
    %v2700 = vunpack.c.l.b16 %v590
    %v2701 = vunpack.c.h.b16 %v590
    %v2702 = vunpack.c.l.b16 %v591
    %v2703 = vunpack.c.h.b16 %v591
    %v2704 = vunpack.c.l.b16 %v592
    %v2705 = vunpack.c.h.b16 %v592
    %v2706 = vunpack.c.l.b16 %v593
    %v2707 = vunpack.c.h.b16 %v593
    %v2708 = vunpack.c.l.b16 %v594
    %v2709 = vunpack.c.h.b16 %v594
    %v2710 = vunpack.c.l.b16 %v595
    %v2711 = vunpack.c.h.b16 %v595
    %v2712 = vunpack.c.l.b16 %v596
    %v2713 = vunpack.c.h.b16 %v596
    %v2714 = vunpack.c.l.b16 %v597
    %v2715 = vunpack.c.h.b16 %v597
    %v2716 = vunpack.c.l.b16 %v598
    %v2717 = vunpack.c.h.b16 %v598
    %v2718 = vunpack.c.l.b16 %v599
    %v2719 = vunpack.c.h.b16 %v599
    %v2720 = vunpack.c.l.b16 %v600
    %v2721 = vunpack.c.h.b16 %v600
    %v2722 = vunpack.c.l.b16 %v601
    %v2723 = vunpack.c.l.b16 %v602
    %v2724 = vunpack.c.h.b16 %v602
    %v2725 = vunpack.c.l.b16 %v603
    %v2726 = vunpack.c.h.b16 %v603
    %v2727 = vunpack.c.l.b16 %v604
    %v2728 = vunpack.c.h.b16 %v604
    %v2729 = vunpack.c.l.b16 %v605
    %v2730 = vunpack.c.h.b16 %v605
    %v2731 = vunpack.c.l.b16 %v606
    %v2732 = vunpack.c.h.b16 %v606
    %v2733 = vunpack.c.l.b16 %v607
    %v2734 = vunpack.c.h.b16 %v607
    %v2735 = vunpack.c.l.b16 %v608
    %v2736 = vunpack.c.h.b16 %v608
    %v2737 = vunpack.c.l.b16 %v609
    %v2738 = vunpack.c.h.b16 %v609
    %v2739 = vunpack.c.l.b16 %v610
    %v2740 = vunpack.c.h.b16 %v610
    %v2741 = vunpack.c.l.b16 %v611
    %v2742 = vunpack.c.h.b16 %v611
    %v2743 = vunpack.c.l.b16 %v612
    %v2744 = vunpack.c.h.b16 %v612
    %v2745 = vunpack.c.l.b16 %v613
    %v2746 = vunpack.c.h.b16 %v613
    %v2747 = vunpack.c.l.b16 %v614
    %v2748 = vunpack.c.l.b16 %v615
    %v2749 = vunpack.c.h.b16 %v615
    %v2750 = vunpack.c.l.b16 %v616
    %v2751 = vunpack.c.h.b16 %v616
    %v2752 = vunpack.c.l.b16 %v617
    %v2753 = vunpack.c.h.b16 %v617
    %v2754 = vunpack.c.l.b16 %v618
    %v2755 = vunpack.c.h.b16 %v618
    %v2756 = vunpack.c.l.b16 %v619
    %v2757 = vunpack.c.h.b16 %v619
    %v2758 = vunpack.c.l.b16 %v620
    %v2759 = vunpack.c.h.b16 %v620
    %v2760 = vunpack.c.l.b16 %v621
    %v2761 = vunpack.c.h.b16 %v621
    %v2762 = vunpack.c.l.b16 %v622
    %v2763 = vunpack.c.h.b16 %v622
    %v2764 = vunpack.c.l.b16 %v623
    %v2765 = vunpack.c.h.b16 %v623
    %v2766 = vunpack.c.l.b16 %v624
    %v2767 = vunpack.c.h.b16 %v624
    %v2768 = vunpack.c.l.b16 %v625
    %v2769 = vunpack.c.h.b16 %v625
    %v2770 = vunpack.c.l.b16 %v626
    %v2771 = vunpack.c.h.b16 %v626
    %v2772 = vunpack.c.l.b16 %v627
    %v2773 = vunpack.c.l.b16 %v628
    %v2774 = vunpack.c.h.b16 %v628
    %v2775 = vunpack.c.l.b16 %v629
    %v2776 = vunpack.c.h.b16 %v629
    %v2777 = vunpack.c.l.b16 %v630
    %v2778 = vunpack.c.h.b16 %v630
    %v2779 = vunpack.c.l.b16 %v631
    %v2780 = vunpack.c.h.b16 %v631
    %v2781 = vunpack.c.l.b16 %v632
    %v2782 = vunpack.c.h.b16 %v632
    %v2783 = vunpack.c.l.b16 %v633
    %v2784 = vunpack.c.h.b16 %v633
    %v2785 = vunpack.c.l.b16 %v634
    %v2786 = vunpack.c.h.b16 %v634
    %v2787 = vunpack.c.l.b16 %v635
    %v2788 = vunpack.c.h.b16 %v635
    %v2789 = vunpack.c.l.b16 %v636
    %v2790 = vunpack.c.h.b16 %v636
    %v2791 = vunpack.c.l.b16 %v637
    %v2792 = vunpack.c.h.b16 %v637
    %v2793 = vunpack.c.l.b16 %v638
    %v2794 = vunpack.c.h.b16 %v638
    %v2795 = vunpack.c.l.b16 %v639
    %v2796 = vunpack.c.h.b16 %v639
    %v2797 = vunpack.c.l.b16 %v640
    %v2798 = vunpack.c.l.b16 %v641
    %v2799 = vunpack.c.h.b16 %v641
    %v2800 = vunpack.c.l.b16 %v642
    %v2801 = vunpack.c.h.b16 %v642
    %v2802 = vunpack.c.l.b16 %v643
    %v2803 = vunpack.c.h.b16 %v643
    %v2804 = vunpack.c.l.b16 %v644
    %v2805 = vunpack.c.h.b16 %v644
    %v2806 = vunpack.c.l.b16 %v645
    %v2807 = vunpack.c.h.b16 %v645
    %v2808 = vunpack.c.l.b16 %v646
    %v2809 = vunpack.c.h.b16 %v646
    %v2810 = vunpack.c.l.b16 %v647
    %v2811 = vunpack.c.h.b16 %v647
    %v2812 = vunpack.c.l.b16 %v648
    %v2813 = vunpack.c.h.b16 %v648
    %v2814 = vunpack.c.l.b16 %v649
    %v2815 = vunpack.c.h.b16 %v649
    %v2816 = vunpack.c.l.b16 %v650
    %v2817 = vunpack.c.h.b16 %v650
    %v2818 = vunpack.c.l.b16 %v651
    %v2819 = vunpack.c.h.b16 %v651
    %v2820 = vunpack.c.l.b16 %v652
    %v2821 = vunpack.c.h.b16 %v652
    %v2822 = vunpack.c.l.b16 %v653
    %v2823 = vunpack.c.l.b16 %v654
    %v2824 = vunpack.c.h.b16 %v654
    %v2825 = vunpack.c.l.b16 %v655
    %v2826 = vunpack.c.h.b16 %v655
    %v2827 = vunpack.c.l.b16 %v656
    %v2828 = vunpack.c.h.b16 %v656
    %v2829 = vunpack.c.l.b16 %v657
    %v2830 = vunpack.c.h.b16 %v657
    %v2831 = vunpack.c.l.b16 %v658
    %v2832 = vunpack.c.h.b16 %v658
    %v2833 = vunpack.c.l.b16 %v659
    %v2834 = vunpack.c.h.b16 %v659
    %v2835 = vunpack.c.l.b16 %v660
    %v2836 = vunpack.c.h.b16 %v660
    %v2837 = vunpack.c.l.b16 %v661
    %v2838 = vunpack.c.h.b16 %v661
    %v2839 = vunpack.c.l.b16 %v662
    %v2840 = vunpack.c.h.b16 %v662
    %v2841 = vunpack.c.l.b16 %v663
    %v2842 = vunpack.c.h.b16 %v663
    %v2843 = vunpack.c.l.b16 %v664
    %v2844 = vunpack.c.h.b16 %v664
    %v2845 = vunpack.c.l.b16 %v665
    %v2846 = vunpack.c.h.b16 %v665
    %v2847 = vunpack.c.l.b16 %v666
    %v2848 = vunpack.c.l.b16 %v667
    %v2849 = vunpack.c.h.b16 %v667
    %v2850 = vunpack.c.l.b16 %v668
    %v2851 = vunpack.c.h.b16 %v668
    %v2852 = vunpack.c.l.b16 %v669
    %v2853 = vunpack.c.h.b16 %v669
    %v2854 = vunpack.c.l.b16 %v670
    %v2855 = vunpack.c.h.b16 %v670
    %v2856 = vunpack.c.l.b16 %v671
    %v2857 = vunpack.c.h.b16 %v671
    %v2858 = vunpack.c.l.b16 %v672
    %v2859 = vunpack.c.h.b16 %v672
    %v2860 = vunpack.c.l.b16 %v673
    %v2861 = vunpack.c.h.b16 %v673
    %v2862 = vunpack.c.l.b16 %v674
    %v2863 = vunpack.c.h.b16 %v674
    %v2864 = vunpack.c.l.b16 %v675
    %v2865 = vunpack.c.h.b16 %v675
    %v2866 = vunpack.c.l.b16 %v676
    %v2867 = vunpack.c.h.b16 %v676
    %v2868 = vunpack.c.l.b16 %v677
    %v2869 = vunpack.c.h.b16 %v677
    %v2870 = vunpack.c.l.b16 %v678
    %v2871 = vunpack.c.h.b16 %v678
    %v2872 = vunpack.c.l.b16 %v679
    %v2873 = vunpack.c.l.b16 %v680
    %v2874 = vunpack.c.h.b16 %v680
    %v2875 = vunpack.c.l.b16 %v681
    %v2876 = vunpack.c.h.b16 %v681
    %v2877 = vunpack.c.l.b16 %v682
    %v2878 = vunpack.c.h.b16 %v682
    %v2879 = vunpack.c.l.b16 %v683
    %v2880 = vunpack.c.h.b16 %v683
    %v2881 = vunpack.c.l.b16 %v684
    %v2882 = vunpack.c.h.b16 %v684
    %v2883 = vunpack.c.l.b16 %v685
    %v2884 = vunpack.c.h.b16 %v685
    %v2885 = vunpack.c.l.b16 %v686
    %v2886 = vunpack.c.h.b16 %v686
    %v2887 = vunpack.c.l.b16 %v687
    %v2888 = vunpack.c.h.b16 %v687
    %v2889 = vunpack.c.l.b16 %v688
    %v2890 = vunpack.c.h.b16 %v688
    %v2891 = vunpack.c.l.b16 %v689
    %v2892 = vunpack.c.h.b16 %v689
    %v2893 = vunpack.c.l.b16 %v690
    %v2894 = vunpack.c.h.b16 %v690
    %v2895 = vunpack.c.l.b16 %v691
    %v2896 = vunpack.c.h.b16 %v691
    %v2897 = vunpack.c.l.b16 %v692
    %v2898 = vunpack.c.l.b16 %v693
    %v2899 = vunpack.c.h.b16 %v693
    %v2900 = vunpack.c.l.b16 %v694
    %v2901 = vunpack.c.h.b16 %v694
    %v2902 = vunpack.c.l.b16 %v695
    %v2903 = vunpack.c.h.b16 %v695
    %v2904 = vunpack.c.l.b16 %v696
    %v2905 = vunpack.c.h.b16 %v696
    %v2906 = vunpack.c.l.b16 %v697
    %v2907 = vunpack.c.h.b16 %v697
    %v2908 = vunpack.c.l.b16 %v698
    %v2909 = vunpack.c.h.b16 %v698
    %v2910 = vunpack.c.l.b16 %v699
    %v2911 = vunpack.c.h.b16 %v699
    %v2912 = vunpack.c.l.b16 %v700
    %v2913 = vunpack.c.h.b16 %v700
    %v2914 = vunpack.c.l.b16 %v701
    %v2915 = vunpack.c.h.b16 %v701
    %v2916 = vunpack.c.l.b16 %v702
    %v2917 = vunpack.c.h.b16 %v702
    %v2918 = vunpack.c.l.b16 %v703
    %v2919 = vunpack.c.h.b16 %v703
    %v2920 = vunpack.c.l.b16 %v704
    %v2921 = vunpack.c.h.b16 %v704
    %v2922 = vunpack.c.l.b16 %v705
    %v2923 = vunpack.c.l.b16 %v706
    %v2924 = vunpack.c.h.b16 %v706
    %v2925 = vunpack.c.l.b16 %v707
    %v2926 = vunpack.c.h.b16 %v707
    %v2927 = vunpack.c.l.b16 %v708
    %v2928 = vunpack.c.h.b16 %v708
    %v2929 = vunpack.c.l.b16 %v709
    %v2930 = vunpack.c.h.b16 %v709
    %v2931 = vunpack.c.l.b16 %v710
    %v2932 = vunpack.c.h.b16 %v710
    %v2933 = vunpack.c.l.b16 %v711
    %v2934 = vunpack.c.h.b16 %v711
    %v2935 = vunpack.c.l.b16 %v712
    %v2936 = vunpack.c.h.b16 %v712
    %v2937 = vunpack.c.l.b16 %v713
    %v2938 = vunpack.c.h.b16 %v713
    %v2939 = vunpack.c.l.b16 %v714
    %v2940 = vunpack.c.h.b16 %v714
    %v2941 = vunpack.c.l.b16 %v715
    %v2942 = vunpack.c.h.b16 %v715
    %v2943 = vunpack.c.l.b16 %v716
    %v2944 = vunpack.c.h.b16 %v716
    %v2945 = vunpack.c.l.b16 %v717
    %v2946 = vunpack.c.h.b16 %v717
    %v2947 = vunpack.c.l.b16 %v718
    %v2948 = vunpack.c.l.b16 %v719
    %v2949 = vunpack.c.h.b16 %v719
    %v2950 = vunpack.c.l.b16 %v720
    %v2951 = vunpack.c.h.b16 %v720
    %v2952 = vunpack.c.l.b16 %v721
    %v2953 = vunpack.c.h.b16 %v721
    %v2954 = vunpack.c.l.b16 %v722
    %v2955 = vunpack.c.h.b16 %v722
    %v2956 = vunpack.c.l.b16 %v723
    %v2957 = vunpack.c.h.b16 %v723
    %v2958 = vunpack.c.l.b16 %v724
    %v2959 = vunpack.c.h.b16 %v724
    %v2960 = vunpack.c.l.b16 %v725
    %v2961 = vunpack.c.h.b16 %v725
    %v2962 = vunpack.c.l.b16 %v726
    %v2963 = vunpack.c.h.b16 %v726
    %v2964 = vunpack.c.l.b16 %v727
    %v2965 = vunpack.c.h.b16 %v727
    %v2966 = vunpack.c.l.b16 %v728
    %v2967 = vunpack.c.h.b16 %v728
    %v2968 = vunpack.c.l.b16 %v729
    %v2969 = vunpack.c.h.b16 %v729
    %v2970 = vunpack.c.l.b16 %v730
    %v2971 = vunpack.c.h.b16 %v730
    %v2972 = vunpack.c.l.b16 %v731
    %v2973 = vunpack.c.l.b16 %v732
    %v2974 = vunpack.c.h.b16 %v732
    %v2975 = vunpack.c.l.b16 %v733
    %v2976 = vunpack.c.h.b16 %v733
    %v2977 = vunpack.c.l.b16 %v734
    %v2978 = vunpack.c.h.b16 %v734
    %v2979 = vunpack.c.l.b16 %v735
    %v2980 = vunpack.c.h.b16 %v735
    %v2981 = vunpack.c.l.b16 %v736
    %v2982 = vunpack.c.h.b16 %v736
    %v2983 = vunpack.c.l.b16 %v737
    %v2984 = vunpack.c.h.b16 %v737
    %v2985 = vunpack.c.l.b16 %v738
    %v2986 = vunpack.c.h.b16 %v738
    %v2987 = vunpack.c.l.b16 %v739
    %v2988 = vunpack.c.h.b16 %v739
    %v2989 = vunpack.c.l.b16 %v740
    %v2990 = vunpack.c.h.b16 %v740
    %v2991 = vunpack.c.l.b16 %v741
    %v2992 = vunpack.c.h.b16 %v741
    %v2993 = vunpack.c.l.b16 %v742
    %v2994 = vunpack.c.h.b16 %v742
    %v2995 = vunpack.c.l.b16 %v743
    %v2996 = vunpack.c.h.b16 %v743
    %v2997 = vunpack.c.l.b16 %v744
    %v2998 = vunpack.c.l.b16 %v745
    %v2999 = vunpack.c.h.b16 %v745
    %v3000 = vunpack.c.l.b16 %v746
    %v3001 = vunpack.c.h.b16 %v746
    %v3002 = vunpack.c.l.b16 %v747
    %v3003 = vunpack.c.h.b16 %v747
    %v3004 = vunpack.c.l.b16 %v748
    %v3005 = vunpack.c.h.b16 %v748
    %v3006 = vunpack.c.l.b16 %v749
    %v3007 = vunpack.c.h.b16 %v749
    %v3008 = vunpack.c.l.b16 %v750
    %v3009 = vunpack.c.h.b16 %v750
    %v3010 = vunpack.c.l.b16 %v751
    %v3011 = vunpack.c.h.b16 %v751
    %v3012 = vunpack.c.l.b16 %v752
    %v3013 = vunpack.c.h.b16 %v752
    %v3014 = vunpack.c.l.b16 %v753
    %v3015 = vunpack.c.h.b16 %v753
    %v3016 = vunpack.c.l.b16 %v754
    %v3017 = vunpack.c.h.b16 %v754
    %v3018 = vunpack.c.l.b16 %v755
    %v3019 = vunpack.c.h.b16 %v755
    %v3020 = vunpack.c.l.b16 %v756
    %v3021 = vunpack.c.h.b16 %v756
    %v3022 = vunpack.c.l.b16 %v757
    %v3023 = vunpack.c.l.b16 %v758
    %v3024 = vunpack.c.h.b16 %v758
    %v3025 = vunpack.c.l.b16 %v759
    %v3026 = vunpack.c.h.b16 %v759
    %v3027 = vunpack.c.l.b16 %v760
    %v3028 = vunpack.c.h.b16 %v760
    %v3029 = vunpack.c.l.b16 %v761
    %v3030 = vunpack.c.h.b16 %v761
    %v3031 = vunpack.c.l.b16 %v762
    %v3032 = vunpack.c.h.b16 %v762
    %v3033 = vunpack.c.l.b16 %v763
    %v3034 = vunpack.c.h.b16 %v763
    %v3035 = vunpack.c.l.b16 %v764
    %v3036 = vunpack.c.h.b16 %v764
    %v3037 = vunpack.c.l.b16 %v765
    %v3038 = vunpack.c.h.b16 %v765
    %v3039 = vunpack.c.l.b16 %v766
    %v3040 = vunpack.c.h.b16 %v766
    %v3041 = vunpack.c.l.b16 %v767
    %v3042 = vunpack.c.h.b16 %v767
    %v3043 = vunpack.c.l.b16 %v768
    %v3044 = vunpack.c.h.b16 %v768
    %v3045 = vunpack.c.l.b16 %v769
    %v3046 = vunpack.c.h.b16 %v769
    %v3047 = vunpack.c.l.b16 %v770
    %v3048 = vunpack.c.l.b16 %v771
    %v3049 = vunpack.c.h.b16 %v771
    %v3050 = vunpack.c.l.b16 %v772
    %v3051 = vunpack.c.h.b16 %v772
    %v3052 = vunpack.c.l.b16 %v773
    %v3053 = vunpack.c.h.b16 %v773
    %v3054 = vunpack.c.l.b16 %v774
    %v3055 = vunpack.c.h.b16 %v774
    %v3056 = vunpack.c.l.b16 %v775
    %v3057 = vunpack.c.h.b16 %v775
    %v3058 = vunpack.c.l.b16 %v776
    %v3059 = vunpack.c.h.b16 %v776
    %v3060 = vunpack.c.l.b16 %v777
    %v3061 = vunpack.c.h.b16 %v777
    %v3062 = vunpack.c.l.b16 %v778
    %v3063 = vunpack.c.h.b16 %v778
    %v3064 = vunpack.c.l.b16 %v779
    %v3065 = vunpack.c.h.b16 %v779
    %v3066 = vunpack.c.l.b16 %v780
    %v3067 = vunpack.c.h.b16 %v780
    %v3068 = vunpack.c.l.b16 %v781
    %v3069 = vunpack.c.h.b16 %v781
    %v3070 = vunpack.c.l.b16 %v782
    %v3071 = vunpack.c.h.b16 %v782
    %v3072 = vunpack.c.l.b16 %v783
    %v3073 = vunpack.c.l.b16 %v784
    %v3074 = vunpack.c.h.b16 %v784
    %v3075 = vunpack.c.l.b16 %v785
    %v3076 = vunpack.c.h.b16 %v785
    %v3077 = vunpack.c.l.b16 %v786
    %v3078 = vunpack.c.h.b16 %v786
    %v3079 = vunpack.c.l.b16 %v787
    %v3080 = vunpack.c.h.b16 %v787
    %v3081 = vunpack.c.l.b16 %v788
    %v3082 = vunpack.c.h.b16 %v788
    %v3083 = vunpack.c.l.b16 %v789
    %v3084 = vunpack.c.h.b16 %v789
    %v3085 = vunpack.c.l.b16 %v790
    %v3086 = vunpack.c.h.b16 %v790
    %v3087 = vunpack.c.l.b16 %v791
    %v3088 = vunpack.c.h.b16 %v791
    %v3089 = vunpack.c.l.b16 %v792
    %v3090 = vunpack.c.h.b16 %v792
    %v3091 = vunpack.c.l.b16 %v793
    %v3092 = vunpack.c.h.b16 %v793
    %v3093 = vunpack.c.l.b16 %v794
    %v3094 = vunpack.c.h.b16 %v794
    %v3095 = vunpack.c.l.b16 %v795
    %v3096 = vunpack.c.h.b16 %v795
    %v3097 = vunpack.c.l.b16 %v796
    %v3098 = vunpack.c.l.b16 %v797
    %v3099 = vunpack.c.h.b16 %v797
    %v3100 = vunpack.c.l.b16 %v798
    %v3101 = vunpack.c.h.b16 %v798
    %v3102 = vunpack.c.l.b16 %v799
    %v3103 = vunpack.c.h.b16 %v799
    %v3104 = vunpack.c.l.b16 %v800
    %v3105 = vunpack.c.h.b16 %v800
    %v3106 = vunpack.c.l.b16 %v801
    %v3107 = vunpack.c.h.b16 %v801
    %v3108 = vunpack.c.l.b16 %v802
    %v3109 = vunpack.c.h.b16 %v802
    %v3110 = vunpack.c.l.b16 %v803
    %v3111 = vunpack.c.h.b16 %v803
    %v3112 = vunpack.c.l.b16 %v804
    %v3113 = vunpack.c.h.b16 %v804
    %v3114 = vunpack.c.l.b16 %v805
    %v3115 = vunpack.c.h.b16 %v805
    %v3116 = vunpack.c.l.b16 %v806
    %v3117 = vunpack.c.h.b16 %v806
    %v3118 = vunpack.c.l.b16 %v807
    %v3119 = vunpack.c.h.b16 %v807
    %v3120 = vunpack.c.l.b16 %v808
    %v3121 = vunpack.c.h.b16 %v808
    %v3122 = vunpack.c.l.b16 %v809
    %v3123 = vunpack.c.l.b16 %v810
    %v3124 = vunpack.c.h.b16 %v810
    %v3125 = vunpack.c.l.b16 %v811
    %v3126 = vunpack.c.h.b16 %v811
    %v3127 = vunpack.c.l.b16 %v812
    %v3128 = vunpack.c.h.b16 %v812
    %v3129 = vunpack.c.l.b16 %v813
    %v3130 = vunpack.c.h.b16 %v813
    %v3131 = vunpack.c.l.b16 %v814
    %v3132 = vunpack.c.h.b16 %v814
    %v3133 = vunpack.c.l.b16 %v815
    %v3134 = vunpack.c.h.b16 %v815
    %v3135 = vunpack.c.l.b16 %v816
    %v3136 = vunpack.c.h.b16 %v816
    %v3137 = vunpack.c.l.b16 %v817
    %v3138 = vunpack.c.h.b16 %v817
    %v3139 = vunpack.c.l.b16 %v818
    %v3140 = vunpack.c.h.b16 %v818
    %v3141 = vunpack.c.l.b16 %v819
    %v3142 = vunpack.c.h.b16 %v819
    %v3143 = vunpack.c.l.b16 %v820
    %v3144 = vunpack.c.h.b16 %v820
    %v3145 = vunpack.c.l.b16 %v821
    %v3146 = vunpack.c.h.b16 %v821
    %v3147 = vunpack.c.l.b16 %v822
    %v3148 = vunpack.c.l.b16 %v823
    %v3149 = vunpack.c.h.b16 %v823
    %v3150 = vunpack.c.l.b16 %v824
    %v3151 = vunpack.c.h.b16 %v824
    %v3152 = vunpack.c.l.b16 %v825
    %v3153 = vunpack.c.h.b16 %v825
    %v3154 = vunpack.c.l.b16 %v826
    %v3155 = vunpack.c.h.b16 %v826
    %v3156 = vunpack.c.l.b16 %v827
    %v3157 = vunpack.c.h.b16 %v827
    %v3158 = vunpack.c.l.b16 %v828
    %v3159 = vunpack.c.h.b16 %v828
    %v3160 = vunpack.c.l.b16 %v829
    %v3161 = vunpack.c.h.b16 %v829
    %v3162 = vunpack.c.l.b16 %v830
    %v3163 = vunpack.c.h.b16 %v830
    %v3164 = vunpack.c.l.b16 %v831
    %v3165 = vunpack.c.h.b16 %v831
    %v3166 = vunpack.c.l.b16 %v832
    %v3167 = vunpack.c.h.b16 %v832
    %v3168 = vunpack.c.l.b16 %v833
    %v3169 = vunpack.c.h.b16 %v833
    %v3170 = vunpack.c.l.b16 %v834
    %v3171 = vunpack.c.h.b16 %v834
    %v3172 = vunpack.c.l.b16 %v835
    %v3173 = vunpack.c.l.b16 %v836
    %v3174 = vunpack.c.h.b16 %v836
    %v3175 = vunpack.c.l.b16 %v837
    %v3176 = vunpack.c.h.b16 %v837
    %v3177 = vunpack.c.l.b16 %v838
    %v3178 = vunpack.c.h.b16 %v838
    %v3179 = vunpack.c.l.b16 %v839
    %v3180 = vunpack.c.h.b16 %v839
    %v3181 = vunpack.c.l.b16 %v840
    %v3182 = vunpack.c.h.b16 %v840
    %v3183 = vunpack.c.l.b16 %v841
    %v3184 = vunpack.c.h.b16 %v841
    %v3185 = vunpack.c.l.b16 %v842
    %v3186 = vunpack.c.h.b16 %v842
    %v3187 = vunpack.c.l.b16 %v843
    %v3188 = vunpack.c.h.b16 %v843
    %v3189 = vunpack.c.l.b16 %v844
    %v3190 = vunpack.c.h.b16 %v844
    %v3191 = vunpack.c.l.b16 %v845
    %v3192 = vunpack.c.h.b16 %v845
    %v3193 = vunpack.c.l.b16 %v846
    %v3194 = vunpack.c.h.b16 %v846
    %v3195 = vunpack.c.l.b16 %v847
    %v3196 = vunpack.c.h.b16 %v847
    %v3197 = vunpack.c.l.b16 %v848
    %v3198 = vunpack.c.l.b16 %v849
    %v3199 = vunpack.c.h.b16 %v849
    %v3200 = vunpack.c.l.b16 %v850
    %v3201 = vunpack.c.h.b16 %v850
    %v3202 = vunpack.c.l.b16 %v851
    %v3203 = vunpack.c.h.b16 %v851
    %v3204 = vunpack.c.l.b16 %v852
    %v3205 = vunpack.c.h.b16 %v852
    %v3206 = vunpack.c.l.b16 %v853
    %v3207 = vunpack.c.h.b16 %v853
    %v3208 = vunpack.c.l.b16 %v854
    %v3209 = vunpack.c.h.b16 %v854
    %v3210 = vunpack.c.l.b16 %v855
    %v3211 = vunpack.c.h.b16 %v855
    %v3212 = vunpack.c.l.b16 %v856
    %v3213 = vunpack.c.h.b16 %v856
    %v3214 = vunpack.c.l.b16 %v857
    %v3215 = vunpack.c.h.b16 %v857
    %v3216 = vunpack.c.l.b16 %v858
    %v3217 = vunpack.c.h.b16 %v858
    %v3218 = vunpack.c.l.b16 %v859
    %v3219 = vunpack.c.h.b16 %v859
    %v3220 = vunpack.c.l.b16 %v860
    %v3221 = vunpack.c.h.b16 %v860
    %v3222 = vunpack.c.l.b16 %v861
    %v3223 = vunpack.c.l.b16 %v862
    %v3224 = vunpack.c.h.b16 %v862
    %v3225 = vunpack.c.l.b16 %v863
    %v3226 = vunpack.c.h.b16 %v863
    %v3227 = vunpack.c.l.b16 %v864
    %v3228 = vunpack.c.h.b16 %v864
    %v3229 = vunpack.c.l.b16 %v865
    %v3230 = vunpack.c.h.b16 %v865
    %v3231 = vunpack.c.l.b16 %v866
    %v3232 = vunpack.c.h.b16 %v866
    %v3233 = vunpack.c.l.b16 %v867
    %v3234 = vunpack.c.h.b16 %v867
    %v3235 = vunpack.c.l.b16 %v868
    %v3236 = vunpack.c.h.b16 %v868
    %v3237 = vunpack.c.l.b16 %v869
    %v3238 = vunpack.c.h.b16 %v869
    %v3239 = vunpack.c.l.b16 %v870
    %v3240 = vunpack.c.h.b16 %v870
    %v3241 = vunpack.c.l.b16 %v871
    %v3242 = vunpack.c.h.b16 %v871
    %v3243 = vunpack.c.l.b16 %v872
    %v3244 = vunpack.c.h.b16 %v872
    %v3245 = vunpack.c.l.b16 %v873
    %v3246 = vunpack.c.h.b16 %v873
    %v3247 = vunpack.c.l.b16 %v874
    %v3248 = vunpack.c.l.b16 %v875
    %v3249 = vunpack.c.h.b16 %v875
    %v3250 = vunpack.c.l.b16 %v876
    %v3251 = vunpack.c.h.b16 %v876
    %v3252 = vunpack.c.l.b16 %v877
    %v3253 = vunpack.c.h.b16 %v877
    %v3254 = vunpack.c.l.b16 %v878
    %v3255 = vunpack.c.h.b16 %v878
    %v3256 = vunpack.c.l.b16 %v879
    %v3257 = vunpack.c.h.b16 %v879
    %v3258 = vunpack.c.l.b16 %v880
    %v3259 = vunpack.c.h.b16 %v880
    %v3260 = vunpack.c.l.b16 %v881
    %v3261 = vunpack.c.h.b16 %v881
    %v3262 = vunpack.c.l.b16 %v882
    %v3263 = vunpack.c.h.b16 %v882
    %v3264 = vunpack.c.l.b16 %v883
    %v3265 = vunpack.c.h.b16 %v883
    %v3266 = vunpack.c.l.b16 %v884
    %v3267 = vunpack.c.h.b16 %v884
    %v3268 = vunpack.c.l.b16 %v885
    %v3269 = vunpack.c.h.b16 %v885
    %v3270 = vunpack.c.l.b16 %v886
    %v3271 = vunpack.c.h.b16 %v886
    %v3272 = vunpack.c.l.b16 %v887
    %v3273 = vunpack.c.l.b16 %v888
    %v3274 = vunpack.c.h.b16 %v888
    %v3275 = vunpack.c.l.b16 %v889
    %v3276 = vunpack.c.h.b16 %v889
    %v3277 = vunpack.c.l.b16 %v890
    %v3278 = vunpack.c.h.b16 %v890
    %v3279 = vunpack.c.l.b16 %v891
    %v3280 = vunpack.c.h.b16 %v891
    %v3281 = vunpack.c.l.b16 %v892
    %v3282 = vunpack.c.h.b16 %v892
    %v3283 = vunpack.c.l.b16 %v893
    %v3284 = vunpack.c.h.b16 %v893
    %v3285 = vunpack.c.l.b16 %v894
    %v3286 = vunpack.c.h.b16 %v894
    %v3287 = vunpack.c.l.b16 %v895
    %v3288 = vunpack.c.h.b16 %v895
    %v3289 = vunpack.c.l.b16 %v896
    %v3290 = vunpack.c.h.b16 %v896
    %v3291 = vunpack.c.l.b16 %v897
    %v3292 = vunpack.c.h.b16 %v897
    %v3293 = vunpack.c.l.b16 %v898
    %v3294 = vunpack.c.h.b16 %v898
    %v3295 = vunpack.c.l.b16 %v899
    %v3296 = vunpack.c.h.b16 %v899
    %v3297 = vunpack.c.l.b16 %v900
    %v3298 = vunpack.c.l.b16 %v901
    %v3299 = vunpack.c.h.b16 %v901
    %v3300 = vunpack.c.l.b16 %v902
    %v3301 = vunpack.c.h.b16 %v902
    %v3302 = vunpack.c.l.b16 %v903
    %v3303 = vunpack.c.h.b16 %v903
    %v3304 = vunpack.c.l.b16 %v904
    %v3305 = vunpack.c.h.b16 %v904
    %v3306 = vunpack.c.l.b16 %v905
    %v3307 = vunpack.c.h.b16 %v905
    %v3308 = vunpack.c.l.b16 %v906
    %v3309 = vunpack.c.h.b16 %v906
    %v3310 = vunpack.c.l.b16 %v907
    %v3311 = vunpack.c.h.b16 %v907
    %v3312 = vunpack.c.l.b16 %v908
    %v3313 = vunpack.c.h.b16 %v908
    %v3314 = vunpack.c.l.b16 %v909
    %v3315 = vunpack.c.h.b16 %v909
    %v3316 = vunpack.c.l.b16 %v910
    %v3317 = vunpack.c.h.b16 %v910
    %v3318 = vunpack.c.l.b16 %v911
    %v3319 = vunpack.c.h.b16 %v911
    %v3320 = vunpack.c.l.b16 %v912
    %v3321 = vunpack.c.h.b16 %v912
    %v3322 = vunpack.c.l.b16 %v913
    %v3323 = vunpack.c.l.b16 %v914
    %v3324 = vunpack.c.h.b16 %v914
    %v3325 = vunpack.c.l.b16 %v915
    %v3326 = vunpack.c.h.b16 %v915
    %v3327 = vunpack.c.l.b16 %v916
    %v3328 = vunpack.c.h.b16 %v916
    %v3329 = vunpack.c.l.b16 %v917
    %v3330 = vunpack.c.h.b16 %v917
    %v3331 = vunpack.c.l.b16 %v918
    %v3332 = vunpack.c.h.b16 %v918
    %v3333 = vunpack.c.l.b16 %v919
    %v3334 = vunpack.c.h.b16 %v919
    %v3335 = vunpack.c.l.b16 %v920
    %v3336 = vunpack.c.h.b16 %v920
    %v3337 = vunpack.c.l.b16 %v921
    %v3338 = vunpack.c.h.b16 %v921
    %v3339 = vunpack.c.l.b16 %v922
    %v3340 = vunpack.c.h.b16 %v922
    %v3341 = vunpack.c.l.b16 %v923
    %v3342 = vunpack.c.h.b16 %v923
    %v3343 = vunpack.c.l.b16 %v924
    %v3344 = vunpack.c.h.b16 %v924
    %v3345 = vunpack.c.l.b16 %v925
    %v3346 = vunpack.c.h.b16 %v925
    %v3347 = vunpack.c.l.b16 %v926
    %v3348 = vunpack.c.l.b16 %v927
    %v3349 = vunpack.c.h.b16 %v927
    %v3350 = vunpack.c.l.b16 %v928
    %v3351 = vunpack.c.h.b16 %v928
    %v3352 = vunpack.c.l.b16 %v929
    %v3353 = vunpack.c.h.b16 %v929
    %v3354 = vunpack.c.l.b16 %v930
    %v3355 = vunpack.c.h.b16 %v930
    %v3356 = vunpack.c.l.b16 %v931
    %v3357 = vunpack.c.h.b16 %v931
    %v3358 = vunpack.c.l.b16 %v932
    %v3359 = vunpack.c.h.b16 %v932
    %v3360 = vunpack.c.l.b16 %v933
    %v3361 = vunpack.c.h.b16 %v933
    %v3362 = vunpack.c.l.b16 %v934
    %v3363 = vunpack.c.h.b16 %v934
    %v3364 = vunpack.c.l.b16 %v935
    %v3365 = vunpack.c.h.b16 %v935
    %v3366 = vunpack.c.l.b16 %v936
    %v3367 = vunpack.c.h.b16 %v936
    %v3368 = vunpack.c.l.b16 %v937
    %v3369 = vunpack.c.h.b16 %v937
    %v3370 = vunpack.c.l.b16 %v938
    %v3371 = vunpack.c.h.b16 %v938
    %v3372 = vunpack.c.l.b16 %v939
    %v3373 = vunpack.c.l.b16 %v940
    %v3374 = vunpack.c.h.b16 %v940
    %v3375 = vunpack.c.l.b16 %v941
    %v3376 = vunpack.c.h.b16 %v941
    %v3377 = vunpack.c.l.b16 %v942
    %v3378 = vunpack.c.h.b16 %v942
    %v3379 = vunpack.c.l.b16 %v943
    %v3380 = vunpack.c.h.b16 %v943
    %v3381 = vunpack.c.l.b16 %v944
    %v3382 = vunpack.c.h.b16 %v944
    %v3383 = vunpack.c.l.b16 %v945
    %v3384 = vunpack.c.h.b16 %v945
    %v3385 = vunpack.c.l.b16 %v946
    %v3386 = vunpack.c.h.b16 %v946
    %v3387 = vunpack.c.l.b16 %v947
    %v3388 = vunpack.c.h.b16 %v947
    %v3389 = vunpack.c.l.b16 %v948
    %v3390 = vunpack.c.h.b16 %v948
    %v3391 = vunpack.c.l.b16 %v949
    %v3392 = vunpack.c.h.b16 %v949
    %v3393 = vunpack.c.l.b16 %v950
    %v3394 = vunpack.c.h.b16 %v950
    %v3395 = vunpack.c.l.b16 %v951
    %v3396 = vunpack.c.h.b16 %v951
    %v3397 = vunpack.c.l.b16 %v952
    %v3398 = vunpack.c.l.b16 %v953
    %v3399 = vunpack.c.h.b16 %v953
    %v3400 = vunpack.c.l.b16 %v954
    %v3401 = vunpack.c.h.b16 %v954
    %v3402 = vunpack.c.l.b16 %v955
    %v3403 = vunpack.c.h.b16 %v955
    %v3404 = vunpack.c.l.b16 %v956
    %v3405 = vunpack.c.h.b16 %v956
    %v3406 = vunpack.c.l.b16 %v957
    %v3407 = vunpack.c.h.b16 %v957
    %v3408 = vunpack.c.l.b16 %v958
    %v3409 = vunpack.c.h.b16 %v958
    %v3410 = vunpack.c.l.b16 %v959
    %v3411 = vunpack.c.h.b16 %v959
    %v3412 = vunpack.c.l.b16 %v960
    %v3413 = vunpack.c.h.b16 %v960
    %v3414 = vunpack.c.l.b16 %v961
    %v3415 = vunpack.c.h.b16 %v961
    %v3416 = vunpack.c.l.b16 %v962
    %v3417 = vunpack.c.h.b16 %v962
    %v3418 = vunpack.c.l.b16 %v963
    %v3419 = vunpack.c.h.b16 %v963
    %v3420 = vunpack.c.l.b16 %v964
    %v3421 = vunpack.c.h.b16 %v964
    %v3422 = vunpack.c.l.b16 %v965
    %v3423 = vunpack.c.l.b16 %v966
    %v3424 = vunpack.c.h.b16 %v966
    %v3425 = vunpack.c.l.b16 %v967
    %v3426 = vunpack.c.h.b16 %v967
    %v3427 = vunpack.c.l.b16 %v968
    %v3428 = vunpack.c.h.b16 %v968
    %v3429 = vunpack.c.l.b16 %v969
    %v3430 = vunpack.c.h.b16 %v969
    %v3431 = vunpack.c.l.b16 %v970
    %v3432 = vunpack.c.h.b16 %v970
    %v3433 = vunpack.c.l.b16 %v971
    %v3434 = vunpack.c.h.b16 %v971
    %v3435 = vunpack.c.l.b16 %v972
    %v3436 = vunpack.c.h.b16 %v972
    %v3437 = vunpack.c.l.b16 %v973
    %v3438 = vunpack.c.h.b16 %v973
    %v3439 = vunpack.c.l.b16 %v974
    %v3440 = vunpack.c.h.b16 %v974
    %v3441 = vunpack.c.l.b16 %v975
    %v3442 = vunpack.c.h.b16 %v975
    %v3443 = vunpack.c.l.b16 %v976
    %v3444 = vunpack.c.h.b16 %v976
    %v3445 = vunpack.c.l.b16 %v977
    %v3446 = vunpack.c.h.b16 %v977
    %v3447 = vunpack.c.l.b16 %v978
    %v3448 = vunpack.c.l.b16 %v979
    %v3449 = vunpack.c.h.b16 %v979
    %v3450 = vunpack.c.l.b16 %v980
    %v3451 = vunpack.c.h.b16 %v980
    %v3452 = vunpack.c.l.b16 %v981
    %v3453 = vunpack.c.h.b16 %v981
    %v3454 = vunpack.c.l.b16 %v982
    %v3455 = vunpack.c.h.b16 %v982
    %v3456 = vunpack.c.l.b16 %v983
    %v3457 = vunpack.c.h.b16 %v983
    %v3458 = vunpack.c.l.b16 %v984
    %v3459 = vunpack.c.h.b16 %v984
    %v3460 = vunpack.c.l.b16 %v985
    %v3461 = vunpack.c.h.b16 %v985
    %v3462 = vunpack.c.l.b16 %v986
    %v3463 = vunpack.c.h.b16 %v986
    %v3464 = vunpack.c.l.b16 %v987
    %v3465 = vunpack.c.h.b16 %v987
    %v3466 = vunpack.c.l.b16 %v988
    %v3467 = vunpack.c.h.b16 %v988
    %v3468 = vunpack.c.l.b16 %v989
    %v3469 = vunpack.c.h.b16 %v989
    %v3470 = vunpack.c.l.b16 %v990
    %v3471 = vunpack.c.h.b16 %v990
    %v3472 = vunpack.c.l.b16 %v991
    %v3473 = vunpack.c.l.b16 %v992
    %v3474 = vunpack.c.h.b16 %v992
    %v3475 = vunpack.c.l.b16 %v993
    %v3476 = vunpack.c.h.b16 %v993
    %v3477 = vunpack.c.l.b16 %v994
    %v3478 = vunpack.c.h.b16 %v994
    %v3479 = vunpack.c.l.b16 %v995
    %v3480 = vunpack.c.h.b16 %v995
    %v3481 = vunpack.c.l.b16 %v996
    %v3482 = vunpack.c.h.b16 %v996
    %v3483 = vunpack.c.l.b16 %v997
    %v3484 = vunpack.c.h.b16 %v997
    %v3485 = vunpack.c.l.b16 %v998
    %v3486 = vunpack.c.h.b16 %v998
    %v3487 = vunpack.c.l.b16 %v999
    %v3488 = vunpack.c.h.b16 %v999
    %v3489 = vunpack.c.l.b16 %v1000
    %v3490 = vunpack.c.h.b16 %v1000
    %v3491 = vunpack.c.l.b16 %v1001
    %v3492 = vunpack.c.h.b16 %v1001
    %v3493 = vunpack.c.l.b16 %v1002
    %v3494 = vunpack.c.h.b16 %v1002
    %v3495 = vunpack.c.l.b16 %v1003
    %v3496 = vunpack.c.h.b16 %v1003
    %v3497 = vunpack.c.l.b16 %v1004
    %v3498 = vunpack.c.l.b16 %v1005
    %v3499 = vunpack.c.h.b16 %v1005
    %v3500 = vunpack.c.l.b16 %v1006
    %v3501 = vunpack.c.h.b16 %v1006
    %v3502 = vunpack.c.l.b16 %v1007
    %v3503 = vunpack.c.h.b16 %v1007
    %v3504 = vunpack.c.l.b16 %v1008
    %v3505 = vunpack.c.h.b16 %v1008
    %v3506 = vunpack.c.l.b16 %v1009
    %v3507 = vunpack.c.h.b16 %v1009
    %v3508 = vunpack.c.l.b16 %v1010
    %v3509 = vunpack.c.h.b16 %v1010
    %v3510 = vunpack.c.l.b16 %v1011
    %v3511 = vunpack.c.h.b16 %v1011
    %v3512 = vunpack.c.l.b16 %v1012
    %v3513 = vunpack.c.h.b16 %v1012
    %v3514 = vunpack.c.l.b16 %v1013
    %v3515 = vunpack.c.h.b16 %v1013
    %v3516 = vunpack.c.l.b16 %v1014
    %v3517 = vunpack.c.h.b16 %v1014
    %v3518 = vunpack.c.l.b16 %v1015
    %v3519 = vunpack.c.h.b16 %v1015
    %v3520 = vunpack.c.l.b16 %v1016
    %v3521 = vunpack.c.h.b16 %v1016
    %v3522 = vunpack.c.l.b16 %v1017
    %v3523 = vunpack.c.l.b16 %v1018
    %v3524 = vunpack.c.h.b16 %v1018
    %v3525 = vunpack.c.l.b16 %v1019
    %v3526 = vunpack.c.h.b16 %v1019
    %v3527 = vunpack.c.l.b16 %v1020
    %v3528 = vunpack.c.h.b16 %v1020
    %v3529 = vunpack.c.l.b16 %v1021
    %v3530 = vunpack.c.h.b16 %v1021
    %v3531 = vunpack.c.l.b16 %v1022
    %v3532 = vunpack.c.h.b16 %v1022
    %v3533 = vunpack.c.l.b16 %v1023
    %v3534 = vunpack.c.h.b16 %v1023
    %v3535 = vunpack.c.l.b16 %v1024
    %v3536 = vunpack.c.h.b16 %v1024
    %v3537 = vunpack.c.l.b16 %v1025
    %v3538 = vunpack.c.h.b16 %v1025
    %v3539 = vunpack.c.l.b16 %v1026
    %v3540 = vunpack.c.h.b16 %v1026
    %v3541 = vunpack.c.l.b16 %v1027
    %v3542 = vunpack.c.h.b16 %v1027
    %v3543 = vunpack.c.l.b16 %v1028
    %v3544 = vunpack.c.h.b16 %v1028
    %v3545 = vunpack.c.l.b16 %v1029
    %v3546 = vunpack.c.h.b16 %v1029
    %v3547 = vunpack.c.l.b16 %v1030
    %v3548 = vunpack.c.l.b16 %v1031
    %v3549 = vunpack.c.h.b16 %v1031
    %v3550 = vunpack.c.l.b16 %v1032
    %v3551 = vunpack.c.h.b16 %v1032
    %v3552 = vunpack.c.l.b16 %v1033
    %v3553 = vunpack.c.h.b16 %v1033
    %v3554 = vunpack.c.l.b16 %v1034
    %v3555 = vunpack.c.h.b16 %v1034
    %v3556 = vunpack.c.l.b16 %v1035
    %v3557 = vunpack.c.h.b16 %v1035
    %v3558 = vunpack.c.l.b16 %v1036
    %v3559 = vunpack.c.h.b16 %v1036
    %v3560 = vunpack.c.l.b16 %v1037
    %v3561 = vunpack.c.h.b16 %v1037
    %v3562 = vunpack.c.l.b16 %v1038
    %v3563 = vunpack.c.h.b16 %v1038
    %v3564 = vunpack.c.l.b16 %v1039
    %v3565 = vunpack.c.h.b16 %v1039
    %v3566 = vunpack.c.l.b16 %v1040
    %v3567 = vunpack.c.h.b16 %v1040
    %v3568 = vunpack.c.l.b16 %v1041
    %v3569 = vunpack.c.h.b16 %v1041
    %v3570 = vunpack.c.l.b16 %v1042
    %v3571 = vunpack.c.h.b16 %v1042
    %v3572 = vunpack.c.l.b16 %v1043
    %v3573 = vunpack.c.l.b16 %v1044
    %v3574 = vunpack.c.h.b16 %v1044
    %v3575 = vunpack.c.l.b16 %v1045
    %v3576 = vunpack.c.h.b16 %v1045
    %v3577 = vunpack.c.l.b16 %v1046
    %v3578 = vunpack.c.h.b16 %v1046
    %v3579 = vunpack.c.l.b16 %v1047
    %v3580 = vunpack.c.h.b16 %v1047
    %v3581 = vunpack.c.l.b16 %v1048
    %v3582 = vunpack.c.h.b16 %v1048
    %v3583 = vunpack.c.l.b16 %v1049
    %v3584 = vunpack.c.h.b16 %v1049
    %v3585 = vunpack.c.l.b16 %v1050
    %v3586 = vunpack.c.h.b16 %v1050
    %v3587 = vunpack.c.l.b16 %v1051
    %v3588 = vunpack.c.h.b16 %v1051
    %v3589 = vunpack.c.l.b16 %v1052
    %v3590 = vunpack.c.h.b16 %v1052
    %v3591 = vunpack.c.l.b16 %v1053
    %v3592 = vunpack.c.h.b16 %v1053
    %v3593 = vunpack.c.l.b16 %v1054
    %v3594 = vunpack.c.h.b16 %v1054
    %v3595 = vunpack.c.l.b16 %v1055
    %v3596 = vunpack.c.h.b16 %v1055
    %v3597 = vunpack.c.l.b16 %v1056
    %v3598 = vunpack.c.l.b16 %v1057
    %v3599 = vunpack.c.h.b16 %v1057
    %v3600 = vunpack.c.l.b16 %v1058
    %v3601 = vunpack.c.h.b16 %v1058
    %v3602 = vunpack.c.l.b16 %v1059
    %v3603 = vunpack.c.h.b16 %v1059
    %v3604 = vunpack.c.l.b16 %v1060
    %v3605 = vunpack.c.h.b16 %v1060
    %v3606 = vunpack.c.l.b16 %v1061
    %v3607 = vunpack.c.h.b16 %v1061
    %v3608 = vunpack.c.l.b16 %v1062
    %v3609 = vunpack.c.h.b16 %v1062
    %v3610 = vunpack.c.l.b16 %v1063
    %v3611 = vunpack.c.h.b16 %v1063
    %v3612 = vunpack.c.l.b16 %v1064
    %v3613 = vunpack.c.h.b16 %v1064
    %v3614 = vunpack.c.l.b16 %v1065
    %v3615 = vunpack.c.h.b16 %v1065
    %v3616 = vunpack.c.l.b16 %v1066
    %v3617 = vunpack.c.h.b16 %v1066
    %v3618 = vunpack.c.l.b16 %v1067
    %v3619 = vunpack.c.h.b16 %v1067
    %v3620 = vunpack.c.l.b16 %v1068
    %v3621 = vunpack.c.h.b16 %v1068
    %v3622 = vunpack.c.l.b16 %v1069
    %v3623 = vunpack.c.l.b16 %v1070
    %v3624 = vunpack.c.h.b16 %v1070
    %v3625 = vunpack.c.l.b16 %v1071
    %v3626 = vunpack.c.h.b16 %v1071
    %v3627 = vunpack.c.l.b16 %v1072
    %v3628 = vunpack.c.h.b16 %v1072
    %v3629 = vunpack.c.l.b16 %v1073
    %v3630 = vunpack.c.h.b16 %v1073
    %v3631 = vunpack.c.l.b16 %v1074
    %v3632 = vunpack.c.h.b16 %v1074
    %v3633 = vunpack.c.l.b16 %v1075
    %v3634 = vunpack.c.h.b16 %v1075
    %v3635 = vunpack.c.l.b16 %v1076
    %v3636 = vunpack.c.h.b16 %v1076
    %v3637 = vunpack.c.l.b16 %v1077
    %v3638 = vunpack.c.h.b16 %v1077
    %v3639 = vunpack.c.l.b16 %v1078
    %v3640 = vunpack.c.h.b16 %v1078
    %v3641 = vunpack.c.l.b16 %v1079
    %v3642 = vunpack.c.h.b16 %v1079
    %v3643 = vunpack.c.l.b16 %v1080
    %v3644 = vunpack.c.h.b16 %v1080
    %v3645 = vunpack.c.l.b16 %v1081
    %v3646 = vunpack.c.h.b16 %v1081
    %v3647 = vunpack.c.l.b16 %v1082
    %v3648 = vpack.c.b16 %v2073, %v2048
    %v3649 = vpack.c.b16 %v2074, %v2049
    %v3650 = vpack.c.b16 %v2075, %v2050
    %v3651 = vpack.c.b16 %v2076, %v2051
    %v3652 = vpack.c.b16 %v2077, %v2052
    %v3653 = vpack.c.b16 %v2078, %v2053
    %v3654 = vpack.c.b16 %v2079, %v2054
    %v3655 = vpack.c.b16 %v2080, %v2055
    %v3656 = vpack.c.b16 %v2081, %v2056
    %v3657 = vpack.c.b16 %v2082, %v2057
    %v3658 = vpack.c.b16 %v2083, %v2058
    %v3659 = vpack.c.b16 %v2084, %v2059
    %v3660 = vpack.c.b16 %v2085, %v2060
    %v3661 = vpack.c.b16 %v2086, %v2061
    %v3662 = vpack.c.b16 %v2087, %v2062
    %v3663 = vpack.c.b16 %v2088, %v2063
    %v3664 = vpack.c.b16 %v2089, %v2064
    %v3665 = vpack.c.b16 %v2090, %v2065
    %v3666 = vpack.c.b16 %v2091, %v2066
    %v3667 = vpack.c.b16 %v2092, %v2067
    %v3668 = vpack.c.b16 %v2093, %v2068
    %v3669 = vpack.c.b16 %v2094, %v2069
    %v3670 = vpack.c.b16 %v2095, %v2070
    %v3671 = vpack.c.b16 %v2096, %v2071
    %v3672 = vpack.c.b16 %v2097, %v2072
    %v3673 = vpack.c.b16 %v2123, %v2098
    %v3674 = vpack.c.b16 %v2124, %v2099
    %v3675 = vpack.c.b16 %v2125, %v2100
    %v3676 = vpack.c.b16 %v2126, %v2101
    %v3677 = vpack.c.b16 %v2127, %v2102
    %v3678 = vpack.c.b16 %v2128, %v2103
    %v3679 = vpack.c.b16 %v2129, %v2104
    %v3680 = vpack.c.b16 %v2130, %v2105
    %v3681 = vpack.c.b16 %v2131, %v2106
    %v3682 = vpack.c.b16 %v2132, %v2107
    %v3683 = vpack.c.b16 %v2133, %v2108
    %v3684 = vpack.c.b16 %v2134, %v2109
    %v3685 = vpack.c.b16 %v2135, %v2110
    %v3686 = vpack.c.b16 %v2136, %v2111
    %v3687 = vpack.c.b16 %v2137, %v2112
    %v3688 = vpack.c.b16 %v2138, %v2113
    %v3689 = vpack.c.b16 %v2139, %v2114
    %v3690 = vpack.c.b16 %v2140, %v2115
    %v3691 = vpack.c.b16 %v2141, %v2116
    %v3692 = vpack.c.b16 %v2142, %v2117
    %v3693 = vpack.c.b16 %v2143, %v2118
    %v3694 = vpack.c.b16 %v2144, %v2119
    %v3695 = vpack.c.b16 %v2145, %v2120
    %v3696 = vpack.c.b16 %v2146, %v2121
    %v3697 = vpack.c.b16 %v2147, %v2122
    %v3698 = vpack.c.b16 %v2173, %v2148
    %v3699 = vpack.c.b16 %v2174, %v2149
    %v3700 = vpack.c.b16 %v2175, %v2150
    %v3701 = vpack.c.b16 %v2176, %v2151
    %v3702 = vpack.c.b16 %v2177, %v2152
    %v3703 = vpack.c.b16 %v2178, %v2153
    %v3704 = vpack.c.b16 %v2179, %v2154
    %v3705 = vpack.c.b16 %v2180, %v2155
    %v3706 = vpack.c.b16 %v2181, %v2156
    %v3707 = vpack.c.b16 %v2182, %v2157
    %v3708 = vpack.c.b16 %v2183, %v2158
    %v3709 = vpack.c.b16 %v2184, %v2159
    %v3710 = vpack.c.b16 %v2185, %v2160
    %v3711 = vpack.c.b16 %v2186, %v2161
    %v3712 = vpack.c.b16 %v2187, %v2162
    %v3713 = vpack.c.b16 %v2188, %v2163
    %v3714 = vpack.c.b16 %v2189, %v2164
    %v3715 = vpack.c.b16 %v2190, %v2165
    %v3716 = vpack.c.b16 %v2191, %v2166
    %v3717 = vpack.c.b16 %v2192, %v2167
    %v3718 = vpack.c.b16 %v2193, %v2168
    %v3719 = vpack.c.b16 %v2194, %v2169
    %v3720 = vpack.c.b16 %v2195, %v2170
    %v3721 = vpack.c.b16 %v2196, %v2171
    %v3722 = vpack.c.b16 %v2197, %v2172
    %v3723 = vpack.c.b16 %v2223, %v2198
    %v3724 = vpack.c.b16 %v2224, %v2199
    %v3725 = vpack.c.b16 %v2225, %v2200
    %v3726 = vpack.c.b16 %v2226, %v2201
    %v3727 = vpack.c.b16 %v2227, %v2202
    %v3728 = vpack.c.b16 %v2228, %v2203
    %v3729 = vpack.c.b16 %v2229, %v2204
    %v3730 = vpack.c.b16 %v2230, %v2205
    %v3731 = vpack.c.b16 %v2231, %v2206
    %v3732 = vpack.c.b16 %v2232, %v2207
    %v3733 = vpack.c.b16 %v2233, %v2208
    %v3734 = vpack.c.b16 %v2234, %v2209
    %v3735 = vpack.c.b16 %v2235, %v2210
    %v3736 = vpack.c.b16 %v2236, %v2211
    %v3737 = vpack.c.b16 %v2237, %v2212
    %v3738 = vpack.c.b16 %v2238, %v2213
    %v3739 = vpack.c.b16 %v2239, %v2214
    %v3740 = vpack.c.b16 %v2240, %v2215
    %v3741 = vpack.c.b16 %v2241, %v2216
    %v3742 = vpack.c.b16 %v2242, %v2217
    %v3743 = vpack.c.b16 %v2243, %v2218
    %v3744 = vpack.c.b16 %v2244, %v2219
    %v3745 = vpack.c.b16 %v2245, %v2220
    %v3746 = vpack.c.b16 %v2246, %v2221
    %v3747 = vpack.c.b16 %v2247, %v2222
    %v3748 = vpack.c.b16 %v2273, %v2248
    %v3749 = vpack.c.b16 %v2274, %v2249
    %v3750 = vpack.c.b16 %v2275, %v2250
    %v3751 = vpack.c.b16 %v2276, %v2251
    %v3752 = vpack.c.b16 %v2277, %v2252
    %v3753 = vpack.c.b16 %v2278, %v2253
    %v3754 = vpack.c.b16 %v2279, %v2254
    %v3755 = vpack.c.b16 %v2280, %v2255
    %v3756 = vpack.c.b16 %v2281, %v2256
    %v3757 = vpack.c.b16 %v2282, %v2257
    %v3758 = vpack.c.b16 %v2283, %v2258
    %v3759 = vpack.c.b16 %v2284, %v2259
    %v3760 = vpack.c.b16 %v2285, %v2260
    %v3761 = vpack.c.b16 %v2286, %v2261
    %v3762 = vpack.c.b16 %v2287, %v2262
    %v3763 = vpack.c.b16 %v2288, %v2263
    %v3764 = vpack.c.b16 %v2289, %v2264
    %v3765 = vpack.c.b16 %v2290, %v2265
    %v3766 = vpack.c.b16 %v2291, %v2266
    %v3767 = vpack.c.b16 %v2292, %v2267
    %v3768 = vpack.c.b16 %v2293, %v2268
    %v3769 = vpack.c.b16 %v2294, %v2269
    %v3770 = vpack.c.b16 %v2295, %v2270
    %v3771 = vpack.c.b16 %v2296, %v2271
    %v3772 = vpack.c.b16 %v2297, %v2272
    %v3773 = vpack.c.b16 %v2323, %v2298
    %v3774 = vpack.c.b16 %v2324, %v2299
    %v3775 = vpack.c.b16 %v2325, %v2300
    %v3776 = vpack.c.b16 %v2326, %v2301
    %v3777 = vpack.c.b16 %v2327, %v2302
    %v3778 = vpack.c.b16 %v2328, %v2303
    %v3779 = vpack.c.b16 %v2329, %v2304
    %v3780 = vpack.c.b16 %v2330, %v2305
    %v3781 = vpack.c.b16 %v2331, %v2306
    %v3782 = vpack.c.b16 %v2332, %v2307
    %v3783 = vpack.c.b16 %v2333, %v2308
    %v3784 = vpack.c.b16 %v2334, %v2309
    %v3785 = vpack.c.b16 %v2335, %v2310
    %v3786 = vpack.c.b16 %v2336, %v2311
    %v3787 = vpack.c.b16 %v2337, %v2312
    %v3788 = vpack.c.b16 %v2338, %v2313
    %v3789 = vpack.c.b16 %v2339, %v2314
    %v3790 = vpack.c.b16 %v2340, %v2315
    %v3791 = vpack.c.b16 %v2341, %v2316
    %v3792 = vpack.c.b16 %v2342, %v2317
    %v3793 = vpack.c.b16 %v2343, %v2318
    %v3794 = vpack.c.b16 %v2344, %v2319
    %v3795 = vpack.c.b16 %v2345, %v2320
    %v3796 = vpack.c.b16 %v2346, %v2321
    %v3797 = vpack.c.b16 %v2347, %v2322
    %v3798 = vpack.c.b16 %v2373, %v2348
    %v3799 = vpack.c.b16 %v2374, %v2349
    %v3800 = vpack.c.b16 %v2375, %v2350
    %v3801 = vpack.c.b16 %v2376, %v2351
    %v3802 = vpack.c.b16 %v2377, %v2352
    %v3803 = vpack.c.b16 %v2378, %v2353
    %v3804 = vpack.c.b16 %v2379, %v2354
    %v3805 = vpack.c.b16 %v2380, %v2355
    %v3806 = vpack.c.b16 %v2381, %v2356
    %v3807 = vpack.c.b16 %v2382, %v2357
    %v3808 = vpack.c.b16 %v2383, %v2358
    %v3809 = vpack.c.b16 %v2384, %v2359
    %v3810 = vpack.c.b16 %v2385, %v2360
    %v3811 = vpack.c.b16 %v2386, %v2361
    %v3812 = vpack.c.b16 %v2387, %v2362
    %v3813 = vpack.c.b16 %v2388, %v2363
    %v3814 = vpack.c.b16 %v2389, %v2364
    %v3815 = vpack.c.b16 %v2390, %v2365
    %v3816 = vpack.c.b16 %v2391, %v2366
    %v3817 = vpack.c.b16 %v2392, %v2367
    %v3818 = vpack.c.b16 %v2393, %v2368
    %v3819 = vpack.c.b16 %v2394, %v2369
    %v3820 = vpack.c.b16 %v2395, %v2370
    %v3821 = vpack.c.b16 %v2396, %v2371
    %v3822 = vpack.c.b16 %v2397, %v2372
    %v3823 = vpack.c.b16 %v2423, %v2398
    %v3824 = vpack.c.b16 %v2424, %v2399
    %v3825 = vpack.c.b16 %v2425, %v2400
    %v3826 = vpack.c.b16 %v2426, %v2401
    %v3827 = vpack.c.b16 %v2427, %v2402
    %v3828 = vpack.c.b16 %v2428, %v2403
    %v3829 = vpack.c.b16 %v2429, %v2404
    %v3830 = vpack.c.b16 %v2430, %v2405
    %v3831 = vpack.c.b16 %v2431, %v2406
    %v3832 = vpack.c.b16 %v2432, %v2407
    %v3833 = vpack.c.b16 %v2433, %v2408
    %v3834 = vpack.c.b16 %v2434, %v2409
    %v3835 = vpack.c.b16 %v2435, %v2410
    %v3836 = vpack.c.b16 %v2436, %v2411
    %v3837 = vpack.c.b16 %v2437, %v2412
    %v3838 = vpack.c.b16 %v2438, %v2413
    %v3839 = vpack.c.b16 %v2439, %v2414
    %v3840 = vpack.c.b16 %v2440, %v2415
    %v3841 = vpack.c.b16 %v2441, %v2416
    %v3842 = vpack.c.b16 %v2442, %v2417
    %v3843 = vpack.c.b16 %v2443, %v2418
    %v3844 = vpack.c.b16 %v2444, %v2419
    %v3845 = vpack.c.b16 %v2445, %v2420
    %v3846 = vpack.c.b16 %v2446, %v2421
    %v3847 = vpack.c.b16 %v2447, %v2422
    %v3848 = vpack.c.b16 %v2473, %v2448
    %v3849 = vpack.c.b16 %v2474, %v2449
    %v3850 = vpack.c.b16 %v2475, %v2450
    %v3851 = vpack.c.b16 %v2476, %v2451
    %v3852 = vpack.c.b16 %v2477, %v2452
    %v3853 = vpack.c.b16 %v2478, %v2453
    %v3854 = vpack.c.b16 %v2479, %v2454
    %v3855 = vpack.c.b16 %v2480, %v2455
    %v3856 = vpack.c.b16 %v2481, %v2456
    %v3857 = vpack.c.b16 %v2482, %v2457
    %v3858 = vpack.c.b16 %v2483, %v2458
    %v3859 = vpack.c.b16 %v2484, %v2459
    %v3860 = vpack.c.b16 %v2485, %v2460
    %v3861 = vpack.c.b16 %v2486, %v2461
    %v3862 = vpack.c.b16 %v2487, %v2462
    %v3863 = vpack.c.b16 %v2488, %v2463
    %v3864 = vpack.c.b16 %v2489, %v2464
    %v3865 = vpack.c.b16 %v2490, %v2465
    %v3866 = vpack.c.b16 %v2491, %v2466
    %v3867 = vpack.c.b16 %v2492, %v2467
    %v3868 = vpack.c.b16 %v2493, %v2468
    %v3869 = vpack.c.b16 %v2494, %v2469
    %v3870 = vpack.c.b16 %v2495, %v2470
    %v3871 = vpack.c.b16 %v2496, %v2471
    %v3872 = vpack.c.b16 %v2497, %v2472
    %v3873 = vpack.c.b16 %v2523, %v2498
    %v3874 = vpack.c.b16 %v2524, %v2499
    %v3875 = vpack.c.b16 %v2525, %v2500
    %v3876 = vpack.c.b16 %v2526, %v2501
    %v3877 = vpack.c.b16 %v2527, %v2502
    %v3878 = vpack.c.b16 %v2528, %v2503
    %v3879 = vpack.c.b16 %v2529, %v2504
    %v3880 = vpack.c.b16 %v2530, %v2505
    %v3881 = vpack.c.b16 %v2531, %v2506
    %v3882 = vpack.c.b16 %v2532, %v2507
    %v3883 = vpack.c.b16 %v2533, %v2508
    %v3884 = vpack.c.b16 %v2534, %v2509
    %v3885 = vpack.c.b16 %v2535, %v2510
    %v3886 = vpack.c.b16 %v2536, %v2511
    %v3887 = vpack.c.b16 %v2537, %v2512
    %v3888 = vpack.c.b16 %v2538, %v2513
    %v3889 = vpack.c.b16 %v2539, %v2514
    %v3890 = vpack.c.b16 %v2540, %v2515
    %v3891 = vpack.c.b16 %v2541, %v2516
    %v3892 = vpack.c.b16 %v2542, %v2517
    %v3893 = vpack.c.b16 %v2543, %v2518
    %v3894 = vpack.c.b16 %v2544, %v2519
    %v3895 = vpack.c.b16 %v2545, %v2520
    %v3896 = vpack.c.b16 %v2546, %v2521
    %v3897 = vpack.c.b16 %v2547, %v2522
    %v3898 = vpack.c.b16 %v2573, %v2548
    %v3899 = vpack.c.b16 %v2574, %v2549
    %v3900 = vpack.c.b16 %v2575, %v2550
    %v3901 = vpack.c.b16 %v2576, %v2551
    %v3902 = vpack.c.b16 %v2577, %v2552
    %v3903 = vpack.c.b16 %v2578, %v2553
    %v3904 = vpack.c.b16 %v2579, %v2554
    %v3905 = vpack.c.b16 %v2580, %v2555
    %v3906 = vpack.c.b16 %v2581, %v2556
    %v3907 = vpack.c.b16 %v2582, %v2557
    %v3908 = vpack.c.b16 %v2583, %v2558
    %v3909 = vpack.c.b16 %v2584, %v2559
    %v3910 = vpack.c.b16 %v2585, %v2560
    %v3911 = vpack.c.b16 %v2586, %v2561
    %v3912 = vpack.c.b16 %v2587, %v2562
    %v3913 = vpack.c.b16 %v2588, %v2563
    %v3914 = vpack.c.b16 %v2589, %v2564
    %v3915 = vpack.c.b16 %v2590, %v2565
    %v3916 = vpack.c.b16 %v2591, %v2566
    %v3917 = vpack.c.b16 %v2592, %v2567
    %v3918 = vpack.c.b16 %v2593, %v2568
    %v3919 = vpack.c.b16 %v2594, %v2569
    %v3920 = vpack.c.b16 %v2595, %v2570
    %v3921 = vpack.c.b16 %v2596, %v2571
    %v3922 = vpack.c.b16 %v2597, %v2572
    %v3923 = vpack.c.b16 %v2623, %v2598
    %v3924 = vpack.c.b16 %v2624, %v2599
    %v3925 = vpack.c.b16 %v2625, %v2600
    %v3926 = vpack.c.b16 %v2626, %v2601
    %v3927 = vpack.c.b16 %v2627, %v2602
    %v3928 = vpack.c.b16 %v2628, %v2603
    %v3929 = vpack.c.b16 %v2629, %v2604
    %v3930 = vpack.c.b16 %v2630, %v2605
    %v3931 = vpack.c.b16 %v2631, %v2606
    %v3932 = vpack.c.b16 %v2632, %v2607
    %v3933 = vpack.c.b16 %v2633, %v2608
    %v3934 = vpack.c.b16 %v2634, %v2609
    %v3935 = vpack.c.b16 %v2635, %v2610
    %v3936 = vpack.c.b16 %v2636, %v2611
    %v3937 = vpack.c.b16 %v2637, %v2612
    %v3938 = vpack.c.b16 %v2638, %v2613
    %v3939 = vpack.c.b16 %v2639, %v2614
    %v3940 = vpack.c.b16 %v2640, %v2615
    %v3941 = vpack.c.b16 %v2641, %v2616
    %v3942 = vpack.c.b16 %v2642, %v2617
    %v3943 = vpack.c.b16 %v2643, %v2618
    %v3944 = vpack.c.b16 %v2644, %v2619
    %v3945 = vpack.c.b16 %v2645, %v2620
    %v3946 = vpack.c.b16 %v2646, %v2621
    %v3947 = vpack.c.b16 %v2647, %v2622
    %v3948 = vpack.c.b16 %v2673, %v2648
    %v3949 = vpack.c.b16 %v2674, %v2649
    %v3950 = vpack.c.b16 %v2675, %v2650
    %v3951 = vpack.c.b16 %v2676, %v2651
    %v3952 = vpack.c.b16 %v2677, %v2652
    %v3953 = vpack.c.b16 %v2678, %v2653
    %v3954 = vpack.c.b16 %v2679, %v2654
    %v3955 = vpack.c.b16 %v2680, %v2655
    %v3956 = vpack.c.b16 %v2681, %v2656
    %v3957 = vpack.c.b16 %v2682, %v2657
    %v3958 = vpack.c.b16 %v2683, %v2658
    %v3959 = vpack.c.b16 %v2684, %v2659
    %v3960 = vpack.c.b16 %v2685, %v2660
    %v3961 = vpack.c.b16 %v2686, %v2661
    %v3962 = vpack.c.b16 %v2687, %v2662
    %v3963 = vpack.c.b16 %v2688, %v2663
    %v3964 = vpack.c.b16 %v2689, %v2664
    %v3965 = vpack.c.b16 %v2690, %v2665
    %v3966 = vpack.c.b16 %v2691, %v2666
    %v3967 = vpack.c.b16 %v2692, %v2667
    %v3968 = vpack.c.b16 %v2693, %v2668
    %v3969 = vpack.c.b16 %v2694, %v2669
    %v3970 = vpack.c.b16 %v2695, %v2670
    %v3971 = vpack.c.b16 %v2696, %v2671
    %v3972 = vpack.c.b16 %v2697, %v2672
    %v3973 = vpack.c.b16 %v2723, %v2698
    %v3974 = vpack.c.b16 %v2724, %v2699
    %v3975 = vpack.c.b16 %v2725, %v2700
    %v3976 = vpack.c.b16 %v2726, %v2701
    %v3977 = vpack.c.b16 %v2727, %v2702
    %v3978 = vpack.c.b16 %v2728, %v2703
    %v3979 = vpack.c.b16 %v2729, %v2704
    %v3980 = vpack.c.b16 %v2730, %v2705
    %v3981 = vpack.c.b16 %v2731, %v2706
    %v3982 = vpack.c.b16 %v2732, %v2707
    %v3983 = vpack.c.b16 %v2733, %v2708
    %v3984 = vpack.c.b16 %v2734, %v2709
    %v3985 = vpack.c.b16 %v2735, %v2710
    %v3986 = vpack.c.b16 %v2736, %v2711
    %v3987 = vpack.c.b16 %v2737, %v2712
    %v3988 = vpack.c.b16 %v2738, %v2713
    %v3989 = vpack.c.b16 %v2739, %v2714
    %v3990 = vpack.c.b16 %v2740, %v2715
    %v3991 = vpack.c.b16 %v2741, %v2716
    %v3992 = vpack.c.b16 %v2742, %v2717
    %v3993 = vpack.c.b16 %v2743, %v2718
    %v3994 = vpack.c.b16 %v2744, %v2719
    %v3995 = vpack.c.b16 %v2745, %v2720
    %v3996 = vpack.c.b16 %v2746, %v2721
    %v3997 = vpack.c.b16 %v2747, %v2722
    %v3998 = vpack.c.b16 %v2773, %v2748
    %v3999 = vpack.c.b16 %v2774, %v2749
    %v4000 = vpack.c.b16 %v2775, %v2750
    %v4001 = vpack.c.b16 %v2776, %v2751
    %v4002 = vpack.c.b16 %v2777, %v2752
    %v4003 = vpack.c.b16 %v2778, %v2753
    %v4004 = vpack.c.b16 %v2779, %v2754
    %v4005 = vpack.c.b16 %v2780, %v2755
    %v4006 = vpack.c.b16 %v2781, %v2756
    %v4007 = vpack.c.b16 %v2782, %v2757
    %v4008 = vpack.c.b16 %v2783, %v2758
    %v4009 = vpack.c.b16 %v2784, %v2759
    %v4010 = vpack.c.b16 %v2785, %v2760
    %v4011 = vpack.c.b16 %v2786, %v2761
    %v4012 = vpack.c.b16 %v2787, %v2762
    %v4013 = vpack.c.b16 %v2788, %v2763
    %v4014 = vpack.c.b16 %v2789, %v2764
    %v4015 = vpack.c.b16 %v2790, %v2765
    %v4016 = vpack.c.b16 %v2791, %v2766
    %v4017 = vpack.c.b16 %v2792, %v2767
    %v4018 = vpack.c.b16 %v2793, %v2768
    %v4019 = vpack.c.b16 %v2794, %v2769
    %v4020 = vpack.c.b16 %v2795, %v2770
    %v4021 = vpack.c.b16 %v2796, %v2771
    %v4022 = vpack.c.b16 %v2797, %v2772
    %v4023 = vpack.c.b16 %v2823, %v2798
    %v4024 = vpack.c.b16 %v2824, %v2799
    %v4025 = vpack.c.b16 %v2825, %v2800
    %v4026 = vpack.c.b16 %v2826, %v2801
    %v4027 = vpack.c.b16 %v2827, %v2802
    %v4028 = vpack.c.b16 %v2828, %v2803
    %v4029 = vpack.c.b16 %v2829, %v2804
    %v4030 = vpack.c.b16 %v2830, %v2805
    %v4031 = vpack.c.b16 %v2831, %v2806
    %v4032 = vpack.c.b16 %v2832, %v2807
    %v4033 = vpack.c.b16 %v2833, %v2808
    %v4034 = vpack.c.b16 %v2834, %v2809
    %v4035 = vpack.c.b16 %v2835, %v2810
    %v4036 = vpack.c.b16 %v2836, %v2811
    %v4037 = vpack.c.b16 %v2837, %v2812
    %v4038 = vpack.c.b16 %v2838, %v2813
    %v4039 = vpack.c.b16 %v2839, %v2814
    %v4040 = vpack.c.b16 %v2840, %v2815
    %v4041 = vpack.c.b16 %v2841, %v2816
    %v4042 = vpack.c.b16 %v2842, %v2817
    %v4043 = vpack.c.b16 %v2843, %v2818
    %v4044 = vpack.c.b16 %v2844, %v2819
    %v4045 = vpack.c.b16 %v2845, %v2820
    %v4046 = vpack.c.b16 %v2846, %v2821
    %v4047 = vpack.c.b16 %v2847, %v2822
    %v4048 = vpack.c.b16 %v2873, %v2848
    %v4049 = vpack.c.b16 %v2874, %v2849
    %v4050 = vpack.c.b16 %v2875, %v2850
    %v4051 = vpack.c.b16 %v2876, %v2851
    %v4052 = vpack.c.b16 %v2877, %v2852
    %v4053 = vpack.c.b16 %v2878, %v2853
    %v4054 = vpack.c.b16 %v2879, %v2854
    %v4055 = vpack.c.b16 %v2880, %v2855
    %v4056 = vpack.c.b16 %v2881, %v2856
    %v4057 = vpack.c.b16 %v2882, %v2857
    %v4058 = vpack.c.b16 %v2883, %v2858
    %v4059 = vpack.c.b16 %v2884, %v2859
    %v4060 = vpack.c.b16 %v2885, %v2860
    %v4061 = vpack.c.b16 %v2886, %v2861
    %v4062 = vpack.c.b16 %v2887, %v2862
    %v4063 = vpack.c.b16 %v2888, %v2863
    %v4064 = vpack.c.b16 %v2889, %v2864
    %v4065 = vpack.c.b16 %v2890, %v2865
    %v4066 = vpack.c.b16 %v2891, %v2866
    %v4067 = vpack.c.b16 %v2892, %v2867
    %v4068 = vpack.c.b16 %v2893, %v2868
    %v4069 = vpack.c.b16 %v2894, %v2869
    %v4070 = vpack.c.b16 %v2895, %v2870
    %v4071 = vpack.c.b16 %v2896, %v2871
    %v4072 = vpack.c.b16 %v2897, %v2872
    %v4073 = vpack.c.b16 %v2923, %v2898
    %v4074 = vpack.c.b16 %v2924, %v2899
    %v4075 = vpack.c.b16 %v2925, %v2900
    %v4076 = vpack.c.b16 %v2926, %v2901
    %v4077 = vpack.c.b16 %v2927, %v2902
    %v4078 = vpack.c.b16 %v2928, %v2903
    %v4079 = vpack.c.b16 %v2929, %v2904
    %v4080 = vpack.c.b16 %v2930, %v2905
    %v4081 = vpack.c.b16 %v2931, %v2906
    %v4082 = vpack.c.b16 %v2932, %v2907
    %v4083 = vpack.c.b16 %v2933, %v2908
    %v4084 = vpack.c.b16 %v2934, %v2909
    %v4085 = vpack.c.b16 %v2935, %v2910
    %v4086 = vpack.c.b16 %v2936, %v2911
    %v4087 = vpack.c.b16 %v2937, %v2912
    %v4088 = vpack.c.b16 %v2938, %v2913
    %v4089 = vpack.c.b16 %v2939, %v2914
    %v4090 = vpack.c.b16 %v2940, %v2915
    %v4091 = vpack.c.b16 %v2941, %v2916
    %v4092 = vpack.c.b16 %v2942, %v2917
    %v4093 = vpack.c.b16 %v2943, %v2918
    %v4094 = vpack.c.b16 %v2944, %v2919
    %v4095 = vpack.c.b16 %v2945, %v2920
    %v4096 = vpack.c.b16 %v2946, %v2921
    %v4097 = vpack.c.b16 %v2947, %v2922
    %v4098 = vpack.c.b16 %v2973, %v2948
    %v4099 = vpack.c.b16 %v2974, %v2949
    %v4100 = vpack.c.b16 %v2975, %v2950
    %v4101 = vpack.c.b16 %v2976, %v2951
    %v4102 = vpack.c.b16 %v2977, %v2952
    %v4103 = vpack.c.b16 %v2978, %v2953
    %v4104 = vpack.c.b16 %v2979, %v2954
    %v4105 = vpack.c.b16 %v2980, %v2955
    %v4106 = vpack.c.b16 %v2981, %v2956
    %v4107 = vpack.c.b16 %v2982, %v2957
    %v4108 = vpack.c.b16 %v2983, %v2958
    %v4109 = vpack.c.b16 %v2984, %v2959
    %v4110 = vpack.c.b16 %v2985, %v2960
    %v4111 = vpack.c.b16 %v2986, %v2961
    %v4112 = vpack.c.b16 %v2987, %v2962
    %v4113 = vpack.c.b16 %v2988, %v2963
    %v4114 = vpack.c.b16 %v2989, %v2964
    %v4115 = vpack.c.b16 %v2990, %v2965
    %v4116 = vpack.c.b16 %v2991, %v2966
    %v4117 = vpack.c.b16 %v2992, %v2967
    %v4118 = vpack.c.b16 %v2993, %v2968
    %v4119 = vpack.c.b16 %v2994, %v2969
    %v4120 = vpack.c.b16 %v2995, %v2970
    %v4121 = vpack.c.b16 %v2996, %v2971
    %v4122 = vpack.c.b16 %v2997, %v2972
    %v4123 = vpack.c.b16 %v3023, %v2998
    %v4124 = vpack.c.b16 %v3024, %v2999
    %v4125 = vpack.c.b16 %v3025, %v3000
    %v4126 = vpack.c.b16 %v3026, %v3001
    %v4127 = vpack.c.b16 %v3027, %v3002
    %v4128 = vpack.c.b16 %v3028, %v3003
    %v4129 = vpack.c.b16 %v3029, %v3004
    %v4130 = vpack.c.b16 %v3030, %v3005
    %v4131 = vpack.c.b16 %v3031, %v3006
    %v4132 = vpack.c.b16 %v3032, %v3007
    %v4133 = vpack.c.b16 %v3033, %v3008
    %v4134 = vpack.c.b16 %v3034, %v3009
    %v4135 = vpack.c.b16 %v3035, %v3010
    %v4136 = vpack.c.b16 %v3036, %v3011
    %v4137 = vpack.c.b16 %v3037, %v3012
    %v4138 = vpack.c.b16 %v3038, %v3013
    %v4139 = vpack.c.b16 %v3039, %v3014
    %v4140 = vpack.c.b16 %v3040, %v3015
    %v4141 = vpack.c.b16 %v3041, %v3016
    %v4142 = vpack.c.b16 %v3042, %v3017
    %v4143 = vpack.c.b16 %v3043, %v3018
    %v4144 = vpack.c.b16 %v3044, %v3019
    %v4145 = vpack.c.b16 %v3045, %v3020
    %v4146 = vpack.c.b16 %v3046, %v3021
    %v4147 = vpack.c.b16 %v3047, %v3022
    %v4148 = vpack.c.b16 %v3073, %v3048
    %v4149 = vpack.c.b16 %v3074, %v3049
    %v4150 = vpack.c.b16 %v3075, %v3050
    %v4151 = vpack.c.b16 %v3076, %v3051
    %v4152 = vpack.c.b16 %v3077, %v3052
    %v4153 = vpack.c.b16 %v3078, %v3053
    %v4154 = vpack.c.b16 %v3079, %v3054
    %v4155 = vpack.c.b16 %v3080, %v3055
    %v4156 = vpack.c.b16 %v3081, %v3056
    %v4157 = vpack.c.b16 %v3082, %v3057
    %v4158 = vpack.c.b16 %v3083, %v3058
    %v4159 = vpack.c.b16 %v3084, %v3059
    %v4160 = vpack.c.b16 %v3085, %v3060
    %v4161 = vpack.c.b16 %v3086, %v3061
    %v4162 = vpack.c.b16 %v3087, %v3062
    %v4163 = vpack.c.b16 %v3088, %v3063
    %v4164 = vpack.c.b16 %v3089, %v3064
    %v4165 = vpack.c.b16 %v3090, %v3065
    %v4166 = vpack.c.b16 %v3091, %v3066
    %v4167 = vpack.c.b16 %v3092, %v3067
    %v4168 = vpack.c.b16 %v3093, %v3068
    %v4169 = vpack.c.b16 %v3094, %v3069
    %v4170 = vpack.c.b16 %v3095, %v3070
    %v4171 = vpack.c.b16 %v3096, %v3071
    %v4172 = vpack.c.b16 %v3097, %v3072
    %v4173 = vpack.c.b16 %v3123, %v3098
    %v4174 = vpack.c.b16 %v3124, %v3099
    %v4175 = vpack.c.b16 %v3125, %v3100
    %v4176 = vpack.c.b16 %v3126, %v3101
    %v4177 = vpack.c.b16 %v3127, %v3102
    %v4178 = vpack.c.b16 %v3128, %v3103
    %v4179 = vpack.c.b16 %v3129, %v3104
    %v4180 = vpack.c.b16 %v3130, %v3105
    %v4181 = vpack.c.b16 %v3131, %v3106
    %v4182 = vpack.c.b16 %v3132, %v3107
    %v4183 = vpack.c.b16 %v3133, %v3108
    %v4184 = vpack.c.b16 %v3134, %v3109
    %v4185 = vpack.c.b16 %v3135, %v3110
    %v4186 = vpack.c.b16 %v3136, %v3111
    %v4187 = vpack.c.b16 %v3137, %v3112
    %v4188 = vpack.c.b16 %v3138, %v3113
    %v4189 = vpack.c.b16 %v3139, %v3114
    %v4190 = vpack.c.b16 %v3140, %v3115
    %v4191 = vpack.c.b16 %v3141, %v3116
    %v4192 = vpack.c.b16 %v3142, %v3117
    %v4193 = vpack.c.b16 %v3143, %v3118
    %v4194 = vpack.c.b16 %v3144, %v3119
    %v4195 = vpack.c.b16 %v3145, %v3120
    %v4196 = vpack.c.b16 %v3146, %v3121
    %v4197 = vpack.c.b16 %v3147, %v3122
    %v4198 = vpack.c.b16 %v3173, %v3148
    %v4199 = vpack.c.b16 %v3174, %v3149
    %v4200 = vpack.c.b16 %v3175, %v3150
    %v4201 = vpack.c.b16 %v3176, %v3151
    %v4202 = vpack.c.b16 %v3177, %v3152
    %v4203 = vpack.c.b16 %v3178, %v3153
    %v4204 = vpack.c.b16 %v3179, %v3154
    %v4205 = vpack.c.b16 %v3180, %v3155
    %v4206 = vpack.c.b16 %v3181, %v3156
    %v4207 = vpack.c.b16 %v3182, %v3157
    %v4208 = vpack.c.b16 %v3183, %v3158
    %v4209 = vpack.c.b16 %v3184, %v3159
    %v4210 = vpack.c.b16 %v3185, %v3160
    %v4211 = vpack.c.b16 %v3186, %v3161
    %v4212 = vpack.c.b16 %v3187, %v3162
    %v4213 = vpack.c.b16 %v3188, %v3163
    %v4214 = vpack.c.b16 %v3189, %v3164
    %v4215 = vpack.c.b16 %v3190, %v3165
    %v4216 = vpack.c.b16 %v3191, %v3166
    %v4217 = vpack.c.b16 %v3192, %v3167
    %v4218 = vpack.c.b16 %v3193, %v3168
    %v4219 = vpack.c.b16 %v3194, %v3169
    %v4220 = vpack.c.b16 %v3195, %v3170
    %v4221 = vpack.c.b16 %v3196, %v3171
    %v4222 = vpack.c.b16 %v3197, %v3172
    %v4223 = vpack.c.b16 %v3223, %v3198
    %v4224 = vpack.c.b16 %v3224, %v3199
    %v4225 = vpack.c.b16 %v3225, %v3200
    %v4226 = vpack.c.b16 %v3226, %v3201
    %v4227 = vpack.c.b16 %v3227, %v3202
    %v4228 = vpack.c.b16 %v3228, %v3203
    %v4229 = vpack.c.b16 %v3229, %v3204
    %v4230 = vpack.c.b16 %v3230, %v3205
    %v4231 = vpack.c.b16 %v3231, %v3206
    %v4232 = vpack.c.b16 %v3232, %v3207
    %v4233 = vpack.c.b16 %v3233, %v3208
    %v4234 = vpack.c.b16 %v3234, %v3209
    %v4235 = vpack.c.b16 %v3235, %v3210
    %v4236 = vpack.c.b16 %v3236, %v3211
    %v4237 = vpack.c.b16 %v3237, %v3212
    %v4238 = vpack.c.b16 %v3238, %v3213
    %v4239 = vpack.c.b16 %v3239, %v3214
    %v4240 = vpack.c.b16 %v3240, %v3215
    %v4241 = vpack.c.b16 %v3241, %v3216
    %v4242 = vpack.c.b16 %v3242, %v3217
    %v4243 = vpack.c.b16 %v3243, %v3218
    %v4244 = vpack.c.b16 %v3244, %v3219
    %v4245 = vpack.c.b16 %v3245, %v3220
    %v4246 = vpack.c.b16 %v3246, %v3221
    %v4247 = vpack.c.b16 %v3247, %v3222
    %v4248 = vpack.c.b16 %v3273, %v3248
    %v4249 = vpack.c.b16 %v3274, %v3249
    %v4250 = vpack.c.b16 %v3275, %v3250
    %v4251 = vpack.c.b16 %v3276, %v3251
    %v4252 = vpack.c.b16 %v3277, %v3252
    %v4253 = vpack.c.b16 %v3278, %v3253
    %v4254 = vpack.c.b16 %v3279, %v3254
    %v4255 = vpack.c.b16 %v3280, %v3255
    %v4256 = vpack.c.b16 %v3281, %v3256
    %v4257 = vpack.c.b16 %v3282, %v3257
    %v4258 = vpack.c.b16 %v3283, %v3258
    %v4259 = vpack.c.b16 %v3284, %v3259
    %v4260 = vpack.c.b16 %v3285, %v3260
    %v4261 = vpack.c.b16 %v3286, %v3261
    %v4262 = vpack.c.b16 %v3287, %v3262
    %v4263 = vpack.c.b16 %v3288, %v3263
    %v4264 = vpack.c.b16 %v3289, %v3264
    %v4265 = vpack.c.b16 %v3290, %v3265
    %v4266 = vpack.c.b16 %v3291, %v3266
    %v4267 = vpack.c.b16 %v3292, %v3267
    %v4268 = vpack.c.b16 %v3293, %v3268
    %v4269 = vpack.c.b16 %v3294, %v3269
    %v4270 = vpack.c.b16 %v3295, %v3270
    %v4271 = vpack.c.b16 %v3296, %v3271
    %v4272 = vpack.c.b16 %v3297, %v3272
    %v4273 = vpack.c.b16 %v3323, %v3298
    %v4274 = vpack.c.b16 %v3324, %v3299
    %v4275 = vpack.c.b16 %v3325, %v3300
    %v4276 = vpack.c.b16 %v3326, %v3301
    %v4277 = vpack.c.b16 %v3327, %v3302
    %v4278 = vpack.c.b16 %v3328, %v3303
    %v4279 = vpack.c.b16 %v3329, %v3304
    %v4280 = vpack.c.b16 %v3330, %v3305
    %v4281 = vpack.c.b16 %v3331, %v3306
    %v4282 = vpack.c.b16 %v3332, %v3307
    %v4283 = vpack.c.b16 %v3333, %v3308
    %v4284 = vpack.c.b16 %v3334, %v3309
    %v4285 = vpack.c.b16 %v3335, %v3310
    %v4286 = vpack.c.b16 %v3336, %v3311
    %v4287 = vpack.c.b16 %v3337, %v3312
    %v4288 = vpack.c.b16 %v3338, %v3313
    %v4289 = vpack.c.b16 %v3339, %v3314
    %v4290 = vpack.c.b16 %v3340, %v3315
    %v4291 = vpack.c.b16 %v3341, %v3316
    %v4292 = vpack.c.b16 %v3342, %v3317
    %v4293 = vpack.c.b16 %v3343, %v3318
    %v4294 = vpack.c.b16 %v3344, %v3319
    %v4295 = vpack.c.b16 %v3345, %v3320
    %v4296 = vpack.c.b16 %v3346, %v3321
    %v4297 = vpack.c.b16 %v3347, %v3322
    %v4298 = vpack.c.b16 %v3373, %v3348
    %v4299 = vpack.c.b16 %v3374, %v3349
    %v4300 = vpack.c.b16 %v3375, %v3350
    %v4301 = vpack.c.b16 %v3376, %v3351
    %v4302 = vpack.c.b16 %v3377, %v3352
    %v4303 = vpack.c.b16 %v3378, %v3353
    %v4304 = vpack.c.b16 %v3379, %v3354
    %v4305 = vpack.c.b16 %v3380, %v3355
    %v4306 = vpack.c.b16 %v3381, %v3356
    %v4307 = vpack.c.b16 %v3382, %v3357
    %v4308 = vpack.c.b16 %v3383, %v3358
    %v4309 = vpack.c.b16 %v3384, %v3359
    %v4310 = vpack.c.b16 %v3385, %v3360
    %v4311 = vpack.c.b16 %v3386, %v3361
    %v4312 = vpack.c.b16 %v3387, %v3362
    %v4313 = vpack.c.b16 %v3388, %v3363
    %v4314 = vpack.c.b16 %v3389, %v3364
    %v4315 = vpack.c.b16 %v3390, %v3365
    %v4316 = vpack.c.b16 %v3391, %v3366
    %v4317 = vpack.c.b16 %v3392, %v3367
    %v4318 = vpack.c.b16 %v3393, %v3368
    %v4319 = vpack.c.b16 %v3394, %v3369
    %v4320 = vpack.c.b16 %v3395, %v3370
    %v4321 = vpack.c.b16 %v3396, %v3371
    %v4322 = vpack.c.b16 %v3397, %v3372
    %v4323 = vpack.c.b16 %v3423, %v3398
    %v4324 = vpack.c.b16 %v3424, %v3399
    %v4325 = vpack.c.b16 %v3425, %v3400
    %v4326 = vpack.c.b16 %v3426, %v3401
    %v4327 = vpack.c.b16 %v3427, %v3402
    %v4328 = vpack.c.b16 %v3428, %v3403
    %v4329 = vpack.c.b16 %v3429, %v3404
    %v4330 = vpack.c.b16 %v3430, %v3405
    %v4331 = vpack.c.b16 %v3431, %v3406
    %v4332 = vpack.c.b16 %v3432, %v3407
    %v4333 = vpack.c.b16 %v3433, %v3408
    %v4334 = vpack.c.b16 %v3434, %v3409
    %v4335 = vpack.c.b16 %v3435, %v3410
    %v4336 = vpack.c.b16 %v3436, %v3411
    %v4337 = vpack.c.b16 %v3437, %v3412
    %v4338 = vpack.c.b16 %v3438, %v3413
    %v4339 = vpack.c.b16 %v3439, %v3414
    %v4340 = vpack.c.b16 %v3440, %v3415
    %v4341 = vpack.c.b16 %v3441, %v3416
    %v4342 = vpack.c.b16 %v3442, %v3417
    %v4343 = vpack.c.b16 %v3443, %v3418
    %v4344 = vpack.c.b16 %v3444, %v3419
    %v4345 = vpack.c.b16 %v3445, %v3420
    %v4346 = vpack.c.b16 %v3446, %v3421
    %v4347 = vpack.c.b16 %v3447, %v3422
    %v4348 = vpack.c.b16 %v3473, %v3448
    %v4349 = vpack.c.b16 %v3474, %v3449
    %v4350 = vpack.c.b16 %v3475, %v3450
    %v4351 = vpack.c.b16 %v3476, %v3451
    %v4352 = vpack.c.b16 %v3477, %v3452
    %v4353 = vpack.c.b16 %v3478, %v3453
    %v4354 = vpack.c.b16 %v3479, %v3454
    %v4355 = vpack.c.b16 %v3480, %v3455
    %v4356 = vpack.c.b16 %v3481, %v3456
    %v4357 = vpack.c.b16 %v3482, %v3457
    %v4358 = vpack.c.b16 %v3483, %v3458
    %v4359 = vpack.c.b16 %v3484, %v3459
    %v4360 = vpack.c.b16 %v3485, %v3460
    %v4361 = vpack.c.b16 %v3486, %v3461
    %v4362 = vpack.c.b16 %v3487, %v3462
    %v4363 = vpack.c.b16 %v3488, %v3463
    %v4364 = vpack.c.b16 %v3489, %v3464
    %v4365 = vpack.c.b16 %v3490, %v3465
    %v4366 = vpack.c.b16 %v3491, %v3466
    %v4367 = vpack.c.b16 %v3492, %v3467
    %v4368 = vpack.c.b16 %v3493, %v3468
    %v4369 = vpack.c.b16 %v3494, %v3469
    %v4370 = vpack.c.b16 %v3495, %v3470
    %v4371 = vpack.c.b16 %v3496, %v3471
    %v4372 = vpack.c.b16 %v3497, %v3472
    %v4373 = vpack.c.b16 %v3523, %v3498
    %v4374 = vpack.c.b16 %v3524, %v3499
    %v4375 = vpack.c.b16 %v3525, %v3500
    %v4376 = vpack.c.b16 %v3526, %v3501
    %v4377 = vpack.c.b16 %v3527, %v3502
    %v4378 = vpack.c.b16 %v3528, %v3503
    %v4379 = vpack.c.b16 %v3529, %v3504
    %v4380 = vpack.c.b16 %v3530, %v3505
    %v4381 = vpack.c.b16 %v3531, %v3506
    %v4382 = vpack.c.b16 %v3532, %v3507
    %v4383 = vpack.c.b16 %v3533, %v3508
    %v4384 = vpack.c.b16 %v3534, %v3509
    %v4385 = vpack.c.b16 %v3535, %v3510
    %v4386 = vpack.c.b16 %v3536, %v3511
    %v4387 = vpack.c.b16 %v3537, %v3512
    %v4388 = vpack.c.b16 %v3538, %v3513
    %v4389 = vpack.c.b16 %v3539, %v3514
    %v4390 = vpack.c.b16 %v3540, %v3515
    %v4391 = vpack.c.b16 %v3541, %v3516
    %v4392 = vpack.c.b16 %v3542, %v3517
    %v4393 = vpack.c.b16 %v3543, %v3518
    %v4394 = vpack.c.b16 %v3544, %v3519
    %v4395 = vpack.c.b16 %v3545, %v3520
    %v4396 = vpack.c.b16 %v3546, %v3521
    %v4397 = vpack.c.b16 %v3547, %v3522
    %v4398 = vpack.c.b16 %v3573, %v3548
    %v4399 = vpack.c.b16 %v3574, %v3549
    %v4400 = vpack.c.b16 %v3575, %v3550
    %v4401 = vpack.c.b16 %v3576, %v3551
    %v4402 = vpack.c.b16 %v3577, %v3552
    %v4403 = vpack.c.b16 %v3578, %v3553
    %v4404 = vpack.c.b16 %v3579, %v3554
    %v4405 = vpack.c.b16 %v3580, %v3555
    %v4406 = vpack.c.b16 %v3581, %v3556
    %v4407 = vpack.c.b16 %v3582, %v3557
    %v4408 = vpack.c.b16 %v3583, %v3558
    %v4409 = vpack.c.b16 %v3584, %v3559
    %v4410 = vpack.c.b16 %v3585, %v3560
    %v4411 = vpack.c.b16 %v3586, %v3561
    %v4412 = vpack.c.b16 %v3587, %v3562
    %v4413 = vpack.c.b16 %v3588, %v3563
    %v4414 = vpack.c.b16 %v3589, %v3564
    %v4415 = vpack.c.b16 %v3590, %v3565
    %v4416 = vpack.c.b16 %v3591, %v3566
    %v4417 = vpack.c.b16 %v3592, %v3567
    %v4418 = vpack.c.b16 %v3593, %v3568
    %v4419 = vpack.c.b16 %v3594, %v3569
    %v4420 = vpack.c.b16 %v3595, %v3570
    %v4421 = vpack.c.b16 %v3596, %v3571
    %v4422 = vpack.c.b16 %v3597, %v3572
    %v4423 = vpack.c.b16 %v3623, %v3598
    %v4424 = vpack.c.b16 %v3624, %v3599
    %v4425 = vpack.c.b16 %v3625, %v3600
    %v4426 = vpack.c.b16 %v3626, %v3601
    %v4427 = vpack.c.b16 %v3627, %v3602
    %v4428 = vpack.c.b16 %v3628, %v3603
    %v4429 = vpack.c.b16 %v3629, %v3604
    %v4430 = vpack.c.b16 %v3630, %v3605
    %v4431 = vpack.c.b16 %v3631, %v3606
    %v4432 = vpack.c.b16 %v3632, %v3607
    %v4433 = vpack.c.b16 %v3633, %v3608
    %v4434 = vpack.c.b16 %v3634, %v3609
    %v4435 = vpack.c.b16 %v3635, %v3610
    %v4436 = vpack.c.b16 %v3636, %v3611
    %v4437 = vpack.c.b16 %v3637, %v3612
    %v4438 = vpack.c.b16 %v3638, %v3613
    %v4439 = vpack.c.b16 %v3639, %v3614
    %v4440 = vpack.c.b16 %v3640, %v3615
    %v4441 = vpack.c.b16 %v3641, %v3616
    %v4442 = vpack.c.b16 %v3642, %v3617
    %v4443 = vpack.c.b16 %v3643, %v3618
    %v4444 = vpack.c.b16 %v3644, %v3619
    %v4445 = vpack.c.b16 %v3645, %v3620
    %v4446 = vpack.c.b16 %v3646, %v3621
    %v4447 = vpack.c.b16 %v3647, %v3622
    %5248 = vmatprep.subr.bf16.mxu0 %v3649
    %5249 = vmatpush1.bf16.msra.mxu0 %v3648
    %5250 = vmatprep.subr.bf16.mxu0 %v3674
    %5251 = vmatpush1.bf16.msra.mxu0 %v3673
    %5252 = vmatprep.subr.bf16.mxu0 %v3699
    %5253 = vmatpush1.bf16.msra.mxu0 %v3698
    %5254 = vmatprep.subr.bf16.mxu0 %v3724
    %5255 = vmatpush1.bf16.msra.mxu0 %v3723
    %5256 = vmatprep.subr.bf16.mxu0 %v3749
    %5257 = vmatpush1.bf16.msra.mxu0 %v3748
    %5258 = vmatprep.subr.bf16.mxu0 %v3774
    %5259 = vmatpush1.bf16.msra.mxu0 %v3773
    %5260 = vmatprep.subr.bf16.mxu0 %v3799
    %5261 = vmatpush1.bf16.msra.mxu0 %v3798
    %5262 = vmatprep.subr.bf16.mxu0 %v3824
    %5263 = vmatpush1.bf16.msra.mxu0 %v3823
    %5264 = vmatprep.subr.bf16.mxu0 %v3849
    %5265 = vmatpush1.bf16.msra.mxu0 %v3848
    %5266 = vmatprep.subr.bf16.mxu0 %v3874
    %5267 = vmatpush1.bf16.msra.mxu0 %v3873
    %5268 = vmatprep.subr.bf16.mxu0 %v3899
    %5269 = vmatpush1.bf16.msra.mxu0 %v3898
    %5270 = vmatprep.subr.bf16.mxu0 %v3924
    %5271 = vmatpush1.bf16.msra.mxu0 %v3923
    %5272 = vmatprep.subr.bf16.mxu0 %v3949
    %5273 = vmatpush1.bf16.msra.mxu0 %v3948
    %5274 = vmatprep.subr.bf16.mxu0 %v3974
    %5275 = vmatpush1.bf16.msra.mxu0 %v3973
    %5276 = vmatprep.subr.bf16.mxu0 %v3999
    %5277 = vmatpush1.bf16.msra.mxu0 %v3998
    %5278 = vmatprep.subr.bf16.mxu0 %v4024
    %5279 = vmatpush1.bf16.msra.mxu0 %v4023
    %5280 = vmatprep.mubr.bf16.mxu0 %v248
    %5281 = vmatmul.mubr.bf16.gmra.mrb[0].mxu0 %v247
    %v5282 = vpop.f32.mrb[0].mxu0
    %v5283 = vadd.f32 %v1094, %v5282
    %v5284 = vpop.f32.mrb[0].mxu0
    %v5285 = vadd.f32 %v1098, %v5284
    %v5286 = vpop.f32.mrb[0].mxu0
    %v5287 = vadd.f32 %v1094, %v5286
    %v5288 = vpop.f32.mrb[0].mxu0
    %v5289 = vadd.f32 %v1098, %v5288
    %5290 = vdwg.mxu0
    %5291 = vmatprep.subr.bf16.mxu0 %v4049
    %5292 = vmatpush1.bf16.msra.mxu0 %v4048
    %5293 = vmatprep.subr.bf16.mxu0 %v4074
    %5294 = vmatpush1.bf16.msra.mxu0 %v4073
    %5295 = vmatprep.subr.bf16.mxu0 %v4099
    %5296 = vmatpush1.bf16.msra.mxu0 %v4098
    %5297 = vmatprep.subr.bf16.mxu0 %v4124
    %5298 = vmatpush1.bf16.msra.mxu0 %v4123
    %5299 = vmatprep.subr.bf16.mxu0 %v4149
    %5300 = vmatpush1.bf16.msra.mxu0 %v4148
    %5301 = vmatprep.subr.bf16.mxu0 %v4174
    %5302 = vmatpush1.bf16.msra.mxu0 %v4173
    %5303 = vmatprep.subr.bf16.mxu0 %v4199
    %5304 = vmatpush1.bf16.msra.mxu0 %v4198
    %5305 = vmatprep.subr.bf16.mxu0 %v4224
    %5306 = vmatpush1.bf16.msra.mxu0 %v4223
    %5307 = vmatprep.subr.bf16.mxu0 %v4249
    %5308 = vmatpush1.bf16.msra.mxu0 %v4248
    %5309 = vmatprep.subr.bf16.mxu0 %v4274
    %5310 = vmatpush1.bf16.msra.mxu0 %v4273
    %5311 = vmatprep.subr.bf16.mxu0 %v4299
    %5312 = vmatpush1.bf16.msra.mxu0 %v4298
    %5313 = vmatprep.subr.bf16.mxu0 %v4324
    %5314 = vmatpush1.bf16.msra.mxu0 %v4323
    %5315 = vmatprep.subr.bf16.mxu0 %v4349
    %5316 = vmatpush1.bf16.msra.mxu0 %v4348
    %5317 = vmatprep.subr.bf16.mxu0 %v4374
    %5318 = vmatpush1.bf16.msra.mxu0 %v4373
    %5319 = vmatprep.subr.bf16.mxu0 %v4399
    %5320 = vmatpush1.bf16.msra.mxu0 %v4398
    %5321 = vmatprep.subr.bf16.mxu0 %v4424
    %5322 = vmatpush1.bf16.msra.mxu0 %v4423
    %5323 = vmatprep.mubr.bf16.mxu0 %v250
    %5324 = vmatmul.mubr.bf16.gmra.mrb[0].mxu0 %v249
    %v5325 = vpop.f32.mrb[0].mxu0
    %v5326 = vadd.f32 %v5283, %v5325
    %v5327 = vpop.f32.mrb[0].mxu0
    %v5328 = vadd.f32 %v5285, %v5327
    %v5329 = vpop.f32.mrb[0].mxu0
    %v5330 = vadd.f32 %v5287, %v5329
    %v5331 = vpop.f32.mrb[0].mxu0
    %v5332 = vadd.f32 %v5289, %v5331
    %5333 = vdwg.mxu0
    %5334 = vmatprep.subr.bf16.mxu0 %v3651
    %5335 = vmatpush1.bf16.msra.mxu0 %v3650
    %5336 = vmatprep.subr.bf16.mxu0 %v3676
    %5337 = vmatpush1.bf16.msra.mxu0 %v3675
    %5338 = vmatprep.subr.bf16.mxu0 %v3701
    %5339 = vmatpush1.bf16.msra.mxu0 %v3700
    %5340 = vmatprep.subr.bf16.mxu0 %v3726
    %5341 = vmatpush1.bf16.msra.mxu0 %v3725
    %5342 = vmatprep.subr.bf16.mxu0 %v3751
    %5343 = vmatpush1.bf16.msra.mxu0 %v3750
    %5344 = vmatprep.subr.bf16.mxu0 %v3776
    %5345 = vmatpush1.bf16.msra.mxu0 %v3775
    %5346 = vmatprep.subr.bf16.mxu0 %v3801
    %5347 = vmatpush1.bf16.msra.mxu0 %v3800
    %5348 = vmatprep.subr.bf16.mxu0 %v3826
    %5349 = vmatpush1.bf16.msra.mxu0 %v3825
    %5350 = vmatprep.subr.bf16.mxu0 %v3851
    %5351 = vmatpush1.bf16.msra.mxu0 %v3850
    %5352 = vmatprep.subr.bf16.mxu0 %v3876
    %5353 = vmatpush1.bf16.msra.mxu0 %v3875
    %5354 = vmatprep.subr.bf16.mxu0 %v3901
    %5355 = vmatpush1.bf16.msra.mxu0 %v3900
    %5356 = vmatprep.subr.bf16.mxu0 %v3926
    %5357 = vmatpush1.bf16.msra.mxu0 %v3925
    %5358 = vmatprep.subr.bf16.mxu0 %v3951
    %5359 = vmatpush1.bf16.msra.mxu0 %v3950
    %5360 = vmatprep.subr.bf16.mxu0 %v3976
    %5361 = vmatpush1.bf16.msra.mxu0 %v3975
    %5362 = vmatprep.subr.bf16.mxu0 %v4001
    %5363 = vmatpush1.bf16.msra.mxu0 %v4000
    %5364 = vmatprep.subr.bf16.mxu0 %v4026
    %5365 = vmatpush1.bf16.msra.mxu0 %v4025
    %5366 = vmatprep.mubr.bf16.mxu0 %v248
    %5367 = vmatmul.mubr.bf16.gmra.mrb[0].mxu0 %v247
    %v5368 = vpop.f32.mrb[0].mxu0
    %v5369 = vadd.f32 %v1102, %v5368
    %v5370 = vpop.f32.mrb[0].mxu0
    %v5371 = vadd.f32 %v1106, %v5370
    %v5372 = vpop.f32.mrb[0].mxu0
    %v5373 = vadd.f32 %v1102, %v5372
    %v5374 = vpop.f32.mrb[0].mxu0
    %v5375 = vadd.f32 %v1106, %v5374
    %5376 = vdwg.mxu0
    %5377 = vmatprep.subr.bf16.mxu0 %v4051
    %5378 = vmatpush1.bf16.msra.mxu0 %v4050
    %5379 = vmatprep.subr.bf16.mxu0 %v4076
    %5380 = vmatpush1.bf16.msra.mxu0 %v4075
    %5381 = vmatprep.subr.bf16.mxu0 %v4101
    %5382 = vmatpush1.bf16.msra.mxu0 %v4100
    %5383 = vmatprep.subr.bf16.mxu0 %v4126
    %5384 = vmatpush1.bf16.msra.mxu0 %v4125
    %5385 = vmatprep.subr.bf16.mxu0 %v4151
    %5386 = vmatpush1.bf16.msra.mxu0 %v4150
    %5387 = vmatprep.subr.bf16.mxu0 %v4176
    %5388 = vmatpush1.bf16.msra.mxu0 %v4175
    %5389 = vmatprep.subr.bf16.mxu0 %v4201
    %5390 = vmatpush1.bf16.msra.mxu0 %v4200
    %5391 = vmatprep.subr.bf16.mxu0 %v4226
    %5392 = vmatpush1.bf16.msra.mxu0 %v4225
    %5393 = vmatprep.subr.bf16.mxu0 %v4251
    %5394 = vmatpush1.bf16.msra.mxu0 %v4250
    %5395 = vmatprep.subr.bf16.mxu0 %v4276
    %5396 = vmatpush1.bf16.msra.mxu0 %v4275
    %5397 = vmatprep.subr.bf16.mxu0 %v4301
    %5398 = vmatpush1.bf16.msra.mxu0 %v4300
    %5399 = vmatprep.subr.bf16.mxu0 %v4326
    %5400 = vmatpush1.bf16.msra.mxu0 %v4325
    %5401 = vmatprep.subr.bf16.mxu0 %v4351
    %5402 = vmatpush1.bf16.msra.mxu0 %v4350
    %5403 = vmatprep.subr.bf16.mxu0 %v4376
    %5404 = vmatpush1.bf16.msra.mxu0 %v4375
    %5405 = vmatprep.subr.bf16.mxu0 %v4401
    %5406 = vmatpush1.bf16.msra.mxu0 %v4400
    %5407 = vmatprep.subr.bf16.mxu0 %v4426
    %5408 = vmatpush1.bf16.msra.mxu0 %v4425
    %5409 = vmatprep.mubr.bf16.mxu0 %v250
    %5410 = vmatmul.mubr.bf16.gmra.mrb[0].mxu0 %v249
    %v5411 = vpop.f32.mrb[0].mxu0
    %v5412 = vadd.f32 %v5369, %v5411
    %v5413 = vpop.f32.mrb[0].mxu0
    %v5414 = vadd.f32 %v5371, %v5413
    %v5415 = vpop.f32.mrb[0].mxu0
    %v5416 = vadd.f32 %v5373, %v5415
    %v5417 = vpop.f32.mrb[0].mxu0
    %v5418 = vadd.f32 %v5375, %v5417
    %5419 = vdwg.mxu0
    %5420 = vmatprep.subr.bf16.mxu0 %v3653
    %5421 = vmatpush1.bf16.msra.mxu0 %v3652
    %5422 = vmatprep.subr.bf16.mxu0 %v3678
    %5423 = vmatpush1.bf16.msra.mxu0 %v3677
    %5424 = vmatprep.subr.bf16.mxu0 %v3703
    %5425 = vmatpush1.bf16.msra.mxu0 %v3702
    %5426 = vmatprep.subr.bf16.mxu0 %v3728
    %5427 = vmatpush1.bf16.msra.mxu0 %v3727
    %5428 = vmatprep.subr.bf16.mxu0 %v3753
    %5429 = vmatpush1.bf16.msra.mxu0 %v3752
    %5430 = vmatprep.subr.bf16.mxu0 %v3778
    %5431 = vmatpush1.bf16.msra.mxu0 %v3777
    %5432 = vmatprep.subr.bf16.mxu0 %v3803
    %5433 = vmatpush1.bf16.msra.mxu0 %v3802
    %5434 = vmatprep.subr.bf16.mxu0 %v3828
    %5435 = vmatpush1.bf16.msra.mxu0 %v3827
    %5436 = vmatprep.subr.bf16.mxu0 %v3853
    %5437 = vmatpush1.bf16.msra.mxu0 %v3852
    %5438 = vmatprep.subr.bf16.mxu0 %v3878
    %5439 = vmatpush1.bf16.msra.mxu0 %v3877
    %5440 = vmatprep.subr.bf16.mxu0 %v3903
    %5441 = vmatpush1.bf16.msra.mxu0 %v3902
    %5442 = vmatprep.subr.bf16.mxu0 %v3928
    %5443 = vmatpush1.bf16.msra.mxu0 %v3927
    %5444 = vmatprep.subr.bf16.mxu0 %v3953
    %5445 = vmatpush1.bf16.msra.mxu0 %v3952
    %5446 = vmatprep.subr.bf16.mxu0 %v3978
    %5447 = vmatpush1.bf16.msra.mxu0 %v3977
    %5448 = vmatprep.subr.bf16.mxu0 %v4003
    %5449 = vmatpush1.bf16.msra.mxu0 %v4002
    %5450 = vmatprep.subr.bf16.mxu0 %v4028
    %5451 = vmatpush1.bf16.msra.mxu0 %v4027
    %5452 = vmatprep.mubr.bf16.mxu0 %v248
    %5453 = vmatmul.mubr.bf16.gmra.mrb[0].mxu0 %v247
    %v5454 = vpop.f32.mrb[0].mxu0
    %v5455 = vadd.f32 %v1110, %v5454
    %v5456 = vpop.f32.mrb[0].mxu0
    %v5457 = vadd.f32 %v1114, %v5456
    %v5458 = vpop.f32.mrb[0].mxu0
    %v5459 = vadd.f32 %v1110, %v5458
    %v5460 = vpop.f32.mrb[0].mxu0
    %v5461 = vadd.f32 %v1114, %v5460
    %5462 = vdwg.mxu0
    %5463 = vmatprep.subr.bf16.mxu0 %v4053
    %5464 = vmatpush1.bf16.msra.mxu0 %v4052
    %5465 = vmatprep.subr.bf16.mxu0 %v4078
    %5466 = vmatpush1.bf16.msra.mxu0 %v4077
    %5467 = vmatprep.subr.bf16.mxu0 %v4103
    %5468 = vmatpush1.bf16.msra.mxu0 %v4102
    %5469 = vmatprep.subr.bf16.mxu0 %v4128
    %5470 = vmatpush1.bf16.msra.mxu0 %v4127
    %5471 = vmatprep.subr.bf16.mxu0 %v4153
    %5472 = vmatpush1.bf16.msra.mxu0 %v4152
    %5473 = vmatprep.subr.bf16.mxu0 %v4178
    %5474 = vmatpush1.bf16.msra.mxu0 %v4177
    %5475 = vmatprep.subr.bf16.mxu0 %v4203
    %5476 = vmatpush1.bf16.msra.mxu0 %v4202
    %5477 = vmatprep.subr.bf16.mxu0 %v4228
    %5478 = vmatpush1.bf16.msra.mxu0 %v4227
    %5479 = vmatprep.subr.bf16.mxu0 %v4253
    %5480 = vmatpush1.bf16.msra.mxu0 %v4252
    %5481 = vmatprep.subr.bf16.mxu0 %v4278
    %5482 = vmatpush1.bf16.msra.mxu0 %v4277
    %5483 = vmatprep.subr.bf16.mxu0 %v4303
    %5484 = vmatpush1.bf16.msra.mxu0 %v4302
    %5485 = vmatprep.subr.bf16.mxu0 %v4328
    %5486 = vmatpush1.bf16.msra.mxu0 %v4327
    %5487 = vmatprep.subr.bf16.mxu0 %v4353
    %5488 = vmatpush1.bf16.msra.mxu0 %v4352
    %5489 = vmatprep.subr.bf16.mxu0 %v4378
    %5490 = vmatpush1.bf16.msra.mxu0 %v4377
    %5491 = vmatprep.subr.bf16.mxu0 %v4403
    %5492 = vmatpush1.bf16.msra.mxu0 %v4402
    %5493 = vmatprep.subr.bf16.mxu0 %v4428
    %5494 = vmatpush1.bf16.msra.mxu0 %v4427
    %5495 = vmatprep.mubr.bf16.mxu0 %v250
    %5496 = vmatmul.mubr.bf16.gmra.mrb[0].mxu0 %v249
    %v5497 = vpop.f32.mrb[0].mxu0
    %v5498 = vadd.f32 %v5455, %v5497
    %v5499 = vpop.f32.mrb[0].mxu0
    %v5500 = vadd.f32 %v5457, %v5499
    %v5501 = vpop.f32.mrb[0].mxu0
    %v5502 = vadd.f32 %v5459, %v5501
    %v5503 = vpop.f32.mrb[0].mxu0
    %v5504 = vadd.f32 %v5461, %v5503
    %5505 = vdwg.mxu0
    %5506 = vmatprep.subr.bf16.mxu0 %v3655
    %5507 = vmatpush1.bf16.msra.mxu0 %v3654
    %5508 = vmatprep.subr.bf16.mxu0 %v3680
    %5509 = vmatpush1.bf16.msra.mxu0 %v3679
    %5510 = vmatprep.subr.bf16.mxu0 %v3705
    %5511 = vmatpush1.bf16.msra.mxu0 %v3704
    %5512 = vmatprep.subr.bf16.mxu0 %v3730
    %5513 = vmatpush1.bf16.msra.mxu0 %v3729
    %5514 = vmatprep.subr.bf16.mxu0 %v3755
    %5515 = vmatpush1.bf16.msra.mxu0 %v3754
    %5516 = vmatprep.subr.bf16.mxu0 %v3780
    %5517 = vmatpush1.bf16.msra.mxu0 %v3779
    %5518 = vmatprep.subr.bf16.mxu0 %v3805
    %5519 = vmatpush1.bf16.msra.mxu0 %v3804
    %5520 = vmatprep.subr.bf16.mxu0 %v3830
    %5521 = vmatpush1.bf16.msra.mxu0 %v3829
    %5522 = vmatprep.subr.bf16.mxu0 %v3855
    %5523 = vmatpush1.bf16.msra.mxu0 %v3854
    %5524 = vmatprep.subr.bf16.mxu0 %v3880
    %5525 = vmatpush1.bf16.msra.mxu0 %v3879
    %5526 = vmatprep.subr.bf16.mxu0 %v3905
    %5527 = vmatpush1.bf16.msra.mxu0 %v3904
    %5528 = vmatprep.subr.bf16.mxu0 %v3930
    %5529 = vmatpush1.bf16.msra.mxu0 %v3929
    %5530 = vmatprep.subr.bf16.mxu0 %v3955
    %5531 = vmatpush1.bf16.msra.mxu0 %v3954
    %5532 = vmatprep.subr.bf16.mxu0 %v3980
    %5533 = vmatpush1.bf16.msra.mxu0 %v3979
    %5534 = vmatprep.subr.bf16.mxu0 %v4005
    %5535 = vmatpush1.bf16.msra.mxu0 %v4004
    %5536 = vmatprep.subr.bf16.mxu0 %v4030
    %5537 = vmatpush1.bf16.msra.mxu0 %v4029
    %5538 = vmatprep.mubr.bf16.mxu0 %v248
    %5539 = vmatmul.mubr.bf16.gmra.mrb[0].mxu0 %v247
    %v5540 = vpop.f32.mrb[0].mxu0
    %v5541 = vadd.f32 %v1118, %v5540
    %v5542 = vpop.f32.mrb[0].mxu0
    %v5543 = vadd.f32 %v1122, %v5542
    %v5544 = vpop.f32.mrb[0].mxu0
    %v5545 = vadd.f32 %v1118, %v5544
    %v5546 = vpop.f32.mrb[0].mxu0
    %v5547 = vadd.f32 %v1122, %v5546
    %5548 = vdwg.mxu0
    %5549 = vmatprep.subr.bf16.mxu0 %v4055
    %5550 = vmatpush1.bf16.msra.mxu0 %v4054
    %5551 = vmatprep.subr.bf16.mxu0 %v4080
    %5552 = vmatpush1.bf16.msra.mxu0 %v4079
    %5553 = vmatprep.subr.bf16.mxu0 %v4105
    %5554 = vmatpush1.bf16.msra.mxu0 %v4104
    %5555 = vmatprep.subr.bf16.mxu0 %v4130
    %5556 = vmatpush1.bf16.msra.mxu0 %v4129
    %5557 = vmatprep.subr.bf16.mxu0 %v4155
    %5558 = vmatpush1.bf16.msra.mxu0 %v4154
    %5559 = vmatprep.subr.bf16.mxu0 %v4180
    %5560 = vmatpush1.bf16.msra.mxu0 %v4179
    %5561 = vmatprep.subr.bf16.mxu0 %v4205
    %5562 = vmatpush1.bf16.msra.mxu0 %v4204
    %5563 = vmatprep.subr.bf16.mxu0 %v4230
    %5564 = vmatpush1.bf16.msra.mxu0 %v4229
    %5565 = vmatprep.subr.bf16.mxu0 %v4255
    %5566 = vmatpush1.bf16.msra.mxu0 %v4254
    %5567 = vmatprep.subr.bf16.mxu0 %v4280
    %5568 = vmatpush1.bf16.msra.mxu0 %v4279
    %5569 = vmatprep.subr.bf16.mxu0 %v4305
    %5570 = vmatpush1.bf16.msra.mxu0 %v4304
    %5571 = vmatprep.subr.bf16.mxu0 %v4330
    %5572 = vmatpush1.bf16.msra.mxu0 %v4329
    %5573 = vmatprep.subr.bf16.mxu0 %v4355
    %5574 = vmatpush1.bf16.msra.mxu0 %v4354
    %5575 = vmatprep.subr.bf16.mxu0 %v4380
    %5576 = vmatpush1.bf16.msra.mxu0 %v4379
    %5577 = vmatprep.subr.bf16.mxu0 %v4405
    %5578 = vmatpush1.bf16.msra.mxu0 %v4404
    %5579 = vmatprep.subr.bf16.mxu0 %v4430
    %5580 = vmatpush1.bf16.msra.mxu0 %v4429
    %5581 = vmatprep.mubr.bf16.mxu0 %v250
    %5582 = vmatmul.mubr.bf16.gmra.mrb[0].mxu0 %v249
    %v5583 = vpop.f32.mrb[0].mxu0
    %v5584 = vadd.f32 %v5541, %v5583
    %v5585 = vpop.f32.mrb[0].mxu0
    %v5586 = vadd.f32 %v5543, %v5585
    %v5587 = vpop.f32.mrb[0].mxu0
    %v5588 = vadd.f32 %v5545, %v5587
    %v5589 = vpop.f32.mrb[0].mxu0
    %v5590 = vadd.f32 %v5547, %v5589
    %5591 = vdwg.mxu0
    %5592 = vmatprep.subr.bf16.mxu0 %v3657
    %5593 = vmatpush1.bf16.msra.mxu0 %v3656
    %5594 = vmatprep.subr.bf16.mxu0 %v3682
    %5595 = vmatpush1.bf16.msra.mxu0 %v3681
    %5596 = vmatprep.subr.bf16.mxu0 %v3707
    %5597 = vmatpush1.bf16.msra.mxu0 %v3706
    %5598 = vmatprep.subr.bf16.mxu0 %v3732
    %5599 = vmatpush1.bf16.msra.mxu0 %v3731
    %5600 = vmatprep.subr.bf16.mxu0 %v3757
    %5601 = vmatpush1.bf16.msra.mxu0 %v3756
    %5602 = vmatprep.subr.bf16.mxu0 %v3782
    %5603 = vmatpush1.bf16.msra.mxu0 %v3781
    %5604 = vmatprep.subr.bf16.mxu0 %v3807
    %5605 = vmatpush1.bf16.msra.mxu0 %v3806
    %5606 = vmatprep.subr.bf16.mxu0 %v3832
    %5607 = vmatpush1.bf16.msra.mxu0 %v3831
    %5608 = vmatprep.subr.bf16.mxu0 %v3857
    %5609 = vmatpush1.bf16.msra.mxu0 %v3856
    %5610 = vmatprep.subr.bf16.mxu0 %v3882
    %5611 = vmatpush1.bf16.msra.mxu0 %v3881
    %5612 = vmatprep.subr.bf16.mxu0 %v3907
    %5613 = vmatpush1.bf16.msra.mxu0 %v3906
    %5614 = vmatprep.subr.bf16.mxu0 %v3932
    %5615 = vmatpush1.bf16.msra.mxu0 %v3931
    %5616 = vmatprep.subr.bf16.mxu0 %v3957
    %5617 = vmatpush1.bf16.msra.mxu0 %v3956
    %5618 = vmatprep.subr.bf16.mxu0 %v3982
    %5619 = vmatpush1.bf16.msra.mxu0 %v3981
    %5620 = vmatprep.subr.bf16.mxu0 %v4007
    %5621 = vmatpush1.bf16.msra.mxu0 %v4006
    %5622 = vmatprep.subr.bf16.mxu0 %v4032
    %5623 = vmatpush1.bf16.msra.mxu0 %v4031
    %5624 = vmatprep.mubr.bf16.mxu0 %v248
    %5625 = vmatmul.mubr.bf16.gmra.mrb[0].mxu0 %v247
    %v5626 = vpop.f32.mrb[0].mxu0
    %v5627 = vadd.f32 %v1126, %v5626
    %v5628 = vpop.f32.mrb[0].mxu0
    %v5629 = vadd.f32 %v1130, %v5628
    %v5630 = vpop.f32.mrb[0].mxu0
    %v5631 = vadd.f32 %v1126, %v5630
    %v5632 = vpop.f32.mrb[0].mxu0
    %v5633 = vadd.f32 %v1130, %v5632
    %5634 = vdwg.mxu0
    %5635 = vmatprep.subr.bf16.mxu0 %v4057
    %5636 = vmatpush1.bf16.msra.mxu0 %v4056
    %5637 = vmatprep.subr.bf16.mxu0 %v4082
    %5638 = vmatpush1.bf16.msra.mxu0 %v4081
    %5639 = vmatprep.subr.bf16.mxu0 %v4107
    %5640 = vmatpush1.bf16.msra.mxu0 %v4106
    %5641 = vmatprep.subr.bf16.mxu0 %v4132
    %5642 = vmatpush1.bf16.msra.mxu0 %v4131
    %5643 = vmatprep.subr.bf16.mxu0 %v4157
    %5644 = vmatpush1.bf16.msra.mxu0 %v4156
    %5645 = vmatprep.subr.bf16.mxu0 %v4182
    %5646 = vmatpush1.bf16.msra.mxu0 %v4181
    %5647 = vmatprep.subr.bf16.mxu0 %v4207
    %5648 = vmatpush1.bf16.msra.mxu0 %v4206
    %5649 = vmatprep.subr.bf16.mxu0 %v4232
    %5650 = vmatpush1.bf16.msra.mxu0 %v4231
    %5651 = vmatprep.subr.bf16.mxu0 %v4257
    %5652 = vmatpush1.bf16.msra.mxu0 %v4256
    %5653 = vmatprep.subr.bf16.mxu0 %v4282
    %5654 = vmatpush1.bf16.msra.mxu0 %v4281
    %5655 = vmatprep.subr.bf16.mxu0 %v4307
    %5656 = vmatpush1.bf16.msra.mxu0 %v4306
    %5657 = vmatprep.subr.bf16.mxu0 %v4332
    %5658 = vmatpush1.bf16.msra.mxu0 %v4331
    %5659 = vmatprep.subr.bf16.mxu0 %v4357
    %5660 = vmatpush1.bf16.msra.mxu0 %v4356
    %5661 = vmatprep.subr.bf16.mxu0 %v4382
    %5662 = vmatpush1.bf16.msra.mxu0 %v4381
    %5663 = vmatprep.subr.bf16.mxu0 %v4407
    %5664 = vmatpush1.bf16.msra.mxu0 %v4406
    %5665 = vmatprep.subr.bf16.mxu0 %v4432
    %5666 = vmatpush1.bf16.msra.mxu0 %v4431
    %5667 = vmatprep.mubr.bf16.mxu0 %v250
    %5668 = vmatmul.mubr.bf16.gmra.mrb[0].mxu0 %v249
    %v5669 = vpop.f32.mrb[0].mxu0
    %v5670 = vadd.f32 %v5627, %v5669
    %v5671 = vpop.f32.mrb[0].mxu0
    %v5672 = vadd.f32 %v5629, %v5671
    %v5673 = vpop.f32.mrb[0].mxu0
    %v5674 = vadd.f32 %v5631, %v5673
    %v5675 = vpop.f32.mrb[0].mxu0
    %v5676 = vadd.f32 %v5633, %v5675
    %5677 = vdwg.mxu0
    %5678 = vmatprep.subr.bf16.mxu0 %v3659
    %5679 = vmatpush1.bf16.msra.mxu0 %v3658
    %5680 = vmatprep.subr.bf16.mxu0 %v3684
    %5681 = vmatpush1.bf16.msra.mxu0 %v3683
    %5682 = vmatprep.subr.bf16.mxu0 %v3709
    %5683 = vmatpush1.bf16.msra.mxu0 %v3708
    %5684 = vmatprep.subr.bf16.mxu0 %v3734
    %5685 = vmatpush1.bf16.msra.mxu0 %v3733
    %5686 = vmatprep.subr.bf16.mxu0 %v3759
    %5687 = vmatpush1.bf16.msra.mxu0 %v3758
    %5688 = vmatprep.subr.bf16.mxu0 %v3784
    %5689 = vmatpush1.bf16.msra.mxu0 %v3783
    %5690 = vmatprep.subr.bf16.mxu0 %v3809
    %5691 = vmatpush1.bf16.msra.mxu0 %v3808
    %5692 = vmatprep.subr.bf16.mxu0 %v3834
    %5693 = vmatpush1.bf16.msra.mxu0 %v3833
    %5694 = vmatprep.subr.bf16.mxu0 %v3859
    %5695 = vmatpush1.bf16.msra.mxu0 %v3858
    %5696 = vmatprep.subr.bf16.mxu0 %v3884
    %5697 = vmatpush1.bf16.msra.mxu0 %v3883
    %5698 = vmatprep.subr.bf16.mxu0 %v3909
    %5699 = vmatpush1.bf16.msra.mxu0 %v3908
    %5700 = vmatprep.subr.bf16.mxu0 %v3934
    %5701 = vmatpush1.bf16.msra.mxu0 %v3933
    %5702 = vmatprep.subr.bf16.mxu0 %v3959
    %5703 = vmatpush1.bf16.msra.mxu0 %v3958
    %5704 = vmatprep.subr.bf16.mxu0 %v3984
    %5705 = vmatpush1.bf16.msra.mxu0 %v3983
    %5706 = vmatprep.subr.bf16.mxu0 %v4009
    %5707 = vmatpush1.bf16.msra.mxu0 %v4008
    %5708 = vmatprep.subr.bf16.mxu0 %v4034
    %5709 = vmatpush1.bf16.msra.mxu0 %v4033
    %5710 = vmatprep.mubr.bf16.mxu0 %v248
    %5711 = vmatmul.mubr.bf16.gmra.mrb[0].mxu0 %v247
    %v5712 = vpop.f32.mrb[0].mxu0
    %v5713 = vadd.f32 %v1134, %v5712
    %v5714 = vpop.f32.mrb[0].mxu0
    %v5715 = vadd.f32 %v1138, %v5714
    %v5716 = vpop.f32.mrb[0].mxu0
    %v5717 = vadd.f32 %v1134, %v5716
    %v5718 = vpop.f32.mrb[0].mxu0
    %v5719 = vadd.f32 %v1138, %v5718
    %5720 = vdwg.mxu0
    %5721 = vmatprep.subr.bf16.mxu0 %v4059
    %5722 = vmatpush1.bf16.msra.mxu0 %v4058
    %5723 = vmatprep.subr.bf16.mxu0 %v4084
    %5724 = vmatpush1.bf16.msra.mxu0 %v4083
    %5725 = vmatprep.subr.bf16.mxu0 %v4109
    %5726 = vmatpush1.bf16.msra.mxu0 %v4108
    %5727 = vmatprep.subr.bf16.mxu0 %v4134
    %5728 = vmatpush1.bf16.msra.mxu0 %v4133
    %5729 = vmatprep.subr.bf16.mxu0 %v4159
    %5730 = vmatpush1.bf16.msra.mxu0 %v4158
    %5731 = vmatprep.subr.bf16.mxu0 %v4184
    %5732 = vmatpush1.bf16.msra.mxu0 %v4183
    %5733 = vmatprep.subr.bf16.mxu0 %v4209
    %5734 = vmatpush1.bf16.msra.mxu0 %v4208
    %5735 = vmatprep.subr.bf16.mxu0 %v4234
    %5736 = vmatpush1.bf16.msra.mxu0 %v4233
    %5737 = vmatprep.subr.bf16.mxu0 %v4259
    %5738 = vmatpush1.bf16.msra.mxu0 %v4258
    %5739 = vmatprep.subr.bf16.mxu0 %v4284
    %5740 = vmatpush1.bf16.msra.mxu0 %v4283
    %5741 = vmatprep.subr.bf16.mxu0 %v4309
    %5742 = vmatpush1.bf16.msra.mxu0 %v4308
    %5743 = vmatprep.subr.bf16.mxu0 %v4334
    %5744 = vmatpush1.bf16.msra.mxu0 %v4333
    %5745 = vmatprep.subr.bf16.mxu0 %v4359
    %5746 = vmatpush1.bf16.msra.mxu0 %v4358
    %5747 = vmatprep.subr.bf16.mxu0 %v4384
    %5748 = vmatpush1.bf16.msra.mxu0 %v4383
    %5749 = vmatprep.subr.bf16.mxu0 %v4409
    %5750 = vmatpush1.bf16.msra.mxu0 %v4408
    %5751 = vmatprep.subr.bf16.mxu0 %v4434
    %5752 = vmatpush1.bf16.msra.mxu0 %v4433
    %5753 = vmatprep.mubr.bf16.mxu0 %v250
    %5754 = vmatmul.mubr.bf16.gmra.mrb[0].mxu0 %v249
    %v5755 = vpop.f32.mrb[0].mxu0
    %v5756 = vadd.f32 %v5713, %v5755
    %v5757 = vpop.f32.mrb[0].mxu0
    %v5758 = vadd.f32 %v5715, %v5757
    %v5759 = vpop.f32.mrb[0].mxu0
    %v5760 = vadd.f32 %v5717, %v5759
    %v5761 = vpop.f32.mrb[0].mxu0
    %v5762 = vadd.f32 %v5719, %v5761
    %5763 = vdwg.mxu0
    %5764 = vmatprep.subr.bf16.mxu0 %v3661
    %5765 = vmatpush1.bf16.msra.mxu0 %v3660
    %5766 = vmatprep.subr.bf16.mxu0 %v3686
    %5767 = vmatpush1.bf16.msra.mxu0 %v3685
    %5768 = vmatprep.subr.bf16.mxu0 %v3711
    %5769 = vmatpush1.bf16.msra.mxu0 %v3710
    %5770 = vmatprep.subr.bf16.mxu0 %v3736
    %5771 = vmatpush1.bf16.msra.mxu0 %v3735
    %5772 = vmatprep.subr.bf16.mxu0 %v3761
    %5773 = vmatpush1.bf16.msra.mxu0 %v3760
    %5774 = vmatprep.subr.bf16.mxu0 %v3786
    %5775 = vmatpush1.bf16.msra.mxu0 %v3785
    %5776 = vmatprep.subr.bf16.mxu0 %v3811
    %5777 = vmatpush1.bf16.msra.mxu0 %v3810
    %5778 = vmatprep.subr.bf16.mxu0 %v3836
    %5779 = vmatpush1.bf16.msra.mxu0 %v3835
    %5780 = vmatprep.subr.bf16.mxu0 %v3861
    %5781 = vmatpush1.bf16.msra.mxu0 %v3860
    %5782 = vmatprep.subr.bf16.mxu0 %v3886
    %5783 = vmatpush1.bf16.msra.mxu0 %v3885
    %5784 = vmatprep.subr.bf16.mxu0 %v3911
    %5785 = vmatpush1.bf16.msra.mxu0 %v3910
    %5786 = vmatprep.subr.bf16.mxu0 %v3936
    %5787 = vmatpush1.bf16.msra.mxu0 %v3935
    %5788 = vmatprep.subr.bf16.mxu0 %v3961
    %5789 = vmatpush1.bf16.msra.mxu0 %v3960
    %5790 = vmatprep.subr.bf16.mxu0 %v3986
    %5791 = vmatpush1.bf16.msra.mxu0 %v3985
    %5792 = vmatprep.subr.bf16.mxu0 %v4011
    %5793 = vmatpush1.bf16.msra.mxu0 %v4010
    %5794 = vmatprep.subr.bf16.mxu0 %v4036
    %5795 = vmatpush1.bf16.msra.mxu0 %v4035
    %5796 = vmatprep.mubr.bf16.mxu0 %v248
    %5797 = vmatmul.mubr.bf16.gmra.mrb[0].mxu0 %v247
    %v5798 = vpop.f32.mrb[0].mxu0
    %v5799 = vadd.f32 %v1142, %v5798
    %v5800 = vpop.f32.mrb[0].mxu0
    %v5801 = vadd.f32 %v1146, %v5800
    %v5802 = vpop.f32.mrb[0].mxu0
    %v5803 = vadd.f32 %v1142, %v5802
    %v5804 = vpop.f32.mrb[0].mxu0
    %v5805 = vadd.f32 %v1146, %v5804
    %5806 = vdwg.mxu0
    %5807 = vmatprep.subr.bf16.mxu0 %v4061
    %5808 = vmatpush1.bf16.msra.mxu0 %v4060
    %5809 = vmatprep.subr.bf16.mxu0 %v4086
    %5810 = vmatpush1.bf16.msra.mxu0 %v4085
    %5811 = vmatprep.subr.bf16.mxu0 %v4111
    %5812 = vmatpush1.bf16.msra.mxu0 %v4110
    %5813 = vmatprep.subr.bf16.mxu0 %v4136
    %5814 = vmatpush1.bf16.msra.mxu0 %v4135
    %5815 = vmatprep.subr.bf16.mxu0 %v4161
    %5816 = vmatpush1.bf16.msra.mxu0 %v4160
    %5817 = vmatprep.subr.bf16.mxu0 %v4186
    %5818 = vmatpush1.bf16.msra.mxu0 %v4185
    %5819 = vmatprep.subr.bf16.mxu0 %v4211
    %5820 = vmatpush1.bf16.msra.mxu0 %v4210
    %5821 = vmatprep.subr.bf16.mxu0 %v4236
    %5822 = vmatpush1.bf16.msra.mxu0 %v4235
    %5823 = vmatprep.subr.bf16.mxu0 %v4261
    %5824 = vmatpush1.bf16.msra.mxu0 %v4260
    %5825 = vmatprep.subr.bf16.mxu0 %v4286
    %5826 = vmatpush1.bf16.msra.mxu0 %v4285
    %5827 = vmatprep.subr.bf16.mxu0 %v4311
    %5828 = vmatpush1.bf16.msra.mxu0 %v4310
    %5829 = vmatprep.subr.bf16.mxu0 %v4336
    %5830 = vmatpush1.bf16.msra.mxu0 %v4335
    %5831 = vmatprep.subr.bf16.mxu0 %v4361
    %5832 = vmatpush1.bf16.msra.mxu0 %v4360
    %5833 = vmatprep.subr.bf16.mxu0 %v4386
    %5834 = vmatpush1.bf16.msra.mxu0 %v4385
    %5835 = vmatprep.subr.bf16.mxu0 %v4411
    %5836 = vmatpush1.bf16.msra.mxu0 %v4410
    %5837 = vmatprep.subr.bf16.mxu0 %v4436
    %5838 = vmatpush1.bf16.msra.mxu0 %v4435
    %5839 = vmatprep.mubr.bf16.mxu0 %v250
    %5840 = vmatmul.mubr.bf16.gmra.mrb[0].mxu0 %v249
    %v5841 = vpop.f32.mrb[0].mxu0
    %v5842 = vadd.f32 %v5799, %v5841
    %v5843 = vpop.f32.mrb[0].mxu0
    %v5844 = vadd.f32 %v5801, %v5843
    %v5845 = vpop.f32.mrb[0].mxu0
    %v5846 = vadd.f32 %v5803, %v5845
    %v5847 = vpop.f32.mrb[0].mxu0
    %v5848 = vadd.f32 %v5805, %v5847
    %5849 = vdwg.mxu0
    %5850 = vmatprep.subr.bf16.mxu0 %v3663
    %5851 = vmatpush1.bf16.msra.mxu0 %v3662
    %5852 = vmatprep.subr.bf16.mxu0 %v3688
    %5853 = vmatpush1.bf16.msra.mxu0 %v3687
    %5854 = vmatprep.subr.bf16.mxu0 %v3713
    %5855 = vmatpush1.bf16.msra.mxu0 %v3712
    %5856 = vmatprep.subr.bf16.mxu0 %v3738
    %5857 = vmatpush1.bf16.msra.mxu0 %v3737
    %5858 = vmatprep.subr.bf16.mxu0 %v3763
    %5859 = vmatpush1.bf16.msra.mxu0 %v3762
    %5860 = vmatprep.subr.bf16.mxu0 %v3788
    %5861 = vmatpush1.bf16.msra.mxu0 %v3787
    %5862 = vmatprep.subr.bf16.mxu0 %v3813
    %5863 = vmatpush1.bf16.msra.mxu0 %v3812
    %5864 = vmatprep.subr.bf16.mxu0 %v3838
    %5865 = vmatpush1.bf16.msra.mxu0 %v3837
    %5866 = vmatprep.subr.bf16.mxu0 %v3863
    %5867 = vmatpush1.bf16.msra.mxu0 %v3862
    %5868 = vmatprep.subr.bf16.mxu0 %v3888
    %5869 = vmatpush1.bf16.msra.mxu0 %v3887
    %5870 = vmatprep.subr.bf16.mxu0 %v3913
    %5871 = vmatpush1.bf16.msra.mxu0 %v3912
    %5872 = vmatprep.subr.bf16.mxu0 %v3938
    %5873 = vmatpush1.bf16.msra.mxu0 %v3937
    %5874 = vmatprep.subr.bf16.mxu0 %v3963
    %5875 = vmatpush1.bf16.msra.mxu0 %v3962
    %5876 = vmatprep.subr.bf16.mxu0 %v3988
    %5877 = vmatpush1.bf16.msra.mxu0 %v3987
    %5878 = vmatprep.subr.bf16.mxu0 %v4013
    %5879 = vmatpush1.bf16.msra.mxu0 %v4012
    %5880 = vmatprep.subr.bf16.mxu0 %v4038
    %5881 = vmatpush1.bf16.msra.mxu0 %v4037
    %5882 = vmatprep.mubr.bf16.mxu0 %v248
    %5883 = vmatmul.mubr.bf16.gmra.mrb[0].mxu0 %v247
    %v5884 = vpop.f32.mrb[0].mxu0
    %v5885 = vadd.f32 %v1150, %v5884
    %v5886 = vpop.f32.mrb[0].mxu0
    %v5887 = vadd.f32 %v1154, %v5886
    %v5888 = vpop.f32.mrb[0].mxu0
    %v5889 = vadd.f32 %v1150, %v5888
    %v5890 = vpop.f32.mrb[0].mxu0
    %v5891 = vadd.f32 %v1154, %v5890
    %5892 = vdwg.mxu0
    %5893 = vmatprep.subr.bf16.mxu0 %v4063
    %5894 = vmatpush1.bf16.msra.mxu0 %v4062
    %5895 = vmatprep.subr.bf16.mxu0 %v4088
    %5896 = vmatpush1.bf16.msra.mxu0 %v4087
    %5897 = vmatprep.subr.bf16.mxu0 %v4113
    %5898 = vmatpush1.bf16.msra.mxu0 %v4112
    %5899 = vmatprep.subr.bf16.mxu0 %v4138
    %5900 = vmatpush1.bf16.msra.mxu0 %v4137
    %5901 = vmatprep.subr.bf16.mxu0 %v4163
    %5902 = vmatpush1.bf16.msra.mxu0 %v4162
    %5903 = vmatprep.subr.bf16.mxu0 %v4188
    %5904 = vmatpush1.bf16.msra.mxu0 %v4187
    %5905 = vmatprep.subr.bf16.mxu0 %v4213
    %5906 = vmatpush1.bf16.msra.mxu0 %v4212
    %5907 = vmatprep.subr.bf16.mxu0 %v4238
    %5908 = vmatpush1.bf16.msra.mxu0 %v4237
    %5909 = vmatprep.subr.bf16.mxu0 %v4263
    %5910 = vmatpush1.bf16.msra.mxu0 %v4262
    %5911 = vmatprep.subr.bf16.mxu0 %v4288
    %5912 = vmatpush1.bf16.msra.mxu0 %v4287
    %5913 = vmatprep.subr.bf16.mxu0 %v4313
    %5914 = vmatpush1.bf16.msra.mxu0 %v4312
    %5915 = vmatprep.subr.bf16.mxu0 %v4338
    %5916 = vmatpush1.bf16.msra.mxu0 %v4337
    %5917 = vmatprep.subr.bf16.mxu0 %v4363
    %5918 = vmatpush1.bf16.msra.mxu0 %v4362
    %5919 = vmatprep.subr.bf16.mxu0 %v4388
    %5920 = vmatpush1.bf16.msra.mxu0 %v4387
    %5921 = vmatprep.subr.bf16.mxu0 %v4413
    %5922 = vmatpush1.bf16.msra.mxu0 %v4412
    %5923 = vmatprep.subr.bf16.mxu0 %v4438
    %5924 = vmatpush1.bf16.msra.mxu0 %v4437
    %5925 = vmatprep.mubr.bf16.mxu0 %v250
    %5926 = vmatmul.mubr.bf16.gmra.mrb[0].mxu0 %v249
    %v5927 = vpop.f32.mrb[0].mxu0
    %v5928 = vadd.f32 %v5885, %v5927
    %v5929 = vpop.f32.mrb[0].mxu0
    %v5930 = vadd.f32 %v5887, %v5929
    %v5931 = vpop.f32.mrb[0].mxu0
    %v5932 = vadd.f32 %v5889, %v5931
    %v5933 = vpop.f32.mrb[0].mxu0
    %v5934 = vadd.f32 %v5891, %v5933
    %5935 = vdwg.mxu0
    %5936 = vmatprep.subr.bf16.mxu0 %v3665
    %5937 = vmatpush1.bf16.msra.mxu0 %v3664
    %5938 = vmatprep.subr.bf16.mxu0 %v3690
    %5939 = vmatpush1.bf16.msra.mxu0 %v3689
    %5940 = vmatprep.subr.bf16.mxu0 %v3715
    %5941 = vmatpush1.bf16.msra.mxu0 %v3714
    %5942 = vmatprep.subr.bf16.mxu0 %v3740
    %5943 = vmatpush1.bf16.msra.mxu0 %v3739
    %5944 = vmatprep.subr.bf16.mxu0 %v3765
    %5945 = vmatpush1.bf16.msra.mxu0 %v3764
    %5946 = vmatprep.subr.bf16.mxu0 %v3790
    %5947 = vmatpush1.bf16.msra.mxu0 %v3789
    %5948 = vmatprep.subr.bf16.mxu0 %v3815
    %5949 = vmatpush1.bf16.msra.mxu0 %v3814
    %5950 = vmatprep.subr.bf16.mxu0 %v3840
    %5951 = vmatpush1.bf16.msra.mxu0 %v3839
    %5952 = vmatprep.subr.bf16.mxu0 %v3865
    %5953 = vmatpush1.bf16.msra.mxu0 %v3864
    %5954 = vmatprep.subr.bf16.mxu0 %v3890
    %5955 = vmatpush1.bf16.msra.mxu0 %v3889
    %5956 = vmatprep.subr.bf16.mxu0 %v3915
    %5957 = vmatpush1.bf16.msra.mxu0 %v3914
    %5958 = vmatprep.subr.bf16.mxu0 %v3940
    %5959 = vmatpush1.bf16.msra.mxu0 %v3939
    %5960 = vmatprep.subr.bf16.mxu0 %v3965
    %5961 = vmatpush1.bf16.msra.mxu0 %v3964
    %5962 = vmatprep.subr.bf16.mxu0 %v3990
    %5963 = vmatpush1.bf16.msra.mxu0 %v3989
    %5964 = vmatprep.subr.bf16.mxu0 %v4015
    %5965 = vmatpush1.bf16.msra.mxu0 %v4014
    %5966 = vmatprep.subr.bf16.mxu0 %v4040
    %5967 = vmatpush1.bf16.msra.mxu0 %v4039
    %5968 = vmatprep.mubr.bf16.mxu0 %v248
    %5969 = vmatmul.mubr.bf16.gmra.mrb[0].mxu0 %v247
    %v5970 = vpop.f32.mrb[0].mxu0
    %v5971 = vadd.f32 %v1158, %v5970
    %v5972 = vpop.f32.mrb[0].mxu0
    %v5973 = vadd.f32 %v1162, %v5972
    %v5974 = vpop.f32.mrb[0].mxu0
    %v5975 = vadd.f32 %v1158, %v5974
    %v5976 = vpop.f32.mrb[0].mxu0
    %v5977 = vadd.f32 %v1162, %v5976
    %5978 = vdwg.mxu0
    %5979 = vmatprep.subr.bf16.mxu0 %v4065
    %5980 = vmatpush1.bf16.msra.mxu0 %v4064
    %5981 = vmatprep.subr.bf16.mxu0 %v4090
    %5982 = vmatpush1.bf16.msra.mxu0 %v4089
    %5983 = vmatprep.subr.bf16.mxu0 %v4115
    %5984 = vmatpush1.bf16.msra.mxu0 %v4114
    %5985 = vmatprep.subr.bf16.mxu0 %v4140
    %5986 = vmatpush1.bf16.msra.mxu0 %v4139
    %5987 = vmatprep.subr.bf16.mxu0 %v4165
    %5988 = vmatpush1.bf16.msra.mxu0 %v4164
    %5989 = vmatprep.subr.bf16.mxu0 %v4190
    %5990 = vmatpush1.bf16.msra.mxu0 %v4189
    %5991 = vmatprep.subr.bf16.mxu0 %v4215
    %5992 = vmatpush1.bf16.msra.mxu0 %v4214
    %5993 = vmatprep.subr.bf16.mxu0 %v4240
    %5994 = vmatpush1.bf16.msra.mxu0 %v4239
    %5995 = vmatprep.subr.bf16.mxu0 %v4265
    %5996 = vmatpush1.bf16.msra.mxu0 %v4264
    %5997 = vmatprep.subr.bf16.mxu0 %v4290
    %5998 = vmatpush1.bf16.msra.mxu0 %v4289
    %5999 = vmatprep.subr.bf16.mxu0 %v4315
    %6000 = vmatpush1.bf16.msra.mxu0 %v4314
    %6001 = vmatprep.subr.bf16.mxu0 %v4340
    %6002 = vmatpush1.bf16.msra.mxu0 %v4339
    %6003 = vmatprep.subr.bf16.mxu0 %v4365
    %6004 = vmatpush1.bf16.msra.mxu0 %v4364
    %6005 = vmatprep.subr.bf16.mxu0 %v4390
    %6006 = vmatpush1.bf16.msra.mxu0 %v4389
    %6007 = vmatprep.subr.bf16.mxu0 %v4415
    %6008 = vmatpush1.bf16.msra.mxu0 %v4414
    %6009 = vmatprep.subr.bf16.mxu0 %v4440
    %6010 = vmatpush1.bf16.msra.mxu0 %v4439
    %6011 = vmatprep.mubr.bf16.mxu0 %v250
    %6012 = vmatmul.mubr.bf16.gmra.mrb[0].mxu0 %v249
    %v6013 = vpop.f32.mrb[0].mxu0
    %v6014 = vadd.f32 %v5971, %v6013
    %v6015 = vpop.f32.mrb[0].mxu0
    %v6016 = vadd.f32 %v5973, %v6015
    %v6017 = vpop.f32.mrb[0].mxu0
    %v6018 = vadd.f32 %v5975, %v6017
    %v6019 = vpop.f32.mrb[0].mxu0
    %v6020 = vadd.f32 %v5977, %v6019
    %6021 = vdwg.mxu0
    %6022 = vmatprep.subr.bf16.mxu0 %v3667
    %6023 = vmatpush1.bf16.msra.mxu0 %v3666
    %6024 = vmatprep.subr.bf16.mxu0 %v3692
    %6025 = vmatpush1.bf16.msra.mxu0 %v3691
    %6026 = vmatprep.subr.bf16.mxu0 %v3717
    %6027 = vmatpush1.bf16.msra.mxu0 %v3716
    %6028 = vmatprep.subr.bf16.mxu0 %v3742
    %6029 = vmatpush1.bf16.msra.mxu0 %v3741
    %6030 = vmatprep.subr.bf16.mxu0 %v3767
    %6031 = vmatpush1.bf16.msra.mxu0 %v3766
    %6032 = vmatprep.subr.bf16.mxu0 %v3792
    %6033 = vmatpush1.bf16.msra.mxu0 %v3791
    %6034 = vmatprep.subr.bf16.mxu0 %v3817
    %6035 = vmatpush1.bf16.msra.mxu0 %v3816
    %6036 = vmatprep.subr.bf16.mxu0 %v3842
    %6037 = vmatpush1.bf16.msra.mxu0 %v3841
    %6038 = vmatprep.subr.bf16.mxu0 %v3867
    %6039 = vmatpush1.bf16.msra.mxu0 %v3866
    %6040 = vmatprep.subr.bf16.mxu0 %v3892
    %6041 = vmatpush1.bf16.msra.mxu0 %v3891
    %6042 = vmatprep.subr.bf16.mxu0 %v3917
    %6043 = vmatpush1.bf16.msra.mxu0 %v3916
    %6044 = vmatprep.subr.bf16.mxu0 %v3942
    %6045 = vmatpush1.bf16.msra.mxu0 %v3941
    %6046 = vmatprep.subr.bf16.mxu0 %v3967
    %6047 = vmatpush1.bf16.msra.mxu0 %v3966
    %6048 = vmatprep.subr.bf16.mxu0 %v3992
    %6049 = vmatpush1.bf16.msra.mxu0 %v3991
    %6050 = vmatprep.subr.bf16.mxu0 %v4017
    %6051 = vmatpush1.bf16.msra.mxu0 %v4016
    %6052 = vmatprep.subr.bf16.mxu0 %v4042
    %6053 = vmatpush1.bf16.msra.mxu0 %v4041
    %6054 = vmatprep.mubr.bf16.mxu0 %v248
    %6055 = vmatmul.mubr.bf16.gmra.mrb[0].mxu0 %v247
    %v6056 = vpop.f32.mrb[0].mxu0
    %v6057 = vadd.f32 %v1166, %v6056
    %v6058 = vpop.f32.mrb[0].mxu0
    %v6059 = vadd.f32 %v1170, %v6058
    %v6060 = vpop.f32.mrb[0].mxu0
    %v6061 = vadd.f32 %v1166, %v6060
    %v6062 = vpop.f32.mrb[0].mxu0
    %v6063 = vadd.f32 %v1170, %v6062
    %6064 = vdwg.mxu0
    %6065 = vmatprep.subr.bf16.mxu0 %v4067
    %6066 = vmatpush1.bf16.msra.mxu0 %v4066
    %6067 = vmatprep.subr.bf16.mxu0 %v4092
    %6068 = vmatpush1.bf16.msra.mxu0 %v4091
    %6069 = vmatprep.subr.bf16.mxu0 %v4117
    %6070 = vmatpush1.bf16.msra.mxu0 %v4116
    %6071 = vmatprep.subr.bf16.mxu0 %v4142
    %6072 = vmatpush1.bf16.msra.mxu0 %v4141
    %6073 = vmatprep.subr.bf16.mxu0 %v4167
    %6074 = vmatpush1.bf16.msra.mxu0 %v4166
    %6075 = vmatprep.subr.bf16.mxu0 %v4192
    %6076 = vmatpush1.bf16.msra.mxu0 %v4191
    %6077 = vmatprep.subr.bf16.mxu0 %v4217
    %6078 = vmatpush1.bf16.msra.mxu0 %v4216
    %6079 = vmatprep.subr.bf16.mxu0 %v4242
    %6080 = vmatpush1.bf16.msra.mxu0 %v4241
    %6081 = vmatprep.subr.bf16.mxu0 %v4267
    %6082 = vmatpush1.bf16.msra.mxu0 %v4266
    %6083 = vmatprep.subr.bf16.mxu0 %v4292
    %6084 = vmatpush1.bf16.msra.mxu0 %v4291
    %6085 = vmatprep.subr.bf16.mxu0 %v4317
    %6086 = vmatpush1.bf16.msra.mxu0 %v4316
    %6087 = vmatprep.subr.bf16.mxu0 %v4342
    %6088 = vmatpush1.bf16.msra.mxu0 %v4341
    %6089 = vmatprep.subr.bf16.mxu0 %v4367
    %6090 = vmatpush1.bf16.msra.mxu0 %v4366
    %6091 = vmatprep.subr.bf16.mxu0 %v4392
    %6092 = vmatpush1.bf16.msra.mxu0 %v4391
    %6093 = vmatprep.subr.bf16.mxu0 %v4417
    %6094 = vmatpush1.bf16.msra.mxu0 %v4416
    %6095 = vmatprep.subr.bf16.mxu0 %v4442
    %6096 = vmatpush1.bf16.msra.mxu0 %v4441
    %6097 = vmatprep.mubr.bf16.mxu0 %v250
    %6098 = vmatmul.mubr.bf16.gmra.mrb[0].mxu0 %v249
    %v6099 = vpop.f32.mrb[0].mxu0
    %v6100 = vadd.f32 %v6057, %v6099
    %v6101 = vpop.f32.mrb[0].mxu0
    %v6102 = vadd.f32 %v6059, %v6101
    %v6103 = vpop.f32.mrb[0].mxu0
    %v6104 = vadd.f32 %v6061, %v6103
    %v6105 = vpop.f32.mrb[0].mxu0
    %v6106 = vadd.f32 %v6063, %v6105
    %6107 = vdwg.mxu0
    %6108 = vmatprep.subr.bf16.mxu0 %v3669
    %6109 = vmatpush1.bf16.msra.mxu0 %v3668
    %6110 = vmatprep.subr.bf16.mxu0 %v3694
    %6111 = vmatpush1.bf16.msra.mxu0 %v3693
    %6112 = vmatprep.subr.bf16.mxu0 %v3719
    %6113 = vmatpush1.bf16.msra.mxu0 %v3718
    %6114 = vmatprep.subr.bf16.mxu0 %v3744
    %6115 = vmatpush1.bf16.msra.mxu0 %v3743
    %6116 = vmatprep.subr.bf16.mxu0 %v3769
    %6117 = vmatpush1.bf16.msra.mxu0 %v3768
    %6118 = vmatprep.subr.bf16.mxu0 %v3794
    %6119 = vmatpush1.bf16.msra.mxu0 %v3793
    %6120 = vmatprep.subr.bf16.mxu0 %v3819
    %6121 = vmatpush1.bf16.msra.mxu0 %v3818
    %6122 = vmatprep.subr.bf16.mxu0 %v3844
    %6123 = vmatpush1.bf16.msra.mxu0 %v3843
    %6124 = vmatprep.subr.bf16.mxu0 %v3869
    %6125 = vmatpush1.bf16.msra.mxu0 %v3868
    %6126 = vmatprep.subr.bf16.mxu0 %v3894
    %6127 = vmatpush1.bf16.msra.mxu0 %v3893
    %6128 = vmatprep.subr.bf16.mxu0 %v3919
    %6129 = vmatpush1.bf16.msra.mxu0 %v3918
    %6130 = vmatprep.subr.bf16.mxu0 %v3944
    %6131 = vmatpush1.bf16.msra.mxu0 %v3943
    %6132 = vmatprep.subr.bf16.mxu0 %v3969
    %6133 = vmatpush1.bf16.msra.mxu0 %v3968
    %6134 = vmatprep.subr.bf16.mxu0 %v3994
    %6135 = vmatpush1.bf16.msra.mxu0 %v3993
    %6136 = vmatprep.subr.bf16.mxu0 %v4019
    %6137 = vmatpush1.bf16.msra.mxu0 %v4018
    %6138 = vmatprep.subr.bf16.mxu0 %v4044
    %6139 = vmatpush1.bf16.msra.mxu0 %v4043
    %6140 = vmatprep.mubr.bf16.mxu0 %v248
    %6141 = vmatmul.mubr.bf16.gmra.mrb[0].mxu0 %v247
    %v6142 = vpop.f32.mrb[0].mxu0
    %v6143 = vadd.f32 %v1174, %v6142
    %v6144 = vpop.f32.mrb[0].mxu0
    %v6145 = vadd.f32 %v1178, %v6144
    %v6146 = vpop.f32.mrb[0].mxu0
    %v6147 = vadd.f32 %v1174, %v6146
    %v6148 = vpop.f32.mrb[0].mxu0
    %v6149 = vadd.f32 %v1178, %v6148
    %6150 = vdwg.mxu0
    %6151 = vmatprep.subr.bf16.mxu0 %v4069
    %6152 = vmatpush1.bf16.msra.mxu0 %v4068
    %6153 = vmatprep.subr.bf16.mxu0 %v4094
    %6154 = vmatpush1.bf16.msra.mxu0 %v4093
    %6155 = vmatprep.subr.bf16.mxu0 %v4119
    %6156 = vmatpush1.bf16.msra.mxu0 %v4118
    %6157 = vmatprep.subr.bf16.mxu0 %v4144
    %6158 = vmatpush1.bf16.msra.mxu0 %v4143
    %6159 = vmatprep.subr.bf16.mxu0 %v4169
    %6160 = vmatpush1.bf16.msra.mxu0 %v4168
    %6161 = vmatprep.subr.bf16.mxu0 %v4194
    %6162 = vmatpush1.bf16.msra.mxu0 %v4193
    %6163 = vmatprep.subr.bf16.mxu0 %v4219
    %6164 = vmatpush1.bf16.msra.mxu0 %v4218
    %6165 = vmatprep.subr.bf16.mxu0 %v4244
    %6166 = vmatpush1.bf16.msra.mxu0 %v4243
    %6167 = vmatprep.subr.bf16.mxu0 %v4269
    %6168 = vmatpush1.bf16.msra.mxu0 %v4268
    %6169 = vmatprep.subr.bf16.mxu0 %v4294
    %6170 = vmatpush1.bf16.msra.mxu0 %v4293
    %6171 = vmatprep.subr.bf16.mxu0 %v4319
    %6172 = vmatpush1.bf16.msra.mxu0 %v4318
    %6173 = vmatprep.subr.bf16.mxu0 %v4344
    %6174 = vmatpush1.bf16.msra.mxu0 %v4343
    %6175 = vmatprep.subr.bf16.mxu0 %v4369
    %6176 = vmatpush1.bf16.msra.mxu0 %v4368
    %6177 = vmatprep.subr.bf16.mxu0 %v4394
    %6178 = vmatpush1.bf16.msra.mxu0 %v4393
    %6179 = vmatprep.subr.bf16.mxu0 %v4419
    %6180 = vmatpush1.bf16.msra.mxu0 %v4418
    %6181 = vmatprep.subr.bf16.mxu0 %v4444
    %6182 = vmatpush1.bf16.msra.mxu0 %v4443
    %6183 = vmatprep.mubr.bf16.mxu0 %v250
    %6184 = vmatmul.mubr.bf16.gmra.mrb[0].mxu0 %v249
    %v6185 = vpop.f32.mrb[0].mxu0
    %v6186 = vadd.f32 %v6143, %v6185
    %v6187 = vpop.f32.mrb[0].mxu0
    %v6188 = vadd.f32 %v6145, %v6187
    %v6189 = vpop.f32.mrb[0].mxu0
    %v6190 = vadd.f32 %v6147, %v6189
    %v6191 = vpop.f32.mrb[0].mxu0
    %v6192 = vadd.f32 %v6149, %v6191
    %6193 = vdwg.mxu0
    %6194 = vmatprep.subr.bf16.mxu0 %v3671
    %6195 = vmatpush1.bf16.msra.mxu0 %v3670
    %6196 = vmatprep.subr.bf16.mxu0 %v3696
    %6197 = vmatpush1.bf16.msra.mxu0 %v3695
    %6198 = vmatprep.subr.bf16.mxu0 %v3721
    %6199 = vmatpush1.bf16.msra.mxu0 %v3720
    %6200 = vmatprep.subr.bf16.mxu0 %v3746
    %6201 = vmatpush1.bf16.msra.mxu0 %v3745
    %6202 = vmatprep.subr.bf16.mxu0 %v3771
    %6203 = vmatpush1.bf16.msra.mxu0 %v3770
    %6204 = vmatprep.subr.bf16.mxu0 %v3796
    %6205 = vmatpush1.bf16.msra.mxu0 %v3795
    %6206 = vmatprep.subr.bf16.mxu0 %v3821
    %6207 = vmatpush1.bf16.msra.mxu0 %v3820
    %6208 = vmatprep.subr.bf16.mxu0 %v3846
    %6209 = vmatpush1.bf16.msra.mxu0 %v3845
    %6210 = vmatprep.subr.bf16.mxu0 %v3871
    %6211 = vmatpush1.bf16.msra.mxu0 %v3870
    %6212 = vmatprep.subr.bf16.mxu0 %v3896
    %6213 = vmatpush1.bf16.msra.mxu0 %v3895
    %6214 = vmatprep.subr.bf16.mxu0 %v3921
    %6215 = vmatpush1.bf16.msra.mxu0 %v3920
    %6216 = vmatprep.subr.bf16.mxu0 %v3946
    %6217 = vmatpush1.bf16.msra.mxu0 %v3945
    %6218 = vmatprep.subr.bf16.mxu0 %v3971
    %6219 = vmatpush1.bf16.msra.mxu0 %v3970
    %6220 = vmatprep.subr.bf16.mxu0 %v3996
    %6221 = vmatpush1.bf16.msra.mxu0 %v3995
    %6222 = vmatprep.subr.bf16.mxu0 %v4021
    %6223 = vmatpush1.bf16.msra.mxu0 %v4020
    %6224 = vmatprep.subr.bf16.mxu0 %v4046
    %6225 = vmatpush1.bf16.msra.mxu0 %v4045
    %6226 = vmatprep.mubr.bf16.mxu0 %v248
    %6227 = vmatmul.mubr.bf16.gmra.mrb[0].mxu0 %v247
    %v6228 = vpop.f32.mrb[0].mxu0
    %v6229 = vadd.f32 %v1182, %v6228
    %v6230 = vpop.f32.mrb[0].mxu0
    %v6231 = vadd.f32 %v1186, %v6230
    %v6232 = vpop.f32.mrb[0].mxu0
    %v6233 = vadd.f32 %v1182, %v6232
    %v6234 = vpop.f32.mrb[0].mxu0
    %v6235 = vadd.f32 %v1186, %v6234
    %6236 = vdwg.mxu0
    %6237 = vmatprep.subr.bf16.mxu0 %v4071
    %6238 = vmatpush1.bf16.msra.mxu0 %v4070
    %6239 = vmatprep.subr.bf16.mxu0 %v4096
    %6240 = vmatpush1.bf16.msra.mxu0 %v4095
    %6241 = vmatprep.subr.bf16.mxu0 %v4121
    %6242 = vmatpush1.bf16.msra.mxu0 %v4120
    %6243 = vmatprep.subr.bf16.mxu0 %v4146
    %6244 = vmatpush1.bf16.msra.mxu0 %v4145
    %6245 = vmatprep.subr.bf16.mxu0 %v4171
    %6246 = vmatpush1.bf16.msra.mxu0 %v4170
    %6247 = vmatprep.subr.bf16.mxu0 %v4196
    %6248 = vmatpush1.bf16.msra.mxu0 %v4195
    %6249 = vmatprep.subr.bf16.mxu0 %v4221
    %6250 = vmatpush1.bf16.msra.mxu0 %v4220
    %6251 = vmatprep.subr.bf16.mxu0 %v4246
    %6252 = vmatpush1.bf16.msra.mxu0 %v4245
    %6253 = vmatprep.subr.bf16.mxu0 %v4271
    %6254 = vmatpush1.bf16.msra.mxu0 %v4270
    %6255 = vmatprep.subr.bf16.mxu0 %v4296
    %6256 = vmatpush1.bf16.msra.mxu0 %v4295
    %6257 = vmatprep.subr.bf16.mxu0 %v4321
    %6258 = vmatpush1.bf16.msra.mxu0 %v4320
    %6259 = vmatprep.subr.bf16.mxu0 %v4346
    %6260 = vmatpush1.bf16.msra.mxu0 %v4345
    %6261 = vmatprep.subr.bf16.mxu0 %v4371
    %6262 = vmatpush1.bf16.msra.mxu0 %v4370
    %6263 = vmatprep.subr.bf16.mxu0 %v4396
    %6264 = vmatpush1.bf16.msra.mxu0 %v4395
    %6265 = vmatprep.subr.bf16.mxu0 %v4421
    %6266 = vmatpush1.bf16.msra.mxu0 %v4420
    %6267 = vmatprep.subr.bf16.mxu0 %v4446
    %6268 = vmatpush1.bf16.msra.mxu0 %v4445
    %6269 = vmatprep.mubr.bf16.mxu0 %v250
    %6270 = vmatmul.mubr.bf16.gmra.mrb[0].mxu0 %v249
    %v6271 = vpop.f32.mrb[0].mxu0
    %v6272 = vadd.f32 %v6229, %v6271
    %v6273 = vpop.f32.mrb[0].mxu0
    %v6274 = vadd.f32 %v6231, %v6273
    %v6275 = vpop.f32.mrb[0].mxu0
    %v6276 = vadd.f32 %v6233, %v6275
    %v6277 = vpop.f32.mrb[0].mxu0
    %v6278 = vadd.f32 %v6235, %v6277
    %6279 = vdwg.mxu0
    %6280 = vmatprep.subr.bf16.mxu0 0
    %6281 = vmatpush1.bf16.msra.mxu0 %v3672
    %6282 = vmatprep.subr.bf16.mxu0 0
    %6283 = vmatpush1.bf16.msra.mxu0 %v3697
    %6284 = vmatprep.subr.bf16.mxu0 0
    %6285 = vmatpush1.bf16.msra.mxu0 %v3722
    %6286 = vmatprep.subr.bf16.mxu0 0
    %6287 = vmatpush1.bf16.msra.mxu0 %v3747
    %6288 = vmatprep.subr.bf16.mxu0 0
    %6289 = vmatpush1.bf16.msra.mxu0 %v3772
    %6290 = vmatprep.subr.bf16.mxu0 0
    %6291 = vmatpush1.bf16.msra.mxu0 %v3797
    %6292 = vmatprep.subr.bf16.mxu0 0
    %6293 = vmatpush1.bf16.msra.mxu0 %v3822
    %6294 = vmatprep.subr.bf16.mxu0 0
    %6295 = vmatpush1.bf16.msra.mxu0 %v3847
    %6296 = vmatprep.subr.bf16.mxu0 0
    %6297 = vmatpush1.bf16.msra.mxu0 %v3872
    %6298 = vmatprep.subr.bf16.mxu0 0
    %6299 = vmatpush1.bf16.msra.mxu0 %v3897
    %6300 = vmatprep.subr.bf16.mxu0 0
    %6301 = vmatpush1.bf16.msra.mxu0 %v3922
    %6302 = vmatprep.subr.bf16.mxu0 0
    %6303 = vmatpush1.bf16.msra.mxu0 %v3947
    %6304 = vmatprep.subr.bf16.mxu0 0
    %6305 = vmatpush1.bf16.msra.mxu0 %v3972
    %6306 = vmatprep.subr.bf16.mxu0 0
    %6307 = vmatpush1.bf16.msra.mxu0 %v3997
    %6308 = vmatprep.subr.bf16.mxu0 0
    %6309 = vmatpush1.bf16.msra.mxu0 %v4022
    %6310 = vmatprep.subr.bf16.mxu0 0
    %6311 = vmatpush1.bf16.msra.mxu0 %v4047
    %6312 = vmatprep.mubr.bf16.mxu0 %v248
    %6313 = vmatmul.mubr.bf16.gmra.mrb[0].mxu0 %v247
    %v6314 = vpop.f32.mrb[0].mxu0
    %v6315 = vadd.f32 %v1190, %v6314
    %v6316 = vpop.f32.mrb[0].mxu0
    %v6317 = vpop.f32.mrb[0].mxu0
    %v6318 = vadd.f32 %v1190, %v6317
    %v6319 = vpop.f32.mrb[0].mxu0
    %6320 = vdwg.mxu0
    %6321 = vmatprep.subr.bf16.mxu0 0
    %6322 = vmatpush1.bf16.msra.mxu0 %v4072
    %6323 = vmatprep.subr.bf16.mxu0 0
    %6324 = vmatpush1.bf16.msra.mxu0 %v4097
    %6325 = vmatprep.subr.bf16.mxu0 0
    %6326 = vmatpush1.bf16.msra.mxu0 %v4122
    %6327 = vmatprep.subr.bf16.mxu0 0
    %6328 = vmatpush1.bf16.msra.mxu0 %v4147
    %6329 = vmatprep.subr.bf16.mxu0 0
    %6330 = vmatpush1.bf16.msra.mxu0 %v4172
    %6331 = vmatprep.subr.bf16.mxu0 0
    %6332 = vmatpush1.bf16.msra.mxu0 %v4197
    %6333 = vmatprep.subr.bf16.mxu0 0
    %6334 = vmatpush1.bf16.msra.mxu0 %v4222
    %6335 = vmatprep.subr.bf16.mxu0 0
    %6336 = vmatpush1.bf16.msra.mxu0 %v4247
    %6337 = vmatprep.subr.bf16.mxu0 0
    %6338 = vmatpush1.bf16.msra.mxu0 %v4272
    %6339 = vmatprep.subr.bf16.mxu0 0
    %6340 = vmatpush1.bf16.msra.mxu0 %v4297
    %6341 = vmatprep.subr.bf16.mxu0 0
    %6342 = vmatpush1.bf16.msra.mxu0 %v4322
    %6343 = vmatprep.subr.bf16.mxu0 0
    %6344 = vmatpush1.bf16.msra.mxu0 %v4347
    %6345 = vmatprep.subr.bf16.mxu0 0
    %6346 = vmatpush1.bf16.msra.mxu0 %v4372
    %6347 = vmatprep.subr.bf16.mxu0 0
    %6348 = vmatpush1.bf16.msra.mxu0 %v4397
    %6349 = vmatprep.subr.bf16.mxu0 0
    %6350 = vmatpush1.bf16.msra.mxu0 %v4422
    %6351 = vmatprep.subr.bf16.mxu0 0
    %6352 = vmatpush1.bf16.msra.mxu0 %v4447
    %6353 = vmatprep.mubr.bf16.mxu0 %v250
    %6354 = vmatmul.mubr.bf16.gmra.mrb[0].mxu0 %v249
    %v6355 = vpop.f32.mrb[0].mxu0
    %v6356 = vadd.f32 %v6315, %v6355
    %v6357 = vpop.f32.mrb[0].mxu0
    %v6358 = vpop.f32.mrb[0].mxu0
    %v6359 = vadd.f32 %v6318, %v6358
    %v6360 = vpop.f32.mrb[0].mxu0
    %6361 = vdwg.mxu0
    %v6362 = vmax.f32 %v5326, 0.0
    %v6363 = vmax.f32 %v5328, 0.0
    %v6364 = vmax.f32 %v5412, 0.0
    %v6365 = vmax.f32 %v5414, 0.0
    %v6366 = vmax.f32 %v5498, 0.0
    %v6367 = vmax.f32 %v5500, 0.0
    %v6368 = vmax.f32 %v5584, 0.0
    %v6369 = vmax.f32 %v5586, 0.0
    %v6370 = vmax.f32 %v5670, 0.0
    %v6371 = vmax.f32 %v5672, 0.0
    %v6372 = vmax.f32 %v5756, 0.0
    %v6373 = vmax.f32 %v5758, 0.0
    %v6374 = vmax.f32 %v5842, 0.0
    %v6375 = vmax.f32 %v5844, 0.0
    %v6376 = vmax.f32 %v5928, 0.0
    %v6377 = vmax.f32 %v5930, 0.0
    %v6378 = vmax.f32 %v6014, 0.0
    %v6379 = vmax.f32 %v6016, 0.0
    %v6380 = vmax.f32 %v6100, 0.0
    %v6381 = vmax.f32 %v6102, 0.0
    %v6382 = vmax.f32 %v6186, 0.0
    %v6383 = vmax.f32 %v6188, 0.0
    %v6384 = vmax.f32 %v6272, 0.0
    %v6385 = vmax.f32 %v6274, 0.0
    %v6386 = vmax.f32 %v6356, 0.0
    %v6387 = vmax.f32 %v5330, 0.0
    %v6388 = vmax.f32 %v5332, 0.0
    %v6389 = vmax.f32 %v5416, 0.0
    %v6390 = vmax.f32 %v5418, 0.0
    %v6391 = vmax.f32 %v5502, 0.0
    %v6392 = vmax.f32 %v5504, 0.0
    %v6393 = vmax.f32 %v5588, 0.0
    %v6394 = vmax.f32 %v5590, 0.0
    %v6395 = vmax.f32 %v5674, 0.0
    %v6396 = vmax.f32 %v5676, 0.0
    %v6397 = vmax.f32 %v5760, 0.0
    %v6398 = vmax.f32 %v5762, 0.0
    %v6399 = vmax.f32 %v5846, 0.0
    %v6400 = vmax.f32 %v5848, 0.0
    %v6401 = vmax.f32 %v5932, 0.0
    %v6402 = vmax.f32 %v5934, 0.0
    %v6403 = vmax.f32 %v6018, 0.0
    %v6404 = vmax.f32 %v6020, 0.0
    %v6405 = vmax.f32 %v6104, 0.0
    %v6406 = vmax.f32 %v6106, 0.0
    %v6407 = vmax.f32 %v6190, 0.0
    %v6408 = vmax.f32 %v6192, 0.0
    %v6409 = vmax.f32 %v6276, 0.0
    %v6410 = vmax.f32 %v6278, 0.0
    %v6411 = vmax.f32 %v6359, 0.0
    %v6412 = vpack.c.bf16 %v6387, %v6362
    %v6413 = vpack.c.bf16 %v6388, %v6363
    %v6414 = vpack.c.bf16 %v6389, %v6364
    %v6415 = vpack.c.bf16 %v6390, %v6365
    %v6416 = vpack.c.bf16 %v6391, %v6366
    %v6417 = vpack.c.bf16 %v6392, %v6367
    %v6418 = vpack.c.bf16 %v6393, %v6368
    %v6419 = vpack.c.bf16 %v6394, %v6369
    %v6420 = vpack.c.bf16 %v6395, %v6370
    %v6421 = vpack.c.bf16 %v6396, %v6371
    %v6422 = vpack.c.bf16 %v6397, %v6372
    %v6423 = vpack.c.bf16 %v6398, %v6373
    %v6424 = vpack.c.bf16 %v6399, %v6374
    %v6425 = vpack.c.bf16 %v6400, %v6375
    %v6426 = vpack.c.bf16 %v6401, %v6376
    %v6427 = vpack.c.bf16 %v6402, %v6377
    %v6428 = vpack.c.bf16 %v6403, %v6378
    %v6429 = vpack.c.bf16 %v6404, %v6379
    %v6430 = vpack.c.bf16 %v6405, %v6380
    %v6431 = vpack.c.bf16 %v6406, %v6381
    %v6432 = vpack.c.bf16 %v6407, %v6382
    %v6433 = vpack.c.bf16 %v6408, %v6383
    %v6434 = vpack.c.bf16 %v6409, %v6384
    %v6435 = vpack.c.bf16 %v6410, %v6385
    %v6436 = vpack.c.bf16 %v6411, %v6386
    %v6462 = vunpack.c.l.b16 %v6412
    %v6463 = vunpack.c.l.b16 %v6413
    %v6464 = vunpack.c.l.b16 %v6414
    %v6465 = vunpack.c.l.b16 %v6415
    %v6466 = vunpack.c.l.b16 %v6416
    %v6467 = vunpack.c.l.b16 %v6417
    %v6468 = vunpack.c.l.b16 %v6418
    %v6469 = vunpack.c.l.b16 %v6419
    %v6470 = vunpack.c.l.b16 %v6420
    %v6471 = vunpack.c.l.b16 %v6421
    %v6472 = vunpack.c.l.b16 %v6422
    %v6473 = vunpack.c.l.b16 %v6423
    %v6474 = vunpack.c.l.b16 %v6424
    %v6475 = vunpack.c.l.b16 %v6425
    %v6476 = vunpack.c.l.b16 %v6426
    %v6477 = vunpack.c.l.b16 %v6427
    %v6478 = vunpack.c.l.b16 %v6428
    %v6479 = vunpack.c.l.b16 %v6429
    %v6480 = vunpack.c.l.b16 %v6430
    %v6481 = vunpack.c.l.b16 %v6431
    %v6482 = vunpack.c.l.b16 %v6432
    %v6483 = vunpack.c.l.b16 %v6433
    %v6484 = vunpack.c.l.b16 %v6434
    %v6485 = vunpack.c.l.b16 %v6435
    %v6486 = vunpack.c.l.b16 %v6436
    %v6487 = vunpack.c.h.b16 %v6412
    %v6488 = vunpack.c.h.b16 %v6413
    %v6489 = vunpack.c.h.b16 %v6414
    %v6490 = vunpack.c.h.b16 %v6415
    %v6491 = vunpack.c.h.b16 %v6416
    %v6492 = vunpack.c.h.b16 %v6417
    %v6493 = vunpack.c.h.b16 %v6418
    %v6494 = vunpack.c.h.b16 %v6419
    %v6495 = vunpack.c.h.b16 %v6420
    %v6496 = vunpack.c.h.b16 %v6421
    %v6497 = vunpack.c.h.b16 %v6422
    %v6498 = vunpack.c.h.b16 %v6423
    %v6499 = vunpack.c.h.b16 %v6424
    %v6500 = vunpack.c.h.b16 %v6425
    %v6501 = vunpack.c.h.b16 %v6426
    %v6502 = vunpack.c.h.b16 %v6427
    %v6503 = vunpack.c.h.b16 %v6428
    %v6504 = vunpack.c.h.b16 %v6429
    %v6505 = vunpack.c.h.b16 %v6430
    %v6506 = vunpack.c.h.b16 %v6431
    %v6507 = vunpack.c.h.b16 %v6432
    %v6508 = vunpack.c.h.b16 %v6433
    %v6509 = vunpack.c.h.b16 %v6434
    %v6510 = vunpack.c.h.b16 %v6435
    %v6511 = vunpack.c.h.b16 %v6436
    %v6512 = vpack.c.b16 %v6463, %v6462
    %v6513 = vpack.c.b16 %v6465, %v6464
    %v6514 = vpack.c.b16 %v6467, %v6466
    %v6515 = vpack.c.b16 %v6469, %v6468
    %v6516 = vpack.c.b16 %v6471, %v6470
    %v6517 = vpack.c.b16 %v6473, %v6472
    %v6518 = vpack.c.b16 %v6475, %v6474
    %v6519 = vpack.c.b16 %v6477, %v6476
    %v6520 = vpack.c.b16 %v6479, %v6478
    %v6521 = vpack.c.b16 %v6481, %v6480
    %v6522 = vpack.c.b16 %v6483, %v6482
    %v6523 = vpack.c.b16 %v6485, %v6484
    %v6524 = vpack.c.b16 %v6486, %v6486
    %v6525 = vpack.c.b16 %v6488, %v6487
    %v6526 = vpack.c.b16 %v6490, %v6489
    %v6527 = vpack.c.b16 %v6492, %v6491
    %v6528 = vpack.c.b16 %v6494, %v6493
    %v6529 = vpack.c.b16 %v6496, %v6495
    %v6530 = vpack.c.b16 %v6498, %v6497
    %v6531 = vpack.c.b16 %v6500, %v6499
    %v6532 = vpack.c.b16 %v6502, %v6501
    %v6533 = vpack.c.b16 %v6504, %v6503
    %v6534 = vpack.c.b16 %v6506, %v6505
    %v6535 = vpack.c.b16 %v6508, %v6507
    %v6536 = vpack.c.b16 %v6510, %v6509
    %v6537 = vpack.c.b16 %v6511, %v6511
    %6564 = vst [vmem:[%s5] sm:$0xff] %v6512
    %6565 = vst [vmem:[%s5 + $0x8] sm:$0xff] %v6513
    %6566 = vst [vmem:[%s5 + $0x10] sm:$0xff] %v6514
    %6567 = vst [vmem:[%s5 + $0x18] sm:$0xff] %v6515
    %6568 = vst [vmem:[%s5 + $0x20] sm:$0xff] %v6516
    %6569 = vst [vmem:[%s5 + $0x28] sm:$0xff] %v6517
    %6570 = vst [vmem:[%s5 + $0x30] sm:$0xff] %v6518
    %6571 = vst [vmem:[%s5 + $0x38] sm:$0xff] %v6519
    %6572 = vst [vmem:[%s5 + $0x40] sm:$0xff] %v6520
    %6573 = vst [vmem:[%s5 + $0x48] sm:$0xff] %v6521
    %6574 = vst [vmem:[%s5 + $0x50] sm:$0xff] %v6522
    %6575 = vst [vmem:[%s5 + $0x58] sm:$0xff] %v6523
    %6576 = vst [vmem:[%s5 + $0x60] sm:$0xf] %v6524
    %6577 = vst [vmem:[%s5 + $0x64] sm:$0xff] %v6525
    %6578 = vst [vmem:[%s5 + $0x6c] sm:$0xff] %v6526
    %6579 = vst [vmem:[%s5 + $0x74] sm:$0xff] %v6527
    %6580 = vst [vmem:[%s5 + $0x7c] sm:$0xff] %v6528
    %6581 = vst [vmem:[%s5 + $0x84] sm:$0xff] %v6529
    %6582 = vst [vmem:[%s5 + $0x8c] sm:$0xff] %v6530
    %6583 = vst [vmem:[%s5 + $0x94] sm:$0xff] %v6531
    %6584 = vst [vmem:[%s5 + $0x9c] sm:$0xff] %v6532
    %6585 = vst [vmem:[%s5 + $0xa4] sm:$0xff] %v6533
    %6586 = vst [vmem:[%s5 + $0xac] sm:$0xff] %v6534
    %6587 = vst [vmem:[%s5 + $0xb4] sm:$0xff] %v6535
    %6588 = vst [vmem:[%s5 + $0xbc] sm:$0xff] %v6536
    %6589 = vst [vmem:[%s5 + $0xc4] sm:$0xf] %v6537
    // Predicated region
    $region38: #{decoder_forward.4} parent=1 // pred_check
      _
    $region39: #{decoder_forward.4} parent=1 // pred_check_branch
      %6591 = sbr.rel (0) target = $region41
    $region40: #{decoder_forward.4} parent=1 // pred_region
      _
    $region41: #{decoder_forward.4} parent=1 // pred_fallthru
      _
    // Predicated region
    $region42: #{decoder_forward.4} parent=1 // pred_check
      _
    $region43: #{decoder_forward.4} parent=1 // pred_check_branch
      %6593 = sbr.rel (0) target = $region45
    $region44: #{decoder_forward.4} parent=1 // pred_region
      _
    $region45: #{decoder_forward.4} parent=1 // pred_fallthru
      _
    %6594 = vsyncpa [#allocation3], 1
    %6595 = vsyncpa [#allocation5], 1
    %6596 = vsyncpa [#allocation8], 1

// kernel: decoder_forward.7
$region0: #{decoder_forward.7}
  #allocation0 [shape = 'u32[]', space=smem, size = 0x4, offset = 0x4, fixed_abs, tag = 'smem constant byte address 0x4 - core index']
  #allocation1 [shape = 'u32[144,128]{1,0:T(1,128)}', space=vmem, size = 0x12000, scoped, tag = 'internal scratch']
  %s0 = inlined_call_operand.vmem [shape: bf16[800,32], index: 0, kind: input, shape index: {}]
  %s1 = inlined_call_operand.vmem [shape: bf16[32,256], index: 1, kind: input, shape index: {}]
  %s2 = inlined_call_operand.vmem [shape: f32[800,256], index: 2, kind: output, shape index: {}]
  %s3 = sld [smem:[#allocation0]]
  $region18: #{decoder_forward.7} parent=0
    _
  %s5 = ssub.s32 1, %s3
  %s6 = scalar_select 0, %s5, %s3
  // Predicated region
  $region2: #{decoder_forward.7} parent=0 // pred_check
    _
  $region3: #{decoder_forward.7} parent=0 // pred_check_branch
    %8 = sbr.rel (0) target = $region5
  $region4: #{decoder_forward.7} parent=0 // pred_region
    _
  $region5: #{decoder_forward.7} parent=0 // pred_fallthru
    _
  // Predicated region
  $region6: #{decoder_forward.7} parent=0 // pred_check
    _
  $region7: #{decoder_forward.7} parent=0 // pred_check_branch
    %10 = sbr.rel (0) target = $region9
  $region8: #{decoder_forward.7} parent=0 // pred_region
    _
  $region9: #{decoder_forward.7} parent=0 // pred_fallthru
    _
  %v12 = vld [vmem:[%s0] sm:$0xf]
  %v13 = vld [vmem:[%s0 + $0x4] sm:$0xf]
  %v14 = vld [vmem:[%s0 + $0x8] sm:$0xf]
  %v15 = vld [vmem:[%s0 + $0xc] sm:$0xf]
  %v16 = vld [vmem:[%s0 + $0x10] sm:$0xf]
  %v17 = vld [vmem:[%s0 + $0x14] sm:$0xf]
  %v18 = vld [vmem:[%s0 + $0x18] sm:$0xf]
  %v19 = vld [vmem:[%s0 + $0x1c] sm:$0xf]
  %v20 = vld [vmem:[%s0 + $0x20] sm:$0xf]
  %v21 = vld [vmem:[%s0 + $0x24] sm:$0xf]
  %v22 = vld [vmem:[%s0 + $0x28] sm:$0xf]
  %v23 = vld [vmem:[%s0 + $0x2c] sm:$0xf]
  %v24 = vld [vmem:[%s0 + $0x30] sm:$0xf]
  %v25 = vld [vmem:[%s0 + $0x34] sm:$0xf]
  %v26 = vld [vmem:[%s0 + $0x38] sm:$0xf]
  %v27 = vld [vmem:[%s0 + $0x3c] sm:$0xf]
  %v28 = vld [vmem:[%s0 + $0x40] sm:$0xf]
  %v29 = vld [vmem:[%s0 + $0x44] sm:$0xf]
  %v30 = vld [vmem:[%s0 + $0x48] sm:$0xf]
  %v31 = vld [vmem:[%s0 + $0x4c] sm:$0xf]
  %v32 = vld [vmem:[%s0 + $0x50] sm:$0xf]
  %v33 = vld [vmem:[%s0 + $0x54] sm:$0xf]
  %v34 = vld [vmem:[%s0 + $0x58] sm:$0xf]
  %v35 = vld [vmem:[%s0 + $0x5c] sm:$0xf]
  %v36 = vld [vmem:[%s0 + $0x60] sm:$0xf]
  %v37 = vld [vmem:[%s0 + $0x64] sm:$0xf]
  %v38 = vld [vmem:[%s0 + $0x68] sm:$0xf]
  %v39 = vld [vmem:[%s0 + $0x6c] sm:$0xf]
  %v40 = vld [vmem:[%s0 + $0x70] sm:$0xf]
  %v41 = vld [vmem:[%s0 + $0x74] sm:$0xf]
  %v42 = vld [vmem:[%s0 + $0x78] sm:$0xf]
  %v43 = vld [vmem:[%s0 + $0x7c] sm:$0xf]
  %v44 = vld [vmem:[%s0 + $0x80] sm:$0xf]
  %v45 = vld [vmem:[%s0 + $0x84] sm:$0xf]
  %v46 = vld [vmem:[%s0 + $0x88] sm:$0xf]
  %v47 = vld [vmem:[%s0 + $0x8c] sm:$0xf]
  %v48 = vld [vmem:[%s0 + $0x90] sm:$0xf]
  %v49 = vld [vmem:[%s0 + $0x94] sm:$0xf]
  %v50 = vld [vmem:[%s0 + $0x98] sm:$0xf]
  %v51 = vld [vmem:[%s0 + $0x9c] sm:$0xf]
  %v52 = vld [vmem:[%s0 + $0xa0] sm:$0xf]
  %v53 = vld [vmem:[%s0 + $0xa4] sm:$0xf]
  %v54 = vld [vmem:[%s0 + $0xa8] sm:$0xf]
  %v55 = vld [vmem:[%s0 + $0xac] sm:$0xf]
  %v56 = vld [vmem:[%s0 + $0xb0] sm:$0xf]
  %v57 = vld [vmem:[%s0 + $0xb4] sm:$0xf]
  %v58 = vld [vmem:[%s0 + $0xb8] sm:$0xf]
  %v59 = vld [vmem:[%s0 + $0xbc] sm:$0xf]
  %v60 = vld [vmem:[%s0 + $0xc0] sm:$0xf]
  %v61 = vld [vmem:[%s0 + $0xc4] sm:$0xf]
  %v62 = vld [vmem:[%s0 + $0xc8] sm:$0xf]
  %v63 = vld [vmem:[%s0 + $0xcc] sm:$0xf]
  %v64 = vld [vmem:[%s0 + $0xd0] sm:$0xf]
  %v65 = vld [vmem:[%s0 + $0xd4] sm:$0xf]
  %v66 = vld [vmem:[%s0 + $0xd8] sm:$0xf]
  %v67 = vld [vmem:[%s0 + $0xdc] sm:$0xf]
  %v68 = vld [vmem:[%s0 + $0xe0] sm:$0xf]
  %v69 = vld [vmem:[%s0 + $0xe4] sm:$0xf]
  %v70 = vld [vmem:[%s0 + $0xe8] sm:$0xf]
  %v71 = vld [vmem:[%s0 + $0xec] sm:$0xf]
  %v72 = vld [vmem:[%s0 + $0xf0] sm:$0xf]
  %v73 = vld [vmem:[%s0 + $0xf4] sm:$0xf]
  %v74 = vld [vmem:[%s0 + $0xf8] sm:$0xf]
  %v75 = vld [vmem:[%s0 + $0xfc] sm:$0xf]
  %v76 = vld [vmem:[%s0 + $0x100] sm:$0xf]
  %v77 = vld [vmem:[%s0 + $0x104] sm:$0xf]
  %v78 = vld [vmem:[%s0 + $0x108] sm:$0xf]
  %v79 = vld [vmem:[%s0 + $0x10c] sm:$0xf]
  %v80 = vld [vmem:[%s0 + $0x110] sm:$0xf]
  %v81 = vld [vmem:[%s0 + $0x114] sm:$0xf]
  %v82 = vld [vmem:[%s0 + $0x118] sm:$0xf]
  %v83 = vld [vmem:[%s0 + $0x11c] sm:$0xf]
  %v84 = vld [vmem:[%s0 + $0x120] sm:$0xf]
  %v85 = vld [vmem:[%s0 + $0x124] sm:$0xf]
  %v86 = vld [vmem:[%s0 + $0x128] sm:$0xf]
  %v87 = vld [vmem:[%s0 + $0x12c] sm:$0xf]
  %v88 = vld [vmem:[%s0 + $0x130] sm:$0xf]
  %v89 = vld [vmem:[%s0 + $0x134] sm:$0xf]
  %v90 = vld [vmem:[%s0 + $0x138] sm:$0xf]
  %v91 = vld [vmem:[%s0 + $0x13c] sm:$0xf]
  %v92 = vld [vmem:[%s0 + $0x140] sm:$0xf]
  %v93 = vld [vmem:[%s0 + $0x144] sm:$0xf]
  %v94 = vld [vmem:[%s0 + $0x148] sm:$0xf]
  %v95 = vld [vmem:[%s0 + $0x14c] sm:$0xf]
  %v96 = vld [vmem:[%s0 + $0x150] sm:$0xf]
  %v97 = vld [vmem:[%s0 + $0x154] sm:$0xf]
  %v98 = vld [vmem:[%s0 + $0x158] sm:$0xf]
  %v99 = vld [vmem:[%s0 + $0x15c] sm:$0xf]
  %v100 = vld [vmem:[%s0 + $0x160] sm:$0xf]
  %v101 = vld [vmem:[%s0 + $0x164] sm:$0xf]
  %v102 = vld [vmem:[%s0 + $0x168] sm:$0xf]
  %v103 = vld [vmem:[%s0 + $0x16c] sm:$0xf]
  %v104 = vld [vmem:[%s0 + $0x170] sm:$0xf]
  %v105 = vld [vmem:[%s0 + $0x174] sm:$0xf]
  %v106 = vld [vmem:[%s0 + $0x178] sm:$0xf]
  %v107 = vld [vmem:[%s0 + $0x17c] sm:$0xf]
  %v108 = vld [vmem:[%s0 + $0x180] sm:$0xf]
  %v109 = vld [vmem:[%s0 + $0x184] sm:$0xf]
  %v110 = vld [vmem:[%s0 + $0x188] sm:$0xf]
  %v111 = vld [vmem:[%s0 + $0x18c] sm:$0xf]
  %v112 = vld [vmem:[%s1] sm:$0xff]
  %v113 = vld [vmem:[%s1 + $0x8] sm:$0xff]
  %v114 = vld [vmem:[%s1 + $0x10] sm:$0xff]
  %v115 = vld [vmem:[%s1 + $0x18] sm:$0xff]
  %v216 = vunpack.c.l.b16 %v12
  %v217 = vunpack.c.l.b16 %v13
  %v218 = vunpack.c.l.b16 %v14
  %v219 = vunpack.c.l.b16 %v15
  %v220 = vunpack.c.l.b16 %v16
  %v221 = vunpack.c.l.b16 %v17
  %v222 = vunpack.c.l.b16 %v18
  %v223 = vunpack.c.l.b16 %v19
  %v224 = vunpack.c.l.b16 %v20
  %v225 = vunpack.c.l.b16 %v21
  %v226 = vunpack.c.l.b16 %v22
  %v227 = vunpack.c.l.b16 %v23
  %v228 = vunpack.c.l.b16 %v24
  %v229 = vunpack.c.l.b16 %v25
  %v230 = vunpack.c.l.b16 %v26
  %v231 = vunpack.c.l.b16 %v27
  %v232 = vunpack.c.l.b16 %v28
  %v233 = vunpack.c.l.b16 %v29
  %v234 = vunpack.c.l.b16 %v30
  %v235 = vunpack.c.l.b16 %v31
  %v236 = vunpack.c.l.b16 %v32
  %v237 = vunpack.c.l.b16 %v33
  %v238 = vunpack.c.l.b16 %v34
  %v239 = vunpack.c.l.b16 %v35
  %v240 = vunpack.c.l.b16 %v36
  %v241 = vunpack.c.l.b16 %v37
  %v242 = vunpack.c.l.b16 %v38
  %v243 = vunpack.c.l.b16 %v39
  %v244 = vunpack.c.l.b16 %v40
  %v245 = vunpack.c.l.b16 %v41
  %v246 = vunpack.c.l.b16 %v42
  %v247 = vunpack.c.l.b16 %v43
  %v248 = vunpack.c.l.b16 %v44
  %v249 = vunpack.c.l.b16 %v45
  %v250 = vunpack.c.l.b16 %v46
  %v251 = vunpack.c.l.b16 %v47
  %v252 = vunpack.c.l.b16 %v48
  %v253 = vunpack.c.l.b16 %v49
  %v254 = vunpack.c.l.b16 %v50
  %v255 = vunpack.c.l.b16 %v51
  %v256 = vunpack.c.l.b16 %v52
  %v257 = vunpack.c.l.b16 %v53
  %v258 = vunpack.c.l.b16 %v54
  %v259 = vunpack.c.l.b16 %v55
  %v260 = vunpack.c.l.b16 %v56
  %v261 = vunpack.c.l.b16 %v57
  %v262 = vunpack.c.l.b16 %v58
  %v263 = vunpack.c.l.b16 %v59
  %v264 = vunpack.c.l.b16 %v60
  %v265 = vunpack.c.l.b16 %v61
  %v266 = vunpack.c.l.b16 %v62
  %v267 = vunpack.c.l.b16 %v63
  %v268 = vunpack.c.l.b16 %v64
  %v269 = vunpack.c.l.b16 %v65
  %v270 = vunpack.c.l.b16 %v66
  %v271 = vunpack.c.l.b16 %v67
  %v272 = vunpack.c.l.b16 %v68
  %v273 = vunpack.c.l.b16 %v69
  %v274 = vunpack.c.l.b16 %v70
  %v275 = vunpack.c.l.b16 %v71
  %v276 = vunpack.c.l.b16 %v72
  %v277 = vunpack.c.l.b16 %v73
  %v278 = vunpack.c.l.b16 %v74
  %v279 = vunpack.c.l.b16 %v75
  %v280 = vunpack.c.l.b16 %v76
  %v281 = vunpack.c.l.b16 %v77
  %v282 = vunpack.c.l.b16 %v78
  %v283 = vunpack.c.l.b16 %v79
  %v284 = vunpack.c.l.b16 %v80
  %v285 = vunpack.c.l.b16 %v81
  %v286 = vunpack.c.l.b16 %v82
  %v287 = vunpack.c.l.b16 %v83
  %v288 = vunpack.c.l.b16 %v84
  %v289 = vunpack.c.l.b16 %v85
  %v290 = vunpack.c.l.b16 %v86
  %v291 = vunpack.c.l.b16 %v87
  %v292 = vunpack.c.l.b16 %v88
  %v293 = vunpack.c.l.b16 %v89
  %v294 = vunpack.c.l.b16 %v90
  %v295 = vunpack.c.l.b16 %v91
  %v296 = vunpack.c.l.b16 %v92
  %v297 = vunpack.c.l.b16 %v93
  %v298 = vunpack.c.l.b16 %v94
  %v299 = vunpack.c.l.b16 %v95
  %v300 = vunpack.c.l.b16 %v96
  %v301 = vunpack.c.l.b16 %v97
  %v302 = vunpack.c.l.b16 %v98
  %v303 = vunpack.c.l.b16 %v99
  %v304 = vunpack.c.l.b16 %v100
  %v305 = vunpack.c.l.b16 %v101
  %v306 = vunpack.c.l.b16 %v102
  %v307 = vunpack.c.l.b16 %v103
  %v308 = vunpack.c.l.b16 %v104
  %v309 = vunpack.c.l.b16 %v105
  %v310 = vunpack.c.l.b16 %v106
  %v311 = vunpack.c.l.b16 %v107
  %v312 = vunpack.c.l.b16 %v108
  %v313 = vunpack.c.l.b16 %v109
  %v314 = vunpack.c.l.b16 %v110
  %v315 = vunpack.c.l.b16 %v111
  %v316 = vpack.c.b16 %v217, %v216
  %v317 = vpack.c.b16 %v219, %v218
  %v318 = vpack.c.b16 %v221, %v220
  %v319 = vpack.c.b16 %v223, %v222
  %v320 = vpack.c.b16 %v225, %v224
  %v321 = vpack.c.b16 %v227, %v226
  %v322 = vpack.c.b16 %v229, %v228
  %v323 = vpack.c.b16 %v231, %v230
  %v324 = vpack.c.b16 %v233, %v232
  %v325 = vpack.c.b16 %v235, %v234
  %v326 = vpack.c.b16 %v237, %v236
  %v327 = vpack.c.b16 %v239, %v238
  %v328 = vpack.c.b16 %v241, %v240
  %v329 = vpack.c.b16 %v243, %v242
  %v330 = vpack.c.b16 %v245, %v244
  %v331 = vpack.c.b16 %v247, %v246
  %v332 = vpack.c.b16 %v249, %v248
  %v333 = vpack.c.b16 %v251, %v250
  %v334 = vpack.c.b16 %v253, %v252
  %v335 = vpack.c.b16 %v255, %v254
  %v336 = vpack.c.b16 %v257, %v256
  %v337 = vpack.c.b16 %v259, %v258
  %v338 = vpack.c.b16 %v261, %v260
  %v339 = vpack.c.b16 %v263, %v262
  %v340 = vpack.c.b16 %v265, %v264
  %v341 = vpack.c.b16 %v267, %v266
  %v342 = vpack.c.b16 %v269, %v268
  %v343 = vpack.c.b16 %v271, %v270
  %v344 = vpack.c.b16 %v273, %v272
  %v345 = vpack.c.b16 %v275, %v274
  %v346 = vpack.c.b16 %v277, %v276
  %v347 = vpack.c.b16 %v279, %v278
  %v348 = vpack.c.b16 %v281, %v280
  %v349 = vpack.c.b16 %v283, %v282
  %v350 = vpack.c.b16 %v285, %v284
  %v351 = vpack.c.b16 %v287, %v286
  %v352 = vpack.c.b16 %v289, %v288
  %v353 = vpack.c.b16 %v291, %v290
  %v354 = vpack.c.b16 %v293, %v292
  %v355 = vpack.c.b16 %v295, %v294
  %v356 = vpack.c.b16 %v297, %v296
  %v357 = vpack.c.b16 %v299, %v298
  %v358 = vpack.c.b16 %v301, %v300
  %v359 = vpack.c.b16 %v303, %v302
  %v360 = vpack.c.b16 %v305, %v304
  %v361 = vpack.c.b16 %v307, %v306
  %v362 = vpack.c.b16 %v309, %v308
  %v363 = vpack.c.b16 %v311, %v310
  %v364 = vpack.c.b16 %v313, %v312
  %v365 = vpack.c.b16 %v315, %v314
  %v370 = vunpack.c.l.b16 %v112
  %v371 = vunpack.c.h.b16 %v112
  %v372 = vunpack.c.l.b16 %v113
  %v373 = vunpack.c.h.b16 %v113
  %v374 = vunpack.c.l.b16 %v114
  %v375 = vunpack.c.h.b16 %v114
  %v376 = vunpack.c.l.b16 %v115
  %v377 = vunpack.c.h.b16 %v115
  %v378 = vpack.c.b16 %v372, %v370
  %v379 = vpack.c.b16 %v373, %v371
  %v380 = vpack.c.b16 %v376, %v374
  %v381 = vpack.c.b16 %v377, %v375
  %vm386 = vcmask 261120
  %v388 = vsel %vm386, %v316, 0
  %v391 = vsel %vm386, %v317, 0
  %v394 = vsel %vm386, %v318, 0
  %v397 = vsel %vm386, %v319, 0
  %v400 = vsel %vm386, %v320, 0
  %v403 = vsel %vm386, %v321, 0
  %v406 = vsel %vm386, %v322, 0
  %v409 = vsel %vm386, %v323, 0
  %v412 = vsel %vm386, %v324, 0
  %v415 = vsel %vm386, %v325, 0
  %v418 = vsel %vm386, %v326, 0
  %v421 = vsel %vm386, %v327, 0
  %v424 = vsel %vm386, %v328, 0
  %v427 = vsel %vm386, %v329, 0
  %v430 = vsel %vm386, %v330, 0
  %v433 = vsel %vm386, %v331, 0
  %v436 = vsel %vm386, %v332, 0
  %v439 = vsel %vm386, %v333, 0
  %v442 = vsel %vm386, %v334, 0
  %v445 = vsel %vm386, %v335, 0
  %v448 = vsel %vm386, %v336, 0
  %v451 = vsel %vm386, %v337, 0
  %v454 = vsel %vm386, %v338, 0
  %v457 = vsel %vm386, %v339, 0
  %v460 = vsel %vm386, %v340, 0
  %v463 = vsel %vm386, %v341, 0
  %v466 = vsel %vm386, %v342, 0
  %v469 = vsel %vm386, %v343, 0
  %v472 = vsel %vm386, %v344, 0
  %v475 = vsel %vm386, %v345, 0
  %v478 = vsel %vm386, %v346, 0
  %v481 = vsel %vm386, %v347, 0
  %v484 = vsel %vm386, %v348, 0
  %v487 = vsel %vm386, %v349, 0
  %v490 = vsel %vm386, %v350, 0
  %v493 = vsel %vm386, %v351, 0
  %v496 = vsel %vm386, %v352, 0
  %v499 = vsel %vm386, %v353, 0
  %v502 = vsel %vm386, %v354, 0
  %v505 = vsel %vm386, %v355, 0
  %v508 = vsel %vm386, %v356, 0
  %v511 = vsel %vm386, %v357, 0
  %v514 = vsel %vm386, %v358, 0
  %v517 = vsel %vm386, %v359, 0
  %v520 = vsel %vm386, %v360, 0
  %v523 = vsel %vm386, %v361, 0
  %v526 = vsel %vm386, %v362, 0
  %v529 = vsel %vm386, %v363, 0
  %v532 = vsel %vm386, %v364, 0
  %v535 = vsel %vm386, %v365, 0
  %537 = vmatprep.subr.bf16.mxu0 %v379
  %538 = vmatpush1.bf16.msra.mxu0 %v378
  %539 = vmatprep.subr.bf16.mxu0 %v381
  %540 = vmatpush1.bf16.msra.mxu0 %v380
  %541 = vmatprep.subr.bf16.mxu0 0
  %542 = vmatpush1.bf16.msra.mxu0 0
  %543 = vmatprep.subr.bf16.mxu0 0
  %544 = vmatpush1.bf16.msra.mxu0 0
  %545 = vmatprep.subr.bf16.mxu0 0
  %546 = vmatpush1.bf16.msra.mxu0 0
  %547 = vmatprep.subr.bf16.mxu0 0
  %548 = vmatpush1.bf16.msra.mxu0 0
  %549 = vmatprep.subr.bf16.mxu0 0
  %550 = vmatpush1.bf16.msra.mxu0 0
  %551 = vmatprep.subr.bf16.mxu0 0
  %552 = vmatpush1.bf16.msra.mxu0 0
  %553 = vmatprep.subr.bf16.mxu0 0
  %554 = vmatpush1.bf16.msra.mxu0 0
  %555 = vmatprep.subr.bf16.mxu0 0
  %556 = vmatpush1.bf16.msra.mxu0 0
  %557 = vmatprep.subr.bf16.mxu0 0
  %558 = vmatpush1.bf16.msra.mxu0 0
  %559 = vmatprep.subr.bf16.mxu0 0
  %560 = vmatpush1.bf16.msra.mxu0 0
  %561 = vmatprep.subr.bf16.mxu0 0
  %562 = vmatpush1.bf16.msra.mxu0 0
  %563 = vmatprep.subr.bf16.mxu0 0
  %564 = vmatpush1.bf16.msra.mxu0 0
  %565 = vmatprep.subr.bf16.mxu0 0
  %566 = vmatpush1.bf16.msra.mxu0 0
  %567 = vmatprep.subr.bf16.mxu0 0
  %568 = vmatpush1.bf16.msra.mxu0 0
  %569 = vmatprep.mubr.bf16.mxu0 0
  %570 = vmatmul.mubr.bf16.gmra.mrb[0].mxu0 %v388
  %v571 = vpop.f32.mrb[0].mxu0
  %v572 = vadd.f32 0.0, %v571
  %v573 = vpop.f32.mrb[0].mxu0
  %v574 = vadd.f32 0.0, %v573
  %v575 = vpop.f32.mrb[0].mxu0
  %v576 = vadd.f32 0.0, %v575
  %v577 = vpop.f32.mrb[0].mxu0
  %v578 = vadd.f32 0.0, %v577
  %579 = vmatprep.mubr.bf16.mxu0 0
  %580 = vmatmul.mubr.bf16.gmra.mrb[0].mxu0 %v391
  %v581 = vpop.f32.mrb[0].mxu0
  %v582 = vadd.f32 0.0, %v581
  %v583 = vpop.f32.mrb[0].mxu0
  %v584 = vadd.f32 0.0, %v583
  %v585 = vpop.f32.mrb[0].mxu0
  %v586 = vadd.f32 0.0, %v585
  %v587 = vpop.f32.mrb[0].mxu0
  %v588 = vadd.f32 0.0, %v587
  %589 = vmatprep.mubr.bf16.mxu0 0
  %590 = vmatmul.mubr.bf16.gmra.mrb[0].mxu0 %v394
  %v591 = vpop.f32.mrb[0].mxu0
  %v592 = vadd.f32 0.0, %v591
  %v593 = vpop.f32.mrb[0].mxu0
  %v594 = vadd.f32 0.0, %v593
  %v595 = vpop.f32.mrb[0].mxu0
  %v596 = vadd.f32 0.0, %v595
  %v597 = vpop.f32.mrb[0].mxu0
  %v598 = vadd.f32 0.0, %v597
  %599 = vmatprep.mubr.bf16.mxu0 0
  %600 = vmatmul.mubr.bf16.gmra.mrb[0].mxu0 %v397
  %v601 = vpop.f32.mrb[0].mxu0
  %v602 = vadd.f32 0.0, %v601
  %v603 = vpop.f32.mrb[0].mxu0
  %v604 = vadd.f32 0.0, %v603
  %v605 = vpop.f32.mrb[0].mxu0
  %v606 = vadd.f32 0.0, %v605
  %v607 = vpop.f32.mrb[0].mxu0
  %v608 = vadd.f32 0.0, %v607
  %609 = vmatprep.mubr.bf16.mxu0 0
  %610 = vmatmul.mubr.bf16.gmra.mrb[0].mxu0 %v400
  %v611 = vpop.f32.mrb[0].mxu0
  %v612 = vadd.f32 0.0, %v611
  %v613 = vpop.f32.mrb[0].mxu0
  %v614 = vadd.f32 0.0, %v613
  %v615 = vpop.f32.mrb[0].mxu0
  %v616 = vadd.f32 0.0, %v615
  %v617 = vpop.f32.mrb[0].mxu0
  %v618 = vadd.f32 0.0, %v617
  %619 = vmatprep.mubr.bf16.mxu0 0
  %620 = vmatmul.mubr.bf16.gmra.mrb[0].mxu0 %v403
  %v621 = vpop.f32.mrb[0].mxu0
  %v622 = vadd.f32 0.0, %v621
  %v623 = vpop.f32.mrb[0].mxu0
  %v624 = vadd.f32 0.0, %v623
  %v625 = vpop.f32.mrb[0].mxu0
  %v626 = vadd.f32 0.0, %v625
  %v627 = vpop.f32.mrb[0].mxu0
  %v628 = vadd.f32 0.0, %v627
  %629 = vmatprep.mubr.bf16.mxu0 0
  %630 = vmatmul.mubr.bf16.gmra.mrb[0].mxu0 %v406
  %v631 = vpop.f32.mrb[0].mxu0
  %v632 = vadd.f32 0.0, %v631
  %v633 = vpop.f32.mrb[0].mxu0
  %v634 = vadd.f32 0.0, %v633
  %v635 = vpop.f32.mrb[0].mxu0
  %v636 = vadd.f32 0.0, %v635
  %v637 = vpop.f32.mrb[0].mxu0
  %v638 = vadd.f32 0.0, %v637
  %639 = vmatprep.mubr.bf16.mxu0 0
  %640 = vmatmul.mubr.bf16.gmra.mrb[0].mxu0 %v409
  %v641 = vpop.f32.mrb[0].mxu0
  %v642 = vadd.f32 0.0, %v641
  %v643 = vpop.f32.mrb[0].mxu0
  %v644 = vadd.f32 0.0, %v643
  %v645 = vpop.f32.mrb[0].mxu0
  %v646 = vadd.f32 0.0, %v645
  %v647 = vpop.f32.mrb[0].mxu0
  %v648 = vadd.f32 0.0, %v647
  %649 = vmatprep.mubr.bf16.mxu0 0
  %650 = vmatmul.mubr.bf16.gmra.mrb[0].mxu0 %v412
  %v651 = vpop.f32.mrb[0].mxu0
  %v652 = vadd.f32 0.0, %v651
  %v653 = vpop.f32.mrb[0].mxu0
  %v654 = vadd.f32 0.0, %v653
  %v655 = vpop.f32.mrb[0].mxu0
  %v656 = vadd.f32 0.0, %v655
  %v657 = vpop.f32.mrb[0].mxu0
  %v658 = vadd.f32 0.0, %v657
  %659 = vmatprep.mubr.bf16.mxu0 0
  %660 = vmatmul.mubr.bf16.gmra.mrb[0].mxu0 %v415
  %v661 = vpop.f32.mrb[0].mxu0
  %v662 = vadd.f32 0.0, %v661
  %v663 = vpop.f32.mrb[0].mxu0
  %v664 = vadd.f32 0.0, %v663
  %v665 = vpop.f32.mrb[0].mxu0
  %v666 = vadd.f32 0.0, %v665
  %v667 = vpop.f32.mrb[0].mxu0
  %v668 = vadd.f32 0.0, %v667
  %669 = vmatprep.mubr.bf16.mxu0 0
  %670 = vmatmul.mubr.bf16.gmra.mrb[0].mxu0 %v418
  %v671 = vpop.f32.mrb[0].mxu0
  %v672 = vadd.f32 0.0, %v671
  %v673 = vpop.f32.mrb[0].mxu0
  %v674 = vadd.f32 0.0, %v673
  %v675 = vpop.f32.mrb[0].mxu0
  %v676 = vadd.f32 0.0, %v675
  %v677 = vpop.f32.mrb[0].mxu0
  %v678 = vadd.f32 0.0, %v677
  %679 = vmatprep.mubr.bf16.mxu0 0
  %680 = vmatmul.mubr.bf16.gmra.mrb[0].mxu0 %v421
  %v681 = vpop.f32.mrb[0].mxu0
  %v682 = vadd.f32 0.0, %v681
  %v683 = vpop.f32.mrb[0].mxu0
  %v684 = vadd.f32 0.0, %v683
  %v685 = vpop.f32.mrb[0].mxu0
  %v686 = vadd.f32 0.0, %v685
  %v687 = vpop.f32.mrb[0].mxu0
  %v688 = vadd.f32 0.0, %v687
  %689 = vmatprep.mubr.bf16.mxu0 0
  %690 = vmatmul.mubr.bf16.gmra.mrb[0].mxu0 %v424
  %v691 = vpop.f32.mrb[0].mxu0
  %v692 = vadd.f32 0.0, %v691
  %v693 = vpop.f32.mrb[0].mxu0
  %v694 = vadd.f32 0.0, %v693
  %v695 = vpop.f32.mrb[0].mxu0
  %v696 = vadd.f32 0.0, %v695
  %v697 = vpop.f32.mrb[0].mxu0
  %v698 = vadd.f32 0.0, %v697
  %699 = vmatprep.mubr.bf16.mxu0 0
  %700 = vmatmul.mubr.bf16.gmra.mrb[0].mxu0 %v427
  %v701 = vpop.f32.mrb[0].mxu0
  %v702 = vadd.f32 0.0, %v701
  %v703 = vpop.f32.mrb[0].mxu0
  %v704 = vadd.f32 0.0, %v703
  %v705 = vpop.f32.mrb[0].mxu0
  %v706 = vadd.f32 0.0, %v705
  %v707 = vpop.f32.mrb[0].mxu0
  %v708 = vadd.f32 0.0, %v707
  %709 = vmatprep.mubr.bf16.mxu0 0
  %710 = vmatmul.mubr.bf16.gmra.mrb[0].mxu0 %v430
  %v711 = vpop.f32.mrb[0].mxu0
  %v712 = vadd.f32 0.0, %v711
  %v713 = vpop.f32.mrb[0].mxu0
  %v714 = vadd.f32 0.0, %v713
  %v715 = vpop.f32.mrb[0].mxu0
  %v716 = vadd.f32 0.0, %v715
  %v717 = vpop.f32.mrb[0].mxu0
  %v718 = vadd.f32 0.0, %v717
  %719 = vmatprep.mubr.bf16.mxu0 0
  %720 = vmatmul.mubr.bf16.gmra.mrb[0].mxu0 %v433
  %v721 = vpop.f32.mrb[0].mxu0
  %v722 = vadd.f32 0.0, %v721
  %v723 = vpop.f32.mrb[0].mxu0
  %v724 = vadd.f32 0.0, %v723
  %v725 = vpop.f32.mrb[0].mxu0
  %v726 = vadd.f32 0.0, %v725
  %v727 = vpop.f32.mrb[0].mxu0
  %v728 = vadd.f32 0.0, %v727
  %729 = vmatprep.mubr.bf16.mxu0 0
  %730 = vmatmul.mubr.bf16.gmra.mrb[0].mxu0 %v436
  %v731 = vpop.f32.mrb[0].mxu0
  %v732 = vadd.f32 0.0, %v731
  %v733 = vpop.f32.mrb[0].mxu0
  %v734 = vadd.f32 0.0, %v733
  %v735 = vpop.f32.mrb[0].mxu0
  %v736 = vadd.f32 0.0, %v735
  %v737 = vpop.f32.mrb[0].mxu0
  %v738 = vadd.f32 0.0, %v737
  %739 = vmatprep.mubr.bf16.mxu0 0
  %740 = vmatmul.mubr.bf16.gmra.mrb[0].mxu0 %v439
  %v741 = vpop.f32.mrb[0].mxu0
  %v742 = vadd.f32 0.0, %v741
  %v743 = vpop.f32.mrb[0].mxu0
  %v744 = vadd.f32 0.0, %v743
  %v745 = vpop.f32.mrb[0].mxu0
  %v746 = vadd.f32 0.0, %v745
  %v747 = vpop.f32.mrb[0].mxu0
  %v748 = vadd.f32 0.0, %v747
  %749 = vmatprep.mubr.bf16.mxu0 0
  %750 = vmatmul.mubr.bf16.gmra.mrb[0].mxu0 %v442
  %v751 = vpop.f32.mrb[0].mxu0
  %v752 = vadd.f32 0.0, %v751
  %v753 = vpop.f32.mrb[0].mxu0
  %v754 = vadd.f32 0.0, %v753
  %v755 = vpop.f32.mrb[0].mxu0
  %v756 = vadd.f32 0.0, %v755
  %v757 = vpop.f32.mrb[0].mxu0
  %v758 = vadd.f32 0.0, %v757
  %759 = vmatprep.mubr.bf16.mxu0 0
  %760 = vmatmul.mubr.bf16.gmra.mrb[0].mxu0 %v445
  %v761 = vpop.f32.mrb[0].mxu0
  %v762 = vadd.f32 0.0, %v761
  %v763 = vpop.f32.mrb[0].mxu0
  %v764 = vadd.f32 0.0, %v763
  %v765 = vpop.f32.mrb[0].mxu0
  %v766 = vadd.f32 0.0, %v765
  %v767 = vpop.f32.mrb[0].mxu0
  %v768 = vadd.f32 0.0, %v767
  %769 = vmatprep.mubr.bf16.mxu0 0
  %770 = vmatmul.mubr.bf16.gmra.mrb[0].mxu0 %v448
  %v771 = vpop.f32.mrb[0].mxu0
  %v772 = vadd.f32 0.0, %v771
  %v773 = vpop.f32.mrb[0].mxu0
  %v774 = vadd.f32 0.0, %v773
  %v775 = vpop.f32.mrb[0].mxu0
  %v776 = vadd.f32 0.0, %v775
  %v777 = vpop.f32.mrb[0].mxu0
  %v778 = vadd.f32 0.0, %v777
  %779 = vmatprep.mubr.bf16.mxu0 0
  %780 = vmatmul.mubr.bf16.gmra.mrb[0].mxu0 %v451
  %v781 = vpop.f32.mrb[0].mxu0
  %v782 = vadd.f32 0.0, %v781
  %v783 = vpop.f32.mrb[0].mxu0
  %v784 = vadd.f32 0.0, %v783
  %v785 = vpop.f32.mrb[0].mxu0
  %v786 = vadd.f32 0.0, %v785
  %v787 = vpop.f32.mrb[0].mxu0
  %v788 = vadd.f32 0.0, %v787
  %789 = vmatprep.mubr.bf16.mxu0 0
  %790 = vmatmul.mubr.bf16.gmra.mrb[0].mxu0 %v454
  %v791 = vpop.f32.mrb[0].mxu0
  %v792 = vadd.f32 0.0, %v791
  %v793 = vpop.f32.mrb[0].mxu0
  %v794 = vadd.f32 0.0, %v793
  %v795 = vpop.f32.mrb[0].mxu0
  %v796 = vadd.f32 0.0, %v795
  %v797 = vpop.f32.mrb[0].mxu0
  %v798 = vadd.f32 0.0, %v797
  %799 = vmatprep.mubr.bf16.mxu0 0
  %800 = vmatmul.mubr.bf16.gmra.mrb[0].mxu0 %v457
  %v801 = vpop.f32.mrb[0].mxu0
  %v802 = vadd.f32 0.0, %v801
  %v803 = vpop.f32.mrb[0].mxu0
  %v804 = vadd.f32 0.0, %v803
  %v805 = vpop.f32.mrb[0].mxu0
  %v806 = vadd.f32 0.0, %v805
  %v807 = vpop.f32.mrb[0].mxu0
  %v808 = vadd.f32 0.0, %v807
  %809 = vmatprep.mubr.bf16.mxu0 0
  %810 = vmatmul.mubr.bf16.gmra.mrb[0].mxu0 %v460
  %v811 = vpop.f32.mrb[0].mxu0
  %v812 = vadd.f32 0.0, %v811
  %v813 = vpop.f32.mrb[0].mxu0
  %v814 = vadd.f32 0.0, %v813
  %v815 = vpop.f32.mrb[0].mxu0
  %v816 = vadd.f32 0.0, %v815
  %v817 = vpop.f32.mrb[0].mxu0
  %v818 = vadd.f32 0.0, %v817
  %819 = vmatprep.mubr.bf16.mxu0 0
  %820 = vmatmul.mubr.bf16.gmra.mrb[0].mxu0 %v463
  %v821 = vpop.f32.mrb[0].mxu0
  %v822 = vadd.f32 0.0, %v821
  %v823 = vpop.f32.mrb[0].mxu0
  %v824 = vadd.f32 0.0, %v823
  %v825 = vpop.f32.mrb[0].mxu0
  %v826 = vadd.f32 0.0, %v825
  %v827 = vpop.f32.mrb[0].mxu0
  %v828 = vadd.f32 0.0, %v827
  %829 = vmatprep.mubr.bf16.mxu0 0
  %830 = vmatmul.mubr.bf16.gmra.mrb[0].mxu0 %v466
  %v831 = vpop.f32.mrb[0].mxu0
  %v832 = vadd.f32 0.0, %v831
  %v833 = vpop.f32.mrb[0].mxu0
  %v834 = vadd.f32 0.0, %v833
  %v835 = vpop.f32.mrb[0].mxu0
  %v836 = vadd.f32 0.0, %v835
  %v837 = vpop.f32.mrb[0].mxu0
  %v838 = vadd.f32 0.0, %v837
  %839 = vmatprep.mubr.bf16.mxu0 0
  %840 = vmatmul.mubr.bf16.gmra.mrb[0].mxu0 %v469
  %v841 = vpop.f32.mrb[0].mxu0
  %v842 = vadd.f32 0.0, %v841
  %v843 = vpop.f32.mrb[0].mxu0
  %v844 = vadd.f32 0.0, %v843
  %v845 = vpop.f32.mrb[0].mxu0
  %v846 = vadd.f32 0.0, %v845
  %v847 = vpop.f32.mrb[0].mxu0
  %v848 = vadd.f32 0.0, %v847
  %849 = vmatprep.mubr.bf16.mxu0 0
  %850 = vmatmul.mubr.bf16.gmra.mrb[0].mxu0 %v472
  %v851 = vpop.f32.mrb[0].mxu0
  %v852 = vadd.f32 0.0, %v851
  %v853 = vpop.f32.mrb[0].mxu0
  %v854 = vadd.f32 0.0, %v853
  %v855 = vpop.f32.mrb[0].mxu0
  %v856 = vadd.f32 0.0, %v855
  %v857 = vpop.f32.mrb[0].mxu0
  %v858 = vadd.f32 0.0, %v857
  %859 = vmatprep.mubr.bf16.mxu0 0
  %860 = vmatmul.mubr.bf16.gmra.mrb[0].mxu0 %v475
  %v861 = vpop.f32.mrb[0].mxu0
  %v862 = vadd.f32 0.0, %v861
  %v863 = vpop.f32.mrb[0].mxu0
  %v864 = vadd.f32 0.0, %v863
  %v865 = vpop.f32.mrb[0].mxu0
  %v866 = vadd.f32 0.0, %v865
  %v867 = vpop.f32.mrb[0].mxu0
  %v868 = vadd.f32 0.0, %v867
  %869 = vmatprep.mubr.bf16.mxu0 0
  %870 = vmatmul.mubr.bf16.gmra.mrb[0].mxu0 %v478
  %v871 = vpop.f32.mrb[0].mxu0
  %v872 = vadd.f32 0.0, %v871
  %v873 = vpop.f32.mrb[0].mxu0
  %v874 = vadd.f32 0.0, %v873
  %v875 = vpop.f32.mrb[0].mxu0
  %v876 = vadd.f32 0.0, %v875
  %v877 = vpop.f32.mrb[0].mxu0
  %v878 = vadd.f32 0.0, %v877
  %879 = vmatprep.mubr.bf16.mxu0 0
  %880 = vmatmul.mubr.bf16.gmra.mrb[0].mxu0 %v481
  %v881 = vpop.f32.mrb[0].mxu0
  %v882 = vadd.f32 0.0, %v881
  %v883 = vpop.f32.mrb[0].mxu0
  %v884 = vadd.f32 0.0, %v883
  %v885 = vpop.f32.mrb[0].mxu0
  %v886 = vadd.f32 0.0, %v885
  %v887 = vpop.f32.mrb[0].mxu0
  %v888 = vadd.f32 0.0, %v887
  %889 = vmatprep.mubr.bf16.mxu0 0
  %890 = vmatmul.mubr.bf16.gmra.mrb[0].mxu0 %v484
  %v891 = vpop.f32.mrb[0].mxu0
  %v892 = vadd.f32 0.0, %v891
  %v893 = vpop.f32.mrb[0].mxu0
  %v894 = vadd.f32 0.0, %v893
  %v895 = vpop.f32.mrb[0].mxu0
  %v896 = vadd.f32 0.0, %v895
  %v897 = vpop.f32.mrb[0].mxu0
  %v898 = vadd.f32 0.0, %v897
  %899 = vmatprep.mubr.bf16.mxu0 0
  %900 = vmatmul.mubr.bf16.gmra.mrb[0].mxu0 %v487
  %v901 = vpop.f32.mrb[0].mxu0
  %v902 = vadd.f32 0.0, %v901
  %v903 = vpop.f32.mrb[0].mxu0
  %v904 = vadd.f32 0.0, %v903
  %v905 = vpop.f32.mrb[0].mxu0
  %v906 = vadd.f32 0.0, %v905
  %v907 = vpop.f32.mrb[0].mxu0
  %v908 = vadd.f32 0.0, %v907
  %909 = vmatprep.mubr.bf16.mxu0 0
  %910 = vmatmul.mubr.bf16.gmra.mrb[0].mxu0 %v490
  %v911 = vpop.f32.mrb[0].mxu0
  %v912 = vadd.f32 0.0, %v911
  %v913 = vpop.f32.mrb[0].mxu0
  %v914 = vadd.f32 0.0, %v913
  %v915 = vpop.f32.mrb[0].mxu0
  %v916 = vadd.f32 0.0, %v915
  %v917 = vpop.f32.mrb[0].mxu0
  %v918 = vadd.f32 0.0, %v917
  %919 = vmatprep.mubr.bf16.mxu0 0
  %920 = vmatmul.mubr.bf16.gmra.mrb[0].mxu0 %v493
  %v921 = vpop.f32.mrb[0].mxu0
  %v922 = vadd.f32 0.0, %v921
  %v923 = vpop.f32.mrb[0].mxu0
  %v924 = vadd.f32 0.0, %v923
  %v925 = vpop.f32.mrb[0].mxu0
  %v926 = vadd.f32 0.0, %v925
  %v927 = vpop.f32.mrb[0].mxu0
  %v928 = vadd.f32 0.0, %v927
  %929 = vmatprep.mubr.bf16.mxu0 0
  %930 = vmatmul.mubr.bf16.gmra.mrb[0].mxu0 %v496
  %v931 = vpop.f32.mrb[0].mxu0
  %v932 = vadd.f32 0.0, %v931
  %v933 = vpop.f32.mrb[0].mxu0
  %v934 = vadd.f32 0.0, %v933
  %v935 = vpop.f32.mrb[0].mxu0
  %v936 = vadd.f32 0.0, %v935
  %v937 = vpop.f32.mrb[0].mxu0
  %v938 = vadd.f32 0.0, %v937
  %939 = vmatprep.mubr.bf16.mxu0 0
  %940 = vmatmul.mubr.bf16.gmra.mrb[0].mxu0 %v499
  %v941 = vpop.f32.mrb[0].mxu0
  %v942 = vadd.f32 0.0, %v941
  %v943 = vpop.f32.mrb[0].mxu0
  %v944 = vadd.f32 0.0, %v943
  %v945 = vpop.f32.mrb[0].mxu0
  %v946 = vadd.f32 0.0, %v945
  %v947 = vpop.f32.mrb[0].mxu0
  %v948 = vadd.f32 0.0, %v947
  %949 = vmatprep.mubr.bf16.mxu0 0
  %950 = vmatmul.mubr.bf16.gmra.mrb[0].mxu0 %v502
  %v951 = vpop.f32.mrb[0].mxu0
  %v952 = vadd.f32 0.0, %v951
  %v953 = vpop.f32.mrb[0].mxu0
  %v954 = vadd.f32 0.0, %v953
  %v955 = vpop.f32.mrb[0].mxu0
  %v956 = vadd.f32 0.0, %v955
  %v957 = vpop.f32.mrb[0].mxu0
  %v958 = vadd.f32 0.0, %v957
  %959 = vmatprep.mubr.bf16.mxu0 0
  %960 = vmatmul.mubr.bf16.gmra.mrb[0].mxu0 %v505
  %v961 = vpop.f32.mrb[0].mxu0
  %v962 = vadd.f32 0.0, %v961
  %v963 = vpop.f32.mrb[0].mxu0
  %v964 = vadd.f32 0.0, %v963
  %v965 = vpop.f32.mrb[0].mxu0
  %v966 = vadd.f32 0.0, %v965
  %v967 = vpop.f32.mrb[0].mxu0
  %v968 = vadd.f32 0.0, %v967
  %969 = vmatprep.mubr.bf16.mxu0 0
  %970 = vmatmul.mubr.bf16.gmra.mrb[0].mxu0 %v508
  %v971 = vpop.f32.mrb[0].mxu0
  %v972 = vadd.f32 0.0, %v971
  %v973 = vpop.f32.mrb[0].mxu0
  %v974 = vadd.f32 0.0, %v973
  %v975 = vpop.f32.mrb[0].mxu0
  %v976 = vadd.f32 0.0, %v975
  %v977 = vpop.f32.mrb[0].mxu0
  %v978 = vadd.f32 0.0, %v977
  %979 = vmatprep.mubr.bf16.mxu0 0
  %980 = vmatmul.mubr.bf16.gmra.mrb[0].mxu0 %v511
  %v981 = vpop.f32.mrb[0].mxu0
  %v982 = vadd.f32 0.0, %v981
  %v983 = vpop.f32.mrb[0].mxu0
  %v984 = vadd.f32 0.0, %v983
  %v985 = vpop.f32.mrb[0].mxu0
  %v986 = vadd.f32 0.0, %v985
  %v987 = vpop.f32.mrb[0].mxu0
  %v988 = vadd.f32 0.0, %v987
  %989 = vmatprep.mubr.bf16.mxu0 0
  %990 = vmatmul.mubr.bf16.gmra.mrb[0].mxu0 %v514
  %v991 = vpop.f32.mrb[0].mxu0
  %v992 = vadd.f32 0.0, %v991
  %v993 = vpop.f32.mrb[0].mxu0
  %v994 = vadd.f32 0.0, %v993
  %v995 = vpop.f32.mrb[0].mxu0
  %v996 = vadd.f32 0.0, %v995
  %v997 = vpop.f32.mrb[0].mxu0
  %v998 = vadd.f32 0.0, %v997
  %999 = vmatprep.mubr.bf16.mxu0 0
  %1000 = vmatmul.mubr.bf16.gmra.mrb[0].mxu0 %v517
  %v1001 = vpop.f32.mrb[0].mxu0
  %v1002 = vadd.f32 0.0, %v1001
  %v1003 = vpop.f32.mrb[0].mxu0
  %v1004 = vadd.f32 0.0, %v1003
  %v1005 = vpop.f32.mrb[0].mxu0
  %v1006 = vadd.f32 0.0, %v1005
  %v1007 = vpop.f32.mrb[0].mxu0
  %v1008 = vadd.f32 0.0, %v1007
  %1009 = vmatprep.mubr.bf16.mxu0 0
  %1010 = vmatmul.mubr.bf16.gmra.mrb[0].mxu0 %v520
  %v1011 = vpop.f32.mrb[0].mxu0
  %v1012 = vadd.f32 0.0, %v1011
  %v1013 = vpop.f32.mrb[0].mxu0
  %v1014 = vadd.f32 0.0, %v1013
  %v1015 = vpop.f32.mrb[0].mxu0
  %v1016 = vadd.f32 0.0, %v1015
  %v1017 = vpop.f32.mrb[0].mxu0
  %v1018 = vadd.f32 0.0, %v1017
  %1019 = vmatprep.mubr.bf16.mxu0 0
  %1020 = vmatmul.mubr.bf16.gmra.mrb[0].mxu0 %v523
  %v1021 = vpop.f32.mrb[0].mxu0
  %v1022 = vadd.f32 0.0, %v1021
  %v1023 = vpop.f32.mrb[0].mxu0
  %v1024 = vadd.f32 0.0, %v1023
  %v1025 = vpop.f32.mrb[0].mxu0
  %v1026 = vadd.f32 0.0, %v1025
  %v1027 = vpop.f32.mrb[0].mxu0
  %v1028 = vadd.f32 0.0, %v1027
  %1029 = vmatprep.mubr.bf16.mxu0 0
  %1030 = vmatmul.mubr.bf16.gmra.mrb[0].mxu0 %v526
  %v1031 = vpop.f32.mrb[0].mxu0
  %v1032 = vadd.f32 0.0, %v1031
  %v1033 = vpop.f32.mrb[0].mxu0
  %v1034 = vadd.f32 0.0, %v1033
  %v1035 = vpop.f32.mrb[0].mxu0
  %v1036 = vadd.f32 0.0, %v1035
  %v1037 = vpop.f32.mrb[0].mxu0
  %v1038 = vadd.f32 0.0, %v1037
  %1039 = vmatprep.mubr.bf16.mxu0 0
  %1040 = vmatmul.mubr.bf16.gmra.mrb[0].mxu0 %v529
  %v1041 = vpop.f32.mrb[0].mxu0
  %v1042 = vadd.f32 0.0, %v1041
  %v1043 = vpop.f32.mrb[0].mxu0
  %v1044 = vadd.f32 0.0, %v1043
  %v1045 = vpop.f32.mrb[0].mxu0
  %v1046 = vadd.f32 0.0, %v1045
  %v1047 = vpop.f32.mrb[0].mxu0
  %v1048 = vadd.f32 0.0, %v1047
  %1049 = vmatprep.mubr.bf16.mxu0 0
  %1050 = vmatmul.mubr.bf16.gmra.mrb[0].mxu0 %v532
  %v1051 = vpop.f32.mrb[0].mxu0
  %v1052 = vadd.f32 0.0, %v1051
  %v1053 = vpop.f32.mrb[0].mxu0
  %v1054 = vadd.f32 0.0, %v1053
  %v1055 = vpop.f32.mrb[0].mxu0
  %v1056 = vadd.f32 0.0, %v1055
  %v1057 = vpop.f32.mrb[0].mxu0
  %v1058 = vadd.f32 0.0, %v1057
  %1059 = vmatprep.mubr.bf16.mxu0 0
  %1060 = vmatmul.mubr.bf16.gmra.mrb[0].mxu0 %v535
  %v1061 = vpop.f32.mrb[0].mxu0
  %v1062 = vadd.f32 0.0, %v1061
  %v1063 = vpop.f32.mrb[0].mxu0
  %v1064 = vadd.f32 0.0, %v1063
  %v1065 = vpop.f32.mrb[0].mxu0
  %v1066 = vadd.f32 0.0, %v1065
  %v1067 = vpop.f32.mrb[0].mxu0
  %v1068 = vadd.f32 0.0, %v1067
  %1069 = vdwg.mxu0
  %1070 = vst [vmem:[%s2] sm:$0xff] %v572
  %1071 = vst [vmem:[%s2 + $0x8] sm:$0xff] %v574
  %1072 = vst [vmem:[%s2 + $0x10] sm:$0xff] %v576
  %1073 = vst [vmem:[%s2 + $0x18] sm:$0xff] %v578
  %1074 = vst [vmem:[%s2 + $0x20] sm:$0xff] %v582
  %1075 = vst [vmem:[%s2 + $0x28] sm:$0xff] %v584
  %1076 = vst [vmem:[%s2 + $0x30] sm:$0xff] %v586
  %1077 = vst [vmem:[%s2 + $0x38] sm:$0xff] %v588
  %1078 = vst [vmem:[%s2 + $0x40] sm:$0xff] %v592
  %1079 = vst [vmem:[%s2 + $0x48] sm:$0xff] %v594
  %1080 = vst [vmem:[%s2 + $0x50] sm:$0xff] %v596
  %1081 = vst [vmem:[%s2 + $0x58] sm:$0xff] %v598
  %1082 = vst [vmem:[%s2 + $0x60] sm:$0xff] %v602
  %1083 = vst [vmem:[%s2 + $0x68] sm:$0xff] %v604
  %1084 = vst [vmem:[%s2 + $0x70] sm:$0xff] %v606
  %1085 = vst [vmem:[%s2 + $0x78] sm:$0xff] %v608
  %1086 = vst [vmem:[%s2 + $0x80] sm:$0xff] %v612
  %1087 = vst [vmem:[%s2 + $0x88] sm:$0xff] %v614
  %1088 = vst [vmem:[%s2 + $0x90] sm:$0xff] %v616
  %1089 = vst [vmem:[%s2 + $0x98] sm:$0xff] %v618
  %1090 = vst [vmem:[%s2 + $0xa0] sm:$0xff] %v622
  %1091 = vst [vmem:[%s2 + $0xa8] sm:$0xff] %v624
  %1092 = vst [vmem:[%s2 + $0xb0] sm:$0xff] %v626
  %1093 = vst [vmem:[%s2 + $0xb8] sm:$0xff] %v628
  %1094 = vst [vmem:[%s2 + $0xc0] sm:$0xff] %v632
  %1095 = vst [vmem:[%s2 + $0xc8] sm:$0xff] %v634
  %1096 = vst [vmem:[%s2 + $0xd0] sm:$0xff] %v636
  %1097 = vst [vmem:[%s2 + $0xd8] sm:$0xff] %v638
  %1098 = vst [vmem:[%s2 + $0xe0] sm:$0xff] %v642
  %1099 = vst [vmem:[%s2 + $0xe8] sm:$0xff] %v644
  %1100 = vst [vmem:[%s2 + $0xf0] sm:$0xff] %v646
  %1101 = vst [vmem:[%s2 + $0xf8] sm:$0xff] %v648
  %1102 = vst [vmem:[%s2 + $0x100] sm:$0xff] %v652
  %1103 = vst [vmem:[%s2 + $0x108] sm:$0xff] %v654
  %1104 = vst [vmem:[%s2 + $0x110] sm:$0xff] %v656
  %1105 = vst [vmem:[%s2 + $0x118] sm:$0xff] %v658
  %1106 = vst [vmem:[%s2 + $0x120] sm:$0xff] %v662
  %1107 = vst [vmem:[%s2 + $0x128] sm:$0xff] %v664
  %1108 = vst [vmem:[%s2 + $0x130] sm:$0xff] %v666
  %1109 = vst [vmem:[%s2 + $0x138] sm:$0xff] %v668
  %1110 = vst [vmem:[%s2 + $0x140] sm:$0xff] %v672
  %1111 = vst [vmem:[%s2 + $0x148] sm:$0xff] %v674
  %1112 = vst [vmem:[%s2 + $0x150] sm:$0xff] %v676
  %1113 = vst [vmem:[%s2 + $0x158] sm:$0xff] %v678
  %1114 = vst [vmem:[%s2 + $0x160] sm:$0xff] %v682
  %1115 = vst [vmem:[%s2 + $0x168] sm:$0xff] %v684
  %1116 = vst [vmem:[%s2 + $0x170] sm:$0xff] %v686
  %1117 = vst [vmem:[%s2 + $0x178] sm:$0xff] %v688
  %1118 = vst [vmem:[%s2 + $0x180] sm:$0xff] %v692
  %1119 = vst [vmem:[%s2 + $0x188] sm:$0xff] %v694
  %1120 = vst [vmem:[%s2 + $0x190] sm:$0xff] %v696
  %1121 = vst [vmem:[%s2 + $0x198] sm:$0xff] %v698
  %1122 = vst [vmem:[%s2 + $0x1a0] sm:$0xff] %v702
  %1123 = vst [vmem:[%s2 + $0x1a8] sm:$0xff] %v704
  %1124 = vst [vmem:[%s2 + $0x1b0] sm:$0xff] %v706
  %1125 = vst [vmem:[%s2 + $0x1b8] sm:$0xff] %v708
  %1126 = vst [vmem:[%s2 + $0x1c0] sm:$0xff] %v712
  %1127 = vst [vmem:[%s2 + $0x1c8] sm:$0xff] %v714
  %1128 = vst [vmem:[%s2 + $0x1d0] sm:$0xff] %v716
  %1129 = vst [vmem:[%s2 + $0x1d8] sm:$0xff] %v718
  %1130 = vst [vmem:[%s2 + $0x1e0] sm:$0xff] %v722
  %1131 = vst [vmem:[%s2 + $0x1e8] sm:$0xff] %v724
  %1132 = vst [vmem:[%s2 + $0x1f0] sm:$0xff] %v726
  %1133 = vst [vmem:[%s2 + $0x1f8] sm:$0xff] %v728
  %1134 = vst [vmem:[%s2 + $0x200] sm:$0xff] %v732
  %1135 = vst [vmem:[%s2 + $0x208] sm:$0xff] %v734
  %1136 = vst [vmem:[%s2 + $0x210] sm:$0xff] %v736
  %1137 = vst [vmem:[%s2 + $0x218] sm:$0xff] %v738
  %1138 = vst [vmem:[%s2 + $0x220] sm:$0xff] %v742
  %1139 = vst [vmem:[%s2 + $0x228] sm:$0xff] %v744
  %1140 = vst [vmem:[%s2 + $0x230] sm:$0xff] %v746
  %1141 = vst [vmem:[%s2 + $0x238] sm:$0xff] %v748
  %1142 = vst [vmem:[%s2 + $0x240] sm:$0xff] %v752
  %1143 = vst [vmem:[%s2 + $0x248] sm:$0xff] %v754
  %1144 = vst [vmem:[%s2 + $0x250] sm:$0xff] %v756
  %1145 = vst [vmem:[%s2 + $0x258] sm:$0xff] %v758
  %1146 = vst [vmem:[%s2 + $0x260] sm:$0xff] %v762
  %1147 = vst [vmem:[%s2 + $0x268] sm:$0xff] %v764
  %1148 = vst [vmem:[%s2 + $0x270] sm:$0xff] %v766
  %1149 = vst [vmem:[%s2 + $0x278] sm:$0xff] %v768
  %1150 = vst [vmem:[%s2 + $0x280] sm:$0xff] %v772
  %1151 = vst [vmem:[%s2 + $0x288] sm:$0xff] %v774
  %1152 = vst [vmem:[%s2 + $0x290] sm:$0xff] %v776
  %1153 = vst [vmem:[%s2 + $0x298] sm:$0xff] %v778
  %1154 = vst [vmem:[%s2 + $0x2a0] sm:$0xff] %v782
  %1155 = vst [vmem:[%s2 + $0x2a8] sm:$0xff] %v784
  %1156 = vst [vmem:[%s2 + $0x2b0] sm:$0xff] %v786
  %1157 = vst [vmem:[%s2 + $0x2b8] sm:$0xff] %v788
  %1158 = vst [vmem:[%s2 + $0x2c0] sm:$0xff] %v792
  %1159 = vst [vmem:[%s2 + $0x2c8] sm:$0xff] %v794
  %1160 = vst [vmem:[%s2 + $0x2d0] sm:$0xff] %v796
  %1161 = vst [vmem:[%s2 + $0x2d8] sm:$0xff] %v798
  %1162 = vst [vmem:[%s2 + $0x2e0] sm:$0xff] %v802
  %1163 = vst [vmem:[%s2 + $0x2e8] sm:$0xff] %v804
  %1164 = vst [vmem:[%s2 + $0x2f0] sm:$0xff] %v806
  %1165 = vst [vmem:[%s2 + $0x2f8] sm:$0xff] %v808
  %1166 = vst [vmem:[%s2 + $0x300] sm:$0xff] %v812
  %1167 = vst [vmem:[%s2 + $0x308] sm:$0xff] %v814
  %1168 = vst [vmem:[%s2 + $0x310] sm:$0xff] %v816
  %1169 = vst [vmem:[%s2 + $0x318] sm:$0xff] %v818
  %1170 = vst [vmem:[%s2 + $0x320] sm:$0xff] %v822
  %1171 = vst [vmem:[%s2 + $0x328] sm:$0xff] %v824
  %1172 = vst [vmem:[%s2 + $0x330] sm:$0xff] %v826
  %1173 = vst [vmem:[%s2 + $0x338] sm:$0xff] %v828
  %1174 = vst [vmem:[%s2 + $0x340] sm:$0xff] %v832
  %1175 = vst [vmem:[%s2 + $0x348] sm:$0xff] %v834
  %1176 = vst [vmem:[%s2 + $0x350] sm:$0xff] %v836
  %1177 = vst [vmem:[%s2 + $0x358] sm:$0xff] %v838
  %1178 = vst [vmem:[%s2 + $0x360] sm:$0xff] %v842
  %1179 = vst [vmem:[%s2 + $0x368] sm:$0xff] %v844
  %1180 = vst [vmem:[%s2 + $0x370] sm:$0xff] %v846
  %1181 = vst [vmem:[%s2 + $0x378] sm:$0xff] %v848
  %1182 = vst [vmem:[%s2 + $0x380] sm:$0xff] %v852
  %1183 = vst [vmem:[%s2 + $0x388] sm:$0xff] %v854
  %1184 = vst [vmem:[%s2 + $0x390] sm:$0xff] %v856
  %1185 = vst [vmem:[%s2 + $0x398] sm:$0xff] %v858
  %1186 = vst [vmem:[%s2 + $0x3a0] sm:$0xff] %v862
  %1187 = vst [vmem:[%s2 + $0x3a8] sm:$0xff] %v864
  %1188 = vst [vmem:[%s2 + $0x3b0] sm:$0xff] %v866
  %1189 = vst [vmem:[%s2 + $0x3b8] sm:$0xff] %v868
  %1190 = vst [vmem:[%s2 + $0x3c0] sm:$0xff] %v872
  %1191 = vst [vmem:[%s2 + $0x3c8] sm:$0xff] %v874
  %1192 = vst [vmem:[%s2 + $0x3d0] sm:$0xff] %v876
  %1193 = vst [vmem:[%s2 + $0x3d8] sm:$0xff] %v878
  %1194 = vst [vmem:[%s2 + $0x3e0] sm:$0xff] %v882
  %1195 = vst [vmem:[%s2 + $0x3e8] sm:$0xff] %v884
  %1196 = vst [vmem:[%s2 + $0x3f0] sm:$0xff] %v886
  %1197 = vst [vmem:[%s2 + $0x3f8] sm:$0xff] %v888
  %1198 = vst [vmem:[%s2 + $0x400] sm:$0xff] %v892
  %1199 = vst [vmem:[%s2 + $0x408] sm:$0xff] %v894
  %1200 = vst [vmem:[%s2 + $0x410] sm:$0xff] %v896
  %1201 = vst [vmem:[%s2 + $0x418] sm:$0xff] %v898
  %1202 = vst [vmem:[%s2 + $0x420] sm:$0xff] %v902
  %1203 = vst [vmem:[%s2 + $0x428] sm:$0xff] %v904
  %1204 = vst [vmem:[%s2 + $0x430] sm:$0xff] %v906
  %1205 = vst [vmem:[%s2 + $0x438] sm:$0xff] %v908
  %1206 = vst [vmem:[%s2 + $0x440] sm:$0xff] %v912
  %1207 = vst [vmem:[%s2 + $0x448] sm:$0xff] %v914
  %1208 = vst [vmem:[%s2 + $0x450] sm:$0xff] %v916
  %1209 = vst [vmem:[%s2 + $0x458] sm:$0xff] %v918
  %1210 = vst [vmem:[%s2 + $0x460] sm:$0xff] %v922
  %1211 = vst [vmem:[%s2 + $0x468] sm:$0xff] %v924
  %1212 = vst [vmem:[%s2 + $0x470] sm:$0xff] %v926
  %1213 = vst [vmem:[%s2 + $0x478] sm:$0xff] %v928
  %1214 = vst [vmem:[%s2 + $0x480] sm:$0xff] %v932
  %1215 = vst [vmem:[%s2 + $0x488] sm:$0xff] %v934
  %1216 = vst [vmem:[%s2 + $0x490] sm:$0xff] %v936
  %1217 = vst [vmem:[%s2 + $0x498] sm:$0xff] %v938
  %1218 = vst [vmem:[%s2 + $0x4a0] sm:$0xff] %v942
  %1219 = vst [vmem:[%s2 + $0x4a8] sm:$0xff] %v944
  %1220 = vst [vmem:[%s2 + $0x4b0] sm:$0xff] %v946
  %1221 = vst [vmem:[%s2 + $0x4b8] sm:$0xff] %v948
  %1222 = vst [vmem:[%s2 + $0x4c0] sm:$0xff] %v952
  %1223 = vst [vmem:[%s2 + $0x4c8] sm:$0xff] %v954
  %1224 = vst [vmem:[%s2 + $0x4d0] sm:$0xff] %v956
  %1225 = vst [vmem:[%s2 + $0x4d8] sm:$0xff] %v958
  %1226 = vst [vmem:[%s2 + $0x4e0] sm:$0xff] %v962
  %1227 = vst [vmem:[%s2 + $0x4e8] sm:$0xff] %v964
  %1228 = vst [vmem:[%s2 + $0x4f0] sm:$0xff] %v966
  %1229 = vst [vmem:[%s2 + $0x4f8] sm:$0xff] %v968
  %1230 = vst [vmem:[%s2 + $0x500] sm:$0xff] %v972
  %1231 = vst [vmem:[%s2 + $0x508] sm:$0xff] %v974
  %1232 = vst [vmem:[%s2 + $0x510] sm:$0xff] %v976
  %1233 = vst [vmem:[%s2 + $0x518] sm:$0xff] %v978
  %1234 = vst [vmem:[%s2 + $0x520] sm:$0xff] %v982
  %1235 = vst [vmem:[%s2 + $0x528] sm:$0xff] %v984
  %1236 = vst [vmem:[%s2 + $0x530] sm:$0xff] %v986
  %1237 = vst [vmem:[%s2 + $0x538] sm:$0xff] %v988
  %1238 = vst [vmem:[%s2 + $0x540] sm:$0xff] %v992
  %1239 = vst [vmem:[%s2 + $0x548] sm:$0xff] %v994
  %1240 = vst [vmem:[%s2 + $0x550] sm:$0xff] %v996
  %1241 = vst [vmem:[%s2 + $0x558] sm:$0xff] %v998
  %1242 = vst [vmem:[%s2 + $0x560] sm:$0xff] %v1002
  %1243 = vst [vmem:[%s2 + $0x568] sm:$0xff] %v1004
  %1244 = vst [vmem:[%s2 + $0x570] sm:$0xff] %v1006
  %1245 = vst [vmem:[%s2 + $0x578] sm:$0xff] %v1008
  %1246 = vst [vmem:[%s2 + $0x580] sm:$0xff] %v1012
  %1247 = vst [vmem:[%s2 + $0x588] sm:$0xff] %v1014
  %1248 = vst [vmem:[%s2 + $0x590] sm:$0xff] %v1016
  %1249 = vst [vmem:[%s2 + $0x598] sm:$0xff] %v1018
  %1250 = vst [vmem:[%s2 + $0x5a0] sm:$0xff] %v1022
  %1251 = vst [vmem:[%s2 + $0x5a8] sm:$0xff] %v1024
  %1252 = vst [vmem:[%s2 + $0x5b0] sm:$0xff] %v1026
  %1253 = vst [vmem:[%s2 + $0x5b8] sm:$0xff] %v1028
  %1254 = vst [vmem:[%s2 + $0x5c0] sm:$0xff] %v1032
  %1255 = vst [vmem:[%s2 + $0x5c8] sm:$0xff] %v1034
  %1256 = vst [vmem:[%s2 + $0x5d0] sm:$0xff] %v1036
  %1257 = vst [vmem:[%s2 + $0x5d8] sm:$0xff] %v1038
  %1258 = vst [vmem:[%s2 + $0x5e0] sm:$0xff] %v1042
  %1259 = vst [vmem:[%s2 + $0x5e8] sm:$0xff] %v1044
  %1260 = vst [vmem:[%s2 + $0x5f0] sm:$0xff] %v1046
  %1261 = vst [vmem:[%s2 + $0x5f8] sm:$0xff] %v1048
  %1262 = vst [vmem:[%s2 + $0x600] sm:$0xff] %v1052
  %1263 = vst [vmem:[%s2 + $0x608] sm:$0xff] %v1054
  %1264 = vst [vmem:[%s2 + $0x610] sm:$0xff] %v1056
  %1265 = vst [vmem:[%s2 + $0x618] sm:$0xff] %v1058
  %1266 = vst [vmem:[%s2 + $0x620] sm:$0xff] %v1062
  %1267 = vst [vmem:[%s2 + $0x628] sm:$0xff] %v1064
  %1268 = vst [vmem:[%s2 + $0x630] sm:$0xff] %v1066
  %1269 = vst [vmem:[%s2 + $0x638] sm:$0xff] %v1068
  // Predicated region
  $region10: #{decoder_forward.7} parent=0 // pred_check
    _
  $region11: #{decoder_forward.7} parent=0 // pred_check_branch
    %1271 = sbr.rel (0) target = $region13
  $region12: #{decoder_forward.7} parent=0 // pred_region
    _
  $region13: #{decoder_forward.7} parent=0 // pred_fallthru
    _
  // Predicated region
  $region14: #{decoder_forward.7} parent=0 // pred_check
    _
  $region15: #{decoder_forward.7} parent=0 // pred_check_branch
    %1273 = sbr.rel (0) target = $region17
  $region16: #{decoder_forward.7} parent=0 // pred_region
    _
  $region17: #{decoder_forward.7} parent=0 // pred_fallthru
    _

</llo_original>
